<compile_context>
chip_gen: v7x
topology: tpu7x:2x2x1
jax: 0.10.0
libtpu: 0.0.40
codegen_flags: <defaults>
</compile_context>

<pallas_src>
import functools
import math

import jax
import jax.numpy as jnp
from jax.experimental import pallas as pl
from jax.experimental.pallas import tpu as pltpu


_LANE = 128
_SMALL_ROWS = 4096                 # below this, XLA's fused pad wins over launch overhead
_MAX_SELECT_D = 8                  # largest last-dim handled by the selection-matmul kernel
_TARGET_STEP_BYTES = 6 * 1024 * 1024   # ~6 MiB of in+out HBM traffic per grid step
_VMEM_LIMIT_BYTES = 32 * 1024 * 1024   # inside v7x default-scoped VMEM, above v5e's 16 MiB default


def _cdiv(a, b):
    return -(-a // b)


def _round_up(a, m):
    return _cdiv(a, m) * m


def _round_down(a, m):
    return (a // m) * m


@functools.lru_cache(maxsize=None)
def _mxu_width() -> int:
    """Systolic-array width of the local TPU: 256 on v6e/v7x, 128 on v5e and older."""
    try:
        kind = jax.devices()[0].device_kind.lower()
    except Exception:
        return 256
    return 128 if any(tag in kind for tag in ("v2", "v3", "v4", "v5")) else 256


@functools.lru_cache(maxsize=None)
def _choose_pack(d: int, mxu: int) -> int:
    """Points packed per lane-dense row.

    Constraints / goals:
      * pack*(d+1) must be a multiple of 128 so every output store is a full
        unmasked 128-lane vst.
      * minimize MXU weight-tile pushes per point:
            ceil(d*pack/mxu) * ceil((d+1)*pack/mxu) / (8*pack)
        For d == 3 this picks 64 on 256-wide MXUs (v6e/v7x) and 32 on 128-wide
        MXUs (v5e and older), keeping even the exact 3-pass f32 matmul hidden
        under the HBM DMAs on every generation.
    """
    step = 128 // math.gcd(d + 1, 128)
    best_pack, best_cost = step, None
    for pack in range(step, 257, step):
        pushes = _cdiv(d * pack, mxu) * _cdiv((d + 1) * pack, mxu) / (8.0 * pack)
        cost = (pushes, pack)                    # tie-break: smaller selection matrix
        if best_cost is None or cost < best_cost:
            best_pack, best_cost = pack, cost
    return best_pack


def _selection_matrix(d: int, pack: int) -> jax.Array:
    """(d*pack, (d+1)*pack) bf16 0/1 matrix: S[d*j + c, (d+1)*j + c] = 1, c < d."""
    kdim, ndim = d * pack, (d + 1) * pack
    src = jnp.arange(kdim, dtype=jnp.int32)[:, None]
    dst = jnp.arange(ndim, dtype=jnp.int32)[None, :]
    comp = dst % (d + 1)
    sel = jnp.logical_and(comp < d, src == d * (dst // (d + 1)) + comp)
    return sel.astype(jnp.bfloat16)


def _w_row(d: int, pack: int) -> jax.Array:
    """(1, (d+1)*pack) f32 row: 1.0 on every (d+1)-th lane (the w lanes), 0.0 elsewhere."""
    ndim = (d + 1) * pack
    lane = jnp.arange(ndim, dtype=jnp.int32)
    return (lane % (d + 1) == d).astype(jnp.float32)[None, :]


def _xla_pad(points: jax.Array) -> jax.Array:
    ones = jnp.ones(points.shape[:-1] + (1,), dtype=points.dtype)
    return jnp.concatenate([points, ones], axis=-1)


def _lane_dense_kernel(x_ref, s_ref, w_ref, o_ref):
    """o = x @ S + w  — a pure lane interleave on the MXU plus the homogeneous 1.0.

    x_ref: (tile_p, d*pack)        input points, `pack` points per lane-dense row
    s_ref: (d*pack, (d+1)*pack)    bf16 0/1 selection matrix (resident: constant block)
    w_ref: (1, (d+1)*pack)         f32 1.0-on-w-lanes row (resident)
    o_ref: (tile_p, (d+1)*pack)
    """
    s = s_ref[...]
    w = w_ref[...]
    x = x_ref[...]

    if x_ref.dtype == jnp.float32:
        # Exact 3-term bf16 split: x == hi + mid + lo, each residual is exactly
        # representable, each dot against the exact-0/1 matrix is exact, and the
        # f32 re-sum (mid + lo first, then + hi) reconstructs x bit-exactly.
        hi = x.astype(jnp.bfloat16)
        r1 = x - hi.astype(jnp.float32)
        mid = r1.astype(jnp.bfloat16)
        lo = (r1 - mid.astype(jnp.float32)).astype(jnp.bfloat16)
        y_hi = jnp.dot(hi, s, preferred_element_type=jnp.float32)
        y_mid = jnp.dot(mid, s, preferred_element_type=jnp.float32)
        y_lo = jnp.dot(lo, s, preferred_element_type=jnp.float32)
        y = y_hi + (y_mid + y_lo)
    else:
        # bfloat16: a single default-precision pass is already exact.
        y = jnp.dot(x, s, preferred_element_type=jnp.float32)

    # The matmul wrote exact 0.0 into every w lane, so a broadcast add of the
    # precomputed 1.0-pattern is exact and costs one VPU add per vreg.
    o_ref[...] = (y + w).astype(o_ref.dtype)


def _lane_dense_call(x2d: jax.Array, pack: int) -> jax.Array:
    rows, d = x2d.shape          # rows % pack == 0 (guaranteed by the caller)
    packed = rows // pack
    kdim = d * pack
    ndim = (d + 1) * pack
    itemsize = x2d.dtype.itemsize

    xk = x2d.reshape(packed, kdim)          # free contiguous view in HBM
    sel = _selection_matrix(d, pack)        # DMA'd once, stays VMEM-resident
    w_row = _w_row(d, pack)

    # Tile sizing: ~_TARGET_STEP_BYTES of in+out HBM traffic per step (amortizes
    # the ~0.35 us fixed per-step pipeline cost), multiple of 8 sublanes, and at
    # least 2 grid steps so both v7x TensorCores get work on small clouds.
    bytes_per_row = (kdim + ndim) * itemsize
    tile_p = max(8, _round_down(_TARGET_STEP_BYTES // bytes_per_row, 8))
    if tile_p >= packed:
        half = _round_up(_cdiv(packed, 2), 8)
        tile_p = half if half < packed else packed
    grid = (_cdiv(packed, tile_p),)

    passes = 3 if x2d.dtype == jnp.dtype(jnp.float32) else 1
    out = pl.pallas_call(
        _lane_dense_kernel,
        out_shape=jax.ShapeDtypeStruct((packed, ndim), x2d.dtype),
        grid=grid,
        in_specs=[
            pl.BlockSpec((tile_p, kdim), lambda i: (i, 0)),
            pl.BlockSpec((kdim, ndim), lambda i: (0, 0)),   # constant block -> resident
            pl.BlockSpec((1, ndim), lambda i: (0, 0)),      # constant block -> resident
        ],
        out_specs=pl.BlockSpec((tile_p, ndim), lambda i: (i, 0)),
        compiler_params=pltpu.CompilerParams(
            dimension_semantics=("parallel",),
            vmem_limit_bytes=_VMEM_LIMIT_BYTES),
        cost_estimate=pl.CostEstimate(
            flops=2 * passes * packed * kdim * ndim,
            transcendentals=0,
            bytes_accessed=(rows * d + rows * (d + 1)) * itemsize),
    )(xk, sel, w_row)

    return out.reshape(rows, d + 1)         # free contiguous view in HBM


def convert_points_to_homogeneous(points: jax.Array) -> jax.Array:
    """JAX/Pallas equivalent of torchgeometry's convert_points_to_homogeneous."""
    if points.ndim < 2:
        raise ValueError(
            "Input must be at least a 2D tensor. Got {}".format(points.shape))

    *lead, d = points.shape
    rows = math.prod(lead)

    lane_dense_ok = (
        0 < d <= _MAX_SELECT_D
        and rows >= _SMALL_ROWS
        and points.dtype in (jnp.dtype(jnp.float32), jnp.dtype(jnp.bfloat16))
    )
    if not lane_dense_ok:
        # TODO(synk): very wide last dims (d > 8) and exotic dtypes stay on XLA's
        # fused pad; a row-tiled Pallas copy with d+1 << 128 lanes would only hit
        # masked stores and a ~32x VMEM/DMA blow-up.
        return _xla_pad(points)

    pack = _choose_pack(d, _mxu_width())
    x2d = points.reshape(rows, d)
    rows_main = rows - rows % pack
    if rows_main == 0:
        return _xla_pad(points)

    main = _lane_dense_call(x2d[:rows_main], pack)
    if rows_main != rows:
        # Ragged tail (< pack rows): handled by XLA so the big prefix keeps the
        # lane-dense fast path (one extra output copy, only when ragged).
        tail = _xla_pad(x2d[rows_main:])
        out2d = jnp.concatenate([main, tail], axis=0)
    else:
        out2d = main
    return out2d.reshape(*lead, d + 1)


class ConvertPointsToHomogeneous:
    """Callable wrapper mirroring the PyTorch nn.Module."""

    def __call__(self, points: jax.Array) -> jax.Array:
        return convert_points_to_homogeneous(points)


if __name__ == "__main__":
    key = jax.random.PRNGKey(0)
    k1, k2, k3, k4, k5 = jax.random.split(key, 5)
    transform = ConvertPointsToHomogeneous()

    # 1) Docstring-sized example (B x N x 3 -> B x N x 4): small-input XLA path.
    x_small = jax.random.uniform(k1, (2, 4, 3), dtype=jnp.float32)
    out_small = jax.block_until_ready(transform(x_small))
    ref_small = jnp.pad(x_small, ((0, 0), (0, 0), (0, 1)),
                        mode="constant", constant_values=1.0)
    assert out_small.shape == (2, 4, 4) and out_small.dtype == x_small.dtype
    assert jnp.array_equal(out_small, ref_small)

    # 2) float32 point cloud: lane-dense Pallas path, multi-step grid.
    x_cloud = jax.random.uniform(k2, (3, 65536, 3), dtype=jnp.float32)
    out_cloud = jax.block_until_ready(convert_points_to_homogeneous(x_cloud))
    ref_cloud = jnp.pad(x_cloud, ((0, 0), (0, 0), (0, 1)),
                        mode="constant", constant_values=1.0)
    assert out_cloud.shape == (3, 65536, 4) and out_cloud.dtype == x_cloud.dtype
    assert jnp.allclose(out_cloud, ref_cloud, rtol=1e-6, atol=1e-6)

    # 3) bfloat16 point cloud: single-pass lane-dense path, bit-exact.
    x_bf16 = jax.random.uniform(k3, (2, 4096, 3), dtype=jnp.float32).astype(jnp.bfloat16)
    out_bf16 = jax.block_until_ready(convert_points_to_homogeneous(x_bf16))
    ref_bf16 = jnp.pad(x_bf16, ((0, 0), (0, 0), (0, 1)),
                       mode="constant", constant_values=1.0)
    assert out_bf16.shape == (2, 4096, 4) and out_bf16.dtype == jnp.bfloat16
    assert jnp.array_equal(out_bf16, ref_bf16)

    # 4) Ragged row count: lane-dense prefix + XLA tail.
    x_rag = jax.random.uniform(k4, (4103, 3), dtype=jnp.float32)
    out_rag = jax.block_until_ready(convert_points_to_homogeneous(x_rag))
    ref_rag = jnp.pad(x_rag, ((0, 0), (0, 1)), mode="constant", constant_values=1.0)
    assert out_rag.shape == (4103, 4)
    assert jnp.allclose(out_rag, ref_rag, rtol=1e-6, atol=1e-6)

    # 5) d == 2 points: lane-dense path with a different pack (128 points/row).
    x_d2 = jax.random.uniform(k5, (8192, 2), dtype=jnp.float32)
    out_d2 = jax.block_until_ready(convert_points_to_homogeneous(x_d2))
    ref_d2 = jnp.pad(x_d2, ((0, 0), (0, 1)), mode="constant", constant_values=1.0)
    assert out_d2.shape == (8192, 3)
    assert jnp.allclose(out_d2, ref_d2, rtol=1e-6, atol=1e-6)

    print("KERNEL_OK")
</pallas_src>

<mosaic_0001>
module attributes {stable_mosaic.version = 11 : i64} {
  func.func @_lane_dense_kernel(%arg0: i32, %arg1: memref<1536x192xf32, #tpu.memory_space<vmem>>, %arg2: memref<192x256xbf16, #tpu.memory_space<vmem>>, %arg3: memref<1x256xf32, #tpu.memory_space<vmem>>, %arg4: memref<1536x256xf32, #tpu.memory_space<vmem>>) attributes {dimension_semantics = [#tpu.dimension_semantics<parallel>], iteration_bounds = array<i64: 2>, scalar_prefetch = 0 : i64, scratch_operands = 0 : i64, tpu.core_type = #tpu.core_type<tc>, window_params = [{transform_indices = @transform_0, window_bounds = array<i64: 1536, 192>}, {pipeline_mode = #tpu.pipeline_mode<synchronous>, transform_indices = @transform_1, window_bounds = array<i64: 192, 256>}, {pipeline_mode = #tpu.pipeline_mode<synchronous>, transform_indices = @transform_2, window_bounds = array<i64: 1, 256>}, {transform_indices = @transform_3, window_bounds = array<i64: 1536, 256>}]} {
    %c0 = arith.constant 0 : index
    %c0_0 = arith.constant 0 : index
    %0 = vector.load %arg2[%c0, %c0_0] : memref<192x256xbf16, #tpu.memory_space<vmem>>, vector<192x256xbf16>
    %c0_1 = arith.constant 0 : index
    %c0_2 = arith.constant 0 : index
    %1 = vector.load %arg3[%c0_1, %c0_2] : memref<1x256xf32, #tpu.memory_space<vmem>>, vector<1x256xf32>
    %c0_3 = arith.constant 0 : index
    %c0_4 = arith.constant 0 : index
    %2 = vector.load %arg1[%c0_3, %c0_4] : memref<1536x192xf32, #tpu.memory_space<vmem>>, vector<1536x192xf32>
    %3 = arith.truncf %2 : vector<1536x192xf32> to vector<1536x192xbf16>
    %4 = arith.extf %3 : vector<1536x192xbf16> to vector<1536x192xf32>
    %5 = arith.subf %2, %4 : vector<1536x192xf32>
    %6 = arith.truncf %5 : vector<1536x192xf32> to vector<1536x192xbf16>
    %7 = arith.extf %6 : vector<1536x192xbf16> to vector<1536x192xf32>
    %8 = arith.subf %5, %7 : vector<1536x192xf32>
    %9 = arith.truncf %8 : vector<1536x192xf32> to vector<1536x192xbf16>
    %cst = arith.constant dense<0.000000e+00> : vector<1536x256xf32>
    %10 = tpu.matmul %3, %0, %cst {dimension_numbers = #tpu.dot_dimension_numbers<[1], [0], [0], [1], [0, 0, 1, 1], [], []>} : vector<1536x192xbf16>, vector<192x256xbf16>, vector<1536x256xf32> -> vector<1536x256xf32>
    %cst_5 = arith.constant dense<0.000000e+00> : vector<1536x256xf32>
    %11 = tpu.matmul %6, %0, %cst_5 {dimension_numbers = #tpu.dot_dimension_numbers<[1], [0], [0], [1], [0, 0, 1, 1], [], []>} : vector<1536x192xbf16>, vector<192x256xbf16>, vector<1536x256xf32> -> vector<1536x256xf32>
    %cst_6 = arith.constant dense<0.000000e+00> : vector<1536x256xf32>
    %12 = tpu.matmul %9, %0, %cst_6 {dimension_numbers = #tpu.dot_dimension_numbers<[1], [0], [0], [1], [0, 0, 1, 1], [], []>} : vector<1536x192xbf16>, vector<192x256xbf16>, vector<1536x256xf32> -> vector<1536x256xf32>
    %13 = arith.addf %11, %12 : vector<1536x256xf32>
    %14 = arith.addf %10, %13 : vector<1536x256xf32>
    %15 = vector.broadcast %1 : vector<1x256xf32> to vector<1536x256xf32>
    %16 = arith.addf %14, %15 : vector<1536x256xf32>
    %c0_7 = arith.constant 0 : index
    %c0_8 = arith.constant 0 : index
    %17 = vector.load %arg4[%c0_7, %c0_8] : memref<1536x256xf32, #tpu.memory_space<vmem>>, vector<1536x256xf32>
    tpu.vector_store %arg4[%c0_7, %c0_8], %16 {strides = array<i32>} : memref<1536x256xf32, #tpu.memory_space<vmem>>, vector<1536x256xf32>,
    return
  }
  func.func @transform_0(%arg0: i32) -> (i32, i32) {
    %c0_i32 = arith.constant 0 : i32
    %c0_i32_0 = arith.constant 0 : i32
    return %arg0, %c0_i32 : i32, i32
  }
  func.func @transform_1(%arg0: i32) -> (i32, i32) {
    %c0_i32 = arith.constant 0 : i32
    %c0_i32_0 = arith.constant 0 : i32
    %c0_i32_1 = arith.constant 0 : i32
    return %c0_i32, %c0_i32_0 : i32, i32
  }
  func.func @transform_2(%arg0: i32) -> (i32, i32) {
    %c0_i32 = arith.constant 0 : i32
    %c0_i32_0 = arith.constant 0 : i32
    %c0_i32_1 = arith.constant 0 : i32
    return %c0_i32, %c0_i32_0 : i32, i32
  }
  func.func @transform_3(%arg0: i32) -> (i32, i32) {
    %c0_i32 = arith.constant 0 : i32
    %c0_i32_0 = arith.constant 0 : i32
    return %arg0, %c0_i32 : i32, i32
  }
}

</mosaic_0001>

<llo_original>
// kernel: tpu_custom_call.1
$region0: #{tpu_custom_call.1}
  #allocation0 [shape = 'u32[]', space=smem, size = 0x4, offset = 0x4, fixed_abs, tag = 'smem constant byte address 0x4 - core index']
  #allocation1 [shape = 'u32[144,128]{1,0:T(1,128)}', space=vmem, size = 0x12000, scoped, tag = 'internal scratch']
  %s0 = inlined_call_operand.vmem [shape: f32[3072,192], index: 0, kind: input, shape index: {}]
  %s1 = inlined_call_operand.vmem [shape: bf16[192,256], index: 1, kind: input, shape index: {}]
  %s2 = inlined_call_operand.vmem [shape: f32[1,256], index: 2, kind: input, shape index: {}]
  %s3 = inlined_call_operand.hbm [shape: f32[3072,256], index: 3, kind: output, shape index: {}]
  %s4 = sld [smem:[#allocation0]]
  $region45: #{tpu_custom_call.1} parent=0
    _
  %s6 = ssub.s32 1, %s4
  %s7 = scalar_select 0, %s6, %s4
  $region1: #{tpu_custom_call.1} parent=0
    #allocation2 [shape = 'u8[3145728]{0}', space=vmem, size = 0x300000, scoped, tag = 'output window, operand 0']
    #allocation3 [shape = 's32[2]{0}', space=sflag, size = 0x8, scoped, tag = 'scoped memory for tpu_custom_call.1']
    %8 = vsyncpa [#allocation3], 0
    %s9 = scalar_lea.sflag [#allocation3], 1
    %10 = vsyncpa %s9, 0
    loop: start=0, step=1, limit=4
    $region2: #{tpu_custom_call.1} parent=1 // loop_pre_header
      _
    $region3: #{tpu_custom_call.1} parent=1 // loop_header
      %s12 = sphi 0, %s16
      %p13 = scmp.ge.s32.totalorder %s12, 4
      %s22 = sphi 0, %s24
      %s25 = sphi 0, %s22
      %s26 = sphi 0, %s25
      %s42 = sphi 0, %s26
      %s46 = sphi 0, %s46
      %s48 = sphi 0, %s46
      %s49 = sphi 0, %s48
      %s63 = sphi 0, %s49
      %s67 = sphi 0, %s67
      %s69 = sphi 0, %s67
      %s70 = sphi 0, %s69
      %s84 = sphi 0, %s70
      %s90 = sphi 0, %s92
      %s93 = sphi 0, %s90
      %s94 = sphi 0, %s93
      %s110 = sphi 0, %s94
    $region4: #{tpu_custom_call.1} parent=1 // loop_header_branch
      %15 = sbr.rel (%p13) target = $region8
    $region5: #{tpu_custom_call.1} parent=1 // loop_body
      %s17 = ssub.s32 %s12, 1
      %s18 = ssub.s32 %s12, 2
      %s19 = sadd.s32 %s12, 1
      %s20 = ssub.s32 %s12, %s19
      %p21 = scmp.eq.s32.totalorder %s20, 0
      %s23 = sadd.s32 %s22, 1
      %s24 = scalar_select %p21, %s22, %s23
      %p27 = pneg %p21
      %p28 = scmp.eq.s32.totalorder %s12, 1
      %p29 = por %p27, %p28
      %p30 = scmp.ne.s32.totalorder %s22, %s25
      %p31 = scmp.eq.s32.totalorder %s12, 0
      %p32 = por %p30, %p31
      %p33 = scmp.ne.s32.totalorder %s22, %s25
      %p34 = scmp.eq.s32.totalorder %s17, 1
      %p35 = por %p33, %p34
      %p36 = scmp.ne.s32.totalorder %s25, %s26
      %p37 = scmp.eq.s32.totalorder %s17, 0
      %p38 = por %p36, %p37
      %p39 = scmp.ne.s32.totalorder %s25, %s26
      %p40 = scmp.eq.s32.totalorder %s18, 1
      %p41 = por %p39, %p40
      %p43 = scmp.ne.s32.totalorder %s26, %s42
      %p44 = scmp.eq.s32.totalorder %s18, 0
      %p45 = por %p43, %p44
      %s47 = sadd.s32 %s46, 1
      %p50 = scmp.eq.s32.totalorder %s12, 1
      %p51 = scmp.ne.s32.totalorder %s46, %s48
      %p52 = scmp.eq.s32.totalorder %s12, 0
      %p53 = por %p51, %p52
      %p54 = scmp.ne.s32.totalorder %s46, %s48
      %p55 = scmp.eq.s32.totalorder %s17, 1
      %p56 = por %p54, %p55
      %p57 = scmp.ne.s32.totalorder %s48, %s49
      %p58 = scmp.eq.s32.totalorder %s17, 0
      %p59 = por %p57, %p58
      %p60 = scmp.ne.s32.totalorder %s48, %s49
      %p61 = scmp.eq.s32.totalorder %s18, 1
      %p62 = por %p60, %p61
      %p64 = scmp.ne.s32.totalorder %s49, %s63
      %p65 = scmp.eq.s32.totalorder %s18, 0
      %p66 = por %p64, %p65
      %s68 = sadd.s32 %s67, 1
      %p71 = scmp.eq.s32.totalorder %s12, 1
      %p72 = scmp.ne.s32.totalorder %s67, %s69
      %p73 = scmp.eq.s32.totalorder %s12, 0
      %p74 = por %p72, %p73
      %p75 = scmp.ne.s32.totalorder %s67, %s69
      %p76 = scmp.eq.s32.totalorder %s17, 1
      %p77 = por %p75, %p76
      %p78 = scmp.ne.s32.totalorder %s69, %s70
      %p79 = scmp.eq.s32.totalorder %s17, 0
      %p80 = por %p78, %p79
      %p81 = scmp.ne.s32.totalorder %s69, %s70
      %p82 = scmp.eq.s32.totalorder %s18, 1
      %p83 = por %p81, %p82
      %p85 = scmp.ne.s32.totalorder %s70, %s84
      %p86 = scmp.eq.s32.totalorder %s18, 0
      %p87 = por %p85, %p86
      %s88 = ssub.s32 %s12, %s19
      %p89 = scmp.eq.s32.totalorder %s88, 0
      %s91 = sadd.s32 %s90, 1
      %s92 = scalar_select %p89, %s90, %s91
      %p95 = pneg %p89
      %p96 = scmp.eq.s32.totalorder %s12, 1
      %p97 = por %p95, %p96
      %p98 = scmp.ne.s32.totalorder %s90, %s93
      %p99 = scmp.eq.s32.totalorder %s12, 0
      %p100 = por %p98, %p99
      %p101 = scmp.ne.s32.totalorder %s90, %s93
      %p102 = scmp.eq.s32.totalorder %s17, 1
      %p103 = por %p101, %p102
      %p104 = scmp.ne.s32.totalorder %s93, %s94
      %p105 = scmp.eq.s32.totalorder %s17, 0
      %p106 = por %p104, %p105
      %p107 = scmp.ne.s32.totalorder %s93, %s94
      %p108 = scmp.eq.s32.totalorder %s18, 1
      %p109 = por %p107, %p108
      %p111 = scmp.ne.s32.totalorder %s94, %s110
      %p112 = scmp.eq.s32.totalorder %s18, 0
      %p113 = por %p111, %p112
      %p114 = scmp.le.s32.totalorder 1, %s12
      %p115 = scmp.lt.s32.totalorder %s12, 3
      %p116 = pnand %p114, %p115
      %p117 = pneg %p116
      // Predicated region
      $region9: #{tpu_custom_call.1} parent=5 // pred_check
        _
      $region10: #{tpu_custom_call.1} parent=5 // pred_check_branch
        %119 = sbr.rel (%p116) target = $region12
      $region11: #{tpu_custom_call.1} parent=5 // pred_region
        %s120 = ssub.s32 %s12, 1
        // Predicated region
        $region13: #{tpu_custom_call.1} parent=11 // pred_check
          %p121 = pneg %p59
        $region14: #{tpu_custom_call.1} parent=11 // pred_check_branch
          %123 = sbr.rel (%p121) target = $region16
        $region15: #{tpu_custom_call.1} parent=11 // pred_region
          _
        $region16: #{tpu_custom_call.1} parent=11 // pred_fallthru
          _
        // Predicated region
        $region17: #{tpu_custom_call.1} parent=11 // pred_check
          %p124 = pneg %p80
        $region18: #{tpu_custom_call.1} parent=11 // pred_check_branch
          %126 = sbr.rel (%p124) target = $region20
        $region19: #{tpu_custom_call.1} parent=11 // pred_region
          _
        $region20: #{tpu_custom_call.1} parent=11 // pred_fallthru
          _
      $region12: #{tpu_custom_call.1} parent=5 // pred_fallthru
        _
      %p127 = scmp.lt.s32.totalorder %s12, 2
      // Predicated region
      $region21: #{tpu_custom_call.1} parent=5 // pred_check
        %p128 = pneg %p127
      $region22: #{tpu_custom_call.1} parent=5 // pred_check_branch
        %130 = sbr.rel (%p128) target = $region24
      $region23: #{tpu_custom_call.1} parent=5 // pred_region
        // Predicated region
        $region25: #{tpu_custom_call.1} parent=23 // pred_check
          %p131 = pneg %p32
        $region26: #{tpu_custom_call.1} parent=23 // pred_check_branch
          %133 = sbr.rel (%p131) target = $region28
        $region27: #{tpu_custom_call.1} parent=23 // pred_region
          %s134 = smul.u32 192, %s12
          %p135 = scmp.lt.s32.totalorder %s134, 383
          %s136 = scalar_select %p135, %s134, 383
          %s137 = smul.addr %s136, 2
          %s138 = smul.addr %s137, 8
          %s139 = scalar_lea.vmem %s0, %s138
          %s140 = smul.u32 192, %s12
        $region28: #{tpu_custom_call.1} parent=23 // pred_fallthru
          _
      $region24: #{tpu_custom_call.1} parent=5 // pred_fallthru
        _
      %p141 = scmp.le.s32.totalorder 1, %s12
      %p142 = scmp.lt.s32.totalorder %s12, 3
      %p143 = pnand %p141, %p142
      %p144 = pneg %p143
      // Predicated region
      $region29: #{tpu_custom_call.1} parent=5 // pred_check
        _
      $region30: #{tpu_custom_call.1} parent=5 // pred_check_branch
        %146 = sbr.rel (%p143) target = $region32
      $region31: #{tpu_custom_call.1} parent=5 // pred_region
        %s147 = ssub.s32 %s12, 1
        %s148 = smul.u32 192, %s17
        %p149 = scmp.lt.s32.totalorder %s148, 383
        %s150 = scalar_select %p149, %s148, 383
        %s151 = smul.addr %s150, 2
        %s152 = smul.addr %s151, 8
        %s153 = scalar_lea.vmem %s0, %s152
        %p154 = pneg %p38
        %p155 = pneg %p35
        %p156 = pneg %p59
        %p157 = pneg %p56
        %p158 = pneg %p80
        %p159 = pneg %p77
        %p160 = pneg %p106
        %p161 = pneg %p103
        %s162 = sand.u32 %s93, 1
        %s163 = scalar_lea.sflag [#allocation3], %s162
        %s164 = sand.u32 %s93, 1
        %s165 = smul.addr %s164, 3072
        %s166 = scalar_lea.vmem [#allocation2], %s165
        %s167 = smul.u32 192, %s17
        %p168 = scmp.lt.s32.totalorder %s167, 383
        %s169 = scalar_select %p168, %s167, 383
        %s170 = smul.addr %s169, 2
        %s171 = smul.addr %s170, 8
        %s172 = scalar_lea.vmem %s0, %s171
        %s173 = smul.u32 192, %s17
        %s174 = smul.u32 192, %s17
        %v176 = vld [vmem:[%s1] sm:$0xff]
        %v177 = vld [vmem:[%s1 + $0x8] sm:$0xff]
        %v178 = vld [vmem:[%s1 + $0x10] sm:$0xff]
        %v179 = vld [vmem:[%s1 + $0x18] sm:$0xff]
        %v180 = vld [vmem:[%s1 + $0x20] sm:$0xff]
        %v181 = vld [vmem:[%s1 + $0x28] sm:$0xff]
        %v182 = vld [vmem:[%s1 + $0x30] sm:$0xff]
        %v183 = vld [vmem:[%s1 + $0x38] sm:$0xff]
        %v184 = vld [vmem:[%s1 + $0x40] sm:$0xff]
        %v185 = vld [vmem:[%s1 + $0x48] sm:$0xff]
        %v186 = vld [vmem:[%s1 + $0x50] sm:$0xff]
        %v187 = vld [vmem:[%s1 + $0x58] sm:$0xff]
        %v188 = vld [vmem:[%s1 + $0x60] sm:$0xff]
        %v189 = vld [vmem:[%s1 + $0x68] sm:$0xff]
        %v190 = vld [vmem:[%s1 + $0x70] sm:$0xff]
        %v191 = vld [vmem:[%s1 + $0x78] sm:$0xff]
        %v192 = vld [vmem:[%s1 + $0x80] sm:$0xff]
        %v193 = vld [vmem:[%s1 + $0x88] sm:$0xff]
        %v194 = vld [vmem:[%s1 + $0x90] sm:$0xff]
        %v195 = vld [vmem:[%s1 + $0x98] sm:$0xff]
        %v196 = vld [vmem:[%s1 + $0xa0] sm:$0xff]
        %v197 = vld [vmem:[%s1 + $0xa8] sm:$0xff]
        %v198 = vld [vmem:[%s1 + $0xb0] sm:$0xff]
        %v199 = vld [vmem:[%s1 + $0xb8] sm:$0xff]
        %v200 = vld [vmem:[%s2] sm:$0x3]
        %v201 = vld [vmem:[%s172] sm:$0xff]
        %v202 = vld [vmem:[%s172 + $0x8] sm:$0xff]
        %v203 = vld [vmem:[%s172 + $0x10] sm:$0xff]
        %v204 = vld [vmem:[%s172 + $0x18] sm:$0xff]
        %v205 = vld [vmem:[%s172 + $0x20] sm:$0xff]
        %v206 = vld [vmem:[%s172 + $0x28] sm:$0xff]
        %v207 = vld [vmem:[%s172 + $0x30] sm:$0xff]
        %v208 = vld [vmem:[%s172 + $0x38] sm:$0xff]
        %v209 = vld [vmem:[%s172 + $0x40] sm:$0xff]
        %v210 = vld [vmem:[%s172 + $0x48] sm:$0xff]
        %v211 = vld [vmem:[%s172 + $0x50] sm:$0xff]
        %v212 = vld [vmem:[%s172 + $0x58] sm:$0xff]
        %v213 = vld [vmem:[%s172 + $0x60] sm:$0xff]
        %v214 = vld [vmem:[%s172 + $0x68] sm:$0xff]
        %v215 = vld [vmem:[%s172 + $0x70] sm:$0xff]
        %v216 = vld [vmem:[%s172 + $0x78] sm:$0xff]
        %v217 = vld [vmem:[%s172 + $0x80] sm:$0xff]
        %v218 = vld [vmem:[%s172 + $0x88] sm:$0xff]
        %v219 = vld [vmem:[%s172 + $0x90] sm:$0xff]
        %v220 = vld [vmem:[%s172 + $0x98] sm:$0xff]
        %v221 = vld [vmem:[%s172 + $0xa0] sm:$0xff]
        %v222 = vld [vmem:[%s172 + $0xa8] sm:$0xff]
        %v223 = vld [vmem:[%s172 + $0xb0] sm:$0xff]
        %v224 = vld [vmem:[%s172 + $0xb8] sm:$0xff]
        %v225 = vld [vmem:[%s172 + $0xc0] sm:$0xff]
        %v226 = vld [vmem:[%s172 + $0xc8] sm:$0xff]
        %v227 = vld [vmem:[%s172 + $0xd0] sm:$0xff]
        %v228 = vld [vmem:[%s172 + $0xd8] sm:$0xff]
        %v229 = vld [vmem:[%s172 + $0xe0] sm:$0xff]
        %v230 = vld [vmem:[%s172 + $0xe8] sm:$0xff]
        %v231 = vld [vmem:[%s172 + $0xf0] sm:$0xff]
        %v232 = vld [vmem:[%s172 + $0xf8] sm:$0xff]
        %v233 = vld [vmem:[%s172 + $0x100] sm:$0xff]
        %v234 = vld [vmem:[%s172 + $0x108] sm:$0xff]
        %v235 = vld [vmem:[%s172 + $0x110] sm:$0xff]
        %v236 = vld [vmem:[%s172 + $0x118] sm:$0xff]
        %v237 = vld [vmem:[%s172 + $0x120] sm:$0xff]
        %v238 = vld [vmem:[%s172 + $0x128] sm:$0xff]
        %v239 = vld [vmem:[%s172 + $0x130] sm:$0xff]
        %v240 = vld [vmem:[%s172 + $0x138] sm:$0xff]
        %v241 = vld [vmem:[%s172 + $0x140] sm:$0xff]
        %v242 = vld [vmem:[%s172 + $0x148] sm:$0xff]
        %v243 = vld [vmem:[%s172 + $0x150] sm:$0xff]
        %v244 = vld [vmem:[%s172 + $0x158] sm:$0xff]
        %v245 = vld [vmem:[%s172 + $0x160] sm:$0xff]
        %v246 = vld [vmem:[%s172 + $0x168] sm:$0xff]
        %v247 = vld [vmem:[%s172 + $0x170] sm:$0xff]
        %v248 = vld [vmem:[%s172 + $0x178] sm:$0xff]
        %v249 = vld [vmem:[%s172 + $0x180] sm:$0xff]
        %v250 = vld [vmem:[%s172 + $0x188] sm:$0xff]
        %v251 = vld [vmem:[%s172 + $0x190] sm:$0xff]
        %v252 = vld [vmem:[%s172 + $0x198] sm:$0xff]
        %v253 = vld [vmem:[%s172 + $0x1a0] sm:$0xff]
        %v254 = vld [vmem:[%s172 + $0x1a8] sm:$0xff]
        %v255 = vld [vmem:[%s172 + $0x1b0] sm:$0xff]
        %v256 = vld [vmem:[%s172 + $0x1b8] sm:$0xff]
        %v257 = vld [vmem:[%s172 + $0x1c0] sm:$0xff]
        %v258 = vld [vmem:[%s172 + $0x1c8] sm:$0xff]
        %v259 = vld [vmem:[%s172 + $0x1d0] sm:$0xff]
        %v260 = vld [vmem:[%s172 + $0x1d8] sm:$0xff]
        %v261 = vld [vmem:[%s172 + $0x1e0] sm:$0xff]
        %v262 = vld [vmem:[%s172 + $0x1e8] sm:$0xff]
        %v263 = vld [vmem:[%s172 + $0x1f0] sm:$0xff]
        %v264 = vld [vmem:[%s172 + $0x1f8] sm:$0xff]
        %v265 = vld [vmem:[%s172 + $0x200] sm:$0xff]
        %v266 = vld [vmem:[%s172 + $0x208] sm:$0xff]
        %v267 = vld [vmem:[%s172 + $0x210] sm:$0xff]
        %v268 = vld [vmem:[%s172 + $0x218] sm:$0xff]
        %v269 = vld [vmem:[%s172 + $0x220] sm:$0xff]
        %v270 = vld [vmem:[%s172 + $0x228] sm:$0xff]
        %v271 = vld [vmem:[%s172 + $0x230] sm:$0xff]
        %v272 = vld [vmem:[%s172 + $0x238] sm:$0xff]
        %v273 = vld [vmem:[%s172 + $0x240] sm:$0xff]
        %v274 = vld [vmem:[%s172 + $0x248] sm:$0xff]
        %v275 = vld [vmem:[%s172 + $0x250] sm:$0xff]
        %v276 = vld [vmem:[%s172 + $0x258] sm:$0xff]
        %v277 = vld [vmem:[%s172 + $0x260] sm:$0xff]
        %v278 = vld [vmem:[%s172 + $0x268] sm:$0xff]
        %v279 = vld [vmem:[%s172 + $0x270] sm:$0xff]
        %v280 = vld [vmem:[%s172 + $0x278] sm:$0xff]
        %v281 = vld [vmem:[%s172 + $0x280] sm:$0xff]
        %v282 = vld [vmem:[%s172 + $0x288] sm:$0xff]
        %v283 = vld [vmem:[%s172 + $0x290] sm:$0xff]
        %v284 = vld [vmem:[%s172 + $0x298] sm:$0xff]
        %v285 = vld [vmem:[%s172 + $0x2a0] sm:$0xff]
        %v286 = vld [vmem:[%s172 + $0x2a8] sm:$0xff]
        %v287 = vld [vmem:[%s172 + $0x2b0] sm:$0xff]
        %v288 = vld [vmem:[%s172 + $0x2b8] sm:$0xff]
        %v289 = vld [vmem:[%s172 + $0x2c0] sm:$0xff]
        %v290 = vld [vmem:[%s172 + $0x2c8] sm:$0xff]
        %v291 = vld [vmem:[%s172 + $0x2d0] sm:$0xff]
        %v292 = vld [vmem:[%s172 + $0x2d8] sm:$0xff]
        %v293 = vld [vmem:[%s172 + $0x2e0] sm:$0xff]
        %v294 = vld [vmem:[%s172 + $0x2e8] sm:$0xff]
        %v295 = vld [vmem:[%s172 + $0x2f0] sm:$0xff]
        %v296 = vld [vmem:[%s172 + $0x2f8] sm:$0xff]
        %v297 = vld [vmem:[%s172 + $0x300] sm:$0xff]
        %v298 = vld [vmem:[%s172 + $0x308] sm:$0xff]
        %v299 = vld [vmem:[%s172 + $0x310] sm:$0xff]
        %v300 = vld [vmem:[%s172 + $0x318] sm:$0xff]
        %v301 = vld [vmem:[%s172 + $0x320] sm:$0xff]
        %v302 = vld [vmem:[%s172 + $0x328] sm:$0xff]
        %v303 = vld [vmem:[%s172 + $0x330] sm:$0xff]
        %v304 = vld [vmem:[%s172 + $0x338] sm:$0xff]
        %v305 = vld [vmem:[%s172 + $0x340] sm:$0xff]
        %v306 = vld [vmem:[%s172 + $0x348] sm:$0xff]
        %v307 = vld [vmem:[%s172 + $0x350] sm:$0xff]
        %v308 = vld [vmem:[%s172 + $0x358] sm:$0xff]
        %v309 = vld [vmem:[%s172 + $0x360] sm:$0xff]
        %v310 = vld [vmem:[%s172 + $0x368] sm:$0xff]
        %v311 = vld [vmem:[%s172 + $0x370] sm:$0xff]
        %v312 = vld [vmem:[%s172 + $0x378] sm:$0xff]
        %v313 = vld [vmem:[%s172 + $0x380] sm:$0xff]
        %v314 = vld [vmem:[%s172 + $0x388] sm:$0xff]
        %v315 = vld [vmem:[%s172 + $0x390] sm:$0xff]
        %v316 = vld [vmem:[%s172 + $0x398] sm:$0xff]
        %v317 = vld [vmem:[%s172 + $0x3a0] sm:$0xff]
        %v318 = vld [vmem:[%s172 + $0x3a8] sm:$0xff]
        %v319 = vld [vmem:[%s172 + $0x3b0] sm:$0xff]
        %v320 = vld [vmem:[%s172 + $0x3b8] sm:$0xff]
        %v321 = vld [vmem:[%s172 + $0x3c0] sm:$0xff]
        %v322 = vld [vmem:[%s172 + $0x3c8] sm:$0xff]
        %v323 = vld [vmem:[%s172 + $0x3d0] sm:$0xff]
        %v324 = vld [vmem:[%s172 + $0x3d8] sm:$0xff]
        %v325 = vld [vmem:[%s172 + $0x3e0] sm:$0xff]
        %v326 = vld [vmem:[%s172 + $0x3e8] sm:$0xff]
        %v327 = vld [vmem:[%s172 + $0x3f0] sm:$0xff]
        %v328 = vld [vmem:[%s172 + $0x3f8] sm:$0xff]
        %v329 = vld [vmem:[%s172 + $0x400] sm:$0xff]
        %v330 = vld [vmem:[%s172 + $0x408] sm:$0xff]
        %v331 = vld [vmem:[%s172 + $0x410] sm:$0xff]
        %v332 = vld [vmem:[%s172 + $0x418] sm:$0xff]
        %v333 = vld [vmem:[%s172 + $0x420] sm:$0xff]
        %v334 = vld [vmem:[%s172 + $0x428] sm:$0xff]
        %v335 = vld [vmem:[%s172 + $0x430] sm:$0xff]
        %v336 = vld [vmem:[%s172 + $0x438] sm:$0xff]
        %v337 = vld [vmem:[%s172 + $0x440] sm:$0xff]
        %v338 = vld [vmem:[%s172 + $0x448] sm:$0xff]
        %v339 = vld [vmem:[%s172 + $0x450] sm:$0xff]
        %v340 = vld [vmem:[%s172 + $0x458] sm:$0xff]
        %v341 = vld [vmem:[%s172 + $0x460] sm:$0xff]
        %v342 = vld [vmem:[%s172 + $0x468] sm:$0xff]
        %v343 = vld [vmem:[%s172 + $0x470] sm:$0xff]
        %v344 = vld [vmem:[%s172 + $0x478] sm:$0xff]
        %v345 = vld [vmem:[%s172 + $0x480] sm:$0xff]
        %v346 = vld [vmem:[%s172 + $0x488] sm:$0xff]
        %v347 = vld [vmem:[%s172 + $0x490] sm:$0xff]
        %v348 = vld [vmem:[%s172 + $0x498] sm:$0xff]
        %v349 = vld [vmem:[%s172 + $0x4a0] sm:$0xff]
        %v350 = vld [vmem:[%s172 + $0x4a8] sm:$0xff]
        %v351 = vld [vmem:[%s172 + $0x4b0] sm:$0xff]
        %v352 = vld [vmem:[%s172 + $0x4b8] sm:$0xff]
        %v353 = vld [vmem:[%s172 + $0x4c0] sm:$0xff]
        %v354 = vld [vmem:[%s172 + $0x4c8] sm:$0xff]
        %v355 = vld [vmem:[%s172 + $0x4d0] sm:$0xff]
        %v356 = vld [vmem:[%s172 + $0x4d8] sm:$0xff]
        %v357 = vld [vmem:[%s172 + $0x4e0] sm:$0xff]
        %v358 = vld [vmem:[%s172 + $0x4e8] sm:$0xff]
        %v359 = vld [vmem:[%s172 + $0x4f0] sm:$0xff]
        %v360 = vld [vmem:[%s172 + $0x4f8] sm:$0xff]
        %v361 = vld [vmem:[%s172 + $0x500] sm:$0xff]
        %v362 = vld [vmem:[%s172 + $0x508] sm:$0xff]
        %v363 = vld [vmem:[%s172 + $0x510] sm:$0xff]
        %v364 = vld [vmem:[%s172 + $0x518] sm:$0xff]
        %v365 = vld [vmem:[%s172 + $0x520] sm:$0xff]
        %v366 = vld [vmem:[%s172 + $0x528] sm:$0xff]
        %v367 = vld [vmem:[%s172 + $0x530] sm:$0xff]
        %v368 = vld [vmem:[%s172 + $0x538] sm:$0xff]
        %v369 = vld [vmem:[%s172 + $0x540] sm:$0xff]
        %v370 = vld [vmem:[%s172 + $0x548] sm:$0xff]
        %v371 = vld [vmem:[%s172 + $0x550] sm:$0xff]
        %v372 = vld [vmem:[%s172 + $0x558] sm:$0xff]
        %v373 = vld [vmem:[%s172 + $0x560] sm:$0xff]
        %v374 = vld [vmem:[%s172 + $0x568] sm:$0xff]
        %v375 = vld [vmem:[%s172 + $0x570] sm:$0xff]
        %v376 = vld [vmem:[%s172 + $0x578] sm:$0xff]
        %v377 = vld [vmem:[%s172 + $0x580] sm:$0xff]
        %v378 = vld [vmem:[%s172 + $0x588] sm:$0xff]
        %v379 = vld [vmem:[%s172 + $0x590] sm:$0xff]
        %v380 = vld [vmem:[%s172 + $0x598] sm:$0xff]
        %v381 = vld [vmem:[%s172 + $0x5a0] sm:$0xff]
        %v382 = vld [vmem:[%s172 + $0x5a8] sm:$0xff]
        %v383 = vld [vmem:[%s172 + $0x5b0] sm:$0xff]
        %v384 = vld [vmem:[%s172 + $0x5b8] sm:$0xff]
        %v385 = vld [vmem:[%s172 + $0x5c0] sm:$0xff]
        %v386 = vld [vmem:[%s172 + $0x5c8] sm:$0xff]
        %v387 = vld [vmem:[%s172 + $0x5d0] sm:$0xff]
        %v388 = vld [vmem:[%s172 + $0x5d8] sm:$0xff]
        %v389 = vld [vmem:[%s172 + $0x5e0] sm:$0xff]
        %v390 = vld [vmem:[%s172 + $0x5e8] sm:$0xff]
        %v391 = vld [vmem:[%s172 + $0x5f0] sm:$0xff]
        %v392 = vld [vmem:[%s172 + $0x5f8] sm:$0xff]
        %v393 = vld [vmem:[%s172 + $0x600] sm:$0xff]
        %v394 = vld [vmem:[%s172 + $0x608] sm:$0xff]
        %v395 = vld [vmem:[%s172 + $0x610] sm:$0xff]
        %v396 = vld [vmem:[%s172 + $0x618] sm:$0xff]
        %v397 = vld [vmem:[%s172 + $0x620] sm:$0xff]
        %v398 = vld [vmem:[%s172 + $0x628] sm:$0xff]
        %v399 = vld [vmem:[%s172 + $0x630] sm:$0xff]
        %v400 = vld [vmem:[%s172 + $0x638] sm:$0xff]
        %v401 = vld [vmem:[%s172 + $0x640] sm:$0xff]
        %v402 = vld [vmem:[%s172 + $0x648] sm:$0xff]
        %v403 = vld [vmem:[%s172 + $0x650] sm:$0xff]
        %v404 = vld [vmem:[%s172 + $0x658] sm:$0xff]
        %v405 = vld [vmem:[%s172 + $0x660] sm:$0xff]
        %v406 = vld [vmem:[%s172 + $0x668] sm:$0xff]
        %v407 = vld [vmem:[%s172 + $0x670] sm:$0xff]
        %v408 = vld [vmem:[%s172 + $0x678] sm:$0xff]
        %v409 = vld [vmem:[%s172 + $0x680] sm:$0xff]
        %v410 = vld [vmem:[%s172 + $0x688] sm:$0xff]
        %v411 = vld [vmem:[%s172 + $0x690] sm:$0xff]
        %v412 = vld [vmem:[%s172 + $0x698] sm:$0xff]
        %v413 = vld [vmem:[%s172 + $0x6a0] sm:$0xff]
        %v414 = vld [vmem:[%s172 + $0x6a8] sm:$0xff]
        %v415 = vld [vmem:[%s172 + $0x6b0] sm:$0xff]
        %v416 = vld [vmem:[%s172 + $0x6b8] sm:$0xff]
        %v417 = vld [vmem:[%s172 + $0x6c0] sm:$0xff]
        %v418 = vld [vmem:[%s172 + $0x6c8] sm:$0xff]
        %v419 = vld [vmem:[%s172 + $0x6d0] sm:$0xff]
        %v420 = vld [vmem:[%s172 + $0x6d8] sm:$0xff]
        %v421 = vld [vmem:[%s172 + $0x6e0] sm:$0xff]
        %v422 = vld [vmem:[%s172 + $0x6e8] sm:$0xff]
        %v423 = vld [vmem:[%s172 + $0x6f0] sm:$0xff]
        %v424 = vld [vmem:[%s172 + $0x6f8] sm:$0xff]
        %v425 = vld [vmem:[%s172 + $0x700] sm:$0xff]
        %v426 = vld [vmem:[%s172 + $0x708] sm:$0xff]
        %v427 = vld [vmem:[%s172 + $0x710] sm:$0xff]
        %v428 = vld [vmem:[%s172 + $0x718] sm:$0xff]
        %v429 = vld [vmem:[%s172 + $0x720] sm:$0xff]
        %v430 = vld [vmem:[%s172 + $0x728] sm:$0xff]
        %v431 = vld [vmem:[%s172 + $0x730] sm:$0xff]
        %v432 = vld [vmem:[%s172 + $0x738] sm:$0xff]
        %v433 = vld [vmem:[%s172 + $0x740] sm:$0xff]
        %v434 = vld [vmem:[%s172 + $0x748] sm:$0xff]
        %v435 = vld [vmem:[%s172 + $0x750] sm:$0xff]
        %v436 = vld [vmem:[%s172 + $0x758] sm:$0xff]
        %v437 = vld [vmem:[%s172 + $0x760] sm:$0xff]
        %v438 = vld [vmem:[%s172 + $0x768] sm:$0xff]
        %v439 = vld [vmem:[%s172 + $0x770] sm:$0xff]
        %v440 = vld [vmem:[%s172 + $0x778] sm:$0xff]
        %v441 = vld [vmem:[%s172 + $0x780] sm:$0xff]
        %v442 = vld [vmem:[%s172 + $0x788] sm:$0xff]
        %v443 = vld [vmem:[%s172 + $0x790] sm:$0xff]
        %v444 = vld [vmem:[%s172 + $0x798] sm:$0xff]
        %v445 = vld [vmem:[%s172 + $0x7a0] sm:$0xff]
        %v446 = vld [vmem:[%s172 + $0x7a8] sm:$0xff]
        %v447 = vld [vmem:[%s172 + $0x7b0] sm:$0xff]
        %v448 = vld [vmem:[%s172 + $0x7b8] sm:$0xff]
        %v449 = vld [vmem:[%s172 + $0x7c0] sm:$0xff]
        %v450 = vld [vmem:[%s172 + $0x7c8] sm:$0xff]
        %v451 = vld [vmem:[%s172 + $0x7d0] sm:$0xff]
        %v452 = vld [vmem:[%s172 + $0x7d8] sm:$0xff]
        %v453 = vld [vmem:[%s172 + $0x7e0] sm:$0xff]
        %v454 = vld [vmem:[%s172 + $0x7e8] sm:$0xff]
        %v455 = vld [vmem:[%s172 + $0x7f0] sm:$0xff]
        %v456 = vld [vmem:[%s172 + $0x7f8] sm:$0xff]
        %v457 = vld [vmem:[%s172 + $0x800] sm:$0xff]
        %v458 = vld [vmem:[%s172 + $0x808] sm:$0xff]
        %v459 = vld [vmem:[%s172 + $0x810] sm:$0xff]
        %v460 = vld [vmem:[%s172 + $0x818] sm:$0xff]
        %v461 = vld [vmem:[%s172 + $0x820] sm:$0xff]
        %v462 = vld [vmem:[%s172 + $0x828] sm:$0xff]
        %v463 = vld [vmem:[%s172 + $0x830] sm:$0xff]
        %v464 = vld [vmem:[%s172 + $0x838] sm:$0xff]
        %v465 = vld [vmem:[%s172 + $0x840] sm:$0xff]
        %v466 = vld [vmem:[%s172 + $0x848] sm:$0xff]
        %v467 = vld [vmem:[%s172 + $0x850] sm:$0xff]
        %v468 = vld [vmem:[%s172 + $0x858] sm:$0xff]
        %v469 = vld [vmem:[%s172 + $0x860] sm:$0xff]
        %v470 = vld [vmem:[%s172 + $0x868] sm:$0xff]
        %v471 = vld [vmem:[%s172 + $0x870] sm:$0xff]
        %v472 = vld [vmem:[%s172 + $0x878] sm:$0xff]
        %v473 = vld [vmem:[%s172 + $0x880] sm:$0xff]
        %v474 = vld [vmem:[%s172 + $0x888] sm:$0xff]
        %v475 = vld [vmem:[%s172 + $0x890] sm:$0xff]
        %v476 = vld [vmem:[%s172 + $0x898] sm:$0xff]
        %v477 = vld [vmem:[%s172 + $0x8a0] sm:$0xff]
        %v478 = vld [vmem:[%s172 + $0x8a8] sm:$0xff]
        %v479 = vld [vmem:[%s172 + $0x8b0] sm:$0xff]
        %v480 = vld [vmem:[%s172 + $0x8b8] sm:$0xff]
        %v481 = vld [vmem:[%s172 + $0x8c0] sm:$0xff]
        %v482 = vld [vmem:[%s172 + $0x8c8] sm:$0xff]
        %v483 = vld [vmem:[%s172 + $0x8d0] sm:$0xff]
        %v484 = vld [vmem:[%s172 + $0x8d8] sm:$0xff]
        %v485 = vld [vmem:[%s172 + $0x8e0] sm:$0xff]
        %v486 = vld [vmem:[%s172 + $0x8e8] sm:$0xff]
        %v487 = vld [vmem:[%s172 + $0x8f0] sm:$0xff]
        %v488 = vld [vmem:[%s172 + $0x8f8] sm:$0xff]
        %v489 = vld [vmem:[%s172 + $0x900] sm:$0xff]
        %v490 = vld [vmem:[%s172 + $0x908] sm:$0xff]
        %v491 = vld [vmem:[%s172 + $0x910] sm:$0xff]
        %v492 = vld [vmem:[%s172 + $0x918] sm:$0xff]
        %v493 = vld [vmem:[%s172 + $0x920] sm:$0xff]
        %v494 = vld [vmem:[%s172 + $0x928] sm:$0xff]
        %v495 = vld [vmem:[%s172 + $0x930] sm:$0xff]
        %v496 = vld [vmem:[%s172 + $0x938] sm:$0xff]
        %v497 = vld [vmem:[%s172 + $0x940] sm:$0xff]
        %v498 = vld [vmem:[%s172 + $0x948] sm:$0xff]
        %v499 = vld [vmem:[%s172 + $0x950] sm:$0xff]
        %v500 = vld [vmem:[%s172 + $0x958] sm:$0xff]
        %v501 = vld [vmem:[%s172 + $0x960] sm:$0xff]
        %v502 = vld [vmem:[%s172 + $0x968] sm:$0xff]
        %v503 = vld [vmem:[%s172 + $0x970] sm:$0xff]
        %v504 = vld [vmem:[%s172 + $0x978] sm:$0xff]
        %v505 = vld [vmem:[%s172 + $0x980] sm:$0xff]
        %v506 = vld [vmem:[%s172 + $0x988] sm:$0xff]
        %v507 = vld [vmem:[%s172 + $0x990] sm:$0xff]
        %v508 = vld [vmem:[%s172 + $0x998] sm:$0xff]
        %v509 = vld [vmem:[%s172 + $0x9a0] sm:$0xff]
        %v510 = vld [vmem:[%s172 + $0x9a8] sm:$0xff]
        %v511 = vld [vmem:[%s172 + $0x9b0] sm:$0xff]
        %v512 = vld [vmem:[%s172 + $0x9b8] sm:$0xff]
        %v513 = vld [vmem:[%s172 + $0x9c0] sm:$0xff]
        %v514 = vld [vmem:[%s172 + $0x9c8] sm:$0xff]
        %v515 = vld [vmem:[%s172 + $0x9d0] sm:$0xff]
        %v516 = vld [vmem:[%s172 + $0x9d8] sm:$0xff]
        %v517 = vld [vmem:[%s172 + $0x9e0] sm:$0xff]
        %v518 = vld [vmem:[%s172 + $0x9e8] sm:$0xff]
        %v519 = vld [vmem:[%s172 + $0x9f0] sm:$0xff]
        %v520 = vld [vmem:[%s172 + $0x9f8] sm:$0xff]
        %v521 = vld [vmem:[%s172 + $0xa00] sm:$0xff]
        %v522 = vld [vmem:[%s172 + $0xa08] sm:$0xff]
        %v523 = vld [vmem:[%s172 + $0xa10] sm:$0xff]
        %v524 = vld [vmem:[%s172 + $0xa18] sm:$0xff]
        %v525 = vld [vmem:[%s172 + $0xa20] sm:$0xff]
        %v526 = vld [vmem:[%s172 + $0xa28] sm:$0xff]
        %v527 = vld [vmem:[%s172 + $0xa30] sm:$0xff]
        %v528 = vld [vmem:[%s172 + $0xa38] sm:$0xff]
        %v529 = vld [vmem:[%s172 + $0xa40] sm:$0xff]
        %v530 = vld [vmem:[%s172 + $0xa48] sm:$0xff]
        %v531 = vld [vmem:[%s172 + $0xa50] sm:$0xff]
        %v532 = vld [vmem:[%s172 + $0xa58] sm:$0xff]
        %v533 = vld [vmem:[%s172 + $0xa60] sm:$0xff]
        %v534 = vld [vmem:[%s172 + $0xa68] sm:$0xff]
        %v535 = vld [vmem:[%s172 + $0xa70] sm:$0xff]
        %v536 = vld [vmem:[%s172 + $0xa78] sm:$0xff]
        %v537 = vld [vmem:[%s172 + $0xa80] sm:$0xff]
        %v538 = vld [vmem:[%s172 + $0xa88] sm:$0xff]
        %v539 = vld [vmem:[%s172 + $0xa90] sm:$0xff]
        %v540 = vld [vmem:[%s172 + $0xa98] sm:$0xff]
        %v541 = vld [vmem:[%s172 + $0xaa0] sm:$0xff]
        %v542 = vld [vmem:[%s172 + $0xaa8] sm:$0xff]
        %v543 = vld [vmem:[%s172 + $0xab0] sm:$0xff]
        %v544 = vld [vmem:[%s172 + $0xab8] sm:$0xff]
        %v545 = vld [vmem:[%s172 + $0xac0] sm:$0xff]
        %v546 = vld [vmem:[%s172 + $0xac8] sm:$0xff]
        %v547 = vld [vmem:[%s172 + $0xad0] sm:$0xff]
        %v548 = vld [vmem:[%s172 + $0xad8] sm:$0xff]
        %v549 = vld [vmem:[%s172 + $0xae0] sm:$0xff]
        %v550 = vld [vmem:[%s172 + $0xae8] sm:$0xff]
        %v551 = vld [vmem:[%s172 + $0xaf0] sm:$0xff]
        %v552 = vld [vmem:[%s172 + $0xaf8] sm:$0xff]
        %v553 = vld [vmem:[%s172 + $0xb00] sm:$0xff]
        %v554 = vld [vmem:[%s172 + $0xb08] sm:$0xff]
        %v555 = vld [vmem:[%s172 + $0xb10] sm:$0xff]
        %v556 = vld [vmem:[%s172 + $0xb18] sm:$0xff]
        %v557 = vld [vmem:[%s172 + $0xb20] sm:$0xff]
        %v558 = vld [vmem:[%s172 + $0xb28] sm:$0xff]
        %v559 = vld [vmem:[%s172 + $0xb30] sm:$0xff]
        %v560 = vld [vmem:[%s172 + $0xb38] sm:$0xff]
        %v561 = vld [vmem:[%s172 + $0xb40] sm:$0xff]
        %v562 = vld [vmem:[%s172 + $0xb48] sm:$0xff]
        %v563 = vld [vmem:[%s172 + $0xb50] sm:$0xff]
        %v564 = vld [vmem:[%s172 + $0xb58] sm:$0xff]
        %v565 = vld [vmem:[%s172 + $0xb60] sm:$0xff]
        %v566 = vld [vmem:[%s172 + $0xb68] sm:$0xff]
        %v567 = vld [vmem:[%s172 + $0xb70] sm:$0xff]
        %v568 = vld [vmem:[%s172 + $0xb78] sm:$0xff]
        %v569 = vld [vmem:[%s172 + $0xb80] sm:$0xff]
        %v570 = vld [vmem:[%s172 + $0xb88] sm:$0xff]
        %v571 = vld [vmem:[%s172 + $0xb90] sm:$0xff]
        %v572 = vld [vmem:[%s172 + $0xb98] sm:$0xff]
        %v573 = vld [vmem:[%s172 + $0xba0] sm:$0xff]
        %v574 = vld [vmem:[%s172 + $0xba8] sm:$0xff]
        %v575 = vld [vmem:[%s172 + $0xbb0] sm:$0xff]
        %v576 = vld [vmem:[%s172 + $0xbb8] sm:$0xff]
        %v577 = vld [vmem:[%s172 + $0xbc0] sm:$0xff]
        %v578 = vld [vmem:[%s172 + $0xbc8] sm:$0xff]
        %v579 = vld [vmem:[%s172 + $0xbd0] sm:$0xff]
        %v580 = vld [vmem:[%s172 + $0xbd8] sm:$0xff]
        %v581 = vld [vmem:[%s172 + $0xbe0] sm:$0xff]
        %v582 = vld [vmem:[%s172 + $0xbe8] sm:$0xff]
        %v583 = vld [vmem:[%s172 + $0xbf0] sm:$0xff]
        %v584 = vld [vmem:[%s172 + $0xbf8] sm:$0xff]
        %v585 = vpack.c.bf16 %v203, %v201
        %v586 = vpack.c.bf16 %v204, %v202
        %v587 = vpack.c.bf16 %v207, %v205
        %v588 = vpack.c.bf16 %v208, %v206
        %v589 = vpack.c.bf16 %v211, %v209
        %v590 = vpack.c.bf16 %v212, %v210
        %v591 = vpack.c.bf16 %v215, %v213
        %v592 = vpack.c.bf16 %v216, %v214
        %v593 = vpack.c.bf16 %v219, %v217
        %v594 = vpack.c.bf16 %v220, %v218
        %v595 = vpack.c.bf16 %v223, %v221
        %v596 = vpack.c.bf16 %v224, %v222
        %v597 = vpack.c.bf16 %v227, %v225
        %v598 = vpack.c.bf16 %v228, %v226
        %v599 = vpack.c.bf16 %v231, %v229
        %v600 = vpack.c.bf16 %v232, %v230
        %v601 = vpack.c.bf16 %v235, %v233
        %v602 = vpack.c.bf16 %v236, %v234
        %v603 = vpack.c.bf16 %v239, %v237
        %v604 = vpack.c.bf16 %v240, %v238
        %v605 = vpack.c.bf16 %v243, %v241
        %v606 = vpack.c.bf16 %v244, %v242
        %v607 = vpack.c.bf16 %v247, %v245
        %v608 = vpack.c.bf16 %v248, %v246
        %v609 = vpack.c.bf16 %v251, %v249
        %v610 = vpack.c.bf16 %v252, %v250
        %v611 = vpack.c.bf16 %v255, %v253
        %v612 = vpack.c.bf16 %v256, %v254
        %v613 = vpack.c.bf16 %v259, %v257
        %v614 = vpack.c.bf16 %v260, %v258
        %v615 = vpack.c.bf16 %v263, %v261
        %v616 = vpack.c.bf16 %v264, %v262
        %v617 = vpack.c.bf16 %v267, %v265
        %v618 = vpack.c.bf16 %v268, %v266
        %v619 = vpack.c.bf16 %v271, %v269
        %v620 = vpack.c.bf16 %v272, %v270
        %v621 = vpack.c.bf16 %v275, %v273
        %v622 = vpack.c.bf16 %v276, %v274
        %v623 = vpack.c.bf16 %v279, %v277
        %v624 = vpack.c.bf16 %v280, %v278
        %v625 = vpack.c.bf16 %v283, %v281
        %v626 = vpack.c.bf16 %v284, %v282
        %v627 = vpack.c.bf16 %v287, %v285
        %v628 = vpack.c.bf16 %v288, %v286
        %v629 = vpack.c.bf16 %v291, %v289
        %v630 = vpack.c.bf16 %v292, %v290
        %v631 = vpack.c.bf16 %v295, %v293
        %v632 = vpack.c.bf16 %v296, %v294
        %v633 = vpack.c.bf16 %v299, %v297
        %v634 = vpack.c.bf16 %v300, %v298
        %v635 = vpack.c.bf16 %v303, %v301
        %v636 = vpack.c.bf16 %v304, %v302
        %v637 = vpack.c.bf16 %v307, %v305
        %v638 = vpack.c.bf16 %v308, %v306
        %v639 = vpack.c.bf16 %v311, %v309
        %v640 = vpack.c.bf16 %v312, %v310
        %v641 = vpack.c.bf16 %v315, %v313
        %v642 = vpack.c.bf16 %v316, %v314
        %v643 = vpack.c.bf16 %v319, %v317
        %v644 = vpack.c.bf16 %v320, %v318
        %v645 = vpack.c.bf16 %v323, %v321
        %v646 = vpack.c.bf16 %v324, %v322
        %v647 = vpack.c.bf16 %v327, %v325
        %v648 = vpack.c.bf16 %v328, %v326
        %v649 = vpack.c.bf16 %v331, %v329
        %v650 = vpack.c.bf16 %v332, %v330
        %v651 = vpack.c.bf16 %v335, %v333
        %v652 = vpack.c.bf16 %v336, %v334
        %v653 = vpack.c.bf16 %v339, %v337
        %v654 = vpack.c.bf16 %v340, %v338
        %v655 = vpack.c.bf16 %v343, %v341
        %v656 = vpack.c.bf16 %v344, %v342
        %v657 = vpack.c.bf16 %v347, %v345
        %v658 = vpack.c.bf16 %v348, %v346
        %v659 = vpack.c.bf16 %v351, %v349
        %v660 = vpack.c.bf16 %v352, %v350
        %v661 = vpack.c.bf16 %v355, %v353
        %v662 = vpack.c.bf16 %v356, %v354
        %v663 = vpack.c.bf16 %v359, %v357
        %v664 = vpack.c.bf16 %v360, %v358
        %v665 = vpack.c.bf16 %v363, %v361
        %v666 = vpack.c.bf16 %v364, %v362
        %v667 = vpack.c.bf16 %v367, %v365
        %v668 = vpack.c.bf16 %v368, %v366
        %v669 = vpack.c.bf16 %v371, %v369
        %v670 = vpack.c.bf16 %v372, %v370
        %v671 = vpack.c.bf16 %v375, %v373
        %v672 = vpack.c.bf16 %v376, %v374
        %v673 = vpack.c.bf16 %v379, %v377
        %v674 = vpack.c.bf16 %v380, %v378
        %v675 = vpack.c.bf16 %v383, %v381
        %v676 = vpack.c.bf16 %v384, %v382
        %v677 = vpack.c.bf16 %v387, %v385
        %v678 = vpack.c.bf16 %v388, %v386
        %v679 = vpack.c.bf16 %v391, %v389
        %v680 = vpack.c.bf16 %v392, %v390
        %v681 = vpack.c.bf16 %v395, %v393
        %v682 = vpack.c.bf16 %v396, %v394
        %v683 = vpack.c.bf16 %v399, %v397
        %v684 = vpack.c.bf16 %v400, %v398
        %v685 = vpack.c.bf16 %v403, %v401
        %v686 = vpack.c.bf16 %v404, %v402
        %v687 = vpack.c.bf16 %v407, %v405
        %v688 = vpack.c.bf16 %v408, %v406
        %v689 = vpack.c.bf16 %v411, %v409
        %v690 = vpack.c.bf16 %v412, %v410
        %v691 = vpack.c.bf16 %v415, %v413
        %v692 = vpack.c.bf16 %v416, %v414
        %v693 = vpack.c.bf16 %v419, %v417
        %v694 = vpack.c.bf16 %v420, %v418
        %v695 = vpack.c.bf16 %v423, %v421
        %v696 = vpack.c.bf16 %v424, %v422
        %v697 = vpack.c.bf16 %v427, %v425
        %v698 = vpack.c.bf16 %v428, %v426
        %v699 = vpack.c.bf16 %v431, %v429
        %v700 = vpack.c.bf16 %v432, %v430
        %v701 = vpack.c.bf16 %v435, %v433
        %v702 = vpack.c.bf16 %v436, %v434
        %v703 = vpack.c.bf16 %v439, %v437
        %v704 = vpack.c.bf16 %v440, %v438
        %v705 = vpack.c.bf16 %v443, %v441
        %v706 = vpack.c.bf16 %v444, %v442
        %v707 = vpack.c.bf16 %v447, %v445
        %v708 = vpack.c.bf16 %v448, %v446
        %v709 = vpack.c.bf16 %v451, %v449
        %v710 = vpack.c.bf16 %v452, %v450
        %v711 = vpack.c.bf16 %v455, %v453
        %v712 = vpack.c.bf16 %v456, %v454
        %v713 = vpack.c.bf16 %v459, %v457
        %v714 = vpack.c.bf16 %v460, %v458
        %v715 = vpack.c.bf16 %v463, %v461
        %v716 = vpack.c.bf16 %v464, %v462
        %v717 = vpack.c.bf16 %v467, %v465
        %v718 = vpack.c.bf16 %v468, %v466
        %v719 = vpack.c.bf16 %v471, %v469
        %v720 = vpack.c.bf16 %v472, %v470
        %v721 = vpack.c.bf16 %v475, %v473
        %v722 = vpack.c.bf16 %v476, %v474
        %v723 = vpack.c.bf16 %v479, %v477
        %v724 = vpack.c.bf16 %v480, %v478
        %v725 = vpack.c.bf16 %v483, %v481
        %v726 = vpack.c.bf16 %v484, %v482
        %v727 = vpack.c.bf16 %v487, %v485
        %v728 = vpack.c.bf16 %v488, %v486
        %v729 = vpack.c.bf16 %v491, %v489
        %v730 = vpack.c.bf16 %v492, %v490
        %v731 = vpack.c.bf16 %v495, %v493
        %v732 = vpack.c.bf16 %v496, %v494
        %v733 = vpack.c.bf16 %v499, %v497
        %v734 = vpack.c.bf16 %v500, %v498
        %v735 = vpack.c.bf16 %v503, %v501
        %v736 = vpack.c.bf16 %v504, %v502
        %v737 = vpack.c.bf16 %v507, %v505
        %v738 = vpack.c.bf16 %v508, %v506
        %v739 = vpack.c.bf16 %v511, %v509
        %v740 = vpack.c.bf16 %v512, %v510
        %v741 = vpack.c.bf16 %v515, %v513
        %v742 = vpack.c.bf16 %v516, %v514
        %v743 = vpack.c.bf16 %v519, %v517
        %v744 = vpack.c.bf16 %v520, %v518
        %v745 = vpack.c.bf16 %v523, %v521
        %v746 = vpack.c.bf16 %v524, %v522
        %v747 = vpack.c.bf16 %v527, %v525
        %v748 = vpack.c.bf16 %v528, %v526
        %v749 = vpack.c.bf16 %v531, %v529
        %v750 = vpack.c.bf16 %v532, %v530
        %v751 = vpack.c.bf16 %v535, %v533
        %v752 = vpack.c.bf16 %v536, %v534
        %v753 = vpack.c.bf16 %v539, %v537
        %v754 = vpack.c.bf16 %v540, %v538
        %v755 = vpack.c.bf16 %v543, %v541
        %v756 = vpack.c.bf16 %v544, %v542
        %v757 = vpack.c.bf16 %v547, %v545
        %v758 = vpack.c.bf16 %v548, %v546
        %v759 = vpack.c.bf16 %v551, %v549
        %v760 = vpack.c.bf16 %v552, %v550
        %v761 = vpack.c.bf16 %v555, %v553
        %v762 = vpack.c.bf16 %v556, %v554
        %v763 = vpack.c.bf16 %v559, %v557
        %v764 = vpack.c.bf16 %v560, %v558
        %v765 = vpack.c.bf16 %v563, %v561
        %v766 = vpack.c.bf16 %v564, %v562
        %v767 = vpack.c.bf16 %v567, %v565
        %v768 = vpack.c.bf16 %v568, %v566
        %v769 = vpack.c.bf16 %v571, %v569
        %v770 = vpack.c.bf16 %v572, %v570
        %v771 = vpack.c.bf16 %v575, %v573
        %v772 = vpack.c.bf16 %v576, %v574
        %v773 = vpack.c.bf16 %v579, %v577
        %v774 = vpack.c.bf16 %v580, %v578
        %v775 = vpack.c.bf16 %v583, %v581
        %v776 = vpack.c.bf16 %v584, %v582
        %v777 = vunpack.c.l.bf16 %v585
        %v778 = vunpack.c.l.bf16 %v586
        %v779 = vunpack.c.h.bf16 %v585
        %v780 = vunpack.c.h.bf16 %v586
        %v781 = vunpack.c.l.bf16 %v587
        %v782 = vunpack.c.l.bf16 %v588
        %v783 = vunpack.c.h.bf16 %v587
        %v784 = vunpack.c.h.bf16 %v588
        %v785 = vunpack.c.l.bf16 %v589
        %v786 = vunpack.c.l.bf16 %v590
        %v787 = vunpack.c.h.bf16 %v589
        %v788 = vunpack.c.h.bf16 %v590
        %v789 = vunpack.c.l.bf16 %v591
        %v790 = vunpack.c.l.bf16 %v592
        %v791 = vunpack.c.h.bf16 %v591
        %v792 = vunpack.c.h.bf16 %v592
        %v793 = vunpack.c.l.bf16 %v593
        %v794 = vunpack.c.l.bf16 %v594
        %v795 = vunpack.c.h.bf16 %v593
        %v796 = vunpack.c.h.bf16 %v594
        %v797 = vunpack.c.l.bf16 %v595
        %v798 = vunpack.c.l.bf16 %v596
        %v799 = vunpack.c.h.bf16 %v595
        %v800 = vunpack.c.h.bf16 %v596
        %v801 = vunpack.c.l.bf16 %v597
        %v802 = vunpack.c.l.bf16 %v598
        %v803 = vunpack.c.h.bf16 %v597
        %v804 = vunpack.c.h.bf16 %v598
        %v805 = vunpack.c.l.bf16 %v599
        %v806 = vunpack.c.l.bf16 %v600
        %v807 = vunpack.c.h.bf16 %v599
        %v808 = vunpack.c.h.bf16 %v600
        %v809 = vunpack.c.l.bf16 %v601
        %v810 = vunpack.c.l.bf16 %v602
        %v811 = vunpack.c.h.bf16 %v601
        %v812 = vunpack.c.h.bf16 %v602
        %v813 = vunpack.c.l.bf16 %v603
        %v814 = vunpack.c.l.bf16 %v604
        %v815 = vunpack.c.h.bf16 %v603
        %v816 = vunpack.c.h.bf16 %v604
        %v817 = vunpack.c.l.bf16 %v605
        %v818 = vunpack.c.l.bf16 %v606
        %v819 = vunpack.c.h.bf16 %v605
        %v820 = vunpack.c.h.bf16 %v606
        %v821 = vunpack.c.l.bf16 %v607
        %v822 = vunpack.c.l.bf16 %v608
        %v823 = vunpack.c.h.bf16 %v607
        %v824 = vunpack.c.h.bf16 %v608
        %v825 = vunpack.c.l.bf16 %v609
        %v826 = vunpack.c.l.bf16 %v610
        %v827 = vunpack.c.h.bf16 %v609
        %v828 = vunpack.c.h.bf16 %v610
        %v829 = vunpack.c.l.bf16 %v611
        %v830 = vunpack.c.l.bf16 %v612
        %v831 = vunpack.c.h.bf16 %v611
        %v832 = vunpack.c.h.bf16 %v612
        %v833 = vunpack.c.l.bf16 %v613
        %v834 = vunpack.c.l.bf16 %v614
        %v835 = vunpack.c.h.bf16 %v613
        %v836 = vunpack.c.h.bf16 %v614
        %v837 = vunpack.c.l.bf16 %v615
        %v838 = vunpack.c.l.bf16 %v616
        %v839 = vunpack.c.h.bf16 %v615
        %v840 = vunpack.c.h.bf16 %v616
        %v841 = vunpack.c.l.bf16 %v617
        %v842 = vunpack.c.l.bf16 %v618
        %v843 = vunpack.c.h.bf16 %v617
        %v844 = vunpack.c.h.bf16 %v618
        %v845 = vunpack.c.l.bf16 %v619
        %v846 = vunpack.c.l.bf16 %v620
        %v847 = vunpack.c.h.bf16 %v619
        %v848 = vunpack.c.h.bf16 %v620
        %v849 = vunpack.c.l.bf16 %v621
        %v850 = vunpack.c.l.bf16 %v622
        %v851 = vunpack.c.h.bf16 %v621
        %v852 = vunpack.c.h.bf16 %v622
        %v853 = vunpack.c.l.bf16 %v623
        %v854 = vunpack.c.l.bf16 %v624
        %v855 = vunpack.c.h.bf16 %v623
        %v856 = vunpack.c.h.bf16 %v624
        %v857 = vunpack.c.l.bf16 %v625
        %v858 = vunpack.c.l.bf16 %v626
        %v859 = vunpack.c.h.bf16 %v625
        %v860 = vunpack.c.h.bf16 %v626
        %v861 = vunpack.c.l.bf16 %v627
        %v862 = vunpack.c.l.bf16 %v628
        %v863 = vunpack.c.h.bf16 %v627
        %v864 = vunpack.c.h.bf16 %v628
        %v865 = vunpack.c.l.bf16 %v629
        %v866 = vunpack.c.l.bf16 %v630
        %v867 = vunpack.c.h.bf16 %v629
        %v868 = vunpack.c.h.bf16 %v630
        %v869 = vunpack.c.l.bf16 %v631
        %v870 = vunpack.c.l.bf16 %v632
        %v871 = vunpack.c.h.bf16 %v631
        %v872 = vunpack.c.h.bf16 %v632
        %v873 = vunpack.c.l.bf16 %v633
        %v874 = vunpack.c.l.bf16 %v634
        %v875 = vunpack.c.h.bf16 %v633
        %v876 = vunpack.c.h.bf16 %v634
        %v877 = vunpack.c.l.bf16 %v635
        %v878 = vunpack.c.l.bf16 %v636
        %v879 = vunpack.c.h.bf16 %v635
        %v880 = vunpack.c.h.bf16 %v636
        %v881 = vunpack.c.l.bf16 %v637
        %v882 = vunpack.c.l.bf16 %v638
        %v883 = vunpack.c.h.bf16 %v637
        %v884 = vunpack.c.h.bf16 %v638
        %v885 = vunpack.c.l.bf16 %v639
        %v886 = vunpack.c.l.bf16 %v640
        %v887 = vunpack.c.h.bf16 %v639
        %v888 = vunpack.c.h.bf16 %v640
        %v889 = vunpack.c.l.bf16 %v641
        %v890 = vunpack.c.l.bf16 %v642
        %v891 = vunpack.c.h.bf16 %v641
        %v892 = vunpack.c.h.bf16 %v642
        %v893 = vunpack.c.l.bf16 %v643
        %v894 = vunpack.c.l.bf16 %v644
        %v895 = vunpack.c.h.bf16 %v643
        %v896 = vunpack.c.h.bf16 %v644
        %v897 = vunpack.c.l.bf16 %v645
        %v898 = vunpack.c.l.bf16 %v646
        %v899 = vunpack.c.h.bf16 %v645
        %v900 = vunpack.c.h.bf16 %v646
        %v901 = vunpack.c.l.bf16 %v647
        %v902 = vunpack.c.l.bf16 %v648
        %v903 = vunpack.c.h.bf16 %v647
        %v904 = vunpack.c.h.bf16 %v648
        %v905 = vunpack.c.l.bf16 %v649
        %v906 = vunpack.c.l.bf16 %v650
        %v907 = vunpack.c.h.bf16 %v649
        %v908 = vunpack.c.h.bf16 %v650
        %v909 = vunpack.c.l.bf16 %v651
        %v910 = vunpack.c.l.bf16 %v652
        %v911 = vunpack.c.h.bf16 %v651
        %v912 = vunpack.c.h.bf16 %v652
        %v913 = vunpack.c.l.bf16 %v653
        %v914 = vunpack.c.l.bf16 %v654
        %v915 = vunpack.c.h.bf16 %v653
        %v916 = vunpack.c.h.bf16 %v654
        %v917 = vunpack.c.l.bf16 %v655
        %v918 = vunpack.c.l.bf16 %v656
        %v919 = vunpack.c.h.bf16 %v655
        %v920 = vunpack.c.h.bf16 %v656
        %v921 = vunpack.c.l.bf16 %v657
        %v922 = vunpack.c.l.bf16 %v658
        %v923 = vunpack.c.h.bf16 %v657
        %v924 = vunpack.c.h.bf16 %v658
        %v925 = vunpack.c.l.bf16 %v659
        %v926 = vunpack.c.l.bf16 %v660
        %v927 = vunpack.c.h.bf16 %v659
        %v928 = vunpack.c.h.bf16 %v660
        %v929 = vunpack.c.l.bf16 %v661
        %v930 = vunpack.c.l.bf16 %v662
        %v931 = vunpack.c.h.bf16 %v661
        %v932 = vunpack.c.h.bf16 %v662
        %v933 = vunpack.c.l.bf16 %v663
        %v934 = vunpack.c.l.bf16 %v664
        %v935 = vunpack.c.h.bf16 %v663
        %v936 = vunpack.c.h.bf16 %v664
        %v937 = vunpack.c.l.bf16 %v665
        %v938 = vunpack.c.l.bf16 %v666
        %v939 = vunpack.c.h.bf16 %v665
        %v940 = vunpack.c.h.bf16 %v666
        %v941 = vunpack.c.l.bf16 %v667
        %v942 = vunpack.c.l.bf16 %v668
        %v943 = vunpack.c.h.bf16 %v667
        %v944 = vunpack.c.h.bf16 %v668
        %v945 = vunpack.c.l.bf16 %v669
        %v946 = vunpack.c.l.bf16 %v670
        %v947 = vunpack.c.h.bf16 %v669
        %v948 = vunpack.c.h.bf16 %v670
        %v949 = vunpack.c.l.bf16 %v671
        %v950 = vunpack.c.l.bf16 %v672
        %v951 = vunpack.c.h.bf16 %v671
        %v952 = vunpack.c.h.bf16 %v672
        %v953 = vunpack.c.l.bf16 %v673
        %v954 = vunpack.c.l.bf16 %v674
        %v955 = vunpack.c.h.bf16 %v673
        %v956 = vunpack.c.h.bf16 %v674
        %v957 = vunpack.c.l.bf16 %v675
        %v958 = vunpack.c.l.bf16 %v676
        %v959 = vunpack.c.h.bf16 %v675
        %v960 = vunpack.c.h.bf16 %v676
        %v961 = vunpack.c.l.bf16 %v677
        %v962 = vunpack.c.l.bf16 %v678
        %v963 = vunpack.c.h.bf16 %v677
        %v964 = vunpack.c.h.bf16 %v678
        %v965 = vunpack.c.l.bf16 %v679
        %v966 = vunpack.c.l.bf16 %v680
        %v967 = vunpack.c.h.bf16 %v679
        %v968 = vunpack.c.h.bf16 %v680
        %v969 = vunpack.c.l.bf16 %v681
        %v970 = vunpack.c.l.bf16 %v682
        %v971 = vunpack.c.h.bf16 %v681
        %v972 = vunpack.c.h.bf16 %v682
        %v973 = vunpack.c.l.bf16 %v683
        %v974 = vunpack.c.l.bf16 %v684
        %v975 = vunpack.c.h.bf16 %v683
        %v976 = vunpack.c.h.bf16 %v684
        %v977 = vunpack.c.l.bf16 %v685
        %v978 = vunpack.c.l.bf16 %v686
        %v979 = vunpack.c.h.bf16 %v685
        %v980 = vunpack.c.h.bf16 %v686
        %v981 = vunpack.c.l.bf16 %v687
        %v982 = vunpack.c.l.bf16 %v688
        %v983 = vunpack.c.h.bf16 %v687
        %v984 = vunpack.c.h.bf16 %v688
        %v985 = vunpack.c.l.bf16 %v689
        %v986 = vunpack.c.l.bf16 %v690
        %v987 = vunpack.c.h.bf16 %v689
        %v988 = vunpack.c.h.bf16 %v690
        %v989 = vunpack.c.l.bf16 %v691
        %v990 = vunpack.c.l.bf16 %v692
        %v991 = vunpack.c.h.bf16 %v691
        %v992 = vunpack.c.h.bf16 %v692
        %v993 = vunpack.c.l.bf16 %v693
        %v994 = vunpack.c.l.bf16 %v694
        %v995 = vunpack.c.h.bf16 %v693
        %v996 = vunpack.c.h.bf16 %v694
        %v997 = vunpack.c.l.bf16 %v695
        %v998 = vunpack.c.l.bf16 %v696
        %v999 = vunpack.c.h.bf16 %v695
        %v1000 = vunpack.c.h.bf16 %v696
        %v1001 = vunpack.c.l.bf16 %v697
        %v1002 = vunpack.c.l.bf16 %v698
        %v1003 = vunpack.c.h.bf16 %v697
        %v1004 = vunpack.c.h.bf16 %v698
        %v1005 = vunpack.c.l.bf16 %v699
        %v1006 = vunpack.c.l.bf16 %v700
        %v1007 = vunpack.c.h.bf16 %v699
        %v1008 = vunpack.c.h.bf16 %v700
        %v1009 = vunpack.c.l.bf16 %v701
        %v1010 = vunpack.c.l.bf16 %v702
        %v1011 = vunpack.c.h.bf16 %v701
        %v1012 = vunpack.c.h.bf16 %v702
        %v1013 = vunpack.c.l.bf16 %v703
        %v1014 = vunpack.c.l.bf16 %v704
        %v1015 = vunpack.c.h.bf16 %v703
        %v1016 = vunpack.c.h.bf16 %v704
        %v1017 = vunpack.c.l.bf16 %v705
        %v1018 = vunpack.c.l.bf16 %v706
        %v1019 = vunpack.c.h.bf16 %v705
        %v1020 = vunpack.c.h.bf16 %v706
        %v1021 = vunpack.c.l.bf16 %v707
        %v1022 = vunpack.c.l.bf16 %v708
        %v1023 = vunpack.c.h.bf16 %v707
        %v1024 = vunpack.c.h.bf16 %v708
        %v1025 = vunpack.c.l.bf16 %v709
        %v1026 = vunpack.c.l.bf16 %v710
        %v1027 = vunpack.c.h.bf16 %v709
        %v1028 = vunpack.c.h.bf16 %v710
        %v1029 = vunpack.c.l.bf16 %v711
        %v1030 = vunpack.c.l.bf16 %v712
        %v1031 = vunpack.c.h.bf16 %v711
        %v1032 = vunpack.c.h.bf16 %v712
        %v1033 = vunpack.c.l.bf16 %v713
        %v1034 = vunpack.c.l.bf16 %v714
        %v1035 = vunpack.c.h.bf16 %v713
        %v1036 = vunpack.c.h.bf16 %v714
        %v1037 = vunpack.c.l.bf16 %v715
        %v1038 = vunpack.c.l.bf16 %v716
        %v1039 = vunpack.c.h.bf16 %v715
        %v1040 = vunpack.c.h.bf16 %v716
        %v1041 = vunpack.c.l.bf16 %v717
        %v1042 = vunpack.c.l.bf16 %v718
        %v1043 = vunpack.c.h.bf16 %v717
        %v1044 = vunpack.c.h.bf16 %v718
        %v1045 = vunpack.c.l.bf16 %v719
        %v1046 = vunpack.c.l.bf16 %v720
        %v1047 = vunpack.c.h.bf16 %v719
        %v1048 = vunpack.c.h.bf16 %v720
        %v1049 = vunpack.c.l.bf16 %v721
        %v1050 = vunpack.c.l.bf16 %v722
        %v1051 = vunpack.c.h.bf16 %v721
        %v1052 = vunpack.c.h.bf16 %v722
        %v1053 = vunpack.c.l.bf16 %v723
        %v1054 = vunpack.c.l.bf16 %v724
        %v1055 = vunpack.c.h.bf16 %v723
        %v1056 = vunpack.c.h.bf16 %v724
        %v1057 = vunpack.c.l.bf16 %v725
        %v1058 = vunpack.c.l.bf16 %v726
        %v1059 = vunpack.c.h.bf16 %v725
        %v1060 = vunpack.c.h.bf16 %v726
        %v1061 = vunpack.c.l.bf16 %v727
        %v1062 = vunpack.c.l.bf16 %v728
        %v1063 = vunpack.c.h.bf16 %v727
        %v1064 = vunpack.c.h.bf16 %v728
        %v1065 = vunpack.c.l.bf16 %v729
        %v1066 = vunpack.c.l.bf16 %v730
        %v1067 = vunpack.c.h.bf16 %v729
        %v1068 = vunpack.c.h.bf16 %v730
        %v1069 = vunpack.c.l.bf16 %v731
        %v1070 = vunpack.c.l.bf16 %v732
        %v1071 = vunpack.c.h.bf16 %v731
        %v1072 = vunpack.c.h.bf16 %v732
        %v1073 = vunpack.c.l.bf16 %v733
        %v1074 = vunpack.c.l.bf16 %v734
        %v1075 = vunpack.c.h.bf16 %v733
        %v1076 = vunpack.c.h.bf16 %v734
        %v1077 = vunpack.c.l.bf16 %v735
        %v1078 = vunpack.c.l.bf16 %v736
        %v1079 = vunpack.c.h.bf16 %v735
        %v1080 = vunpack.c.h.bf16 %v736
        %v1081 = vunpack.c.l.bf16 %v737
        %v1082 = vunpack.c.l.bf16 %v738
        %v1083 = vunpack.c.h.bf16 %v737
        %v1084 = vunpack.c.h.bf16 %v738
        %v1085 = vunpack.c.l.bf16 %v739
        %v1086 = vunpack.c.l.bf16 %v740
        %v1087 = vunpack.c.h.bf16 %v739
        %v1088 = vunpack.c.h.bf16 %v740
        %v1089 = vunpack.c.l.bf16 %v741
        %v1090 = vunpack.c.l.bf16 %v742
        %v1091 = vunpack.c.h.bf16 %v741
        %v1092 = vunpack.c.h.bf16 %v742
        %v1093 = vunpack.c.l.bf16 %v743
        %v1094 = vunpack.c.l.bf16 %v744
        %v1095 = vunpack.c.h.bf16 %v743
        %v1096 = vunpack.c.h.bf16 %v744
        %v1097 = vunpack.c.l.bf16 %v745
        %v1098 = vunpack.c.l.bf16 %v746
        %v1099 = vunpack.c.h.bf16 %v745
        %v1100 = vunpack.c.h.bf16 %v746
        %v1101 = vunpack.c.l.bf16 %v747
        %v1102 = vunpack.c.l.bf16 %v748
        %v1103 = vunpack.c.h.bf16 %v747
        %v1104 = vunpack.c.h.bf16 %v748
        %v1105 = vunpack.c.l.bf16 %v749
        %v1106 = vunpack.c.l.bf16 %v750
        %v1107 = vunpack.c.h.bf16 %v749
        %v1108 = vunpack.c.h.bf16 %v750
        %v1109 = vunpack.c.l.bf16 %v751
        %v1110 = vunpack.c.l.bf16 %v752
        %v1111 = vunpack.c.h.bf16 %v751
        %v1112 = vunpack.c.h.bf16 %v752
        %v1113 = vunpack.c.l.bf16 %v753
        %v1114 = vunpack.c.l.bf16 %v754
        %v1115 = vunpack.c.h.bf16 %v753
        %v1116 = vunpack.c.h.bf16 %v754
        %v1117 = vunpack.c.l.bf16 %v755
        %v1118 = vunpack.c.l.bf16 %v756
        %v1119 = vunpack.c.h.bf16 %v755
        %v1120 = vunpack.c.h.bf16 %v756
        %v1121 = vunpack.c.l.bf16 %v757
        %v1122 = vunpack.c.l.bf16 %v758
        %v1123 = vunpack.c.h.bf16 %v757
        %v1124 = vunpack.c.h.bf16 %v758
        %v1125 = vunpack.c.l.bf16 %v759
        %v1126 = vunpack.c.l.bf16 %v760
        %v1127 = vunpack.c.h.bf16 %v759
        %v1128 = vunpack.c.h.bf16 %v760
        %v1129 = vunpack.c.l.bf16 %v761
        %v1130 = vunpack.c.l.bf16 %v762
        %v1131 = vunpack.c.h.bf16 %v761
        %v1132 = vunpack.c.h.bf16 %v762
        %v1133 = vunpack.c.l.bf16 %v763
        %v1134 = vunpack.c.l.bf16 %v764
        %v1135 = vunpack.c.h.bf16 %v763
        %v1136 = vunpack.c.h.bf16 %v764
        %v1137 = vunpack.c.l.bf16 %v765
        %v1138 = vunpack.c.l.bf16 %v766
        %v1139 = vunpack.c.h.bf16 %v765
        %v1140 = vunpack.c.h.bf16 %v766
        %v1141 = vunpack.c.l.bf16 %v767
        %v1142 = vunpack.c.l.bf16 %v768
        %v1143 = vunpack.c.h.bf16 %v767
        %v1144 = vunpack.c.h.bf16 %v768
        %v1145 = vunpack.c.l.bf16 %v769
        %v1146 = vunpack.c.l.bf16 %v770
        %v1147 = vunpack.c.h.bf16 %v769
        %v1148 = vunpack.c.h.bf16 %v770
        %v1149 = vunpack.c.l.bf16 %v771
        %v1150 = vunpack.c.l.bf16 %v772
        %v1151 = vunpack.c.h.bf16 %v771
        %v1152 = vunpack.c.h.bf16 %v772
        %v1153 = vunpack.c.l.bf16 %v773
        %v1154 = vunpack.c.l.bf16 %v774
        %v1155 = vunpack.c.h.bf16 %v773
        %v1156 = vunpack.c.h.bf16 %v774
        %v1157 = vunpack.c.l.bf16 %v775
        %v1158 = vunpack.c.l.bf16 %v776
        %v1159 = vunpack.c.h.bf16 %v775
        %v1160 = vunpack.c.h.bf16 %v776
        %v1161 = vsub.f32 %v201, %v777
        %v1162 = vsub.f32 %v202, %v778
        %v1163 = vsub.f32 %v203, %v779
        %v1164 = vsub.f32 %v204, %v780
        %v1165 = vsub.f32 %v205, %v781
        %v1166 = vsub.f32 %v206, %v782
        %v1167 = vsub.f32 %v207, %v783
        %v1168 = vsub.f32 %v208, %v784
        %v1169 = vsub.f32 %v209, %v785
        %v1170 = vsub.f32 %v210, %v786
        %v1171 = vsub.f32 %v211, %v787
        %v1172 = vsub.f32 %v212, %v788
        %v1173 = vsub.f32 %v213, %v789
        %v1174 = vsub.f32 %v214, %v790
        %v1175 = vsub.f32 %v215, %v791
        %v1176 = vsub.f32 %v216, %v792
        %v1177 = vsub.f32 %v217, %v793
        %v1178 = vsub.f32 %v218, %v794
        %v1179 = vsub.f32 %v219, %v795
        %v1180 = vsub.f32 %v220, %v796
        %v1181 = vsub.f32 %v221, %v797
        %v1182 = vsub.f32 %v222, %v798
        %v1183 = vsub.f32 %v223, %v799
        %v1184 = vsub.f32 %v224, %v800
        %v1185 = vsub.f32 %v225, %v801
        %v1186 = vsub.f32 %v226, %v802
        %v1187 = vsub.f32 %v227, %v803
        %v1188 = vsub.f32 %v228, %v804
        %v1189 = vsub.f32 %v229, %v805
        %v1190 = vsub.f32 %v230, %v806
        %v1191 = vsub.f32 %v231, %v807
        %v1192 = vsub.f32 %v232, %v808
        %v1193 = vsub.f32 %v233, %v809
        %v1194 = vsub.f32 %v234, %v810
        %v1195 = vsub.f32 %v235, %v811
        %v1196 = vsub.f32 %v236, %v812
        %v1197 = vsub.f32 %v237, %v813
        %v1198 = vsub.f32 %v238, %v814
        %v1199 = vsub.f32 %v239, %v815
        %v1200 = vsub.f32 %v240, %v816
        %v1201 = vsub.f32 %v241, %v817
        %v1202 = vsub.f32 %v242, %v818
        %v1203 = vsub.f32 %v243, %v819
        %v1204 = vsub.f32 %v244, %v820
        %v1205 = vsub.f32 %v245, %v821
        %v1206 = vsub.f32 %v246, %v822
        %v1207 = vsub.f32 %v247, %v823
        %v1208 = vsub.f32 %v248, %v824
        %v1209 = vsub.f32 %v249, %v825
        %v1210 = vsub.f32 %v250, %v826
        %v1211 = vsub.f32 %v251, %v827
        %v1212 = vsub.f32 %v252, %v828
        %v1213 = vsub.f32 %v253, %v829
        %v1214 = vsub.f32 %v254, %v830
        %v1215 = vsub.f32 %v255, %v831
        %v1216 = vsub.f32 %v256, %v832
        %v1217 = vsub.f32 %v257, %v833
        %v1218 = vsub.f32 %v258, %v834
        %v1219 = vsub.f32 %v259, %v835
        %v1220 = vsub.f32 %v260, %v836
        %v1221 = vsub.f32 %v261, %v837
        %v1222 = vsub.f32 %v262, %v838
        %v1223 = vsub.f32 %v263, %v839
        %v1224 = vsub.f32 %v264, %v840
        %v1225 = vsub.f32 %v265, %v841
        %v1226 = vsub.f32 %v266, %v842
        %v1227 = vsub.f32 %v267, %v843
        %v1228 = vsub.f32 %v268, %v844
        %v1229 = vsub.f32 %v269, %v845
        %v1230 = vsub.f32 %v270, %v846
        %v1231 = vsub.f32 %v271, %v847
        %v1232 = vsub.f32 %v272, %v848
        %v1233 = vsub.f32 %v273, %v849
        %v1234 = vsub.f32 %v274, %v850
        %v1235 = vsub.f32 %v275, %v851
        %v1236 = vsub.f32 %v276, %v852
        %v1237 = vsub.f32 %v277, %v853
        %v1238 = vsub.f32 %v278, %v854
        %v1239 = vsub.f32 %v279, %v855
        %v1240 = vsub.f32 %v280, %v856
        %v1241 = vsub.f32 %v281, %v857
        %v1242 = vsub.f32 %v282, %v858
        %v1243 = vsub.f32 %v283, %v859
        %v1244 = vsub.f32 %v284, %v860
        %v1245 = vsub.f32 %v285, %v861
        %v1246 = vsub.f32 %v286, %v862
        %v1247 = vsub.f32 %v287, %v863
        %v1248 = vsub.f32 %v288, %v864
        %v1249 = vsub.f32 %v289, %v865
        %v1250 = vsub.f32 %v290, %v866
        %v1251 = vsub.f32 %v291, %v867
        %v1252 = vsub.f32 %v292, %v868
        %v1253 = vsub.f32 %v293, %v869
        %v1254 = vsub.f32 %v294, %v870
        %v1255 = vsub.f32 %v295, %v871
        %v1256 = vsub.f32 %v296, %v872
        %v1257 = vsub.f32 %v297, %v873
        %v1258 = vsub.f32 %v298, %v874
        %v1259 = vsub.f32 %v299, %v875
        %v1260 = vsub.f32 %v300, %v876
        %v1261 = vsub.f32 %v301, %v877
        %v1262 = vsub.f32 %v302, %v878
        %v1263 = vsub.f32 %v303, %v879
        %v1264 = vsub.f32 %v304, %v880
        %v1265 = vsub.f32 %v305, %v881
        %v1266 = vsub.f32 %v306, %v882
        %v1267 = vsub.f32 %v307, %v883
        %v1268 = vsub.f32 %v308, %v884
        %v1269 = vsub.f32 %v309, %v885
        %v1270 = vsub.f32 %v310, %v886
        %v1271 = vsub.f32 %v311, %v887
        %v1272 = vsub.f32 %v312, %v888
        %v1273 = vsub.f32 %v313, %v889
        %v1274 = vsub.f32 %v314, %v890
        %v1275 = vsub.f32 %v315, %v891
        %v1276 = vsub.f32 %v316, %v892
        %v1277 = vsub.f32 %v317, %v893
        %v1278 = vsub.f32 %v318, %v894
        %v1279 = vsub.f32 %v319, %v895
        %v1280 = vsub.f32 %v320, %v896
        %v1281 = vsub.f32 %v321, %v897
        %v1282 = vsub.f32 %v322, %v898
        %v1283 = vsub.f32 %v323, %v899
        %v1284 = vsub.f32 %v324, %v900
        %v1285 = vsub.f32 %v325, %v901
        %v1286 = vsub.f32 %v326, %v902
        %v1287 = vsub.f32 %v327, %v903
        %v1288 = vsub.f32 %v328, %v904
        %v1289 = vsub.f32 %v329, %v905
        %v1290 = vsub.f32 %v330, %v906
        %v1291 = vsub.f32 %v331, %v907
        %v1292 = vsub.f32 %v332, %v908
        %v1293 = vsub.f32 %v333, %v909
        %v1294 = vsub.f32 %v334, %v910
        %v1295 = vsub.f32 %v335, %v911
        %v1296 = vsub.f32 %v336, %v912
        %v1297 = vsub.f32 %v337, %v913
        %v1298 = vsub.f32 %v338, %v914
        %v1299 = vsub.f32 %v339, %v915
        %v1300 = vsub.f32 %v340, %v916
        %v1301 = vsub.f32 %v341, %v917
        %v1302 = vsub.f32 %v342, %v918
        %v1303 = vsub.f32 %v343, %v919
        %v1304 = vsub.f32 %v344, %v920
        %v1305 = vsub.f32 %v345, %v921
        %v1306 = vsub.f32 %v346, %v922
        %v1307 = vsub.f32 %v347, %v923
        %v1308 = vsub.f32 %v348, %v924
        %v1309 = vsub.f32 %v349, %v925
        %v1310 = vsub.f32 %v350, %v926
        %v1311 = vsub.f32 %v351, %v927
        %v1312 = vsub.f32 %v352, %v928
        %v1313 = vsub.f32 %v353, %v929
        %v1314 = vsub.f32 %v354, %v930
        %v1315 = vsub.f32 %v355, %v931
        %v1316 = vsub.f32 %v356, %v932
        %v1317 = vsub.f32 %v357, %v933
        %v1318 = vsub.f32 %v358, %v934
        %v1319 = vsub.f32 %v359, %v935
        %v1320 = vsub.f32 %v360, %v936
        %v1321 = vsub.f32 %v361, %v937
        %v1322 = vsub.f32 %v362, %v938
        %v1323 = vsub.f32 %v363, %v939
        %v1324 = vsub.f32 %v364, %v940
        %v1325 = vsub.f32 %v365, %v941
        %v1326 = vsub.f32 %v366, %v942
        %v1327 = vsub.f32 %v367, %v943
        %v1328 = vsub.f32 %v368, %v944
        %v1329 = vsub.f32 %v369, %v945
        %v1330 = vsub.f32 %v370, %v946
        %v1331 = vsub.f32 %v371, %v947
        %v1332 = vsub.f32 %v372, %v948
        %v1333 = vsub.f32 %v373, %v949
        %v1334 = vsub.f32 %v374, %v950
        %v1335 = vsub.f32 %v375, %v951
        %v1336 = vsub.f32 %v376, %v952
        %v1337 = vsub.f32 %v377, %v953
        %v1338 = vsub.f32 %v378, %v954
        %v1339 = vsub.f32 %v379, %v955
        %v1340 = vsub.f32 %v380, %v956
        %v1341 = vsub.f32 %v381, %v957
        %v1342 = vsub.f32 %v382, %v958
        %v1343 = vsub.f32 %v383, %v959
        %v1344 = vsub.f32 %v384, %v960
        %v1345 = vsub.f32 %v385, %v961
        %v1346 = vsub.f32 %v386, %v962
        %v1347 = vsub.f32 %v387, %v963
        %v1348 = vsub.f32 %v388, %v964
        %v1349 = vsub.f32 %v389, %v965
        %v1350 = vsub.f32 %v390, %v966
        %v1351 = vsub.f32 %v391, %v967
        %v1352 = vsub.f32 %v392, %v968
        %v1353 = vsub.f32 %v393, %v969
        %v1354 = vsub.f32 %v394, %v970
        %v1355 = vsub.f32 %v395, %v971
        %v1356 = vsub.f32 %v396, %v972
        %v1357 = vsub.f32 %v397, %v973
        %v1358 = vsub.f32 %v398, %v974
        %v1359 = vsub.f32 %v399, %v975
        %v1360 = vsub.f32 %v400, %v976
        %v1361 = vsub.f32 %v401, %v977
        %v1362 = vsub.f32 %v402, %v978
        %v1363 = vsub.f32 %v403, %v979
        %v1364 = vsub.f32 %v404, %v980
        %v1365 = vsub.f32 %v405, %v981
        %v1366 = vsub.f32 %v406, %v982
        %v1367 = vsub.f32 %v407, %v983
        %v1368 = vsub.f32 %v408, %v984
        %v1369 = vsub.f32 %v409, %v985
        %v1370 = vsub.f32 %v410, %v986
        %v1371 = vsub.f32 %v411, %v987
        %v1372 = vsub.f32 %v412, %v988
        %v1373 = vsub.f32 %v413, %v989
        %v1374 = vsub.f32 %v414, %v990
        %v1375 = vsub.f32 %v415, %v991
        %v1376 = vsub.f32 %v416, %v992
        %v1377 = vsub.f32 %v417, %v993
        %v1378 = vsub.f32 %v418, %v994
        %v1379 = vsub.f32 %v419, %v995
        %v1380 = vsub.f32 %v420, %v996
        %v1381 = vsub.f32 %v421, %v997
        %v1382 = vsub.f32 %v422, %v998
        %v1383 = vsub.f32 %v423, %v999
        %v1384 = vsub.f32 %v424, %v1000
        %v1385 = vsub.f32 %v425, %v1001
        %v1386 = vsub.f32 %v426, %v1002
        %v1387 = vsub.f32 %v427, %v1003
        %v1388 = vsub.f32 %v428, %v1004
        %v1389 = vsub.f32 %v429, %v1005
        %v1390 = vsub.f32 %v430, %v1006
        %v1391 = vsub.f32 %v431, %v1007
        %v1392 = vsub.f32 %v432, %v1008
        %v1393 = vsub.f32 %v433, %v1009
        %v1394 = vsub.f32 %v434, %v1010
        %v1395 = vsub.f32 %v435, %v1011
        %v1396 = vsub.f32 %v436, %v1012
        %v1397 = vsub.f32 %v437, %v1013
        %v1398 = vsub.f32 %v438, %v1014
        %v1399 = vsub.f32 %v439, %v1015
        %v1400 = vsub.f32 %v440, %v1016
        %v1401 = vsub.f32 %v441, %v1017
        %v1402 = vsub.f32 %v442, %v1018
        %v1403 = vsub.f32 %v443, %v1019
        %v1404 = vsub.f32 %v444, %v1020
        %v1405 = vsub.f32 %v445, %v1021
        %v1406 = vsub.f32 %v446, %v1022
        %v1407 = vsub.f32 %v447, %v1023
        %v1408 = vsub.f32 %v448, %v1024
        %v1409 = vsub.f32 %v449, %v1025
        %v1410 = vsub.f32 %v450, %v1026
        %v1411 = vsub.f32 %v451, %v1027
        %v1412 = vsub.f32 %v452, %v1028
        %v1413 = vsub.f32 %v453, %v1029
        %v1414 = vsub.f32 %v454, %v1030
        %v1415 = vsub.f32 %v455, %v1031
        %v1416 = vsub.f32 %v456, %v1032
        %v1417 = vsub.f32 %v457, %v1033
        %v1418 = vsub.f32 %v458, %v1034
        %v1419 = vsub.f32 %v459, %v1035
        %v1420 = vsub.f32 %v460, %v1036
        %v1421 = vsub.f32 %v461, %v1037
        %v1422 = vsub.f32 %v462, %v1038
        %v1423 = vsub.f32 %v463, %v1039
        %v1424 = vsub.f32 %v464, %v1040
        %v1425 = vsub.f32 %v465, %v1041
        %v1426 = vsub.f32 %v466, %v1042
        %v1427 = vsub.f32 %v467, %v1043
        %v1428 = vsub.f32 %v468, %v1044
        %v1429 = vsub.f32 %v469, %v1045
        %v1430 = vsub.f32 %v470, %v1046
        %v1431 = vsub.f32 %v471, %v1047
        %v1432 = vsub.f32 %v472, %v1048
        %v1433 = vsub.f32 %v473, %v1049
        %v1434 = vsub.f32 %v474, %v1050
        %v1435 = vsub.f32 %v475, %v1051
        %v1436 = vsub.f32 %v476, %v1052
        %v1437 = vsub.f32 %v477, %v1053
        %v1438 = vsub.f32 %v478, %v1054
        %v1439 = vsub.f32 %v479, %v1055
        %v1440 = vsub.f32 %v480, %v1056
        %v1441 = vsub.f32 %v481, %v1057
        %v1442 = vsub.f32 %v482, %v1058
        %v1443 = vsub.f32 %v483, %v1059
        %v1444 = vsub.f32 %v484, %v1060
        %v1445 = vsub.f32 %v485, %v1061
        %v1446 = vsub.f32 %v486, %v1062
        %v1447 = vsub.f32 %v487, %v1063
        %v1448 = vsub.f32 %v488, %v1064
        %v1449 = vsub.f32 %v489, %v1065
        %v1450 = vsub.f32 %v490, %v1066
        %v1451 = vsub.f32 %v491, %v1067
        %v1452 = vsub.f32 %v492, %v1068
        %v1453 = vsub.f32 %v493, %v1069
        %v1454 = vsub.f32 %v494, %v1070
        %v1455 = vsub.f32 %v495, %v1071
        %v1456 = vsub.f32 %v496, %v1072
        %v1457 = vsub.f32 %v497, %v1073
        %v1458 = vsub.f32 %v498, %v1074
        %v1459 = vsub.f32 %v499, %v1075
        %v1460 = vsub.f32 %v500, %v1076
        %v1461 = vsub.f32 %v501, %v1077
        %v1462 = vsub.f32 %v502, %v1078
        %v1463 = vsub.f32 %v503, %v1079
        %v1464 = vsub.f32 %v504, %v1080
        %v1465 = vsub.f32 %v505, %v1081
        %v1466 = vsub.f32 %v506, %v1082
        %v1467 = vsub.f32 %v507, %v1083
        %v1468 = vsub.f32 %v508, %v1084
        %v1469 = vsub.f32 %v509, %v1085
        %v1470 = vsub.f32 %v510, %v1086
        %v1471 = vsub.f32 %v511, %v1087
        %v1472 = vsub.f32 %v512, %v1088
        %v1473 = vsub.f32 %v513, %v1089
        %v1474 = vsub.f32 %v514, %v1090
        %v1475 = vsub.f32 %v515, %v1091
        %v1476 = vsub.f32 %v516, %v1092
        %v1477 = vsub.f32 %v517, %v1093
        %v1478 = vsub.f32 %v518, %v1094
        %v1479 = vsub.f32 %v519, %v1095
        %v1480 = vsub.f32 %v520, %v1096
        %v1481 = vsub.f32 %v521, %v1097
        %v1482 = vsub.f32 %v522, %v1098
        %v1483 = vsub.f32 %v523, %v1099
        %v1484 = vsub.f32 %v524, %v1100
        %v1485 = vsub.f32 %v525, %v1101
        %v1486 = vsub.f32 %v526, %v1102
        %v1487 = vsub.f32 %v527, %v1103
        %v1488 = vsub.f32 %v528, %v1104
        %v1489 = vsub.f32 %v529, %v1105
        %v1490 = vsub.f32 %v530, %v1106
        %v1491 = vsub.f32 %v531, %v1107
        %v1492 = vsub.f32 %v532, %v1108
        %v1493 = vsub.f32 %v533, %v1109
        %v1494 = vsub.f32 %v534, %v1110
        %v1495 = vsub.f32 %v535, %v1111
        %v1496 = vsub.f32 %v536, %v1112
        %v1497 = vsub.f32 %v537, %v1113
        %v1498 = vsub.f32 %v538, %v1114
        %v1499 = vsub.f32 %v539, %v1115
        %v1500 = vsub.f32 %v540, %v1116
        %v1501 = vsub.f32 %v541, %v1117
        %v1502 = vsub.f32 %v542, %v1118
        %v1503 = vsub.f32 %v543, %v1119
        %v1504 = vsub.f32 %v544, %v1120
        %v1505 = vsub.f32 %v545, %v1121
        %v1506 = vsub.f32 %v546, %v1122
        %v1507 = vsub.f32 %v547, %v1123
        %v1508 = vsub.f32 %v548, %v1124
        %v1509 = vsub.f32 %v549, %v1125
        %v1510 = vsub.f32 %v550, %v1126
        %v1511 = vsub.f32 %v551, %v1127
        %v1512 = vsub.f32 %v552, %v1128
        %v1513 = vsub.f32 %v553, %v1129
        %v1514 = vsub.f32 %v554, %v1130
        %v1515 = vsub.f32 %v555, %v1131
        %v1516 = vsub.f32 %v556, %v1132
        %v1517 = vsub.f32 %v557, %v1133
        %v1518 = vsub.f32 %v558, %v1134
        %v1519 = vsub.f32 %v559, %v1135
        %v1520 = vsub.f32 %v560, %v1136
        %v1521 = vsub.f32 %v561, %v1137
        %v1522 = vsub.f32 %v562, %v1138
        %v1523 = vsub.f32 %v563, %v1139
        %v1524 = vsub.f32 %v564, %v1140
        %v1525 = vsub.f32 %v565, %v1141
        %v1526 = vsub.f32 %v566, %v1142
        %v1527 = vsub.f32 %v567, %v1143
        %v1528 = vsub.f32 %v568, %v1144
        %v1529 = vsub.f32 %v569, %v1145
        %v1530 = vsub.f32 %v570, %v1146
        %v1531 = vsub.f32 %v571, %v1147
        %v1532 = vsub.f32 %v572, %v1148
        %v1533 = vsub.f32 %v573, %v1149
        %v1534 = vsub.f32 %v574, %v1150
        %v1535 = vsub.f32 %v575, %v1151
        %v1536 = vsub.f32 %v576, %v1152
        %v1537 = vsub.f32 %v577, %v1153
        %v1538 = vsub.f32 %v578, %v1154
        %v1539 = vsub.f32 %v579, %v1155
        %v1540 = vsub.f32 %v580, %v1156
        %v1541 = vsub.f32 %v581, %v1157
        %v1542 = vsub.f32 %v582, %v1158
        %v1543 = vsub.f32 %v583, %v1159
        %v1544 = vsub.f32 %v584, %v1160
        %v1545 = vpack.c.bf16 %v1163, %v1161
        %v1546 = vpack.c.bf16 %v1164, %v1162
        %v1547 = vpack.c.bf16 %v1167, %v1165
        %v1548 = vpack.c.bf16 %v1168, %v1166
        %v1549 = vpack.c.bf16 %v1171, %v1169
        %v1550 = vpack.c.bf16 %v1172, %v1170
        %v1551 = vpack.c.bf16 %v1175, %v1173
        %v1552 = vpack.c.bf16 %v1176, %v1174
        %v1553 = vpack.c.bf16 %v1179, %v1177
        %v1554 = vpack.c.bf16 %v1180, %v1178
        %v1555 = vpack.c.bf16 %v1183, %v1181
        %v1556 = vpack.c.bf16 %v1184, %v1182
        %v1557 = vpack.c.bf16 %v1187, %v1185
        %v1558 = vpack.c.bf16 %v1188, %v1186
        %v1559 = vpack.c.bf16 %v1191, %v1189
        %v1560 = vpack.c.bf16 %v1192, %v1190
        %v1561 = vpack.c.bf16 %v1195, %v1193
        %v1562 = vpack.c.bf16 %v1196, %v1194
        %v1563 = vpack.c.bf16 %v1199, %v1197
        %v1564 = vpack.c.bf16 %v1200, %v1198
        %v1565 = vpack.c.bf16 %v1203, %v1201
        %v1566 = vpack.c.bf16 %v1204, %v1202
        %v1567 = vpack.c.bf16 %v1207, %v1205
        %v1568 = vpack.c.bf16 %v1208, %v1206
        %v1569 = vpack.c.bf16 %v1211, %v1209
        %v1570 = vpack.c.bf16 %v1212, %v1210
        %v1571 = vpack.c.bf16 %v1215, %v1213
        %v1572 = vpack.c.bf16 %v1216, %v1214
        %v1573 = vpack.c.bf16 %v1219, %v1217
        %v1574 = vpack.c.bf16 %v1220, %v1218
        %v1575 = vpack.c.bf16 %v1223, %v1221
        %v1576 = vpack.c.bf16 %v1224, %v1222
        %v1577 = vpack.c.bf16 %v1227, %v1225
        %v1578 = vpack.c.bf16 %v1228, %v1226
        %v1579 = vpack.c.bf16 %v1231, %v1229
        %v1580 = vpack.c.bf16 %v1232, %v1230
        %v1581 = vpack.c.bf16 %v1235, %v1233
        %v1582 = vpack.c.bf16 %v1236, %v1234
        %v1583 = vpack.c.bf16 %v1239, %v1237
        %v1584 = vpack.c.bf16 %v1240, %v1238
        %v1585 = vpack.c.bf16 %v1243, %v1241
        %v1586 = vpack.c.bf16 %v1244, %v1242
        %v1587 = vpack.c.bf16 %v1247, %v1245
        %v1588 = vpack.c.bf16 %v1248, %v1246
        %v1589 = vpack.c.bf16 %v1251, %v1249
        %v1590 = vpack.c.bf16 %v1252, %v1250
        %v1591 = vpack.c.bf16 %v1255, %v1253
        %v1592 = vpack.c.bf16 %v1256, %v1254
        %v1593 = vpack.c.bf16 %v1259, %v1257
        %v1594 = vpack.c.bf16 %v1260, %v1258
        %v1595 = vpack.c.bf16 %v1263, %v1261
        %v1596 = vpack.c.bf16 %v1264, %v1262
        %v1597 = vpack.c.bf16 %v1267, %v1265
        %v1598 = vpack.c.bf16 %v1268, %v1266
        %v1599 = vpack.c.bf16 %v1271, %v1269
        %v1600 = vpack.c.bf16 %v1272, %v1270
        %v1601 = vpack.c.bf16 %v1275, %v1273
        %v1602 = vpack.c.bf16 %v1276, %v1274
        %v1603 = vpack.c.bf16 %v1279, %v1277
        %v1604 = vpack.c.bf16 %v1280, %v1278
        %v1605 = vpack.c.bf16 %v1283, %v1281
        %v1606 = vpack.c.bf16 %v1284, %v1282
        %v1607 = vpack.c.bf16 %v1287, %v1285
        %v1608 = vpack.c.bf16 %v1288, %v1286
        %v1609 = vpack.c.bf16 %v1291, %v1289
        %v1610 = vpack.c.bf16 %v1292, %v1290
        %v1611 = vpack.c.bf16 %v1295, %v1293
        %v1612 = vpack.c.bf16 %v1296, %v1294
        %v1613 = vpack.c.bf16 %v1299, %v1297
        %v1614 = vpack.c.bf16 %v1300, %v1298
        %v1615 = vpack.c.bf16 %v1303, %v1301
        %v1616 = vpack.c.bf16 %v1304, %v1302
        %v1617 = vpack.c.bf16 %v1307, %v1305
        %v1618 = vpack.c.bf16 %v1308, %v1306
        %v1619 = vpack.c.bf16 %v1311, %v1309
        %v1620 = vpack.c.bf16 %v1312, %v1310
        %v1621 = vpack.c.bf16 %v1315, %v1313
        %v1622 = vpack.c.bf16 %v1316, %v1314
        %v1623 = vpack.c.bf16 %v1319, %v1317
        %v1624 = vpack.c.bf16 %v1320, %v1318
        %v1625 = vpack.c.bf16 %v1323, %v1321
        %v1626 = vpack.c.bf16 %v1324, %v1322
        %v1627 = vpack.c.bf16 %v1327, %v1325
        %v1628 = vpack.c.bf16 %v1328, %v1326
        %v1629 = vpack.c.bf16 %v1331, %v1329
        %v1630 = vpack.c.bf16 %v1332, %v1330
        %v1631 = vpack.c.bf16 %v1335, %v1333
        %v1632 = vpack.c.bf16 %v1336, %v1334
        %v1633 = vpack.c.bf16 %v1339, %v1337
        %v1634 = vpack.c.bf16 %v1340, %v1338
        %v1635 = vpack.c.bf16 %v1343, %v1341
        %v1636 = vpack.c.bf16 %v1344, %v1342
        %v1637 = vpack.c.bf16 %v1347, %v1345
        %v1638 = vpack.c.bf16 %v1348, %v1346
        %v1639 = vpack.c.bf16 %v1351, %v1349
        %v1640 = vpack.c.bf16 %v1352, %v1350
        %v1641 = vpack.c.bf16 %v1355, %v1353
        %v1642 = vpack.c.bf16 %v1356, %v1354
        %v1643 = vpack.c.bf16 %v1359, %v1357
        %v1644 = vpack.c.bf16 %v1360, %v1358
        %v1645 = vpack.c.bf16 %v1363, %v1361
        %v1646 = vpack.c.bf16 %v1364, %v1362
        %v1647 = vpack.c.bf16 %v1367, %v1365
        %v1648 = vpack.c.bf16 %v1368, %v1366
        %v1649 = vpack.c.bf16 %v1371, %v1369
        %v1650 = vpack.c.bf16 %v1372, %v1370
        %v1651 = vpack.c.bf16 %v1375, %v1373
        %v1652 = vpack.c.bf16 %v1376, %v1374
        %v1653 = vpack.c.bf16 %v1379, %v1377
        %v1654 = vpack.c.bf16 %v1380, %v1378
        %v1655 = vpack.c.bf16 %v1383, %v1381
        %v1656 = vpack.c.bf16 %v1384, %v1382
        %v1657 = vpack.c.bf16 %v1387, %v1385
        %v1658 = vpack.c.bf16 %v1388, %v1386
        %v1659 = vpack.c.bf16 %v1391, %v1389
        %v1660 = vpack.c.bf16 %v1392, %v1390
        %v1661 = vpack.c.bf16 %v1395, %v1393
        %v1662 = vpack.c.bf16 %v1396, %v1394
        %v1663 = vpack.c.bf16 %v1399, %v1397
        %v1664 = vpack.c.bf16 %v1400, %v1398
        %v1665 = vpack.c.bf16 %v1403, %v1401
        %v1666 = vpack.c.bf16 %v1404, %v1402
        %v1667 = vpack.c.bf16 %v1407, %v1405
        %v1668 = vpack.c.bf16 %v1408, %v1406
        %v1669 = vpack.c.bf16 %v1411, %v1409
        %v1670 = vpack.c.bf16 %v1412, %v1410
        %v1671 = vpack.c.bf16 %v1415, %v1413
        %v1672 = vpack.c.bf16 %v1416, %v1414
        %v1673 = vpack.c.bf16 %v1419, %v1417
        %v1674 = vpack.c.bf16 %v1420, %v1418
        %v1675 = vpack.c.bf16 %v1423, %v1421
        %v1676 = vpack.c.bf16 %v1424, %v1422
        %v1677 = vpack.c.bf16 %v1427, %v1425
        %v1678 = vpack.c.bf16 %v1428, %v1426
        %v1679 = vpack.c.bf16 %v1431, %v1429
        %v1680 = vpack.c.bf16 %v1432, %v1430
        %v1681 = vpack.c.bf16 %v1435, %v1433
        %v1682 = vpack.c.bf16 %v1436, %v1434
        %v1683 = vpack.c.bf16 %v1439, %v1437
        %v1684 = vpack.c.bf16 %v1440, %v1438
        %v1685 = vpack.c.bf16 %v1443, %v1441
        %v1686 = vpack.c.bf16 %v1444, %v1442
        %v1687 = vpack.c.bf16 %v1447, %v1445
        %v1688 = vpack.c.bf16 %v1448, %v1446
        %v1689 = vpack.c.bf16 %v1451, %v1449
        %v1690 = vpack.c.bf16 %v1452, %v1450
        %v1691 = vpack.c.bf16 %v1455, %v1453
        %v1692 = vpack.c.bf16 %v1456, %v1454
        %v1693 = vpack.c.bf16 %v1459, %v1457
        %v1694 = vpack.c.bf16 %v1460, %v1458
        %v1695 = vpack.c.bf16 %v1463, %v1461
        %v1696 = vpack.c.bf16 %v1464, %v1462
        %v1697 = vpack.c.bf16 %v1467, %v1465
        %v1698 = vpack.c.bf16 %v1468, %v1466
        %v1699 = vpack.c.bf16 %v1471, %v1469
        %v1700 = vpack.c.bf16 %v1472, %v1470
        %v1701 = vpack.c.bf16 %v1475, %v1473
        %v1702 = vpack.c.bf16 %v1476, %v1474
        %v1703 = vpack.c.bf16 %v1479, %v1477
        %v1704 = vpack.c.bf16 %v1480, %v1478
        %v1705 = vpack.c.bf16 %v1483, %v1481
        %v1706 = vpack.c.bf16 %v1484, %v1482
        %v1707 = vpack.c.bf16 %v1487, %v1485
        %v1708 = vpack.c.bf16 %v1488, %v1486
        %v1709 = vpack.c.bf16 %v1491, %v1489
        %v1710 = vpack.c.bf16 %v1492, %v1490
        %v1711 = vpack.c.bf16 %v1495, %v1493
        %v1712 = vpack.c.bf16 %v1496, %v1494
        %v1713 = vpack.c.bf16 %v1499, %v1497
        %v1714 = vpack.c.bf16 %v1500, %v1498
        %v1715 = vpack.c.bf16 %v1503, %v1501
        %v1716 = vpack.c.bf16 %v1504, %v1502
        %v1717 = vpack.c.bf16 %v1507, %v1505
        %v1718 = vpack.c.bf16 %v1508, %v1506
        %v1719 = vpack.c.bf16 %v1511, %v1509
        %v1720 = vpack.c.bf16 %v1512, %v1510
        %v1721 = vpack.c.bf16 %v1515, %v1513
        %v1722 = vpack.c.bf16 %v1516, %v1514
        %v1723 = vpack.c.bf16 %v1519, %v1517
        %v1724 = vpack.c.bf16 %v1520, %v1518
        %v1725 = vpack.c.bf16 %v1523, %v1521
        %v1726 = vpack.c.bf16 %v1524, %v1522
        %v1727 = vpack.c.bf16 %v1527, %v1525
        %v1728 = vpack.c.bf16 %v1528, %v1526
        %v1729 = vpack.c.bf16 %v1531, %v1529
        %v1730 = vpack.c.bf16 %v1532, %v1530
        %v1731 = vpack.c.bf16 %v1535, %v1533
        %v1732 = vpack.c.bf16 %v1536, %v1534
        %v1733 = vpack.c.bf16 %v1539, %v1537
        %v1734 = vpack.c.bf16 %v1540, %v1538
        %v1735 = vpack.c.bf16 %v1543, %v1541
        %v1736 = vpack.c.bf16 %v1544, %v1542
        %v1737 = vunpack.c.l.bf16 %v1545
        %v1738 = vunpack.c.l.bf16 %v1546
        %v1739 = vunpack.c.h.bf16 %v1545
        %v1740 = vunpack.c.h.bf16 %v1546
        %v1741 = vunpack.c.l.bf16 %v1547
        %v1742 = vunpack.c.l.bf16 %v1548
        %v1743 = vunpack.c.h.bf16 %v1547
        %v1744 = vunpack.c.h.bf16 %v1548
        %v1745 = vunpack.c.l.bf16 %v1549
        %v1746 = vunpack.c.l.bf16 %v1550
        %v1747 = vunpack.c.h.bf16 %v1549
        %v1748 = vunpack.c.h.bf16 %v1550
        %v1749 = vunpack.c.l.bf16 %v1551
        %v1750 = vunpack.c.l.bf16 %v1552
        %v1751 = vunpack.c.h.bf16 %v1551
        %v1752 = vunpack.c.h.bf16 %v1552
        %v1753 = vunpack.c.l.bf16 %v1553
        %v1754 = vunpack.c.l.bf16 %v1554
        %v1755 = vunpack.c.h.bf16 %v1553
        %v1756 = vunpack.c.h.bf16 %v1554
        %v1757 = vunpack.c.l.bf16 %v1555
        %v1758 = vunpack.c.l.bf16 %v1556
        %v1759 = vunpack.c.h.bf16 %v1555
        %v1760 = vunpack.c.h.bf16 %v1556
        %v1761 = vunpack.c.l.bf16 %v1557
        %v1762 = vunpack.c.l.bf16 %v1558
        %v1763 = vunpack.c.h.bf16 %v1557
        %v1764 = vunpack.c.h.bf16 %v1558
        %v1765 = vunpack.c.l.bf16 %v1559
        %v1766 = vunpack.c.l.bf16 %v1560
        %v1767 = vunpack.c.h.bf16 %v1559
        %v1768 = vunpack.c.h.bf16 %v1560
        %v1769 = vunpack.c.l.bf16 %v1561
        %v1770 = vunpack.c.l.bf16 %v1562
        %v1771 = vunpack.c.h.bf16 %v1561
        %v1772 = vunpack.c.h.bf16 %v1562
        %v1773 = vunpack.c.l.bf16 %v1563
        %v1774 = vunpack.c.l.bf16 %v1564
        %v1775 = vunpack.c.h.bf16 %v1563
        %v1776 = vunpack.c.h.bf16 %v1564
        %v1777 = vunpack.c.l.bf16 %v1565
        %v1778 = vunpack.c.l.bf16 %v1566
        %v1779 = vunpack.c.h.bf16 %v1565
        %v1780 = vunpack.c.h.bf16 %v1566
        %v1781 = vunpack.c.l.bf16 %v1567
        %v1782 = vunpack.c.l.bf16 %v1568
        %v1783 = vunpack.c.h.bf16 %v1567
        %v1784 = vunpack.c.h.bf16 %v1568
        %v1785 = vunpack.c.l.bf16 %v1569
        %v1786 = vunpack.c.l.bf16 %v1570
        %v1787 = vunpack.c.h.bf16 %v1569
        %v1788 = vunpack.c.h.bf16 %v1570
        %v1789 = vunpack.c.l.bf16 %v1571
        %v1790 = vunpack.c.l.bf16 %v1572
        %v1791 = vunpack.c.h.bf16 %v1571
        %v1792 = vunpack.c.h.bf16 %v1572
        %v1793 = vunpack.c.l.bf16 %v1573
        %v1794 = vunpack.c.l.bf16 %v1574
        %v1795 = vunpack.c.h.bf16 %v1573
        %v1796 = vunpack.c.h.bf16 %v1574
        %v1797 = vunpack.c.l.bf16 %v1575
        %v1798 = vunpack.c.l.bf16 %v1576
        %v1799 = vunpack.c.h.bf16 %v1575
        %v1800 = vunpack.c.h.bf16 %v1576
        %v1801 = vunpack.c.l.bf16 %v1577
        %v1802 = vunpack.c.l.bf16 %v1578
        %v1803 = vunpack.c.h.bf16 %v1577
        %v1804 = vunpack.c.h.bf16 %v1578
        %v1805 = vunpack.c.l.bf16 %v1579
        %v1806 = vunpack.c.l.bf16 %v1580
        %v1807 = vunpack.c.h.bf16 %v1579
        %v1808 = vunpack.c.h.bf16 %v1580
        %v1809 = vunpack.c.l.bf16 %v1581
        %v1810 = vunpack.c.l.bf16 %v1582
        %v1811 = vunpack.c.h.bf16 %v1581
        %v1812 = vunpack.c.h.bf16 %v1582
        %v1813 = vunpack.c.l.bf16 %v1583
        %v1814 = vunpack.c.l.bf16 %v1584
        %v1815 = vunpack.c.h.bf16 %v1583
        %v1816 = vunpack.c.h.bf16 %v1584
        %v1817 = vunpack.c.l.bf16 %v1585
        %v1818 = vunpack.c.l.bf16 %v1586
        %v1819 = vunpack.c.h.bf16 %v1585
        %v1820 = vunpack.c.h.bf16 %v1586
        %v1821 = vunpack.c.l.bf16 %v1587
        %v1822 = vunpack.c.l.bf16 %v1588
        %v1823 = vunpack.c.h.bf16 %v1587
        %v1824 = vunpack.c.h.bf16 %v1588
        %v1825 = vunpack.c.l.bf16 %v1589
        %v1826 = vunpack.c.l.bf16 %v1590
        %v1827 = vunpack.c.h.bf16 %v1589
        %v1828 = vunpack.c.h.bf16 %v1590
        %v1829 = vunpack.c.l.bf16 %v1591
        %v1830 = vunpack.c.l.bf16 %v1592
        %v1831 = vunpack.c.h.bf16 %v1591
        %v1832 = vunpack.c.h.bf16 %v1592
        %v1833 = vunpack.c.l.bf16 %v1593
        %v1834 = vunpack.c.l.bf16 %v1594
        %v1835 = vunpack.c.h.bf16 %v1593
        %v1836 = vunpack.c.h.bf16 %v1594
        %v1837 = vunpack.c.l.bf16 %v1595
        %v1838 = vunpack.c.l.bf16 %v1596
        %v1839 = vunpack.c.h.bf16 %v1595
        %v1840 = vunpack.c.h.bf16 %v1596
        %v1841 = vunpack.c.l.bf16 %v1597
        %v1842 = vunpack.c.l.bf16 %v1598
        %v1843 = vunpack.c.h.bf16 %v1597
        %v1844 = vunpack.c.h.bf16 %v1598
        %v1845 = vunpack.c.l.bf16 %v1599
        %v1846 = vunpack.c.l.bf16 %v1600
        %v1847 = vunpack.c.h.bf16 %v1599
        %v1848 = vunpack.c.h.bf16 %v1600
        %v1849 = vunpack.c.l.bf16 %v1601
        %v1850 = vunpack.c.l.bf16 %v1602
        %v1851 = vunpack.c.h.bf16 %v1601
        %v1852 = vunpack.c.h.bf16 %v1602
        %v1853 = vunpack.c.l.bf16 %v1603
        %v1854 = vunpack.c.l.bf16 %v1604
        %v1855 = vunpack.c.h.bf16 %v1603
        %v1856 = vunpack.c.h.bf16 %v1604
        %v1857 = vunpack.c.l.bf16 %v1605
        %v1858 = vunpack.c.l.bf16 %v1606
        %v1859 = vunpack.c.h.bf16 %v1605
        %v1860 = vunpack.c.h.bf16 %v1606
        %v1861 = vunpack.c.l.bf16 %v1607
        %v1862 = vunpack.c.l.bf16 %v1608
        %v1863 = vunpack.c.h.bf16 %v1607
        %v1864 = vunpack.c.h.bf16 %v1608
        %v1865 = vunpack.c.l.bf16 %v1609
        %v1866 = vunpack.c.l.bf16 %v1610
        %v1867 = vunpack.c.h.bf16 %v1609
        %v1868 = vunpack.c.h.bf16 %v1610
        %v1869 = vunpack.c.l.bf16 %v1611
        %v1870 = vunpack.c.l.bf16 %v1612
        %v1871 = vunpack.c.h.bf16 %v1611
        %v1872 = vunpack.c.h.bf16 %v1612
        %v1873 = vunpack.c.l.bf16 %v1613
        %v1874 = vunpack.c.l.bf16 %v1614
        %v1875 = vunpack.c.h.bf16 %v1613
        %v1876 = vunpack.c.h.bf16 %v1614
        %v1877 = vunpack.c.l.bf16 %v1615
        %v1878 = vunpack.c.l.bf16 %v1616
        %v1879 = vunpack.c.h.bf16 %v1615
        %v1880 = vunpack.c.h.bf16 %v1616
        %v1881 = vunpack.c.l.bf16 %v1617
        %v1882 = vunpack.c.l.bf16 %v1618
        %v1883 = vunpack.c.h.bf16 %v1617
        %v1884 = vunpack.c.h.bf16 %v1618
        %v1885 = vunpack.c.l.bf16 %v1619
        %v1886 = vunpack.c.l.bf16 %v1620
        %v1887 = vunpack.c.h.bf16 %v1619
        %v1888 = vunpack.c.h.bf16 %v1620
        %v1889 = vunpack.c.l.bf16 %v1621
        %v1890 = vunpack.c.l.bf16 %v1622
        %v1891 = vunpack.c.h.bf16 %v1621
        %v1892 = vunpack.c.h.bf16 %v1622
        %v1893 = vunpack.c.l.bf16 %v1623
        %v1894 = vunpack.c.l.bf16 %v1624
        %v1895 = vunpack.c.h.bf16 %v1623
        %v1896 = vunpack.c.h.bf16 %v1624
        %v1897 = vunpack.c.l.bf16 %v1625
        %v1898 = vunpack.c.l.bf16 %v1626
        %v1899 = vunpack.c.h.bf16 %v1625
        %v1900 = vunpack.c.h.bf16 %v1626
        %v1901 = vunpack.c.l.bf16 %v1627
        %v1902 = vunpack.c.l.bf16 %v1628
        %v1903 = vunpack.c.h.bf16 %v1627
        %v1904 = vunpack.c.h.bf16 %v1628
        %v1905 = vunpack.c.l.bf16 %v1629
        %v1906 = vunpack.c.l.bf16 %v1630
        %v1907 = vunpack.c.h.bf16 %v1629
        %v1908 = vunpack.c.h.bf16 %v1630
        %v1909 = vunpack.c.l.bf16 %v1631
        %v1910 = vunpack.c.l.bf16 %v1632
        %v1911 = vunpack.c.h.bf16 %v1631
        %v1912 = vunpack.c.h.bf16 %v1632
        %v1913 = vunpack.c.l.bf16 %v1633
        %v1914 = vunpack.c.l.bf16 %v1634
        %v1915 = vunpack.c.h.bf16 %v1633
        %v1916 = vunpack.c.h.bf16 %v1634
        %v1917 = vunpack.c.l.bf16 %v1635
        %v1918 = vunpack.c.l.bf16 %v1636
        %v1919 = vunpack.c.h.bf16 %v1635
        %v1920 = vunpack.c.h.bf16 %v1636
        %v1921 = vunpack.c.l.bf16 %v1637
        %v1922 = vunpack.c.l.bf16 %v1638
        %v1923 = vunpack.c.h.bf16 %v1637
        %v1924 = vunpack.c.h.bf16 %v1638
        %v1925 = vunpack.c.l.bf16 %v1639
        %v1926 = vunpack.c.l.bf16 %v1640
        %v1927 = vunpack.c.h.bf16 %v1639
        %v1928 = vunpack.c.h.bf16 %v1640
        %v1929 = vunpack.c.l.bf16 %v1641
        %v1930 = vunpack.c.l.bf16 %v1642
        %v1931 = vunpack.c.h.bf16 %v1641
        %v1932 = vunpack.c.h.bf16 %v1642
        %v1933 = vunpack.c.l.bf16 %v1643
        %v1934 = vunpack.c.l.bf16 %v1644
        %v1935 = vunpack.c.h.bf16 %v1643
        %v1936 = vunpack.c.h.bf16 %v1644
        %v1937 = vunpack.c.l.bf16 %v1645
        %v1938 = vunpack.c.l.bf16 %v1646
        %v1939 = vunpack.c.h.bf16 %v1645
        %v1940 = vunpack.c.h.bf16 %v1646
        %v1941 = vunpack.c.l.bf16 %v1647
        %v1942 = vunpack.c.l.bf16 %v1648
        %v1943 = vunpack.c.h.bf16 %v1647
        %v1944 = vunpack.c.h.bf16 %v1648
        %v1945 = vunpack.c.l.bf16 %v1649
        %v1946 = vunpack.c.l.bf16 %v1650
        %v1947 = vunpack.c.h.bf16 %v1649
        %v1948 = vunpack.c.h.bf16 %v1650
        %v1949 = vunpack.c.l.bf16 %v1651
        %v1950 = vunpack.c.l.bf16 %v1652
        %v1951 = vunpack.c.h.bf16 %v1651
        %v1952 = vunpack.c.h.bf16 %v1652
        %v1953 = vunpack.c.l.bf16 %v1653
        %v1954 = vunpack.c.l.bf16 %v1654
        %v1955 = vunpack.c.h.bf16 %v1653
        %v1956 = vunpack.c.h.bf16 %v1654
        %v1957 = vunpack.c.l.bf16 %v1655
        %v1958 = vunpack.c.l.bf16 %v1656
        %v1959 = vunpack.c.h.bf16 %v1655
        %v1960 = vunpack.c.h.bf16 %v1656
        %v1961 = vunpack.c.l.bf16 %v1657
        %v1962 = vunpack.c.l.bf16 %v1658
        %v1963 = vunpack.c.h.bf16 %v1657
        %v1964 = vunpack.c.h.bf16 %v1658
        %v1965 = vunpack.c.l.bf16 %v1659
        %v1966 = vunpack.c.l.bf16 %v1660
        %v1967 = vunpack.c.h.bf16 %v1659
        %v1968 = vunpack.c.h.bf16 %v1660
        %v1969 = vunpack.c.l.bf16 %v1661
        %v1970 = vunpack.c.l.bf16 %v1662
        %v1971 = vunpack.c.h.bf16 %v1661
        %v1972 = vunpack.c.h.bf16 %v1662
        %v1973 = vunpack.c.l.bf16 %v1663
        %v1974 = vunpack.c.l.bf16 %v1664
        %v1975 = vunpack.c.h.bf16 %v1663
        %v1976 = vunpack.c.h.bf16 %v1664
        %v1977 = vunpack.c.l.bf16 %v1665
        %v1978 = vunpack.c.l.bf16 %v1666
        %v1979 = vunpack.c.h.bf16 %v1665
        %v1980 = vunpack.c.h.bf16 %v1666
        %v1981 = vunpack.c.l.bf16 %v1667
        %v1982 = vunpack.c.l.bf16 %v1668
        %v1983 = vunpack.c.h.bf16 %v1667
        %v1984 = vunpack.c.h.bf16 %v1668
        %v1985 = vunpack.c.l.bf16 %v1669
        %v1986 = vunpack.c.l.bf16 %v1670
        %v1987 = vunpack.c.h.bf16 %v1669
        %v1988 = vunpack.c.h.bf16 %v1670
        %v1989 = vunpack.c.l.bf16 %v1671
        %v1990 = vunpack.c.l.bf16 %v1672
        %v1991 = vunpack.c.h.bf16 %v1671
        %v1992 = vunpack.c.h.bf16 %v1672
        %v1993 = vunpack.c.l.bf16 %v1673
        %v1994 = vunpack.c.l.bf16 %v1674
        %v1995 = vunpack.c.h.bf16 %v1673
        %v1996 = vunpack.c.h.bf16 %v1674
        %v1997 = vunpack.c.l.bf16 %v1675
        %v1998 = vunpack.c.l.bf16 %v1676
        %v1999 = vunpack.c.h.bf16 %v1675
        %v2000 = vunpack.c.h.bf16 %v1676
        %v2001 = vunpack.c.l.bf16 %v1677
        %v2002 = vunpack.c.l.bf16 %v1678
        %v2003 = vunpack.c.h.bf16 %v1677
        %v2004 = vunpack.c.h.bf16 %v1678
        %v2005 = vunpack.c.l.bf16 %v1679
        %v2006 = vunpack.c.l.bf16 %v1680
        %v2007 = vunpack.c.h.bf16 %v1679
        %v2008 = vunpack.c.h.bf16 %v1680
        %v2009 = vunpack.c.l.bf16 %v1681
        %v2010 = vunpack.c.l.bf16 %v1682
        %v2011 = vunpack.c.h.bf16 %v1681
        %v2012 = vunpack.c.h.bf16 %v1682
        %v2013 = vunpack.c.l.bf16 %v1683
        %v2014 = vunpack.c.l.bf16 %v1684
        %v2015 = vunpack.c.h.bf16 %v1683
        %v2016 = vunpack.c.h.bf16 %v1684
        %v2017 = vunpack.c.l.bf16 %v1685
        %v2018 = vunpack.c.l.bf16 %v1686
        %v2019 = vunpack.c.h.bf16 %v1685
        %v2020 = vunpack.c.h.bf16 %v1686
        %v2021 = vunpack.c.l.bf16 %v1687
        %v2022 = vunpack.c.l.bf16 %v1688
        %v2023 = vunpack.c.h.bf16 %v1687
        %v2024 = vunpack.c.h.bf16 %v1688
        %v2025 = vunpack.c.l.bf16 %v1689
        %v2026 = vunpack.c.l.bf16 %v1690
        %v2027 = vunpack.c.h.bf16 %v1689
        %v2028 = vunpack.c.h.bf16 %v1690
        %v2029 = vunpack.c.l.bf16 %v1691
        %v2030 = vunpack.c.l.bf16 %v1692
        %v2031 = vunpack.c.h.bf16 %v1691
        %v2032 = vunpack.c.h.bf16 %v1692
        %v2033 = vunpack.c.l.bf16 %v1693
        %v2034 = vunpack.c.l.bf16 %v1694
        %v2035 = vunpack.c.h.bf16 %v1693
        %v2036 = vunpack.c.h.bf16 %v1694
        %v2037 = vunpack.c.l.bf16 %v1695
        %v2038 = vunpack.c.l.bf16 %v1696
        %v2039 = vunpack.c.h.bf16 %v1695
        %v2040 = vunpack.c.h.bf16 %v1696
        %v2041 = vunpack.c.l.bf16 %v1697
        %v2042 = vunpack.c.l.bf16 %v1698
        %v2043 = vunpack.c.h.bf16 %v1697
        %v2044 = vunpack.c.h.bf16 %v1698
        %v2045 = vunpack.c.l.bf16 %v1699
        %v2046 = vunpack.c.l.bf16 %v1700
        %v2047 = vunpack.c.h.bf16 %v1699
        %v2048 = vunpack.c.h.bf16 %v1700
        %v2049 = vunpack.c.l.bf16 %v1701
        %v2050 = vunpack.c.l.bf16 %v1702
        %v2051 = vunpack.c.h.bf16 %v1701
        %v2052 = vunpack.c.h.bf16 %v1702
        %v2053 = vunpack.c.l.bf16 %v1703
        %v2054 = vunpack.c.l.bf16 %v1704
        %v2055 = vunpack.c.h.bf16 %v1703
        %v2056 = vunpack.c.h.bf16 %v1704
        %v2057 = vunpack.c.l.bf16 %v1705
        %v2058 = vunpack.c.l.bf16 %v1706
        %v2059 = vunpack.c.h.bf16 %v1705
        %v2060 = vunpack.c.h.bf16 %v1706
        %v2061 = vunpack.c.l.bf16 %v1707
        %v2062 = vunpack.c.l.bf16 %v1708
        %v2063 = vunpack.c.h.bf16 %v1707
        %v2064 = vunpack.c.h.bf16 %v1708
        %v2065 = vunpack.c.l.bf16 %v1709
        %v2066 = vunpack.c.l.bf16 %v1710
        %v2067 = vunpack.c.h.bf16 %v1709
        %v2068 = vunpack.c.h.bf16 %v1710
        %v2069 = vunpack.c.l.bf16 %v1711
        %v2070 = vunpack.c.l.bf16 %v1712
        %v2071 = vunpack.c.h.bf16 %v1711
        %v2072 = vunpack.c.h.bf16 %v1712
        %v2073 = vunpack.c.l.bf16 %v1713
        %v2074 = vunpack.c.l.bf16 %v1714
        %v2075 = vunpack.c.h.bf16 %v1713
        %v2076 = vunpack.c.h.bf16 %v1714
        %v2077 = vunpack.c.l.bf16 %v1715
        %v2078 = vunpack.c.l.bf16 %v1716
        %v2079 = vunpack.c.h.bf16 %v1715
        %v2080 = vunpack.c.h.bf16 %v1716
        %v2081 = vunpack.c.l.bf16 %v1717
        %v2082 = vunpack.c.l.bf16 %v1718
        %v2083 = vunpack.c.h.bf16 %v1717
        %v2084 = vunpack.c.h.bf16 %v1718
        %v2085 = vunpack.c.l.bf16 %v1719
        %v2086 = vunpack.c.l.bf16 %v1720
        %v2087 = vunpack.c.h.bf16 %v1719
        %v2088 = vunpack.c.h.bf16 %v1720
        %v2089 = vunpack.c.l.bf16 %v1721
        %v2090 = vunpack.c.l.bf16 %v1722
        %v2091 = vunpack.c.h.bf16 %v1721
        %v2092 = vunpack.c.h.bf16 %v1722
        %v2093 = vunpack.c.l.bf16 %v1723
        %v2094 = vunpack.c.l.bf16 %v1724
        %v2095 = vunpack.c.h.bf16 %v1723
        %v2096 = vunpack.c.h.bf16 %v1724
        %v2097 = vunpack.c.l.bf16 %v1725
        %v2098 = vunpack.c.l.bf16 %v1726
        %v2099 = vunpack.c.h.bf16 %v1725
        %v2100 = vunpack.c.h.bf16 %v1726
        %v2101 = vunpack.c.l.bf16 %v1727
        %v2102 = vunpack.c.l.bf16 %v1728
        %v2103 = vunpack.c.h.bf16 %v1727
        %v2104 = vunpack.c.h.bf16 %v1728
        %v2105 = vunpack.c.l.bf16 %v1729
        %v2106 = vunpack.c.l.bf16 %v1730
        %v2107 = vunpack.c.h.bf16 %v1729
        %v2108 = vunpack.c.h.bf16 %v1730
        %v2109 = vunpack.c.l.bf16 %v1731
        %v2110 = vunpack.c.l.bf16 %v1732
        %v2111 = vunpack.c.h.bf16 %v1731
        %v2112 = vunpack.c.h.bf16 %v1732
        %v2113 = vunpack.c.l.bf16 %v1733
        %v2114 = vunpack.c.l.bf16 %v1734
        %v2115 = vunpack.c.h.bf16 %v1733
        %v2116 = vunpack.c.h.bf16 %v1734
        %v2117 = vunpack.c.l.bf16 %v1735
        %v2118 = vunpack.c.l.bf16 %v1736
        %v2119 = vunpack.c.h.bf16 %v1735
        %v2120 = vunpack.c.h.bf16 %v1736
        %v2121 = vsub.f32 %v1161, %v1737
        %v2122 = vsub.f32 %v1162, %v1738
        %v2123 = vsub.f32 %v1163, %v1739
        %v2124 = vsub.f32 %v1164, %v1740
        %v2125 = vsub.f32 %v1165, %v1741
        %v2126 = vsub.f32 %v1166, %v1742
        %v2127 = vsub.f32 %v1167, %v1743
        %v2128 = vsub.f32 %v1168, %v1744
        %v2129 = vsub.f32 %v1169, %v1745
        %v2130 = vsub.f32 %v1170, %v1746
        %v2131 = vsub.f32 %v1171, %v1747
        %v2132 = vsub.f32 %v1172, %v1748
        %v2133 = vsub.f32 %v1173, %v1749
        %v2134 = vsub.f32 %v1174, %v1750
        %v2135 = vsub.f32 %v1175, %v1751
        %v2136 = vsub.f32 %v1176, %v1752
        %v2137 = vsub.f32 %v1177, %v1753
        %v2138 = vsub.f32 %v1178, %v1754
        %v2139 = vsub.f32 %v1179, %v1755
        %v2140 = vsub.f32 %v1180, %v1756
        %v2141 = vsub.f32 %v1181, %v1757
        %v2142 = vsub.f32 %v1182, %v1758
        %v2143 = vsub.f32 %v1183, %v1759
        %v2144 = vsub.f32 %v1184, %v1760
        %v2145 = vsub.f32 %v1185, %v1761
        %v2146 = vsub.f32 %v1186, %v1762
        %v2147 = vsub.f32 %v1187, %v1763
        %v2148 = vsub.f32 %v1188, %v1764
        %v2149 = vsub.f32 %v1189, %v1765
        %v2150 = vsub.f32 %v1190, %v1766
        %v2151 = vsub.f32 %v1191, %v1767
        %v2152 = vsub.f32 %v1192, %v1768
        %v2153 = vsub.f32 %v1193, %v1769
        %v2154 = vsub.f32 %v1194, %v1770
        %v2155 = vsub.f32 %v1195, %v1771
        %v2156 = vsub.f32 %v1196, %v1772
        %v2157 = vsub.f32 %v1197, %v1773
        %v2158 = vsub.f32 %v1198, %v1774
        %v2159 = vsub.f32 %v1199, %v1775
        %v2160 = vsub.f32 %v1200, %v1776
        %v2161 = vsub.f32 %v1201, %v1777
        %v2162 = vsub.f32 %v1202, %v1778
        %v2163 = vsub.f32 %v1203, %v1779
        %v2164 = vsub.f32 %v1204, %v1780
        %v2165 = vsub.f32 %v1205, %v1781
        %v2166 = vsub.f32 %v1206, %v1782
        %v2167 = vsub.f32 %v1207, %v1783
        %v2168 = vsub.f32 %v1208, %v1784
        %v2169 = vsub.f32 %v1209, %v1785
        %v2170 = vsub.f32 %v1210, %v1786
        %v2171 = vsub.f32 %v1211, %v1787
        %v2172 = vsub.f32 %v1212, %v1788
        %v2173 = vsub.f32 %v1213, %v1789
        %v2174 = vsub.f32 %v1214, %v1790
        %v2175 = vsub.f32 %v1215, %v1791
        %v2176 = vsub.f32 %v1216, %v1792
        %v2177 = vsub.f32 %v1217, %v1793
        %v2178 = vsub.f32 %v1218, %v1794
        %v2179 = vsub.f32 %v1219, %v1795
        %v2180 = vsub.f32 %v1220, %v1796
        %v2181 = vsub.f32 %v1221, %v1797
        %v2182 = vsub.f32 %v1222, %v1798
        %v2183 = vsub.f32 %v1223, %v1799
        %v2184 = vsub.f32 %v1224, %v1800
        %v2185 = vsub.f32 %v1225, %v1801
        %v2186 = vsub.f32 %v1226, %v1802
        %v2187 = vsub.f32 %v1227, %v1803
        %v2188 = vsub.f32 %v1228, %v1804
        %v2189 = vsub.f32 %v1229, %v1805
        %v2190 = vsub.f32 %v1230, %v1806
        %v2191 = vsub.f32 %v1231, %v1807
        %v2192 = vsub.f32 %v1232, %v1808
        %v2193 = vsub.f32 %v1233, %v1809
        %v2194 = vsub.f32 %v1234, %v1810
        %v2195 = vsub.f32 %v1235, %v1811
        %v2196 = vsub.f32 %v1236, %v1812
        %v2197 = vsub.f32 %v1237, %v1813
        %v2198 = vsub.f32 %v1238, %v1814
        %v2199 = vsub.f32 %v1239, %v1815
        %v2200 = vsub.f32 %v1240, %v1816
        %v2201 = vsub.f32 %v1241, %v1817
        %v2202 = vsub.f32 %v1242, %v1818
        %v2203 = vsub.f32 %v1243, %v1819
        %v2204 = vsub.f32 %v1244, %v1820
        %v2205 = vsub.f32 %v1245, %v1821
        %v2206 = vsub.f32 %v1246, %v1822
        %v2207 = vsub.f32 %v1247, %v1823
        %v2208 = vsub.f32 %v1248, %v1824
        %v2209 = vsub.f32 %v1249, %v1825
        %v2210 = vsub.f32 %v1250, %v1826
        %v2211 = vsub.f32 %v1251, %v1827
        %v2212 = vsub.f32 %v1252, %v1828
        %v2213 = vsub.f32 %v1253, %v1829
        %v2214 = vsub.f32 %v1254, %v1830
        %v2215 = vsub.f32 %v1255, %v1831
        %v2216 = vsub.f32 %v1256, %v1832
        %v2217 = vsub.f32 %v1257, %v1833
        %v2218 = vsub.f32 %v1258, %v1834
        %v2219 = vsub.f32 %v1259, %v1835
        %v2220 = vsub.f32 %v1260, %v1836
        %v2221 = vsub.f32 %v1261, %v1837
        %v2222 = vsub.f32 %v1262, %v1838
        %v2223 = vsub.f32 %v1263, %v1839
        %v2224 = vsub.f32 %v1264, %v1840
        %v2225 = vsub.f32 %v1265, %v1841
        %v2226 = vsub.f32 %v1266, %v1842
        %v2227 = vsub.f32 %v1267, %v1843
        %v2228 = vsub.f32 %v1268, %v1844
        %v2229 = vsub.f32 %v1269, %v1845
        %v2230 = vsub.f32 %v1270, %v1846
        %v2231 = vsub.f32 %v1271, %v1847
        %v2232 = vsub.f32 %v1272, %v1848
        %v2233 = vsub.f32 %v1273, %v1849
        %v2234 = vsub.f32 %v1274, %v1850
        %v2235 = vsub.f32 %v1275, %v1851
        %v2236 = vsub.f32 %v1276, %v1852
        %v2237 = vsub.f32 %v1277, %v1853
        %v2238 = vsub.f32 %v1278, %v1854
        %v2239 = vsub.f32 %v1279, %v1855
        %v2240 = vsub.f32 %v1280, %v1856
        %v2241 = vsub.f32 %v1281, %v1857
        %v2242 = vsub.f32 %v1282, %v1858
        %v2243 = vsub.f32 %v1283, %v1859
        %v2244 = vsub.f32 %v1284, %v1860
        %v2245 = vsub.f32 %v1285, %v1861
        %v2246 = vsub.f32 %v1286, %v1862
        %v2247 = vsub.f32 %v1287, %v1863
        %v2248 = vsub.f32 %v1288, %v1864
        %v2249 = vsub.f32 %v1289, %v1865
        %v2250 = vsub.f32 %v1290, %v1866
        %v2251 = vsub.f32 %v1291, %v1867
        %v2252 = vsub.f32 %v1292, %v1868
        %v2253 = vsub.f32 %v1293, %v1869
        %v2254 = vsub.f32 %v1294, %v1870
        %v2255 = vsub.f32 %v1295, %v1871
        %v2256 = vsub.f32 %v1296, %v1872
        %v2257 = vsub.f32 %v1297, %v1873
        %v2258 = vsub.f32 %v1298, %v1874
        %v2259 = vsub.f32 %v1299, %v1875
        %v2260 = vsub.f32 %v1300, %v1876
        %v2261 = vsub.f32 %v1301, %v1877
        %v2262 = vsub.f32 %v1302, %v1878
        %v2263 = vsub.f32 %v1303, %v1879
        %v2264 = vsub.f32 %v1304, %v1880
        %v2265 = vsub.f32 %v1305, %v1881
        %v2266 = vsub.f32 %v1306, %v1882
        %v2267 = vsub.f32 %v1307, %v1883
        %v2268 = vsub.f32 %v1308, %v1884
        %v2269 = vsub.f32 %v1309, %v1885
        %v2270 = vsub.f32 %v1310, %v1886
        %v2271 = vsub.f32 %v1311, %v1887
        %v2272 = vsub.f32 %v1312, %v1888
        %v2273 = vsub.f32 %v1313, %v1889
        %v2274 = vsub.f32 %v1314, %v1890
        %v2275 = vsub.f32 %v1315, %v1891
        %v2276 = vsub.f32 %v1316, %v1892
        %v2277 = vsub.f32 %v1317, %v1893
        %v2278 = vsub.f32 %v1318, %v1894
        %v2279 = vsub.f32 %v1319, %v1895
        %v2280 = vsub.f32 %v1320, %v1896
        %v2281 = vsub.f32 %v1321, %v1897
        %v2282 = vsub.f32 %v1322, %v1898
        %v2283 = vsub.f32 %v1323, %v1899
        %v2284 = vsub.f32 %v1324, %v1900
        %v2285 = vsub.f32 %v1325, %v1901
        %v2286 = vsub.f32 %v1326, %v1902
        %v2287 = vsub.f32 %v1327, %v1903
        %v2288 = vsub.f32 %v1328, %v1904
        %v2289 = vsub.f32 %v1329, %v1905
        %v2290 = vsub.f32 %v1330, %v1906
        %v2291 = vsub.f32 %v1331, %v1907
        %v2292 = vsub.f32 %v1332, %v1908
        %v2293 = vsub.f32 %v1333, %v1909
        %v2294 = vsub.f32 %v1334, %v1910
        %v2295 = vsub.f32 %v1335, %v1911
        %v2296 = vsub.f32 %v1336, %v1912
        %v2297 = vsub.f32 %v1337, %v1913
        %v2298 = vsub.f32 %v1338, %v1914
        %v2299 = vsub.f32 %v1339, %v1915
        %v2300 = vsub.f32 %v1340, %v1916
        %v2301 = vsub.f32 %v1341, %v1917
        %v2302 = vsub.f32 %v1342, %v1918
        %v2303 = vsub.f32 %v1343, %v1919
        %v2304 = vsub.f32 %v1344, %v1920
        %v2305 = vsub.f32 %v1345, %v1921
        %v2306 = vsub.f32 %v1346, %v1922
        %v2307 = vsub.f32 %v1347, %v1923
        %v2308 = vsub.f32 %v1348, %v1924
        %v2309 = vsub.f32 %v1349, %v1925
        %v2310 = vsub.f32 %v1350, %v1926
        %v2311 = vsub.f32 %v1351, %v1927
        %v2312 = vsub.f32 %v1352, %v1928
        %v2313 = vsub.f32 %v1353, %v1929
        %v2314 = vsub.f32 %v1354, %v1930
        %v2315 = vsub.f32 %v1355, %v1931
        %v2316 = vsub.f32 %v1356, %v1932
        %v2317 = vsub.f32 %v1357, %v1933
        %v2318 = vsub.f32 %v1358, %v1934
        %v2319 = vsub.f32 %v1359, %v1935
        %v2320 = vsub.f32 %v1360, %v1936
        %v2321 = vsub.f32 %v1361, %v1937
        %v2322 = vsub.f32 %v1362, %v1938
        %v2323 = vsub.f32 %v1363, %v1939
        %v2324 = vsub.f32 %v1364, %v1940
        %v2325 = vsub.f32 %v1365, %v1941
        %v2326 = vsub.f32 %v1366, %v1942
        %v2327 = vsub.f32 %v1367, %v1943
        %v2328 = vsub.f32 %v1368, %v1944
        %v2329 = vsub.f32 %v1369, %v1945
        %v2330 = vsub.f32 %v1370, %v1946
        %v2331 = vsub.f32 %v1371, %v1947
        %v2332 = vsub.f32 %v1372, %v1948
        %v2333 = vsub.f32 %v1373, %v1949
        %v2334 = vsub.f32 %v1374, %v1950
        %v2335 = vsub.f32 %v1375, %v1951
        %v2336 = vsub.f32 %v1376, %v1952
        %v2337 = vsub.f32 %v1377, %v1953
        %v2338 = vsub.f32 %v1378, %v1954
        %v2339 = vsub.f32 %v1379, %v1955
        %v2340 = vsub.f32 %v1380, %v1956
        %v2341 = vsub.f32 %v1381, %v1957
        %v2342 = vsub.f32 %v1382, %v1958
        %v2343 = vsub.f32 %v1383, %v1959
        %v2344 = vsub.f32 %v1384, %v1960
        %v2345 = vsub.f32 %v1385, %v1961
        %v2346 = vsub.f32 %v1386, %v1962
        %v2347 = vsub.f32 %v1387, %v1963
        %v2348 = vsub.f32 %v1388, %v1964
        %v2349 = vsub.f32 %v1389, %v1965
        %v2350 = vsub.f32 %v1390, %v1966
        %v2351 = vsub.f32 %v1391, %v1967
        %v2352 = vsub.f32 %v1392, %v1968
        %v2353 = vsub.f32 %v1393, %v1969
        %v2354 = vsub.f32 %v1394, %v1970
        %v2355 = vsub.f32 %v1395, %v1971
        %v2356 = vsub.f32 %v1396, %v1972
        %v2357 = vsub.f32 %v1397, %v1973
        %v2358 = vsub.f32 %v1398, %v1974
        %v2359 = vsub.f32 %v1399, %v1975
        %v2360 = vsub.f32 %v1400, %v1976
        %v2361 = vsub.f32 %v1401, %v1977
        %v2362 = vsub.f32 %v1402, %v1978
        %v2363 = vsub.f32 %v1403, %v1979
        %v2364 = vsub.f32 %v1404, %v1980
        %v2365 = vsub.f32 %v1405, %v1981
        %v2366 = vsub.f32 %v1406, %v1982
        %v2367 = vsub.f32 %v1407, %v1983
        %v2368 = vsub.f32 %v1408, %v1984
        %v2369 = vsub.f32 %v1409, %v1985
        %v2370 = vsub.f32 %v1410, %v1986
        %v2371 = vsub.f32 %v1411, %v1987
        %v2372 = vsub.f32 %v1412, %v1988
        %v2373 = vsub.f32 %v1413, %v1989
        %v2374 = vsub.f32 %v1414, %v1990
        %v2375 = vsub.f32 %v1415, %v1991
        %v2376 = vsub.f32 %v1416, %v1992
        %v2377 = vsub.f32 %v1417, %v1993
        %v2378 = vsub.f32 %v1418, %v1994
        %v2379 = vsub.f32 %v1419, %v1995
        %v2380 = vsub.f32 %v1420, %v1996
        %v2381 = vsub.f32 %v1421, %v1997
        %v2382 = vsub.f32 %v1422, %v1998
        %v2383 = vsub.f32 %v1423, %v1999
        %v2384 = vsub.f32 %v1424, %v2000
        %v2385 = vsub.f32 %v1425, %v2001
        %v2386 = vsub.f32 %v1426, %v2002
        %v2387 = vsub.f32 %v1427, %v2003
        %v2388 = vsub.f32 %v1428, %v2004
        %v2389 = vsub.f32 %v1429, %v2005
        %v2390 = vsub.f32 %v1430, %v2006
        %v2391 = vsub.f32 %v1431, %v2007
        %v2392 = vsub.f32 %v1432, %v2008
        %v2393 = vsub.f32 %v1433, %v2009
        %v2394 = vsub.f32 %v1434, %v2010
        %v2395 = vsub.f32 %v1435, %v2011
        %v2396 = vsub.f32 %v1436, %v2012
        %v2397 = vsub.f32 %v1437, %v2013
        %v2398 = vsub.f32 %v1438, %v2014
        %v2399 = vsub.f32 %v1439, %v2015
        %v2400 = vsub.f32 %v1440, %v2016
        %v2401 = vsub.f32 %v1441, %v2017
        %v2402 = vsub.f32 %v1442, %v2018
        %v2403 = vsub.f32 %v1443, %v2019
        %v2404 = vsub.f32 %v1444, %v2020
        %v2405 = vsub.f32 %v1445, %v2021
        %v2406 = vsub.f32 %v1446, %v2022
        %v2407 = vsub.f32 %v1447, %v2023
        %v2408 = vsub.f32 %v1448, %v2024
        %v2409 = vsub.f32 %v1449, %v2025
        %v2410 = vsub.f32 %v1450, %v2026
        %v2411 = vsub.f32 %v1451, %v2027
        %v2412 = vsub.f32 %v1452, %v2028
        %v2413 = vsub.f32 %v1453, %v2029
        %v2414 = vsub.f32 %v1454, %v2030
        %v2415 = vsub.f32 %v1455, %v2031
        %v2416 = vsub.f32 %v1456, %v2032
        %v2417 = vsub.f32 %v1457, %v2033
        %v2418 = vsub.f32 %v1458, %v2034
        %v2419 = vsub.f32 %v1459, %v2035
        %v2420 = vsub.f32 %v1460, %v2036
        %v2421 = vsub.f32 %v1461, %v2037
        %v2422 = vsub.f32 %v1462, %v2038
        %v2423 = vsub.f32 %v1463, %v2039
        %v2424 = vsub.f32 %v1464, %v2040
        %v2425 = vsub.f32 %v1465, %v2041
        %v2426 = vsub.f32 %v1466, %v2042
        %v2427 = vsub.f32 %v1467, %v2043
        %v2428 = vsub.f32 %v1468, %v2044
        %v2429 = vsub.f32 %v1469, %v2045
        %v2430 = vsub.f32 %v1470, %v2046
        %v2431 = vsub.f32 %v1471, %v2047
        %v2432 = vsub.f32 %v1472, %v2048
        %v2433 = vsub.f32 %v1473, %v2049
        %v2434 = vsub.f32 %v1474, %v2050
        %v2435 = vsub.f32 %v1475, %v2051
        %v2436 = vsub.f32 %v1476, %v2052
        %v2437 = vsub.f32 %v1477, %v2053
        %v2438 = vsub.f32 %v1478, %v2054
        %v2439 = vsub.f32 %v1479, %v2055
        %v2440 = vsub.f32 %v1480, %v2056
        %v2441 = vsub.f32 %v1481, %v2057
        %v2442 = vsub.f32 %v1482, %v2058
        %v2443 = vsub.f32 %v1483, %v2059
        %v2444 = vsub.f32 %v1484, %v2060
        %v2445 = vsub.f32 %v1485, %v2061
        %v2446 = vsub.f32 %v1486, %v2062
        %v2447 = vsub.f32 %v1487, %v2063
        %v2448 = vsub.f32 %v1488, %v2064
        %v2449 = vsub.f32 %v1489, %v2065
        %v2450 = vsub.f32 %v1490, %v2066
        %v2451 = vsub.f32 %v1491, %v2067
        %v2452 = vsub.f32 %v1492, %v2068
        %v2453 = vsub.f32 %v1493, %v2069
        %v2454 = vsub.f32 %v1494, %v2070
        %v2455 = vsub.f32 %v1495, %v2071
        %v2456 = vsub.f32 %v1496, %v2072
        %v2457 = vsub.f32 %v1497, %v2073
        %v2458 = vsub.f32 %v1498, %v2074
        %v2459 = vsub.f32 %v1499, %v2075
        %v2460 = vsub.f32 %v1500, %v2076
        %v2461 = vsub.f32 %v1501, %v2077
        %v2462 = vsub.f32 %v1502, %v2078
        %v2463 = vsub.f32 %v1503, %v2079
        %v2464 = vsub.f32 %v1504, %v2080
        %v2465 = vsub.f32 %v1505, %v2081
        %v2466 = vsub.f32 %v1506, %v2082
        %v2467 = vsub.f32 %v1507, %v2083
        %v2468 = vsub.f32 %v1508, %v2084
        %v2469 = vsub.f32 %v1509, %v2085
        %v2470 = vsub.f32 %v1510, %v2086
        %v2471 = vsub.f32 %v1511, %v2087
        %v2472 = vsub.f32 %v1512, %v2088
        %v2473 = vsub.f32 %v1513, %v2089
        %v2474 = vsub.f32 %v1514, %v2090
        %v2475 = vsub.f32 %v1515, %v2091
        %v2476 = vsub.f32 %v1516, %v2092
        %v2477 = vsub.f32 %v1517, %v2093
        %v2478 = vsub.f32 %v1518, %v2094
        %v2479 = vsub.f32 %v1519, %v2095
        %v2480 = vsub.f32 %v1520, %v2096
        %v2481 = vsub.f32 %v1521, %v2097
        %v2482 = vsub.f32 %v1522, %v2098
        %v2483 = vsub.f32 %v1523, %v2099
        %v2484 = vsub.f32 %v1524, %v2100
        %v2485 = vsub.f32 %v1525, %v2101
        %v2486 = vsub.f32 %v1526, %v2102
        %v2487 = vsub.f32 %v1527, %v2103
        %v2488 = vsub.f32 %v1528, %v2104
        %v2489 = vsub.f32 %v1529, %v2105
        %v2490 = vsub.f32 %v1530, %v2106
        %v2491 = vsub.f32 %v1531, %v2107
        %v2492 = vsub.f32 %v1532, %v2108
        %v2493 = vsub.f32 %v1533, %v2109
        %v2494 = vsub.f32 %v1534, %v2110
        %v2495 = vsub.f32 %v1535, %v2111
        %v2496 = vsub.f32 %v1536, %v2112
        %v2497 = vsub.f32 %v1537, %v2113
        %v2498 = vsub.f32 %v1538, %v2114
        %v2499 = vsub.f32 %v1539, %v2115
        %v2500 = vsub.f32 %v1540, %v2116
        %v2501 = vsub.f32 %v1541, %v2117
        %v2502 = vsub.f32 %v1542, %v2118
        %v2503 = vsub.f32 %v1543, %v2119
        %v2504 = vsub.f32 %v1544, %v2120
        %v2505 = vpack.c.bf16 %v2123, %v2121
        %v2506 = vpack.c.bf16 %v2124, %v2122
        %v2507 = vpack.c.bf16 %v2127, %v2125
        %v2508 = vpack.c.bf16 %v2128, %v2126
        %v2509 = vpack.c.bf16 %v2131, %v2129
        %v2510 = vpack.c.bf16 %v2132, %v2130
        %v2511 = vpack.c.bf16 %v2135, %v2133
        %v2512 = vpack.c.bf16 %v2136, %v2134
        %v2513 = vpack.c.bf16 %v2139, %v2137
        %v2514 = vpack.c.bf16 %v2140, %v2138
        %v2515 = vpack.c.bf16 %v2143, %v2141
        %v2516 = vpack.c.bf16 %v2144, %v2142
        %v2517 = vpack.c.bf16 %v2147, %v2145
        %v2518 = vpack.c.bf16 %v2148, %v2146
        %v2519 = vpack.c.bf16 %v2151, %v2149
        %v2520 = vpack.c.bf16 %v2152, %v2150
        %v2521 = vpack.c.bf16 %v2155, %v2153
        %v2522 = vpack.c.bf16 %v2156, %v2154
        %v2523 = vpack.c.bf16 %v2159, %v2157
        %v2524 = vpack.c.bf16 %v2160, %v2158
        %v2525 = vpack.c.bf16 %v2163, %v2161
        %v2526 = vpack.c.bf16 %v2164, %v2162
        %v2527 = vpack.c.bf16 %v2167, %v2165
        %v2528 = vpack.c.bf16 %v2168, %v2166
        %v2529 = vpack.c.bf16 %v2171, %v2169
        %v2530 = vpack.c.bf16 %v2172, %v2170
        %v2531 = vpack.c.bf16 %v2175, %v2173
        %v2532 = vpack.c.bf16 %v2176, %v2174
        %v2533 = vpack.c.bf16 %v2179, %v2177
        %v2534 = vpack.c.bf16 %v2180, %v2178
        %v2535 = vpack.c.bf16 %v2183, %v2181
        %v2536 = vpack.c.bf16 %v2184, %v2182
        %v2537 = vpack.c.bf16 %v2187, %v2185
        %v2538 = vpack.c.bf16 %v2188, %v2186
        %v2539 = vpack.c.bf16 %v2191, %v2189
        %v2540 = vpack.c.bf16 %v2192, %v2190
        %v2541 = vpack.c.bf16 %v2195, %v2193
        %v2542 = vpack.c.bf16 %v2196, %v2194
        %v2543 = vpack.c.bf16 %v2199, %v2197
        %v2544 = vpack.c.bf16 %v2200, %v2198
        %v2545 = vpack.c.bf16 %v2203, %v2201
        %v2546 = vpack.c.bf16 %v2204, %v2202
        %v2547 = vpack.c.bf16 %v2207, %v2205
        %v2548 = vpack.c.bf16 %v2208, %v2206
        %v2549 = vpack.c.bf16 %v2211, %v2209
        %v2550 = vpack.c.bf16 %v2212, %v2210
        %v2551 = vpack.c.bf16 %v2215, %v2213
        %v2552 = vpack.c.bf16 %v2216, %v2214
        %v2553 = vpack.c.bf16 %v2219, %v2217
        %v2554 = vpack.c.bf16 %v2220, %v2218
        %v2555 = vpack.c.bf16 %v2223, %v2221
        %v2556 = vpack.c.bf16 %v2224, %v2222
        %v2557 = vpack.c.bf16 %v2227, %v2225
        %v2558 = vpack.c.bf16 %v2228, %v2226
        %v2559 = vpack.c.bf16 %v2231, %v2229
        %v2560 = vpack.c.bf16 %v2232, %v2230
        %v2561 = vpack.c.bf16 %v2235, %v2233
        %v2562 = vpack.c.bf16 %v2236, %v2234
        %v2563 = vpack.c.bf16 %v2239, %v2237
        %v2564 = vpack.c.bf16 %v2240, %v2238
        %v2565 = vpack.c.bf16 %v2243, %v2241
        %v2566 = vpack.c.bf16 %v2244, %v2242
        %v2567 = vpack.c.bf16 %v2247, %v2245
        %v2568 = vpack.c.bf16 %v2248, %v2246
        %v2569 = vpack.c.bf16 %v2251, %v2249
        %v2570 = vpack.c.bf16 %v2252, %v2250
        %v2571 = vpack.c.bf16 %v2255, %v2253
        %v2572 = vpack.c.bf16 %v2256, %v2254
        %v2573 = vpack.c.bf16 %v2259, %v2257
        %v2574 = vpack.c.bf16 %v2260, %v2258
        %v2575 = vpack.c.bf16 %v2263, %v2261
        %v2576 = vpack.c.bf16 %v2264, %v2262
        %v2577 = vpack.c.bf16 %v2267, %v2265
        %v2578 = vpack.c.bf16 %v2268, %v2266
        %v2579 = vpack.c.bf16 %v2271, %v2269
        %v2580 = vpack.c.bf16 %v2272, %v2270
        %v2581 = vpack.c.bf16 %v2275, %v2273
        %v2582 = vpack.c.bf16 %v2276, %v2274
        %v2583 = vpack.c.bf16 %v2279, %v2277
        %v2584 = vpack.c.bf16 %v2280, %v2278
        %v2585 = vpack.c.bf16 %v2283, %v2281
        %v2586 = vpack.c.bf16 %v2284, %v2282
        %v2587 = vpack.c.bf16 %v2287, %v2285
        %v2588 = vpack.c.bf16 %v2288, %v2286
        %v2589 = vpack.c.bf16 %v2291, %v2289
        %v2590 = vpack.c.bf16 %v2292, %v2290
        %v2591 = vpack.c.bf16 %v2295, %v2293
        %v2592 = vpack.c.bf16 %v2296, %v2294
        %v2593 = vpack.c.bf16 %v2299, %v2297
        %v2594 = vpack.c.bf16 %v2300, %v2298
        %v2595 = vpack.c.bf16 %v2303, %v2301
        %v2596 = vpack.c.bf16 %v2304, %v2302
        %v2597 = vpack.c.bf16 %v2307, %v2305
        %v2598 = vpack.c.bf16 %v2308, %v2306
        %v2599 = vpack.c.bf16 %v2311, %v2309
        %v2600 = vpack.c.bf16 %v2312, %v2310
        %v2601 = vpack.c.bf16 %v2315, %v2313
        %v2602 = vpack.c.bf16 %v2316, %v2314
        %v2603 = vpack.c.bf16 %v2319, %v2317
        %v2604 = vpack.c.bf16 %v2320, %v2318
        %v2605 = vpack.c.bf16 %v2323, %v2321
        %v2606 = vpack.c.bf16 %v2324, %v2322
        %v2607 = vpack.c.bf16 %v2327, %v2325
        %v2608 = vpack.c.bf16 %v2328, %v2326
        %v2609 = vpack.c.bf16 %v2331, %v2329
        %v2610 = vpack.c.bf16 %v2332, %v2330
        %v2611 = vpack.c.bf16 %v2335, %v2333
        %v2612 = vpack.c.bf16 %v2336, %v2334
        %v2613 = vpack.c.bf16 %v2339, %v2337
        %v2614 = vpack.c.bf16 %v2340, %v2338
        %v2615 = vpack.c.bf16 %v2343, %v2341
        %v2616 = vpack.c.bf16 %v2344, %v2342
        %v2617 = vpack.c.bf16 %v2347, %v2345
        %v2618 = vpack.c.bf16 %v2348, %v2346
        %v2619 = vpack.c.bf16 %v2351, %v2349
        %v2620 = vpack.c.bf16 %v2352, %v2350
        %v2621 = vpack.c.bf16 %v2355, %v2353
        %v2622 = vpack.c.bf16 %v2356, %v2354
        %v2623 = vpack.c.bf16 %v2359, %v2357
        %v2624 = vpack.c.bf16 %v2360, %v2358
        %v2625 = vpack.c.bf16 %v2363, %v2361
        %v2626 = vpack.c.bf16 %v2364, %v2362
        %v2627 = vpack.c.bf16 %v2367, %v2365
        %v2628 = vpack.c.bf16 %v2368, %v2366
        %v2629 = vpack.c.bf16 %v2371, %v2369
        %v2630 = vpack.c.bf16 %v2372, %v2370
        %v2631 = vpack.c.bf16 %v2375, %v2373
        %v2632 = vpack.c.bf16 %v2376, %v2374
        %v2633 = vpack.c.bf16 %v2379, %v2377
        %v2634 = vpack.c.bf16 %v2380, %v2378
        %v2635 = vpack.c.bf16 %v2383, %v2381
        %v2636 = vpack.c.bf16 %v2384, %v2382
        %v2637 = vpack.c.bf16 %v2387, %v2385
        %v2638 = vpack.c.bf16 %v2388, %v2386
        %v2639 = vpack.c.bf16 %v2391, %v2389
        %v2640 = vpack.c.bf16 %v2392, %v2390
        %v2641 = vpack.c.bf16 %v2395, %v2393
        %v2642 = vpack.c.bf16 %v2396, %v2394
        %v2643 = vpack.c.bf16 %v2399, %v2397
        %v2644 = vpack.c.bf16 %v2400, %v2398
        %v2645 = vpack.c.bf16 %v2403, %v2401
        %v2646 = vpack.c.bf16 %v2404, %v2402
        %v2647 = vpack.c.bf16 %v2407, %v2405
        %v2648 = vpack.c.bf16 %v2408, %v2406
        %v2649 = vpack.c.bf16 %v2411, %v2409
        %v2650 = vpack.c.bf16 %v2412, %v2410
        %v2651 = vpack.c.bf16 %v2415, %v2413
        %v2652 = vpack.c.bf16 %v2416, %v2414
        %v2653 = vpack.c.bf16 %v2419, %v2417
        %v2654 = vpack.c.bf16 %v2420, %v2418
        %v2655 = vpack.c.bf16 %v2423, %v2421
        %v2656 = vpack.c.bf16 %v2424, %v2422
        %v2657 = vpack.c.bf16 %v2427, %v2425
        %v2658 = vpack.c.bf16 %v2428, %v2426
        %v2659 = vpack.c.bf16 %v2431, %v2429
        %v2660 = vpack.c.bf16 %v2432, %v2430
        %v2661 = vpack.c.bf16 %v2435, %v2433
        %v2662 = vpack.c.bf16 %v2436, %v2434
        %v2663 = vpack.c.bf16 %v2439, %v2437
        %v2664 = vpack.c.bf16 %v2440, %v2438
        %v2665 = vpack.c.bf16 %v2443, %v2441
        %v2666 = vpack.c.bf16 %v2444, %v2442
        %v2667 = vpack.c.bf16 %v2447, %v2445
        %v2668 = vpack.c.bf16 %v2448, %v2446
        %v2669 = vpack.c.bf16 %v2451, %v2449
        %v2670 = vpack.c.bf16 %v2452, %v2450
        %v2671 = vpack.c.bf16 %v2455, %v2453
        %v2672 = vpack.c.bf16 %v2456, %v2454
        %v2673 = vpack.c.bf16 %v2459, %v2457
        %v2674 = vpack.c.bf16 %v2460, %v2458
        %v2675 = vpack.c.bf16 %v2463, %v2461
        %v2676 = vpack.c.bf16 %v2464, %v2462
        %v2677 = vpack.c.bf16 %v2467, %v2465
        %v2678 = vpack.c.bf16 %v2468, %v2466
        %v2679 = vpack.c.bf16 %v2471, %v2469
        %v2680 = vpack.c.bf16 %v2472, %v2470
        %v2681 = vpack.c.bf16 %v2475, %v2473
        %v2682 = vpack.c.bf16 %v2476, %v2474
        %v2683 = vpack.c.bf16 %v2479, %v2477
        %v2684 = vpack.c.bf16 %v2480, %v2478
        %v2685 = vpack.c.bf16 %v2483, %v2481
        %v2686 = vpack.c.bf16 %v2484, %v2482
        %v2687 = vpack.c.bf16 %v2487, %v2485
        %v2688 = vpack.c.bf16 %v2488, %v2486
        %v2689 = vpack.c.bf16 %v2491, %v2489
        %v2690 = vpack.c.bf16 %v2492, %v2490
        %v2691 = vpack.c.bf16 %v2495, %v2493
        %v2692 = vpack.c.bf16 %v2496, %v2494
        %v2693 = vpack.c.bf16 %v2499, %v2497
        %v2694 = vpack.c.bf16 %v2500, %v2498
        %v2695 = vpack.c.bf16 %v2503, %v2501
        %v2696 = vpack.c.bf16 %v2504, %v2502
        %v2721 = vunpack.c.l.b16 %v176
        %v2722 = vunpack.c.h.b16 %v176
        %v2723 = vunpack.c.l.b16 %v177
        %v2724 = vunpack.c.h.b16 %v177
        %v2725 = vunpack.c.l.b16 %v178
        %v2726 = vunpack.c.h.b16 %v178
        %v2727 = vunpack.c.l.b16 %v179
        %v2728 = vunpack.c.h.b16 %v179
        %v2729 = vunpack.c.l.b16 %v180
        %v2730 = vunpack.c.h.b16 %v180
        %v2731 = vunpack.c.l.b16 %v181
        %v2732 = vunpack.c.h.b16 %v181
        %v2733 = vunpack.c.l.b16 %v182
        %v2734 = vunpack.c.h.b16 %v182
        %v2735 = vunpack.c.l.b16 %v183
        %v2736 = vunpack.c.h.b16 %v183
        %v2737 = vunpack.c.l.b16 %v184
        %v2738 = vunpack.c.h.b16 %v184
        %v2739 = vunpack.c.l.b16 %v185
        %v2740 = vunpack.c.h.b16 %v185
        %v2741 = vunpack.c.l.b16 %v186
        %v2742 = vunpack.c.h.b16 %v186
        %v2743 = vunpack.c.l.b16 %v187
        %v2744 = vunpack.c.h.b16 %v187
        %v2745 = vunpack.c.l.b16 %v188
        %v2746 = vunpack.c.h.b16 %v188
        %v2747 = vunpack.c.l.b16 %v189
        %v2748 = vunpack.c.h.b16 %v189
        %v2749 = vunpack.c.l.b16 %v190
        %v2750 = vunpack.c.h.b16 %v190
        %v2751 = vunpack.c.l.b16 %v191
        %v2752 = vunpack.c.h.b16 %v191
        %v2753 = vunpack.c.l.b16 %v192
        %v2754 = vunpack.c.h.b16 %v192
        %v2755 = vunpack.c.l.b16 %v193
        %v2756 = vunpack.c.h.b16 %v193
        %v2757 = vunpack.c.l.b16 %v194
        %v2758 = vunpack.c.h.b16 %v194
        %v2759 = vunpack.c.l.b16 %v195
        %v2760 = vunpack.c.h.b16 %v195
        %v2761 = vunpack.c.l.b16 %v196
        %v2762 = vunpack.c.h.b16 %v196
        %v2763 = vunpack.c.l.b16 %v197
        %v2764 = vunpack.c.h.b16 %v197
        %v2765 = vunpack.c.l.b16 %v198
        %v2766 = vunpack.c.h.b16 %v198
        %v2767 = vunpack.c.l.b16 %v199
        %v2768 = vunpack.c.h.b16 %v199
        %v2769 = vpack.c.b16 %v2723, %v2721
        %v2770 = vpack.c.b16 %v2724, %v2722
        %v2771 = vpack.c.b16 %v2727, %v2725
        %v2772 = vpack.c.b16 %v2728, %v2726
        %v2773 = vpack.c.b16 %v2731, %v2729
        %v2774 = vpack.c.b16 %v2732, %v2730
        %v2775 = vpack.c.b16 %v2735, %v2733
        %v2776 = vpack.c.b16 %v2736, %v2734
        %v2777 = vpack.c.b16 %v2739, %v2737
        %v2778 = vpack.c.b16 %v2740, %v2738
        %v2779 = vpack.c.b16 %v2743, %v2741
        %v2780 = vpack.c.b16 %v2744, %v2742
        %v2781 = vpack.c.b16 %v2747, %v2745
        %v2782 = vpack.c.b16 %v2748, %v2746
        %v2783 = vpack.c.b16 %v2751, %v2749
        %v2784 = vpack.c.b16 %v2752, %v2750
        %v2785 = vpack.c.b16 %v2755, %v2753
        %v2786 = vpack.c.b16 %v2756, %v2754
        %v2787 = vpack.c.b16 %v2759, %v2757
        %v2788 = vpack.c.b16 %v2760, %v2758
        %v2789 = vpack.c.b16 %v2763, %v2761
        %v2790 = vpack.c.b16 %v2764, %v2762
        %v2791 = vpack.c.b16 %v2767, %v2765
        %v2792 = vpack.c.b16 %v2768, %v2766
        %vm2817 = vcmask 523264
        %v2819 = vsel %vm2817, %v2506, 0
        %v2822 = vsel %vm2817, %v2508, 0
        %v2825 = vsel %vm2817, %v2510, 0
        %v2828 = vsel %vm2817, %v2512, 0
        %v2831 = vsel %vm2817, %v2514, 0
        %v2834 = vsel %vm2817, %v2516, 0
        %v2837 = vsel %vm2817, %v2518, 0
        %v2840 = vsel %vm2817, %v2520, 0
        %v2843 = vsel %vm2817, %v2522, 0
        %v2846 = vsel %vm2817, %v2524, 0
        %v2849 = vsel %vm2817, %v2526, 0
        %v2852 = vsel %vm2817, %v2528, 0
        %v2855 = vsel %vm2817, %v2530, 0
        %v2858 = vsel %vm2817, %v2532, 0
        %v2861 = vsel %vm2817, %v2534, 0
        %v2864 = vsel %vm2817, %v2536, 0
        %v2867 = vsel %vm2817, %v2538, 0
        %v2870 = vsel %vm2817, %v2540, 0
        %v2873 = vsel %vm2817, %v2542, 0
        %v2876 = vsel %vm2817, %v2544, 0
        %v2879 = vsel %vm2817, %v2546, 0
        %v2882 = vsel %vm2817, %v2548, 0
        %v2885 = vsel %vm2817, %v2550, 0
        %v2888 = vsel %vm2817, %v2552, 0
        %v2891 = vsel %vm2817, %v2554, 0
        %v2894 = vsel %vm2817, %v2556, 0
        %v2897 = vsel %vm2817, %v2558, 0
        %v2900 = vsel %vm2817, %v2560, 0
        %v2903 = vsel %vm2817, %v2562, 0
        %v2906 = vsel %vm2817, %v2564, 0
        %v2909 = vsel %vm2817, %v2566, 0
        %v2912 = vsel %vm2817, %v2568, 0
        %v2915 = vsel %vm2817, %v2570, 0
        %v2918 = vsel %vm2817, %v2572, 0
        %v2921 = vsel %vm2817, %v2574, 0
        %v2924 = vsel %vm2817, %v2576, 0
        %v2927 = vsel %vm2817, %v2578, 0
        %v2930 = vsel %vm2817, %v2580, 0
        %v2933 = vsel %vm2817, %v2582, 0
        %v2936 = vsel %vm2817, %v2584, 0
        %v2939 = vsel %vm2817, %v2586, 0
        %v2942 = vsel %vm2817, %v2588, 0
        %v2945 = vsel %vm2817, %v2590, 0
        %v2948 = vsel %vm2817, %v2592, 0
        %v2951 = vsel %vm2817, %v2594, 0
        %v2954 = vsel %vm2817, %v2596, 0
        %v2957 = vsel %vm2817, %v2598, 0
        %v2960 = vsel %vm2817, %v2600, 0
        %v2963 = vsel %vm2817, %v2602, 0
        %v2966 = vsel %vm2817, %v2604, 0
        %v2969 = vsel %vm2817, %v2606, 0
        %v2972 = vsel %vm2817, %v2608, 0
        %v2975 = vsel %vm2817, %v2610, 0
        %v2978 = vsel %vm2817, %v2612, 0
        %v2981 = vsel %vm2817, %v2614, 0
        %v2984 = vsel %vm2817, %v2616, 0
        %v2987 = vsel %vm2817, %v2618, 0
        %v2990 = vsel %vm2817, %v2620, 0
        %v2993 = vsel %vm2817, %v2622, 0
        %v2996 = vsel %vm2817, %v2624, 0
        %v2999 = vsel %vm2817, %v2626, 0
        %v3002 = vsel %vm2817, %v2628, 0
        %v3005 = vsel %vm2817, %v2630, 0
        %v3008 = vsel %vm2817, %v2632, 0
        %v3011 = vsel %vm2817, %v2634, 0
        %v3014 = vsel %vm2817, %v2636, 0
        %v3017 = vsel %vm2817, %v2638, 0
        %v3020 = vsel %vm2817, %v2640, 0
        %v3023 = vsel %vm2817, %v2642, 0
        %v3026 = vsel %vm2817, %v2644, 0
        %v3029 = vsel %vm2817, %v2646, 0
        %v3032 = vsel %vm2817, %v2648, 0
        %v3035 = vsel %vm2817, %v2650, 0
        %v3038 = vsel %vm2817, %v2652, 0
        %v3041 = vsel %vm2817, %v2654, 0
        %v3044 = vsel %vm2817, %v2656, 0
        %v3047 = vsel %vm2817, %v2658, 0
        %v3050 = vsel %vm2817, %v2660, 0
        %v3053 = vsel %vm2817, %v2662, 0
        %v3056 = vsel %vm2817, %v2664, 0
        %v3059 = vsel %vm2817, %v2666, 0
        %v3062 = vsel %vm2817, %v2668, 0
        %v3065 = vsel %vm2817, %v2670, 0
        %v3068 = vsel %vm2817, %v2672, 0
        %v3071 = vsel %vm2817, %v2674, 0
        %v3074 = vsel %vm2817, %v2676, 0
        %v3077 = vsel %vm2817, %v2678, 0
        %v3080 = vsel %vm2817, %v2680, 0
        %v3083 = vsel %vm2817, %v2682, 0
        %v3086 = vsel %vm2817, %v2684, 0
        %v3089 = vsel %vm2817, %v2686, 0
        %v3092 = vsel %vm2817, %v2688, 0
        %v3095 = vsel %vm2817, %v2690, 0
        %v3098 = vsel %vm2817, %v2692, 0
        %v3101 = vsel %vm2817, %v2694, 0
        %v3104 = vsel %vm2817, %v2696, 0
        %3106 = vmatprep.subr.bf16.mxu0 %v2770
        %3107 = vmatpush1.bf16.msra.mxu0 %v2769
        %3108 = vmatprep.subr.bf16.mxu0 %v2772
        %3109 = vmatpush1.bf16.msra.mxu0 %v2771
        %3110 = vmatprep.subr.bf16.mxu0 %v2774
        %3111 = vmatpush1.bf16.msra.mxu0 %v2773
        %3112 = vmatprep.subr.bf16.mxu0 %v2776
        %3113 = vmatpush1.bf16.msra.mxu0 %v2775
        %3114 = vmatprep.subr.bf16.mxu0 %v2778
        %3115 = vmatpush1.bf16.msra.mxu0 %v2777
        %3116 = vmatprep.subr.bf16.mxu0 %v2780
        %3117 = vmatpush1.bf16.msra.mxu0 %v2779
        %3118 = vmatprep.subr.bf16.mxu0 %v2782
        %3119 = vmatpush1.bf16.msra.mxu0 %v2781
        %3120 = vmatprep.subr.bf16.mxu0 %v2784
        %3121 = vmatpush1.bf16.msra.mxu0 %v2783
        %3122 = vmatprep.subr.bf16.mxu0 %v2786
        %3123 = vmatpush1.bf16.msra.mxu0 %v2785
        %3124 = vmatprep.subr.bf16.mxu0 %v2788
        %3125 = vmatpush1.bf16.msra.mxu0 %v2787
        %3126 = vmatprep.subr.bf16.mxu0 %v2790
        %3127 = vmatpush1.bf16.msra.mxu0 %v2789
        %3128 = vmatprep.subr.bf16.mxu0 %v2792
        %3129 = vmatpush1.bf16.msra.mxu0 %v2791
        %3130 = vmatprep.subr.bf16.mxu0 0
        %3131 = vmatpush1.bf16.msra.mxu0 0
        %3132 = vmatprep.subr.bf16.mxu0 0
        %3133 = vmatpush1.bf16.msra.mxu0 0
        %3134 = vmatprep.subr.bf16.mxu0 0
        %3135 = vmatpush1.bf16.msra.mxu0 0
        %3136 = vmatprep.subr.bf16.mxu0 0
        %3137 = vmatpush1.bf16.msra.mxu0 0
        %3138 = vmatprep.mubr.bf16.mxu0 %v2819
        %3139 = vmatmul.mubr.bf16.gmra.mrb[0].mxu0 %v2505
        %v3140 = vpop.f32.mrb[0].mxu0
        %v3141 = vadd.f32 0.0, %v3140
        %v3142 = vpop.f32.mrb[0].mxu0
        %v3143 = vadd.f32 0.0, %v3142
        %v3144 = vpop.f32.mrb[0].mxu0
        %v3145 = vadd.f32 0.0, %v3144
        %v3146 = vpop.f32.mrb[0].mxu0
        %v3147 = vadd.f32 0.0, %v3146
        %3148 = vmatprep.mubr.bf16.mxu0 %v2822
        %3149 = vmatmul.mubr.bf16.gmra.mrb[0].mxu0 %v2507
        %v3150 = vpop.f32.mrb[0].mxu0
        %v3151 = vadd.f32 0.0, %v3150
        %v3152 = vpop.f32.mrb[0].mxu0
        %v3153 = vadd.f32 0.0, %v3152
        %v3154 = vpop.f32.mrb[0].mxu0
        %v3155 = vadd.f32 0.0, %v3154
        %v3156 = vpop.f32.mrb[0].mxu0
        %v3157 = vadd.f32 0.0, %v3156
        %3158 = vmatprep.mubr.bf16.mxu0 %v2825
        %3159 = vmatmul.mubr.bf16.gmra.mrb[0].mxu0 %v2509
        %v3160 = vpop.f32.mrb[0].mxu0
        %v3161 = vadd.f32 0.0, %v3160
        %v3162 = vpop.f32.mrb[0].mxu0
        %v3163 = vadd.f32 0.0, %v3162
        %v3164 = vpop.f32.mrb[0].mxu0
        %v3165 = vadd.f32 0.0, %v3164
        %v3166 = vpop.f32.mrb[0].mxu0
        %v3167 = vadd.f32 0.0, %v3166
        %3168 = vmatprep.mubr.bf16.mxu0 %v2828
        %3169 = vmatmul.mubr.bf16.gmra.mrb[0].mxu0 %v2511
        %v3170 = vpop.f32.mrb[0].mxu0
        %v3171 = vadd.f32 0.0, %v3170
        %v3172 = vpop.f32.mrb[0].mxu0
        %v3173 = vadd.f32 0.0, %v3172
        %v3174 = vpop.f32.mrb[0].mxu0
        %v3175 = vadd.f32 0.0, %v3174
        %v3176 = vpop.f32.mrb[0].mxu0
        %v3177 = vadd.f32 0.0, %v3176
        %3178 = vmatprep.mubr.bf16.mxu0 %v2831
        %3179 = vmatmul.mubr.bf16.gmra.mrb[0].mxu0 %v2513
        %v3180 = vpop.f32.mrb[0].mxu0
        %v3181 = vadd.f32 0.0, %v3180
        %v3182 = vpop.f32.mrb[0].mxu0
        %v3183 = vadd.f32 0.0, %v3182
        %v3184 = vpop.f32.mrb[0].mxu0
        %v3185 = vadd.f32 0.0, %v3184
        %v3186 = vpop.f32.mrb[0].mxu0
        %v3187 = vadd.f32 0.0, %v3186
        %3188 = vmatprep.mubr.bf16.mxu0 %v2834
        %3189 = vmatmul.mubr.bf16.gmra.mrb[0].mxu0 %v2515
        %v3190 = vpop.f32.mrb[0].mxu0
        %v3191 = vadd.f32 0.0, %v3190
        %v3192 = vpop.f32.mrb[0].mxu0
        %v3193 = vadd.f32 0.0, %v3192
        %v3194 = vpop.f32.mrb[0].mxu0
        %v3195 = vadd.f32 0.0, %v3194
        %v3196 = vpop.f32.mrb[0].mxu0
        %v3197 = vadd.f32 0.0, %v3196
        %3198 = vmatprep.mubr.bf16.mxu0 %v2837
        %3199 = vmatmul.mubr.bf16.gmra.mrb[0].mxu0 %v2517
        %v3200 = vpop.f32.mrb[0].mxu0
        %v3201 = vadd.f32 0.0, %v3200
        %v3202 = vpop.f32.mrb[0].mxu0
        %v3203 = vadd.f32 0.0, %v3202
        %v3204 = vpop.f32.mrb[0].mxu0
        %v3205 = vadd.f32 0.0, %v3204
        %v3206 = vpop.f32.mrb[0].mxu0
        %v3207 = vadd.f32 0.0, %v3206
        %3208 = vmatprep.mubr.bf16.mxu0 %v2840
        %3209 = vmatmul.mubr.bf16.gmra.mrb[0].mxu0 %v2519
        %v3210 = vpop.f32.mrb[0].mxu0
        %v3211 = vadd.f32 0.0, %v3210
        %v3212 = vpop.f32.mrb[0].mxu0
        %v3213 = vadd.f32 0.0, %v3212
        %v3214 = vpop.f32.mrb[0].mxu0
        %v3215 = vadd.f32 0.0, %v3214
        %v3216 = vpop.f32.mrb[0].mxu0
        %v3217 = vadd.f32 0.0, %v3216
        %3218 = vmatprep.mubr.bf16.mxu0 %v2843
        %3219 = vmatmul.mubr.bf16.gmra.mrb[0].mxu0 %v2521
        %v3220 = vpop.f32.mrb[0].mxu0
        %v3221 = vadd.f32 0.0, %v3220
        %v3222 = vpop.f32.mrb[0].mxu0
        %v3223 = vadd.f32 0.0, %v3222
        %v3224 = vpop.f32.mrb[0].mxu0
        %v3225 = vadd.f32 0.0, %v3224
        %v3226 = vpop.f32.mrb[0].mxu0
        %v3227 = vadd.f32 0.0, %v3226
        %3228 = vmatprep.mubr.bf16.mxu0 %v2846
        %3229 = vmatmul.mubr.bf16.gmra.mrb[0].mxu0 %v2523
        %v3230 = vpop.f32.mrb[0].mxu0
        %v3231 = vadd.f32 0.0, %v3230
        %v3232 = vpop.f32.mrb[0].mxu0
        %v3233 = vadd.f32 0.0, %v3232
        %v3234 = vpop.f32.mrb[0].mxu0
        %v3235 = vadd.f32 0.0, %v3234
        %v3236 = vpop.f32.mrb[0].mxu0
        %v3237 = vadd.f32 0.0, %v3236
        %3238 = vmatprep.mubr.bf16.mxu0 %v2849
        %3239 = vmatmul.mubr.bf16.gmra.mrb[0].mxu0 %v2525
        %v3240 = vpop.f32.mrb[0].mxu0
        %v3241 = vadd.f32 0.0, %v3240
        %v3242 = vpop.f32.mrb[0].mxu0
        %v3243 = vadd.f32 0.0, %v3242
        %v3244 = vpop.f32.mrb[0].mxu0
        %v3245 = vadd.f32 0.0, %v3244
        %v3246 = vpop.f32.mrb[0].mxu0
        %v3247 = vadd.f32 0.0, %v3246
        %3248 = vmatprep.mubr.bf16.mxu0 %v2852
        %3249 = vmatmul.mubr.bf16.gmra.mrb[0].mxu0 %v2527
        %v3250 = vpop.f32.mrb[0].mxu0
        %v3251 = vadd.f32 0.0, %v3250
        %v3252 = vpop.f32.mrb[0].mxu0
        %v3253 = vadd.f32 0.0, %v3252
        %v3254 = vpop.f32.mrb[0].mxu0
        %v3255 = vadd.f32 0.0, %v3254
        %v3256 = vpop.f32.mrb[0].mxu0
        %v3257 = vadd.f32 0.0, %v3256
        %3258 = vmatprep.mubr.bf16.mxu0 %v2855
        %3259 = vmatmul.mubr.bf16.gmra.mrb[0].mxu0 %v2529
        %v3260 = vpop.f32.mrb[0].mxu0
        %v3261 = vadd.f32 0.0, %v3260
        %v3262 = vpop.f32.mrb[0].mxu0
        %v3263 = vadd.f32 0.0, %v3262
        %v3264 = vpop.f32.mrb[0].mxu0
        %v3265 = vadd.f32 0.0, %v3264
        %v3266 = vpop.f32.mrb[0].mxu0
        %v3267 = vadd.f32 0.0, %v3266
        %3268 = vmatprep.mubr.bf16.mxu0 %v2858
        %3269 = vmatmul.mubr.bf16.gmra.mrb[0].mxu0 %v2531
        %v3270 = vpop.f32.mrb[0].mxu0
        %v3271 = vadd.f32 0.0, %v3270
        %v3272 = vpop.f32.mrb[0].mxu0
        %v3273 = vadd.f32 0.0, %v3272
        %v3274 = vpop.f32.mrb[0].mxu0
        %v3275 = vadd.f32 0.0, %v3274
        %v3276 = vpop.f32.mrb[0].mxu0
        %v3277 = vadd.f32 0.0, %v3276
        %3278 = vmatprep.mubr.bf16.mxu0 %v2861
        %3279 = vmatmul.mubr.bf16.gmra.mrb[0].mxu0 %v2533
        %v3280 = vpop.f32.mrb[0].mxu0
        %v3281 = vadd.f32 0.0, %v3280
        %v3282 = vpop.f32.mrb[0].mxu0
        %v3283 = vadd.f32 0.0, %v3282
        %v3284 = vpop.f32.mrb[0].mxu0
        %v3285 = vadd.f32 0.0, %v3284
        %v3286 = vpop.f32.mrb[0].mxu0
        %v3287 = vadd.f32 0.0, %v3286
        %3288 = vmatprep.mubr.bf16.mxu0 %v2864
        %3289 = vmatmul.mubr.bf16.gmra.mrb[0].mxu0 %v2535
        %v3290 = vpop.f32.mrb[0].mxu0
        %v3291 = vadd.f32 0.0, %v3290
        %v3292 = vpop.f32.mrb[0].mxu0
        %v3293 = vadd.f32 0.0, %v3292
        %v3294 = vpop.f32.mrb[0].mxu0
        %v3295 = vadd.f32 0.0, %v3294
        %v3296 = vpop.f32.mrb[0].mxu0
        %v3297 = vadd.f32 0.0, %v3296
        %3298 = vmatprep.mubr.bf16.mxu0 %v2867
        %3299 = vmatmul.mubr.bf16.gmra.mrb[0].mxu0 %v2537
        %v3300 = vpop.f32.mrb[0].mxu0
        %v3301 = vadd.f32 0.0, %v3300
        %v3302 = vpop.f32.mrb[0].mxu0
        %v3303 = vadd.f32 0.0, %v3302
        %v3304 = vpop.f32.mrb[0].mxu0
        %v3305 = vadd.f32 0.0, %v3304
        %v3306 = vpop.f32.mrb[0].mxu0
        %v3307 = vadd.f32 0.0, %v3306
        %3308 = vmatprep.mubr.bf16.mxu0 %v2870
        %3309 = vmatmul.mubr.bf16.gmra.mrb[0].mxu0 %v2539
        %v3310 = vpop.f32.mrb[0].mxu0
        %v3311 = vadd.f32 0.0, %v3310
        %v3312 = vpop.f32.mrb[0].mxu0
        %v3313 = vadd.f32 0.0, %v3312
        %v3314 = vpop.f32.mrb[0].mxu0
        %v3315 = vadd.f32 0.0, %v3314
        %v3316 = vpop.f32.mrb[0].mxu0
        %v3317 = vadd.f32 0.0, %v3316
        %3318 = vmatprep.mubr.bf16.mxu0 %v2873
        %3319 = vmatmul.mubr.bf16.gmra.mrb[0].mxu0 %v2541
        %v3320 = vpop.f32.mrb[0].mxu0
        %v3321 = vadd.f32 0.0, %v3320
        %v3322 = vpop.f32.mrb[0].mxu0
        %v3323 = vadd.f32 0.0, %v3322
        %v3324 = vpop.f32.mrb[0].mxu0
        %v3325 = vadd.f32 0.0, %v3324
        %v3326 = vpop.f32.mrb[0].mxu0
        %v3327 = vadd.f32 0.0, %v3326
        %3328 = vmatprep.mubr.bf16.mxu0 %v2876
        %3329 = vmatmul.mubr.bf16.gmra.mrb[0].mxu0 %v2543
        %v3330 = vpop.f32.mrb[0].mxu0
        %v3331 = vadd.f32 0.0, %v3330
        %v3332 = vpop.f32.mrb[0].mxu0
        %v3333 = vadd.f32 0.0, %v3332
        %v3334 = vpop.f32.mrb[0].mxu0
        %v3335 = vadd.f32 0.0, %v3334
        %v3336 = vpop.f32.mrb[0].mxu0
        %v3337 = vadd.f32 0.0, %v3336
        %3338 = vmatprep.mubr.bf16.mxu0 %v2879
        %3339 = vmatmul.mubr.bf16.gmra.mrb[0].mxu0 %v2545
        %v3340 = vpop.f32.mrb[0].mxu0
        %v3341 = vadd.f32 0.0, %v3340
        %v3342 = vpop.f32.mrb[0].mxu0
        %v3343 = vadd.f32 0.0, %v3342
        %v3344 = vpop.f32.mrb[0].mxu0
        %v3345 = vadd.f32 0.0, %v3344
        %v3346 = vpop.f32.mrb[0].mxu0
        %v3347 = vadd.f32 0.0, %v3346
        %3348 = vmatprep.mubr.bf16.mxu0 %v2882
        %3349 = vmatmul.mubr.bf16.gmra.mrb[0].mxu0 %v2547
        %v3350 = vpop.f32.mrb[0].mxu0
        %v3351 = vadd.f32 0.0, %v3350
        %v3352 = vpop.f32.mrb[0].mxu0
        %v3353 = vadd.f32 0.0, %v3352
        %v3354 = vpop.f32.mrb[0].mxu0
        %v3355 = vadd.f32 0.0, %v3354
        %v3356 = vpop.f32.mrb[0].mxu0
        %v3357 = vadd.f32 0.0, %v3356
        %3358 = vmatprep.mubr.bf16.mxu0 %v2885
        %3359 = vmatmul.mubr.bf16.gmra.mrb[0].mxu0 %v2549
        %v3360 = vpop.f32.mrb[0].mxu0
        %v3361 = vadd.f32 0.0, %v3360
        %v3362 = vpop.f32.mrb[0].mxu0
        %v3363 = vadd.f32 0.0, %v3362
        %v3364 = vpop.f32.mrb[0].mxu0
        %v3365 = vadd.f32 0.0, %v3364
        %v3366 = vpop.f32.mrb[0].mxu0
        %v3367 = vadd.f32 0.0, %v3366
        %3368 = vmatprep.mubr.bf16.mxu0 %v2888
        %3369 = vmatmul.mubr.bf16.gmra.mrb[0].mxu0 %v2551
        %v3370 = vpop.f32.mrb[0].mxu0
        %v3371 = vadd.f32 0.0, %v3370
        %v3372 = vpop.f32.mrb[0].mxu0
        %v3373 = vadd.f32 0.0, %v3372
        %v3374 = vpop.f32.mrb[0].mxu0
        %v3375 = vadd.f32 0.0, %v3374
        %v3376 = vpop.f32.mrb[0].mxu0
        %v3377 = vadd.f32 0.0, %v3376
        %3378 = vmatprep.mubr.bf16.mxu0 %v2891
        %3379 = vmatmul.mubr.bf16.gmra.mrb[0].mxu0 %v2553
        %v3380 = vpop.f32.mrb[0].mxu0
        %v3381 = vadd.f32 0.0, %v3380
        %v3382 = vpop.f32.mrb[0].mxu0
        %v3383 = vadd.f32 0.0, %v3382
        %v3384 = vpop.f32.mrb[0].mxu0
        %v3385 = vadd.f32 0.0, %v3384
        %v3386 = vpop.f32.mrb[0].mxu0
        %v3387 = vadd.f32 0.0, %v3386
        %3388 = vmatprep.mubr.bf16.mxu0 %v2894
        %3389 = vmatmul.mubr.bf16.gmra.mrb[0].mxu0 %v2555
        %v3390 = vpop.f32.mrb[0].mxu0
        %v3391 = vadd.f32 0.0, %v3390
        %v3392 = vpop.f32.mrb[0].mxu0
        %v3393 = vadd.f32 0.0, %v3392
        %v3394 = vpop.f32.mrb[0].mxu0
        %v3395 = vadd.f32 0.0, %v3394
        %v3396 = vpop.f32.mrb[0].mxu0
        %v3397 = vadd.f32 0.0, %v3396
        %3398 = vmatprep.mubr.bf16.mxu0 %v2897
        %3399 = vmatmul.mubr.bf16.gmra.mrb[0].mxu0 %v2557
        %v3400 = vpop.f32.mrb[0].mxu0
        %v3401 = vadd.f32 0.0, %v3400
        %v3402 = vpop.f32.mrb[0].mxu0
        %v3403 = vadd.f32 0.0, %v3402
        %v3404 = vpop.f32.mrb[0].mxu0
        %v3405 = vadd.f32 0.0, %v3404
        %v3406 = vpop.f32.mrb[0].mxu0
        %v3407 = vadd.f32 0.0, %v3406
        %3408 = vmatprep.mubr.bf16.mxu0 %v2900
        %3409 = vmatmul.mubr.bf16.gmra.mrb[0].mxu0 %v2559
        %v3410 = vpop.f32.mrb[0].mxu0
        %v3411 = vadd.f32 0.0, %v3410
        %v3412 = vpop.f32.mrb[0].mxu0
        %v3413 = vadd.f32 0.0, %v3412
        %v3414 = vpop.f32.mrb[0].mxu0
        %v3415 = vadd.f32 0.0, %v3414
        %v3416 = vpop.f32.mrb[0].mxu0
        %v3417 = vadd.f32 0.0, %v3416
        %3418 = vmatprep.mubr.bf16.mxu0 %v2903
        %3419 = vmatmul.mubr.bf16.gmra.mrb[0].mxu0 %v2561
        %v3420 = vpop.f32.mrb[0].mxu0
        %v3421 = vadd.f32 0.0, %v3420
        %v3422 = vpop.f32.mrb[0].mxu0
        %v3423 = vadd.f32 0.0, %v3422
        %v3424 = vpop.f32.mrb[0].mxu0
        %v3425 = vadd.f32 0.0, %v3424
        %v3426 = vpop.f32.mrb[0].mxu0
        %v3427 = vadd.f32 0.0, %v3426
        %3428 = vmatprep.mubr.bf16.mxu0 %v2906
        %3429 = vmatmul.mubr.bf16.gmra.mrb[0].mxu0 %v2563
        %v3430 = vpop.f32.mrb[0].mxu0
        %v3431 = vadd.f32 0.0, %v3430
        %v3432 = vpop.f32.mrb[0].mxu0
        %v3433 = vadd.f32 0.0, %v3432
        %v3434 = vpop.f32.mrb[0].mxu0
        %v3435 = vadd.f32 0.0, %v3434
        %v3436 = vpop.f32.mrb[0].mxu0
        %v3437 = vadd.f32 0.0, %v3436
        %3438 = vmatprep.mubr.bf16.mxu0 %v2909
        %3439 = vmatmul.mubr.bf16.gmra.mrb[0].mxu0 %v2565
        %v3440 = vpop.f32.mrb[0].mxu0
        %v3441 = vadd.f32 0.0, %v3440
        %v3442 = vpop.f32.mrb[0].mxu0
        %v3443 = vadd.f32 0.0, %v3442
        %v3444 = vpop.f32.mrb[0].mxu0
        %v3445 = vadd.f32 0.0, %v3444
        %v3446 = vpop.f32.mrb[0].mxu0
        %v3447 = vadd.f32 0.0, %v3446
        %3448 = vmatprep.mubr.bf16.mxu0 %v2912
        %3449 = vmatmul.mubr.bf16.gmra.mrb[0].mxu0 %v2567
        %v3450 = vpop.f32.mrb[0].mxu0
        %v3451 = vadd.f32 0.0, %v3450
        %v3452 = vpop.f32.mrb[0].mxu0
        %v3453 = vadd.f32 0.0, %v3452
        %v3454 = vpop.f32.mrb[0].mxu0
        %v3455 = vadd.f32 0.0, %v3454
        %v3456 = vpop.f32.mrb[0].mxu0
        %v3457 = vadd.f32 0.0, %v3456
        %3458 = vmatprep.mubr.bf16.mxu0 %v2915
        %3459 = vmatmul.mubr.bf16.gmra.mrb[0].mxu0 %v2569
        %v3460 = vpop.f32.mrb[0].mxu0
        %v3461 = vadd.f32 0.0, %v3460
        %v3462 = vpop.f32.mrb[0].mxu0
        %v3463 = vadd.f32 0.0, %v3462
        %v3464 = vpop.f32.mrb[0].mxu0
        %v3465 = vadd.f32 0.0, %v3464
        %v3466 = vpop.f32.mrb[0].mxu0
        %v3467 = vadd.f32 0.0, %v3466
        %3468 = vmatprep.mubr.bf16.mxu0 %v2918
        %3469 = vmatmul.mubr.bf16.gmra.mrb[0].mxu0 %v2571
        %v3470 = vpop.f32.mrb[0].mxu0
        %v3471 = vadd.f32 0.0, %v3470
        %v3472 = vpop.f32.mrb[0].mxu0
        %v3473 = vadd.f32 0.0, %v3472
        %v3474 = vpop.f32.mrb[0].mxu0
        %v3475 = vadd.f32 0.0, %v3474
        %v3476 = vpop.f32.mrb[0].mxu0
        %v3477 = vadd.f32 0.0, %v3476
        %3478 = vmatprep.mubr.bf16.mxu0 %v2921
        %3479 = vmatmul.mubr.bf16.gmra.mrb[0].mxu0 %v2573
        %v3480 = vpop.f32.mrb[0].mxu0
        %v3481 = vadd.f32 0.0, %v3480
        %v3482 = vpop.f32.mrb[0].mxu0
        %v3483 = vadd.f32 0.0, %v3482
        %v3484 = vpop.f32.mrb[0].mxu0
        %v3485 = vadd.f32 0.0, %v3484
        %v3486 = vpop.f32.mrb[0].mxu0
        %v3487 = vadd.f32 0.0, %v3486
        %3488 = vmatprep.mubr.bf16.mxu0 %v2924
        %3489 = vmatmul.mubr.bf16.gmra.mrb[0].mxu0 %v2575
        %v3490 = vpop.f32.mrb[0].mxu0
        %v3491 = vadd.f32 0.0, %v3490
        %v3492 = vpop.f32.mrb[0].mxu0
        %v3493 = vadd.f32 0.0, %v3492
        %v3494 = vpop.f32.mrb[0].mxu0
        %v3495 = vadd.f32 0.0, %v3494
        %v3496 = vpop.f32.mrb[0].mxu0
        %v3497 = vadd.f32 0.0, %v3496
        %3498 = vmatprep.mubr.bf16.mxu0 %v2927
        %3499 = vmatmul.mubr.bf16.gmra.mrb[0].mxu0 %v2577
        %v3500 = vpop.f32.mrb[0].mxu0
        %v3501 = vadd.f32 0.0, %v3500
        %v3502 = vpop.f32.mrb[0].mxu0
        %v3503 = vadd.f32 0.0, %v3502
        %v3504 = vpop.f32.mrb[0].mxu0
        %v3505 = vadd.f32 0.0, %v3504
        %v3506 = vpop.f32.mrb[0].mxu0
        %v3507 = vadd.f32 0.0, %v3506
        %3508 = vmatprep.mubr.bf16.mxu0 %v2930
        %3509 = vmatmul.mubr.bf16.gmra.mrb[0].mxu0 %v2579
        %v3510 = vpop.f32.mrb[0].mxu0
        %v3511 = vadd.f32 0.0, %v3510
        %v3512 = vpop.f32.mrb[0].mxu0
        %v3513 = vadd.f32 0.0, %v3512
        %v3514 = vpop.f32.mrb[0].mxu0
        %v3515 = vadd.f32 0.0, %v3514
        %v3516 = vpop.f32.mrb[0].mxu0
        %v3517 = vadd.f32 0.0, %v3516
        %3518 = vmatprep.mubr.bf16.mxu0 %v2933
        %3519 = vmatmul.mubr.bf16.gmra.mrb[0].mxu0 %v2581
        %v3520 = vpop.f32.mrb[0].mxu0
        %v3521 = vadd.f32 0.0, %v3520
        %v3522 = vpop.f32.mrb[0].mxu0
        %v3523 = vadd.f32 0.0, %v3522
        %v3524 = vpop.f32.mrb[0].mxu0
        %v3525 = vadd.f32 0.0, %v3524
        %v3526 = vpop.f32.mrb[0].mxu0
        %v3527 = vadd.f32 0.0, %v3526
        %3528 = vmatprep.mubr.bf16.mxu0 %v2936
        %3529 = vmatmul.mubr.bf16.gmra.mrb[0].mxu0 %v2583
        %v3530 = vpop.f32.mrb[0].mxu0
        %v3531 = vadd.f32 0.0, %v3530
        %v3532 = vpop.f32.mrb[0].mxu0
        %v3533 = vadd.f32 0.0, %v3532
        %v3534 = vpop.f32.mrb[0].mxu0
        %v3535 = vadd.f32 0.0, %v3534
        %v3536 = vpop.f32.mrb[0].mxu0
        %v3537 = vadd.f32 0.0, %v3536
        %3538 = vmatprep.mubr.bf16.mxu0 %v2939
        %3539 = vmatmul.mubr.bf16.gmra.mrb[0].mxu0 %v2585
        %v3540 = vpop.f32.mrb[0].mxu0
        %v3541 = vadd.f32 0.0, %v3540
        %v3542 = vpop.f32.mrb[0].mxu0
        %v3543 = vadd.f32 0.0, %v3542
        %v3544 = vpop.f32.mrb[0].mxu0
        %v3545 = vadd.f32 0.0, %v3544
        %v3546 = vpop.f32.mrb[0].mxu0
        %v3547 = vadd.f32 0.0, %v3546
        %3548 = vmatprep.mubr.bf16.mxu0 %v2942
        %3549 = vmatmul.mubr.bf16.gmra.mrb[0].mxu0 %v2587
        %v3550 = vpop.f32.mrb[0].mxu0
        %v3551 = vadd.f32 0.0, %v3550
        %v3552 = vpop.f32.mrb[0].mxu0
        %v3553 = vadd.f32 0.0, %v3552
        %v3554 = vpop.f32.mrb[0].mxu0
        %v3555 = vadd.f32 0.0, %v3554
        %v3556 = vpop.f32.mrb[0].mxu0
        %v3557 = vadd.f32 0.0, %v3556
        %3558 = vmatprep.mubr.bf16.mxu0 %v2945
        %3559 = vmatmul.mubr.bf16.gmra.mrb[0].mxu0 %v2589
        %v3560 = vpop.f32.mrb[0].mxu0
        %v3561 = vadd.f32 0.0, %v3560
        %v3562 = vpop.f32.mrb[0].mxu0
        %v3563 = vadd.f32 0.0, %v3562
        %v3564 = vpop.f32.mrb[0].mxu0
        %v3565 = vadd.f32 0.0, %v3564
        %v3566 = vpop.f32.mrb[0].mxu0
        %v3567 = vadd.f32 0.0, %v3566
        %3568 = vmatprep.mubr.bf16.mxu0 %v2948
        %3569 = vmatmul.mubr.bf16.gmra.mrb[0].mxu0 %v2591
        %v3570 = vpop.f32.mrb[0].mxu0
        %v3571 = vadd.f32 0.0, %v3570
        %v3572 = vpop.f32.mrb[0].mxu0
        %v3573 = vadd.f32 0.0, %v3572
        %v3574 = vpop.f32.mrb[0].mxu0
        %v3575 = vadd.f32 0.0, %v3574
        %v3576 = vpop.f32.mrb[0].mxu0
        %v3577 = vadd.f32 0.0, %v3576
        %3578 = vmatprep.mubr.bf16.mxu0 %v2951
        %3579 = vmatmul.mubr.bf16.gmra.mrb[0].mxu0 %v2593
        %v3580 = vpop.f32.mrb[0].mxu0
        %v3581 = vadd.f32 0.0, %v3580
        %v3582 = vpop.f32.mrb[0].mxu0
        %v3583 = vadd.f32 0.0, %v3582
        %v3584 = vpop.f32.mrb[0].mxu0
        %v3585 = vadd.f32 0.0, %v3584
        %v3586 = vpop.f32.mrb[0].mxu0
        %v3587 = vadd.f32 0.0, %v3586
        %3588 = vmatprep.mubr.bf16.mxu0 %v2954
        %3589 = vmatmul.mubr.bf16.gmra.mrb[0].mxu0 %v2595
        %v3590 = vpop.f32.mrb[0].mxu0
        %v3591 = vadd.f32 0.0, %v3590
        %v3592 = vpop.f32.mrb[0].mxu0
        %v3593 = vadd.f32 0.0, %v3592
        %v3594 = vpop.f32.mrb[0].mxu0
        %v3595 = vadd.f32 0.0, %v3594
        %v3596 = vpop.f32.mrb[0].mxu0
        %v3597 = vadd.f32 0.0, %v3596
        %3598 = vmatprep.mubr.bf16.mxu0 %v2957
        %3599 = vmatmul.mubr.bf16.gmra.mrb[0].mxu0 %v2597
        %v3600 = vpop.f32.mrb[0].mxu0
        %v3601 = vadd.f32 0.0, %v3600
        %v3602 = vpop.f32.mrb[0].mxu0
        %v3603 = vadd.f32 0.0, %v3602
        %v3604 = vpop.f32.mrb[0].mxu0
        %v3605 = vadd.f32 0.0, %v3604
        %v3606 = vpop.f32.mrb[0].mxu0
        %v3607 = vadd.f32 0.0, %v3606
        %3608 = vmatprep.mubr.bf16.mxu0 %v2960
        %3609 = vmatmul.mubr.bf16.gmra.mrb[0].mxu0 %v2599
        %v3610 = vpop.f32.mrb[0].mxu0
        %v3611 = vadd.f32 0.0, %v3610
        %v3612 = vpop.f32.mrb[0].mxu0
        %v3613 = vadd.f32 0.0, %v3612
        %v3614 = vpop.f32.mrb[0].mxu0
        %v3615 = vadd.f32 0.0, %v3614
        %v3616 = vpop.f32.mrb[0].mxu0
        %v3617 = vadd.f32 0.0, %v3616
        %3618 = vmatprep.mubr.bf16.mxu0 %v2963
        %3619 = vmatmul.mubr.bf16.gmra.mrb[0].mxu0 %v2601
        %v3620 = vpop.f32.mrb[0].mxu0
        %v3621 = vadd.f32 0.0, %v3620
        %v3622 = vpop.f32.mrb[0].mxu0
        %v3623 = vadd.f32 0.0, %v3622
        %v3624 = vpop.f32.mrb[0].mxu0
        %v3625 = vadd.f32 0.0, %v3624
        %v3626 = vpop.f32.mrb[0].mxu0
        %v3627 = vadd.f32 0.0, %v3626
        %3628 = vmatprep.mubr.bf16.mxu0 %v2966
        %3629 = vmatmul.mubr.bf16.gmra.mrb[0].mxu0 %v2603
        %v3630 = vpop.f32.mrb[0].mxu0
        %v3631 = vadd.f32 0.0, %v3630
        %v3632 = vpop.f32.mrb[0].mxu0
        %v3633 = vadd.f32 0.0, %v3632
        %v3634 = vpop.f32.mrb[0].mxu0
        %v3635 = vadd.f32 0.0, %v3634
        %v3636 = vpop.f32.mrb[0].mxu0
        %v3637 = vadd.f32 0.0, %v3636
        %3638 = vmatprep.mubr.bf16.mxu0 %v2969
        %3639 = vmatmul.mubr.bf16.gmra.mrb[0].mxu0 %v2605
        %v3640 = vpop.f32.mrb[0].mxu0
        %v3641 = vadd.f32 0.0, %v3640
        %v3642 = vpop.f32.mrb[0].mxu0
        %v3643 = vadd.f32 0.0, %v3642
        %v3644 = vpop.f32.mrb[0].mxu0
        %v3645 = vadd.f32 0.0, %v3644
        %v3646 = vpop.f32.mrb[0].mxu0
        %v3647 = vadd.f32 0.0, %v3646
        %3648 = vmatprep.mubr.bf16.mxu0 %v2972
        %3649 = vmatmul.mubr.bf16.gmra.mrb[0].mxu0 %v2607
        %v3650 = vpop.f32.mrb[0].mxu0
        %v3651 = vadd.f32 0.0, %v3650
        %v3652 = vpop.f32.mrb[0].mxu0
        %v3653 = vadd.f32 0.0, %v3652
        %v3654 = vpop.f32.mrb[0].mxu0
        %v3655 = vadd.f32 0.0, %v3654
        %v3656 = vpop.f32.mrb[0].mxu0
        %v3657 = vadd.f32 0.0, %v3656
        %3658 = vmatprep.mubr.bf16.mxu0 %v2975
        %3659 = vmatmul.mubr.bf16.gmra.mrb[0].mxu0 %v2609
        %v3660 = vpop.f32.mrb[0].mxu0
        %v3661 = vadd.f32 0.0, %v3660
        %v3662 = vpop.f32.mrb[0].mxu0
        %v3663 = vadd.f32 0.0, %v3662
        %v3664 = vpop.f32.mrb[0].mxu0
        %v3665 = vadd.f32 0.0, %v3664
        %v3666 = vpop.f32.mrb[0].mxu0
        %v3667 = vadd.f32 0.0, %v3666
        %3668 = vmatprep.mubr.bf16.mxu0 %v2978
        %3669 = vmatmul.mubr.bf16.gmra.mrb[0].mxu0 %v2611
        %v3670 = vpop.f32.mrb[0].mxu0
        %v3671 = vadd.f32 0.0, %v3670
        %v3672 = vpop.f32.mrb[0].mxu0
        %v3673 = vadd.f32 0.0, %v3672
        %v3674 = vpop.f32.mrb[0].mxu0
        %v3675 = vadd.f32 0.0, %v3674
        %v3676 = vpop.f32.mrb[0].mxu0
        %v3677 = vadd.f32 0.0, %v3676
        %3678 = vmatprep.mubr.bf16.mxu0 %v2981
        %3679 = vmatmul.mubr.bf16.gmra.mrb[0].mxu0 %v2613
        %v3680 = vpop.f32.mrb[0].mxu0
        %v3681 = vadd.f32 0.0, %v3680
        %v3682 = vpop.f32.mrb[0].mxu0
        %v3683 = vadd.f32 0.0, %v3682
        %v3684 = vpop.f32.mrb[0].mxu0
        %v3685 = vadd.f32 0.0, %v3684
        %v3686 = vpop.f32.mrb[0].mxu0
        %v3687 = vadd.f32 0.0, %v3686
        %3688 = vmatprep.mubr.bf16.mxu0 %v2984
        %3689 = vmatmul.mubr.bf16.gmra.mrb[0].mxu0 %v2615
        %v3690 = vpop.f32.mrb[0].mxu0
        %v3691 = vadd.f32 0.0, %v3690
        %v3692 = vpop.f32.mrb[0].mxu0
        %v3693 = vadd.f32 0.0, %v3692
        %v3694 = vpop.f32.mrb[0].mxu0
        %v3695 = vadd.f32 0.0, %v3694
        %v3696 = vpop.f32.mrb[0].mxu0
        %v3697 = vadd.f32 0.0, %v3696
        %3698 = vmatprep.mubr.bf16.mxu0 %v2987
        %3699 = vmatmul.mubr.bf16.gmra.mrb[0].mxu0 %v2617
        %v3700 = vpop.f32.mrb[0].mxu0
        %v3701 = vadd.f32 0.0, %v3700
        %v3702 = vpop.f32.mrb[0].mxu0
        %v3703 = vadd.f32 0.0, %v3702
        %v3704 = vpop.f32.mrb[0].mxu0
        %v3705 = vadd.f32 0.0, %v3704
        %v3706 = vpop.f32.mrb[0].mxu0
        %v3707 = vadd.f32 0.0, %v3706
        %3708 = vmatprep.mubr.bf16.mxu0 %v2990
        %3709 = vmatmul.mubr.bf16.gmra.mrb[0].mxu0 %v2619
        %v3710 = vpop.f32.mrb[0].mxu0
        %v3711 = vadd.f32 0.0, %v3710
        %v3712 = vpop.f32.mrb[0].mxu0
        %v3713 = vadd.f32 0.0, %v3712
        %v3714 = vpop.f32.mrb[0].mxu0
        %v3715 = vadd.f32 0.0, %v3714
        %v3716 = vpop.f32.mrb[0].mxu0
        %v3717 = vadd.f32 0.0, %v3716
        %3718 = vmatprep.mubr.bf16.mxu0 %v2993
        %3719 = vmatmul.mubr.bf16.gmra.mrb[0].mxu0 %v2621
        %v3720 = vpop.f32.mrb[0].mxu0
        %v3721 = vadd.f32 0.0, %v3720
        %v3722 = vpop.f32.mrb[0].mxu0
        %v3723 = vadd.f32 0.0, %v3722
        %v3724 = vpop.f32.mrb[0].mxu0
        %v3725 = vadd.f32 0.0, %v3724
        %v3726 = vpop.f32.mrb[0].mxu0
        %v3727 = vadd.f32 0.0, %v3726
        %3728 = vmatprep.mubr.bf16.mxu0 %v2996
        %3729 = vmatmul.mubr.bf16.gmra.mrb[0].mxu0 %v2623
        %v3730 = vpop.f32.mrb[0].mxu0
        %v3731 = vadd.f32 0.0, %v3730
        %v3732 = vpop.f32.mrb[0].mxu0
        %v3733 = vadd.f32 0.0, %v3732
        %v3734 = vpop.f32.mrb[0].mxu0
        %v3735 = vadd.f32 0.0, %v3734
        %v3736 = vpop.f32.mrb[0].mxu0
        %v3737 = vadd.f32 0.0, %v3736
        %3738 = vmatprep.mubr.bf16.mxu0 %v2999
        %3739 = vmatmul.mubr.bf16.gmra.mrb[0].mxu0 %v2625
        %v3740 = vpop.f32.mrb[0].mxu0
        %v3741 = vadd.f32 0.0, %v3740
        %v3742 = vpop.f32.mrb[0].mxu0
        %v3743 = vadd.f32 0.0, %v3742
        %v3744 = vpop.f32.mrb[0].mxu0
        %v3745 = vadd.f32 0.0, %v3744
        %v3746 = vpop.f32.mrb[0].mxu0
        %v3747 = vadd.f32 0.0, %v3746
        %3748 = vmatprep.mubr.bf16.mxu0 %v3002
        %3749 = vmatmul.mubr.bf16.gmra.mrb[0].mxu0 %v2627
        %v3750 = vpop.f32.mrb[0].mxu0
        %v3751 = vadd.f32 0.0, %v3750
        %v3752 = vpop.f32.mrb[0].mxu0
        %v3753 = vadd.f32 0.0, %v3752
        %v3754 = vpop.f32.mrb[0].mxu0
        %v3755 = vadd.f32 0.0, %v3754
        %v3756 = vpop.f32.mrb[0].mxu0
        %v3757 = vadd.f32 0.0, %v3756
        %3758 = vmatprep.mubr.bf16.mxu0 %v3005
        %3759 = vmatmul.mubr.bf16.gmra.mrb[0].mxu0 %v2629
        %v3760 = vpop.f32.mrb[0].mxu0
        %v3761 = vadd.f32 0.0, %v3760
        %v3762 = vpop.f32.mrb[0].mxu0
        %v3763 = vadd.f32 0.0, %v3762
        %v3764 = vpop.f32.mrb[0].mxu0
        %v3765 = vadd.f32 0.0, %v3764
        %v3766 = vpop.f32.mrb[0].mxu0
        %v3767 = vadd.f32 0.0, %v3766
        %3768 = vmatprep.mubr.bf16.mxu0 %v3008
        %3769 = vmatmul.mubr.bf16.gmra.mrb[0].mxu0 %v2631
        %v3770 = vpop.f32.mrb[0].mxu0
        %v3771 = vadd.f32 0.0, %v3770
        %v3772 = vpop.f32.mrb[0].mxu0
        %v3773 = vadd.f32 0.0, %v3772
        %v3774 = vpop.f32.mrb[0].mxu0
        %v3775 = vadd.f32 0.0, %v3774
        %v3776 = vpop.f32.mrb[0].mxu0
        %v3777 = vadd.f32 0.0, %v3776
        %3778 = vmatprep.mubr.bf16.mxu0 %v3011
        %3779 = vmatmul.mubr.bf16.gmra.mrb[0].mxu0 %v2633
        %v3780 = vpop.f32.mrb[0].mxu0
        %v3781 = vadd.f32 0.0, %v3780
        %v3782 = vpop.f32.mrb[0].mxu0
        %v3783 = vadd.f32 0.0, %v3782
        %v3784 = vpop.f32.mrb[0].mxu0
        %v3785 = vadd.f32 0.0, %v3784
        %v3786 = vpop.f32.mrb[0].mxu0
        %v3787 = vadd.f32 0.0, %v3786
        %3788 = vmatprep.mubr.bf16.mxu0 %v3014
        %3789 = vmatmul.mubr.bf16.gmra.mrb[0].mxu0 %v2635
        %v3790 = vpop.f32.mrb[0].mxu0
        %v3791 = vadd.f32 0.0, %v3790
        %v3792 = vpop.f32.mrb[0].mxu0
        %v3793 = vadd.f32 0.0, %v3792
        %v3794 = vpop.f32.mrb[0].mxu0
        %v3795 = vadd.f32 0.0, %v3794
        %v3796 = vpop.f32.mrb[0].mxu0
        %v3797 = vadd.f32 0.0, %v3796
        %3798 = vmatprep.mubr.bf16.mxu0 %v3017
        %3799 = vmatmul.mubr.bf16.gmra.mrb[0].mxu0 %v2637
        %v3800 = vpop.f32.mrb[0].mxu0
        %v3801 = vadd.f32 0.0, %v3800
        %v3802 = vpop.f32.mrb[0].mxu0
        %v3803 = vadd.f32 0.0, %v3802
        %v3804 = vpop.f32.mrb[0].mxu0
        %v3805 = vadd.f32 0.0, %v3804
        %v3806 = vpop.f32.mrb[0].mxu0
        %v3807 = vadd.f32 0.0, %v3806
        %3808 = vmatprep.mubr.bf16.mxu0 %v3020
        %3809 = vmatmul.mubr.bf16.gmra.mrb[0].mxu0 %v2639
        %v3810 = vpop.f32.mrb[0].mxu0
        %v3811 = vadd.f32 0.0, %v3810
        %v3812 = vpop.f32.mrb[0].mxu0
        %v3813 = vadd.f32 0.0, %v3812
        %v3814 = vpop.f32.mrb[0].mxu0
        %v3815 = vadd.f32 0.0, %v3814
        %v3816 = vpop.f32.mrb[0].mxu0
        %v3817 = vadd.f32 0.0, %v3816
        %3818 = vmatprep.mubr.bf16.mxu0 %v3023
        %3819 = vmatmul.mubr.bf16.gmra.mrb[0].mxu0 %v2641
        %v3820 = vpop.f32.mrb[0].mxu0
        %v3821 = vadd.f32 0.0, %v3820
        %v3822 = vpop.f32.mrb[0].mxu0
        %v3823 = vadd.f32 0.0, %v3822
        %v3824 = vpop.f32.mrb[0].mxu0
        %v3825 = vadd.f32 0.0, %v3824
        %v3826 = vpop.f32.mrb[0].mxu0
        %v3827 = vadd.f32 0.0, %v3826
        %3828 = vmatprep.mubr.bf16.mxu0 %v3026
        %3829 = vmatmul.mubr.bf16.gmra.mrb[0].mxu0 %v2643
        %v3830 = vpop.f32.mrb[0].mxu0
        %v3831 = vadd.f32 0.0, %v3830
        %v3832 = vpop.f32.mrb[0].mxu0
        %v3833 = vadd.f32 0.0, %v3832
        %v3834 = vpop.f32.mrb[0].mxu0
        %v3835 = vadd.f32 0.0, %v3834
        %v3836 = vpop.f32.mrb[0].mxu0
        %v3837 = vadd.f32 0.0, %v3836
        %3838 = vmatprep.mubr.bf16.mxu0 %v3029
        %3839 = vmatmul.mubr.bf16.gmra.mrb[0].mxu0 %v2645
        %v3840 = vpop.f32.mrb[0].mxu0
        %v3841 = vadd.f32 0.0, %v3840
        %v3842 = vpop.f32.mrb[0].mxu0
        %v3843 = vadd.f32 0.0, %v3842
        %v3844 = vpop.f32.mrb[0].mxu0
        %v3845 = vadd.f32 0.0, %v3844
        %v3846 = vpop.f32.mrb[0].mxu0
        %v3847 = vadd.f32 0.0, %v3846
        %3848 = vmatprep.mubr.bf16.mxu0 %v3032
        %3849 = vmatmul.mubr.bf16.gmra.mrb[0].mxu0 %v2647
        %v3850 = vpop.f32.mrb[0].mxu0
        %v3851 = vadd.f32 0.0, %v3850
        %v3852 = vpop.f32.mrb[0].mxu0
        %v3853 = vadd.f32 0.0, %v3852
        %v3854 = vpop.f32.mrb[0].mxu0
        %v3855 = vadd.f32 0.0, %v3854
        %v3856 = vpop.f32.mrb[0].mxu0
        %v3857 = vadd.f32 0.0, %v3856
        %3858 = vmatprep.mubr.bf16.mxu0 %v3035
        %3859 = vmatmul.mubr.bf16.gmra.mrb[0].mxu0 %v2649
        %v3860 = vpop.f32.mrb[0].mxu0
        %v3861 = vadd.f32 0.0, %v3860
        %v3862 = vpop.f32.mrb[0].mxu0
        %v3863 = vadd.f32 0.0, %v3862
        %v3864 = vpop.f32.mrb[0].mxu0
        %v3865 = vadd.f32 0.0, %v3864
        %v3866 = vpop.f32.mrb[0].mxu0
        %v3867 = vadd.f32 0.0, %v3866
        %3868 = vmatprep.mubr.bf16.mxu0 %v3038
        %3869 = vmatmul.mubr.bf16.gmra.mrb[0].mxu0 %v2651
        %v3870 = vpop.f32.mrb[0].mxu0
        %v3871 = vadd.f32 0.0, %v3870
        %v3872 = vpop.f32.mrb[0].mxu0
        %v3873 = vadd.f32 0.0, %v3872
        %v3874 = vpop.f32.mrb[0].mxu0
        %v3875 = vadd.f32 0.0, %v3874
        %v3876 = vpop.f32.mrb[0].mxu0
        %v3877 = vadd.f32 0.0, %v3876
        %3878 = vmatprep.mubr.bf16.mxu0 %v3041
        %3879 = vmatmul.mubr.bf16.gmra.mrb[0].mxu0 %v2653
        %v3880 = vpop.f32.mrb[0].mxu0
        %v3881 = vadd.f32 0.0, %v3880
        %v3882 = vpop.f32.mrb[0].mxu0
        %v3883 = vadd.f32 0.0, %v3882
        %v3884 = vpop.f32.mrb[0].mxu0
        %v3885 = vadd.f32 0.0, %v3884
        %v3886 = vpop.f32.mrb[0].mxu0
        %v3887 = vadd.f32 0.0, %v3886
        %3888 = vmatprep.mubr.bf16.mxu0 %v3044
        %3889 = vmatmul.mubr.bf16.gmra.mrb[0].mxu0 %v2655
        %v3890 = vpop.f32.mrb[0].mxu0
        %v3891 = vadd.f32 0.0, %v3890
        %v3892 = vpop.f32.mrb[0].mxu0
        %v3893 = vadd.f32 0.0, %v3892
        %v3894 = vpop.f32.mrb[0].mxu0
        %v3895 = vadd.f32 0.0, %v3894
        %v3896 = vpop.f32.mrb[0].mxu0
        %v3897 = vadd.f32 0.0, %v3896
        %3898 = vmatprep.mubr.bf16.mxu0 %v3047
        %3899 = vmatmul.mubr.bf16.gmra.mrb[0].mxu0 %v2657
        %v3900 = vpop.f32.mrb[0].mxu0
        %v3901 = vadd.f32 0.0, %v3900
        %v3902 = vpop.f32.mrb[0].mxu0
        %v3903 = vadd.f32 0.0, %v3902
        %v3904 = vpop.f32.mrb[0].mxu0
        %v3905 = vadd.f32 0.0, %v3904
        %v3906 = vpop.f32.mrb[0].mxu0
        %v3907 = vadd.f32 0.0, %v3906
        %3908 = vmatprep.mubr.bf16.mxu0 %v3050
        %3909 = vmatmul.mubr.bf16.gmra.mrb[0].mxu0 %v2659
        %v3910 = vpop.f32.mrb[0].mxu0
        %v3911 = vadd.f32 0.0, %v3910
        %v3912 = vpop.f32.mrb[0].mxu0
        %v3913 = vadd.f32 0.0, %v3912
        %v3914 = vpop.f32.mrb[0].mxu0
        %v3915 = vadd.f32 0.0, %v3914
        %v3916 = vpop.f32.mrb[0].mxu0
        %v3917 = vadd.f32 0.0, %v3916
        %3918 = vmatprep.mubr.bf16.mxu0 %v3053
        %3919 = vmatmul.mubr.bf16.gmra.mrb[0].mxu0 %v2661
        %v3920 = vpop.f32.mrb[0].mxu0
        %v3921 = vadd.f32 0.0, %v3920
        %v3922 = vpop.f32.mrb[0].mxu0
        %v3923 = vadd.f32 0.0, %v3922
        %v3924 = vpop.f32.mrb[0].mxu0
        %v3925 = vadd.f32 0.0, %v3924
        %v3926 = vpop.f32.mrb[0].mxu0
        %v3927 = vadd.f32 0.0, %v3926
        %3928 = vmatprep.mubr.bf16.mxu0 %v3056
        %3929 = vmatmul.mubr.bf16.gmra.mrb[0].mxu0 %v2663
        %v3930 = vpop.f32.mrb[0].mxu0
        %v3931 = vadd.f32 0.0, %v3930
        %v3932 = vpop.f32.mrb[0].mxu0
        %v3933 = vadd.f32 0.0, %v3932
        %v3934 = vpop.f32.mrb[0].mxu0
        %v3935 = vadd.f32 0.0, %v3934
        %v3936 = vpop.f32.mrb[0].mxu0
        %v3937 = vadd.f32 0.0, %v3936
        %3938 = vmatprep.mubr.bf16.mxu0 %v3059
        %3939 = vmatmul.mubr.bf16.gmra.mrb[0].mxu0 %v2665
        %v3940 = vpop.f32.mrb[0].mxu0
        %v3941 = vadd.f32 0.0, %v3940
        %v3942 = vpop.f32.mrb[0].mxu0
        %v3943 = vadd.f32 0.0, %v3942
        %v3944 = vpop.f32.mrb[0].mxu0
        %v3945 = vadd.f32 0.0, %v3944
        %v3946 = vpop.f32.mrb[0].mxu0
        %v3947 = vadd.f32 0.0, %v3946
        %3948 = vmatprep.mubr.bf16.mxu0 %v3062
        %3949 = vmatmul.mubr.bf16.gmra.mrb[0].mxu0 %v2667
        %v3950 = vpop.f32.mrb[0].mxu0
        %v3951 = vadd.f32 0.0, %v3950
        %v3952 = vpop.f32.mrb[0].mxu0
        %v3953 = vadd.f32 0.0, %v3952
        %v3954 = vpop.f32.mrb[0].mxu0
        %v3955 = vadd.f32 0.0, %v3954
        %v3956 = vpop.f32.mrb[0].mxu0
        %v3957 = vadd.f32 0.0, %v3956
        %3958 = vmatprep.mubr.bf16.mxu0 %v3065
        %3959 = vmatmul.mubr.bf16.gmra.mrb[0].mxu0 %v2669
        %v3960 = vpop.f32.mrb[0].mxu0
        %v3961 = vadd.f32 0.0, %v3960
        %v3962 = vpop.f32.mrb[0].mxu0
        %v3963 = vadd.f32 0.0, %v3962
        %v3964 = vpop.f32.mrb[0].mxu0
        %v3965 = vadd.f32 0.0, %v3964
        %v3966 = vpop.f32.mrb[0].mxu0
        %v3967 = vadd.f32 0.0, %v3966
        %3968 = vmatprep.mubr.bf16.mxu0 %v3068
        %3969 = vmatmul.mubr.bf16.gmra.mrb[0].mxu0 %v2671
        %v3970 = vpop.f32.mrb[0].mxu0
        %v3971 = vadd.f32 0.0, %v3970
        %v3972 = vpop.f32.mrb[0].mxu0
        %v3973 = vadd.f32 0.0, %v3972
        %v3974 = vpop.f32.mrb[0].mxu0
        %v3975 = vadd.f32 0.0, %v3974
        %v3976 = vpop.f32.mrb[0].mxu0
        %v3977 = vadd.f32 0.0, %v3976
        %3978 = vmatprep.mubr.bf16.mxu0 %v3071
        %3979 = vmatmul.mubr.bf16.gmra.mrb[0].mxu0 %v2673
        %v3980 = vpop.f32.mrb[0].mxu0
        %v3981 = vadd.f32 0.0, %v3980
        %v3982 = vpop.f32.mrb[0].mxu0
        %v3983 = vadd.f32 0.0, %v3982
        %v3984 = vpop.f32.mrb[0].mxu0
        %v3985 = vadd.f32 0.0, %v3984
        %v3986 = vpop.f32.mrb[0].mxu0
        %v3987 = vadd.f32 0.0, %v3986
        %3988 = vmatprep.mubr.bf16.mxu0 %v3074
        %3989 = vmatmul.mubr.bf16.gmra.mrb[0].mxu0 %v2675
        %v3990 = vpop.f32.mrb[0].mxu0
        %v3991 = vadd.f32 0.0, %v3990
        %v3992 = vpop.f32.mrb[0].mxu0
        %v3993 = vadd.f32 0.0, %v3992
        %v3994 = vpop.f32.mrb[0].mxu0
        %v3995 = vadd.f32 0.0, %v3994
        %v3996 = vpop.f32.mrb[0].mxu0
        %v3997 = vadd.f32 0.0, %v3996
        %3998 = vmatprep.mubr.bf16.mxu0 %v3077
        %3999 = vmatmul.mubr.bf16.gmra.mrb[0].mxu0 %v2677
        %v4000 = vpop.f32.mrb[0].mxu0
        %v4001 = vadd.f32 0.0, %v4000
        %v4002 = vpop.f32.mrb[0].mxu0
        %v4003 = vadd.f32 0.0, %v4002
        %v4004 = vpop.f32.mrb[0].mxu0
        %v4005 = vadd.f32 0.0, %v4004
        %v4006 = vpop.f32.mrb[0].mxu0
        %v4007 = vadd.f32 0.0, %v4006
        %4008 = vmatprep.mubr.bf16.mxu0 %v3080
        %4009 = vmatmul.mubr.bf16.gmra.mrb[0].mxu0 %v2679
        %v4010 = vpop.f32.mrb[0].mxu0
        %v4011 = vadd.f32 0.0, %v4010
        %v4012 = vpop.f32.mrb[0].mxu0
        %v4013 = vadd.f32 0.0, %v4012
        %v4014 = vpop.f32.mrb[0].mxu0
        %v4015 = vadd.f32 0.0, %v4014
        %v4016 = vpop.f32.mrb[0].mxu0
        %v4017 = vadd.f32 0.0, %v4016
        %4018 = vmatprep.mubr.bf16.mxu0 %v3083
        %4019 = vmatmul.mubr.bf16.gmra.mrb[0].mxu0 %v2681
        %v4020 = vpop.f32.mrb[0].mxu0
        %v4021 = vadd.f32 0.0, %v4020
        %v4022 = vpop.f32.mrb[0].mxu0
        %v4023 = vadd.f32 0.0, %v4022
        %v4024 = vpop.f32.mrb[0].mxu0
        %v4025 = vadd.f32 0.0, %v4024
        %v4026 = vpop.f32.mrb[0].mxu0
        %v4027 = vadd.f32 0.0, %v4026
        %4028 = vmatprep.mubr.bf16.mxu0 %v3086
        %4029 = vmatmul.mubr.bf16.gmra.mrb[0].mxu0 %v2683
        %v4030 = vpop.f32.mrb[0].mxu0
        %v4031 = vadd.f32 0.0, %v4030
        %v4032 = vpop.f32.mrb[0].mxu0
        %v4033 = vadd.f32 0.0, %v4032
        %v4034 = vpop.f32.mrb[0].mxu0
        %v4035 = vadd.f32 0.0, %v4034
        %v4036 = vpop.f32.mrb[0].mxu0
        %v4037 = vadd.f32 0.0, %v4036
        %4038 = vmatprep.mubr.bf16.mxu0 %v3089
        %4039 = vmatmul.mubr.bf16.gmra.mrb[0].mxu0 %v2685
        %v4040 = vpop.f32.mrb[0].mxu0
        %v4041 = vadd.f32 0.0, %v4040
        %v4042 = vpop.f32.mrb[0].mxu0
        %v4043 = vadd.f32 0.0, %v4042
        %v4044 = vpop.f32.mrb[0].mxu0
        %v4045 = vadd.f32 0.0, %v4044
        %v4046 = vpop.f32.mrb[0].mxu0
        %v4047 = vadd.f32 0.0, %v4046
        %4048 = vmatprep.mubr.bf16.mxu0 %v3092
        %4049 = vmatmul.mubr.bf16.gmra.mrb[0].mxu0 %v2687
        %v4050 = vpop.f32.mrb[0].mxu0
        %v4051 = vadd.f32 0.0, %v4050
        %v4052 = vpop.f32.mrb[0].mxu0
        %v4053 = vadd.f32 0.0, %v4052
        %v4054 = vpop.f32.mrb[0].mxu0
        %v4055 = vadd.f32 0.0, %v4054
        %v4056 = vpop.f32.mrb[0].mxu0
        %v4057 = vadd.f32 0.0, %v4056
        %4058 = vmatprep.mubr.bf16.mxu0 %v3095
        %4059 = vmatmul.mubr.bf16.gmra.mrb[0].mxu0 %v2689
        %v4060 = vpop.f32.mrb[0].mxu0
        %v4061 = vadd.f32 0.0, %v4060
        %v4062 = vpop.f32.mrb[0].mxu0
        %v4063 = vadd.f32 0.0, %v4062
        %v4064 = vpop.f32.mrb[0].mxu0
        %v4065 = vadd.f32 0.0, %v4064
        %v4066 = vpop.f32.mrb[0].mxu0
        %v4067 = vadd.f32 0.0, %v4066
        %4068 = vmatprep.mubr.bf16.mxu0 %v3098
        %4069 = vmatmul.mubr.bf16.gmra.mrb[0].mxu0 %v2691
        %v4070 = vpop.f32.mrb[0].mxu0
        %v4071 = vadd.f32 0.0, %v4070
        %v4072 = vpop.f32.mrb[0].mxu0
        %v4073 = vadd.f32 0.0, %v4072
        %v4074 = vpop.f32.mrb[0].mxu0
        %v4075 = vadd.f32 0.0, %v4074
        %v4076 = vpop.f32.mrb[0].mxu0
        %v4077 = vadd.f32 0.0, %v4076
        %4078 = vmatprep.mubr.bf16.mxu0 %v3101
        %4079 = vmatmul.mubr.bf16.gmra.mrb[0].mxu0 %v2693
        %v4080 = vpop.f32.mrb[0].mxu0
        %v4081 = vadd.f32 0.0, %v4080
        %v4082 = vpop.f32.mrb[0].mxu0
        %v4083 = vadd.f32 0.0, %v4082
        %v4084 = vpop.f32.mrb[0].mxu0
        %v4085 = vadd.f32 0.0, %v4084
        %v4086 = vpop.f32.mrb[0].mxu0
        %v4087 = vadd.f32 0.0, %v4086
        %4088 = vmatprep.mubr.bf16.mxu0 %v3104
        %4089 = vmatmul.mubr.bf16.gmra.mrb[0].mxu0 %v2695
        %v4090 = vpop.f32.mrb[0].mxu0
        %v4091 = vadd.f32 0.0, %v4090
        %v4092 = vpop.f32.mrb[0].mxu0
        %v4093 = vadd.f32 0.0, %v4092
        %v4094 = vpop.f32.mrb[0].mxu0
        %v4095 = vadd.f32 0.0, %v4094
        %v4096 = vpop.f32.mrb[0].mxu0
        %v4097 = vadd.f32 0.0, %v4096
        %4098 = vdwg.mxu0
        %v4100 = vsel %vm2817, %v1546, 0
        %v4103 = vsel %vm2817, %v1548, 0
        %v4106 = vsel %vm2817, %v1550, 0
        %v4109 = vsel %vm2817, %v1552, 0
        %v4112 = vsel %vm2817, %v1554, 0
        %v4115 = vsel %vm2817, %v1556, 0
        %v4118 = vsel %vm2817, %v1558, 0
        %v4121 = vsel %vm2817, %v1560, 0
        %v4124 = vsel %vm2817, %v1562, 0
        %v4127 = vsel %vm2817, %v1564, 0
        %v4130 = vsel %vm2817, %v1566, 0
        %v4133 = vsel %vm2817, %v1568, 0
        %v4136 = vsel %vm2817, %v1570, 0
        %v4139 = vsel %vm2817, %v1572, 0
        %v4142 = vsel %vm2817, %v1574, 0
        %v4145 = vsel %vm2817, %v1576, 0
        %v4148 = vsel %vm2817, %v1578, 0
        %v4151 = vsel %vm2817, %v1580, 0
        %v4154 = vsel %vm2817, %v1582, 0
        %v4157 = vsel %vm2817, %v1584, 0
        %v4160 = vsel %vm2817, %v1586, 0
        %v4163 = vsel %vm2817, %v1588, 0
        %v4166 = vsel %vm2817, %v1590, 0
        %v4169 = vsel %vm2817, %v1592, 0
        %v4172 = vsel %vm2817, %v1594, 0
        %v4175 = vsel %vm2817, %v1596, 0
        %v4178 = vsel %vm2817, %v1598, 0
        %v4181 = vsel %vm2817, %v1600, 0
        %v4184 = vsel %vm2817, %v1602, 0
        %v4187 = vsel %vm2817, %v1604, 0
        %v4190 = vsel %vm2817, %v1606, 0
        %v4193 = vsel %vm2817, %v1608, 0
        %v4196 = vsel %vm2817, %v1610, 0
        %v4199 = vsel %vm2817, %v1612, 0
        %v4202 = vsel %vm2817, %v1614, 0
        %v4205 = vsel %vm2817, %v1616, 0
        %v4208 = vsel %vm2817, %v1618, 0
        %v4211 = vsel %vm2817, %v1620, 0
        %v4214 = vsel %vm2817, %v1622, 0
        %v4217 = vsel %vm2817, %v1624, 0
        %v4220 = vsel %vm2817, %v1626, 0
        %v4223 = vsel %vm2817, %v1628, 0
        %v4226 = vsel %vm2817, %v1630, 0
        %v4229 = vsel %vm2817, %v1632, 0
        %v4232 = vsel %vm2817, %v1634, 0
        %v4235 = vsel %vm2817, %v1636, 0
        %v4238 = vsel %vm2817, %v1638, 0
        %v4241 = vsel %vm2817, %v1640, 0
        %v4244 = vsel %vm2817, %v1642, 0
        %v4247 = vsel %vm2817, %v1644, 0
        %v4250 = vsel %vm2817, %v1646, 0
        %v4253 = vsel %vm2817, %v1648, 0
        %v4256 = vsel %vm2817, %v1650, 0
        %v4259 = vsel %vm2817, %v1652, 0
        %v4262 = vsel %vm2817, %v1654, 0
        %v4265 = vsel %vm2817, %v1656, 0
        %v4268 = vsel %vm2817, %v1658, 0
        %v4271 = vsel %vm2817, %v1660, 0
        %v4274 = vsel %vm2817, %v1662, 0
        %v4277 = vsel %vm2817, %v1664, 0
        %v4280 = vsel %vm2817, %v1666, 0
        %v4283 = vsel %vm2817, %v1668, 0
        %v4286 = vsel %vm2817, %v1670, 0
        %v4289 = vsel %vm2817, %v1672, 0
        %v4292 = vsel %vm2817, %v1674, 0
        %v4295 = vsel %vm2817, %v1676, 0
        %v4298 = vsel %vm2817, %v1678, 0
        %v4301 = vsel %vm2817, %v1680, 0
        %v4304 = vsel %vm2817, %v1682, 0
        %v4307 = vsel %vm2817, %v1684, 0
        %v4310 = vsel %vm2817, %v1686, 0
        %v4313 = vsel %vm2817, %v1688, 0
        %v4316 = vsel %vm2817, %v1690, 0
        %v4319 = vsel %vm2817, %v1692, 0
        %v4322 = vsel %vm2817, %v1694, 0
        %v4325 = vsel %vm2817, %v1696, 0
        %v4328 = vsel %vm2817, %v1698, 0
        %v4331 = vsel %vm2817, %v1700, 0
        %v4334 = vsel %vm2817, %v1702, 0
        %v4337 = vsel %vm2817, %v1704, 0
        %v4340 = vsel %vm2817, %v1706, 0
        %v4343 = vsel %vm2817, %v1708, 0
        %v4346 = vsel %vm2817, %v1710, 0
        %v4349 = vsel %vm2817, %v1712, 0
        %v4352 = vsel %vm2817, %v1714, 0
        %v4355 = vsel %vm2817, %v1716, 0
        %v4358 = vsel %vm2817, %v1718, 0
        %v4361 = vsel %vm2817, %v1720, 0
        %v4364 = vsel %vm2817, %v1722, 0
        %v4367 = vsel %vm2817, %v1724, 0
        %v4370 = vsel %vm2817, %v1726, 0
        %v4373 = vsel %vm2817, %v1728, 0
        %v4376 = vsel %vm2817, %v1730, 0
        %v4379 = vsel %vm2817, %v1732, 0
        %v4382 = vsel %vm2817, %v1734, 0
        %v4385 = vsel %vm2817, %v1736, 0
        %4387 = vmatprep.subr.bf16.mxu0 %v2770
        %4388 = vmatpush1.bf16.msra.mxu0 %v2769
        %4389 = vmatprep.subr.bf16.mxu0 %v2772
        %4390 = vmatpush1.bf16.msra.mxu0 %v2771
        %4391 = vmatprep.subr.bf16.mxu0 %v2774
        %4392 = vmatpush1.bf16.msra.mxu0 %v2773
        %4393 = vmatprep.subr.bf16.mxu0 %v2776
        %4394 = vmatpush1.bf16.msra.mxu0 %v2775
        %4395 = vmatprep.subr.bf16.mxu0 %v2778
        %4396 = vmatpush1.bf16.msra.mxu0 %v2777
        %4397 = vmatprep.subr.bf16.mxu0 %v2780
        %4398 = vmatpush1.bf16.msra.mxu0 %v2779
        %4399 = vmatprep.subr.bf16.mxu0 %v2782
        %4400 = vmatpush1.bf16.msra.mxu0 %v2781
        %4401 = vmatprep.subr.bf16.mxu0 %v2784
        %4402 = vmatpush1.bf16.msra.mxu0 %v2783
        %4403 = vmatprep.subr.bf16.mxu0 %v2786
        %4404 = vmatpush1.bf16.msra.mxu0 %v2785
        %4405 = vmatprep.subr.bf16.mxu0 %v2788
        %4406 = vmatpush1.bf16.msra.mxu0 %v2787
        %4407 = vmatprep.subr.bf16.mxu0 %v2790
        %4408 = vmatpush1.bf16.msra.mxu0 %v2789
        %4409 = vmatprep.subr.bf16.mxu0 %v2792
        %4410 = vmatpush1.bf16.msra.mxu0 %v2791
        %4411 = vmatprep.subr.bf16.mxu0 0
        %4412 = vmatpush1.bf16.msra.mxu0 0
        %4413 = vmatprep.subr.bf16.mxu0 0
        %4414 = vmatpush1.bf16.msra.mxu0 0
        %4415 = vmatprep.subr.bf16.mxu0 0
        %4416 = vmatpush1.bf16.msra.mxu0 0
        %4417 = vmatprep.subr.bf16.mxu0 0
        %4418 = vmatpush1.bf16.msra.mxu0 0
        %4419 = vmatprep.mubr.bf16.mxu0 %v4100
        %4420 = vmatmul.mubr.bf16.gmra.mrb[0].mxu0 %v1545
        %v4421 = vpop.f32.mrb[0].mxu0
        %v4422 = vadd.f32 %v3141, %v4421
        %v4423 = vpop.f32.mrb[0].mxu0
        %v4424 = vadd.f32 %v3143, %v4423
        %v4425 = vpop.f32.mrb[0].mxu0
        %v4426 = vadd.f32 %v3145, %v4425
        %v4427 = vpop.f32.mrb[0].mxu0
        %v4428 = vadd.f32 %v3147, %v4427
        %4429 = vmatprep.mubr.bf16.mxu0 %v4103
        %4430 = vmatmul.mubr.bf16.gmra.mrb[0].mxu0 %v1547
        %v4431 = vpop.f32.mrb[0].mxu0
        %v4432 = vadd.f32 %v3151, %v4431
        %v4433 = vpop.f32.mrb[0].mxu0
        %v4434 = vadd.f32 %v3153, %v4433
        %v4435 = vpop.f32.mrb[0].mxu0
        %v4436 = vadd.f32 %v3155, %v4435
        %v4437 = vpop.f32.mrb[0].mxu0
        %v4438 = vadd.f32 %v3157, %v4437
        %4439 = vmatprep.mubr.bf16.mxu0 %v4106
        %4440 = vmatmul.mubr.bf16.gmra.mrb[0].mxu0 %v1549
        %v4441 = vpop.f32.mrb[0].mxu0
        %v4442 = vadd.f32 %v3161, %v4441
        %v4443 = vpop.f32.mrb[0].mxu0
        %v4444 = vadd.f32 %v3163, %v4443
        %v4445 = vpop.f32.mrb[0].mxu0
        %v4446 = vadd.f32 %v3165, %v4445
        %v4447 = vpop.f32.mrb[0].mxu0
        %v4448 = vadd.f32 %v3167, %v4447
        %4449 = vmatprep.mubr.bf16.mxu0 %v4109
        %4450 = vmatmul.mubr.bf16.gmra.mrb[0].mxu0 %v1551
        %v4451 = vpop.f32.mrb[0].mxu0
        %v4452 = vadd.f32 %v3171, %v4451
        %v4453 = vpop.f32.mrb[0].mxu0
        %v4454 = vadd.f32 %v3173, %v4453
        %v4455 = vpop.f32.mrb[0].mxu0
        %v4456 = vadd.f32 %v3175, %v4455
        %v4457 = vpop.f32.mrb[0].mxu0
        %v4458 = vadd.f32 %v3177, %v4457
        %4459 = vmatprep.mubr.bf16.mxu0 %v4112
        %4460 = vmatmul.mubr.bf16.gmra.mrb[0].mxu0 %v1553
        %v4461 = vpop.f32.mrb[0].mxu0
        %v4462 = vadd.f32 %v3181, %v4461
        %v4463 = vpop.f32.mrb[0].mxu0
        %v4464 = vadd.f32 %v3183, %v4463
        %v4465 = vpop.f32.mrb[0].mxu0
        %v4466 = vadd.f32 %v3185, %v4465
        %v4467 = vpop.f32.mrb[0].mxu0
        %v4468 = vadd.f32 %v3187, %v4467
        %4469 = vmatprep.mubr.bf16.mxu0 %v4115
        %4470 = vmatmul.mubr.bf16.gmra.mrb[0].mxu0 %v1555
        %v4471 = vpop.f32.mrb[0].mxu0
        %v4472 = vadd.f32 %v3191, %v4471
        %v4473 = vpop.f32.mrb[0].mxu0
        %v4474 = vadd.f32 %v3193, %v4473
        %v4475 = vpop.f32.mrb[0].mxu0
        %v4476 = vadd.f32 %v3195, %v4475
        %v4477 = vpop.f32.mrb[0].mxu0
        %v4478 = vadd.f32 %v3197, %v4477
        %4479 = vmatprep.mubr.bf16.mxu0 %v4118
        %4480 = vmatmul.mubr.bf16.gmra.mrb[0].mxu0 %v1557
        %v4481 = vpop.f32.mrb[0].mxu0
        %v4482 = vadd.f32 %v3201, %v4481
        %v4483 = vpop.f32.mrb[0].mxu0
        %v4484 = vadd.f32 %v3203, %v4483
        %v4485 = vpop.f32.mrb[0].mxu0
        %v4486 = vadd.f32 %v3205, %v4485
        %v4487 = vpop.f32.mrb[0].mxu0
        %v4488 = vadd.f32 %v3207, %v4487
        %4489 = vmatprep.mubr.bf16.mxu0 %v4121
        %4490 = vmatmul.mubr.bf16.gmra.mrb[0].mxu0 %v1559
        %v4491 = vpop.f32.mrb[0].mxu0
        %v4492 = vadd.f32 %v3211, %v4491
        %v4493 = vpop.f32.mrb[0].mxu0
        %v4494 = vadd.f32 %v3213, %v4493
        %v4495 = vpop.f32.mrb[0].mxu0
        %v4496 = vadd.f32 %v3215, %v4495
        %v4497 = vpop.f32.mrb[0].mxu0
        %v4498 = vadd.f32 %v3217, %v4497
        %4499 = vmatprep.mubr.bf16.mxu0 %v4124
        %4500 = vmatmul.mubr.bf16.gmra.mrb[0].mxu0 %v1561
        %v4501 = vpop.f32.mrb[0].mxu0
        %v4502 = vadd.f32 %v3221, %v4501
        %v4503 = vpop.f32.mrb[0].mxu0
        %v4504 = vadd.f32 %v3223, %v4503
        %v4505 = vpop.f32.mrb[0].mxu0
        %v4506 = vadd.f32 %v3225, %v4505
        %v4507 = vpop.f32.mrb[0].mxu0
        %v4508 = vadd.f32 %v3227, %v4507
        %4509 = vmatprep.mubr.bf16.mxu0 %v4127
        %4510 = vmatmul.mubr.bf16.gmra.mrb[0].mxu0 %v1563
        %v4511 = vpop.f32.mrb[0].mxu0
        %v4512 = vadd.f32 %v3231, %v4511
        %v4513 = vpop.f32.mrb[0].mxu0
        %v4514 = vadd.f32 %v3233, %v4513
        %v4515 = vpop.f32.mrb[0].mxu0
        %v4516 = vadd.f32 %v3235, %v4515
        %v4517 = vpop.f32.mrb[0].mxu0
        %v4518 = vadd.f32 %v3237, %v4517
        %4519 = vmatprep.mubr.bf16.mxu0 %v4130
        %4520 = vmatmul.mubr.bf16.gmra.mrb[0].mxu0 %v1565
        %v4521 = vpop.f32.mrb[0].mxu0
        %v4522 = vadd.f32 %v3241, %v4521
        %v4523 = vpop.f32.mrb[0].mxu0
        %v4524 = vadd.f32 %v3243, %v4523
        %v4525 = vpop.f32.mrb[0].mxu0
        %v4526 = vadd.f32 %v3245, %v4525
        %v4527 = vpop.f32.mrb[0].mxu0
        %v4528 = vadd.f32 %v3247, %v4527
        %4529 = vmatprep.mubr.bf16.mxu0 %v4133
        %4530 = vmatmul.mubr.bf16.gmra.mrb[0].mxu0 %v1567
        %v4531 = vpop.f32.mrb[0].mxu0
        %v4532 = vadd.f32 %v3251, %v4531
        %v4533 = vpop.f32.mrb[0].mxu0
        %v4534 = vadd.f32 %v3253, %v4533
        %v4535 = vpop.f32.mrb[0].mxu0
        %v4536 = vadd.f32 %v3255, %v4535
        %v4537 = vpop.f32.mrb[0].mxu0
        %v4538 = vadd.f32 %v3257, %v4537
        %4539 = vmatprep.mubr.bf16.mxu0 %v4136
        %4540 = vmatmul.mubr.bf16.gmra.mrb[0].mxu0 %v1569
        %v4541 = vpop.f32.mrb[0].mxu0
        %v4542 = vadd.f32 %v3261, %v4541
        %v4543 = vpop.f32.mrb[0].mxu0
        %v4544 = vadd.f32 %v3263, %v4543
        %v4545 = vpop.f32.mrb[0].mxu0
        %v4546 = vadd.f32 %v3265, %v4545
        %v4547 = vpop.f32.mrb[0].mxu0
        %v4548 = vadd.f32 %v3267, %v4547
        %4549 = vmatprep.mubr.bf16.mxu0 %v4139
        %4550 = vmatmul.mubr.bf16.gmra.mrb[0].mxu0 %v1571
        %v4551 = vpop.f32.mrb[0].mxu0
        %v4552 = vadd.f32 %v3271, %v4551
        %v4553 = vpop.f32.mrb[0].mxu0
        %v4554 = vadd.f32 %v3273, %v4553
        %v4555 = vpop.f32.mrb[0].mxu0
        %v4556 = vadd.f32 %v3275, %v4555
        %v4557 = vpop.f32.mrb[0].mxu0
        %v4558 = vadd.f32 %v3277, %v4557
        %4559 = vmatprep.mubr.bf16.mxu0 %v4142
        %4560 = vmatmul.mubr.bf16.gmra.mrb[0].mxu0 %v1573
        %v4561 = vpop.f32.mrb[0].mxu0
        %v4562 = vadd.f32 %v3281, %v4561
        %v4563 = vpop.f32.mrb[0].mxu0
        %v4564 = vadd.f32 %v3283, %v4563
        %v4565 = vpop.f32.mrb[0].mxu0
        %v4566 = vadd.f32 %v3285, %v4565
        %v4567 = vpop.f32.mrb[0].mxu0
        %v4568 = vadd.f32 %v3287, %v4567
        %4569 = vmatprep.mubr.bf16.mxu0 %v4145
        %4570 = vmatmul.mubr.bf16.gmra.mrb[0].mxu0 %v1575
        %v4571 = vpop.f32.mrb[0].mxu0
        %v4572 = vadd.f32 %v3291, %v4571
        %v4573 = vpop.f32.mrb[0].mxu0
        %v4574 = vadd.f32 %v3293, %v4573
        %v4575 = vpop.f32.mrb[0].mxu0
        %v4576 = vadd.f32 %v3295, %v4575
        %v4577 = vpop.f32.mrb[0].mxu0
        %v4578 = vadd.f32 %v3297, %v4577
        %4579 = vmatprep.mubr.bf16.mxu0 %v4148
        %4580 = vmatmul.mubr.bf16.gmra.mrb[0].mxu0 %v1577
        %v4581 = vpop.f32.mrb[0].mxu0
        %v4582 = vadd.f32 %v3301, %v4581
        %v4583 = vpop.f32.mrb[0].mxu0
        %v4584 = vadd.f32 %v3303, %v4583
        %v4585 = vpop.f32.mrb[0].mxu0
        %v4586 = vadd.f32 %v3305, %v4585
        %v4587 = vpop.f32.mrb[0].mxu0
        %v4588 = vadd.f32 %v3307, %v4587
        %4589 = vmatprep.mubr.bf16.mxu0 %v4151
        %4590 = vmatmul.mubr.bf16.gmra.mrb[0].mxu0 %v1579
        %v4591 = vpop.f32.mrb[0].mxu0
        %v4592 = vadd.f32 %v3311, %v4591
        %v4593 = vpop.f32.mrb[0].mxu0
        %v4594 = vadd.f32 %v3313, %v4593
        %v4595 = vpop.f32.mrb[0].mxu0
        %v4596 = vadd.f32 %v3315, %v4595
        %v4597 = vpop.f32.mrb[0].mxu0
        %v4598 = vadd.f32 %v3317, %v4597
        %4599 = vmatprep.mubr.bf16.mxu0 %v4154
        %4600 = vmatmul.mubr.bf16.gmra.mrb[0].mxu0 %v1581
        %v4601 = vpop.f32.mrb[0].mxu0
        %v4602 = vadd.f32 %v3321, %v4601
        %v4603 = vpop.f32.mrb[0].mxu0
        %v4604 = vadd.f32 %v3323, %v4603
        %v4605 = vpop.f32.mrb[0].mxu0
        %v4606 = vadd.f32 %v3325, %v4605
        %v4607 = vpop.f32.mrb[0].mxu0
        %v4608 = vadd.f32 %v3327, %v4607
        %4609 = vmatprep.mubr.bf16.mxu0 %v4157
        %4610 = vmatmul.mubr.bf16.gmra.mrb[0].mxu0 %v1583
        %v4611 = vpop.f32.mrb[0].mxu0
        %v4612 = vadd.f32 %v3331, %v4611
        %v4613 = vpop.f32.mrb[0].mxu0
        %v4614 = vadd.f32 %v3333, %v4613
        %v4615 = vpop.f32.mrb[0].mxu0
        %v4616 = vadd.f32 %v3335, %v4615
        %v4617 = vpop.f32.mrb[0].mxu0
        %v4618 = vadd.f32 %v3337, %v4617
        %4619 = vmatprep.mubr.bf16.mxu0 %v4160
        %4620 = vmatmul.mubr.bf16.gmra.mrb[0].mxu0 %v1585
        %v4621 = vpop.f32.mrb[0].mxu0
        %v4622 = vadd.f32 %v3341, %v4621
        %v4623 = vpop.f32.mrb[0].mxu0
        %v4624 = vadd.f32 %v3343, %v4623
        %v4625 = vpop.f32.mrb[0].mxu0
        %v4626 = vadd.f32 %v3345, %v4625
        %v4627 = vpop.f32.mrb[0].mxu0
        %v4628 = vadd.f32 %v3347, %v4627
        %4629 = vmatprep.mubr.bf16.mxu0 %v4163
        %4630 = vmatmul.mubr.bf16.gmra.mrb[0].mxu0 %v1587
        %v4631 = vpop.f32.mrb[0].mxu0
        %v4632 = vadd.f32 %v3351, %v4631
        %v4633 = vpop.f32.mrb[0].mxu0
        %v4634 = vadd.f32 %v3353, %v4633
        %v4635 = vpop.f32.mrb[0].mxu0
        %v4636 = vadd.f32 %v3355, %v4635
        %v4637 = vpop.f32.mrb[0].mxu0
        %v4638 = vadd.f32 %v3357, %v4637
        %4639 = vmatprep.mubr.bf16.mxu0 %v4166
        %4640 = vmatmul.mubr.bf16.gmra.mrb[0].mxu0 %v1589
        %v4641 = vpop.f32.mrb[0].mxu0
        %v4642 = vadd.f32 %v3361, %v4641
        %v4643 = vpop.f32.mrb[0].mxu0
        %v4644 = vadd.f32 %v3363, %v4643
        %v4645 = vpop.f32.mrb[0].mxu0
        %v4646 = vadd.f32 %v3365, %v4645
        %v4647 = vpop.f32.mrb[0].mxu0
        %v4648 = vadd.f32 %v3367, %v4647
        %4649 = vmatprep.mubr.bf16.mxu0 %v4169
        %4650 = vmatmul.mubr.bf16.gmra.mrb[0].mxu0 %v1591
        %v4651 = vpop.f32.mrb[0].mxu0
        %v4652 = vadd.f32 %v3371, %v4651
        %v4653 = vpop.f32.mrb[0].mxu0
        %v4654 = vadd.f32 %v3373, %v4653
        %v4655 = vpop.f32.mrb[0].mxu0
        %v4656 = vadd.f32 %v3375, %v4655
        %v4657 = vpop.f32.mrb[0].mxu0
        %v4658 = vadd.f32 %v3377, %v4657
        %4659 = vmatprep.mubr.bf16.mxu0 %v4172
        %4660 = vmatmul.mubr.bf16.gmra.mrb[0].mxu0 %v1593
        %v4661 = vpop.f32.mrb[0].mxu0
        %v4662 = vadd.f32 %v3381, %v4661
        %v4663 = vpop.f32.mrb[0].mxu0
        %v4664 = vadd.f32 %v3383, %v4663
        %v4665 = vpop.f32.mrb[0].mxu0
        %v4666 = vadd.f32 %v3385, %v4665
        %v4667 = vpop.f32.mrb[0].mxu0
        %v4668 = vadd.f32 %v3387, %v4667
        %4669 = vmatprep.mubr.bf16.mxu0 %v4175
        %4670 = vmatmul.mubr.bf16.gmra.mrb[0].mxu0 %v1595
        %v4671 = vpop.f32.mrb[0].mxu0
        %v4672 = vadd.f32 %v3391, %v4671
        %v4673 = vpop.f32.mrb[0].mxu0
        %v4674 = vadd.f32 %v3393, %v4673
        %v4675 = vpop.f32.mrb[0].mxu0
        %v4676 = vadd.f32 %v3395, %v4675
        %v4677 = vpop.f32.mrb[0].mxu0
        %v4678 = vadd.f32 %v3397, %v4677
        %4679 = vmatprep.mubr.bf16.mxu0 %v4178
        %4680 = vmatmul.mubr.bf16.gmra.mrb[0].mxu0 %v1597
        %v4681 = vpop.f32.mrb[0].mxu0
        %v4682 = vadd.f32 %v3401, %v4681
        %v4683 = vpop.f32.mrb[0].mxu0
        %v4684 = vadd.f32 %v3403, %v4683
        %v4685 = vpop.f32.mrb[0].mxu0
        %v4686 = vadd.f32 %v3405, %v4685
        %v4687 = vpop.f32.mrb[0].mxu0
        %v4688 = vadd.f32 %v3407, %v4687
        %4689 = vmatprep.mubr.bf16.mxu0 %v4181
        %4690 = vmatmul.mubr.bf16.gmra.mrb[0].mxu0 %v1599
        %v4691 = vpop.f32.mrb[0].mxu0
        %v4692 = vadd.f32 %v3411, %v4691
        %v4693 = vpop.f32.mrb[0].mxu0
        %v4694 = vadd.f32 %v3413, %v4693
        %v4695 = vpop.f32.mrb[0].mxu0
        %v4696 = vadd.f32 %v3415, %v4695
        %v4697 = vpop.f32.mrb[0].mxu0
        %v4698 = vadd.f32 %v3417, %v4697
        %4699 = vmatprep.mubr.bf16.mxu0 %v4184
        %4700 = vmatmul.mubr.bf16.gmra.mrb[0].mxu0 %v1601
        %v4701 = vpop.f32.mrb[0].mxu0
        %v4702 = vadd.f32 %v3421, %v4701
        %v4703 = vpop.f32.mrb[0].mxu0
        %v4704 = vadd.f32 %v3423, %v4703
        %v4705 = vpop.f32.mrb[0].mxu0
        %v4706 = vadd.f32 %v3425, %v4705
        %v4707 = vpop.f32.mrb[0].mxu0
        %v4708 = vadd.f32 %v3427, %v4707
        %4709 = vmatprep.mubr.bf16.mxu0 %v4187
        %4710 = vmatmul.mubr.bf16.gmra.mrb[0].mxu0 %v1603
        %v4711 = vpop.f32.mrb[0].mxu0
        %v4712 = vadd.f32 %v3431, %v4711
        %v4713 = vpop.f32.mrb[0].mxu0
        %v4714 = vadd.f32 %v3433, %v4713
        %v4715 = vpop.f32.mrb[0].mxu0
        %v4716 = vadd.f32 %v3435, %v4715
        %v4717 = vpop.f32.mrb[0].mxu0
        %v4718 = vadd.f32 %v3437, %v4717
        %4719 = vmatprep.mubr.bf16.mxu0 %v4190
        %4720 = vmatmul.mubr.bf16.gmra.mrb[0].mxu0 %v1605
        %v4721 = vpop.f32.mrb[0].mxu0
        %v4722 = vadd.f32 %v3441, %v4721
        %v4723 = vpop.f32.mrb[0].mxu0
        %v4724 = vadd.f32 %v3443, %v4723
        %v4725 = vpop.f32.mrb[0].mxu0
        %v4726 = vadd.f32 %v3445, %v4725
        %v4727 = vpop.f32.mrb[0].mxu0
        %v4728 = vadd.f32 %v3447, %v4727
        %4729 = vmatprep.mubr.bf16.mxu0 %v4193
        %4730 = vmatmul.mubr.bf16.gmra.mrb[0].mxu0 %v1607
        %v4731 = vpop.f32.mrb[0].mxu0
        %v4732 = vadd.f32 %v3451, %v4731
        %v4733 = vpop.f32.mrb[0].mxu0
        %v4734 = vadd.f32 %v3453, %v4733
        %v4735 = vpop.f32.mrb[0].mxu0
        %v4736 = vadd.f32 %v3455, %v4735
        %v4737 = vpop.f32.mrb[0].mxu0
        %v4738 = vadd.f32 %v3457, %v4737
        %4739 = vmatprep.mubr.bf16.mxu0 %v4196
        %4740 = vmatmul.mubr.bf16.gmra.mrb[0].mxu0 %v1609
        %v4741 = vpop.f32.mrb[0].mxu0
        %v4742 = vadd.f32 %v3461, %v4741
        %v4743 = vpop.f32.mrb[0].mxu0
        %v4744 = vadd.f32 %v3463, %v4743
        %v4745 = vpop.f32.mrb[0].mxu0
        %v4746 = vadd.f32 %v3465, %v4745
        %v4747 = vpop.f32.mrb[0].mxu0
        %v4748 = vadd.f32 %v3467, %v4747
        %4749 = vmatprep.mubr.bf16.mxu0 %v4199
        %4750 = vmatmul.mubr.bf16.gmra.mrb[0].mxu0 %v1611
        %v4751 = vpop.f32.mrb[0].mxu0
        %v4752 = vadd.f32 %v3471, %v4751
        %v4753 = vpop.f32.mrb[0].mxu0
        %v4754 = vadd.f32 %v3473, %v4753
        %v4755 = vpop.f32.mrb[0].mxu0
        %v4756 = vadd.f32 %v3475, %v4755
        %v4757 = vpop.f32.mrb[0].mxu0
        %v4758 = vadd.f32 %v3477, %v4757
        %4759 = vmatprep.mubr.bf16.mxu0 %v4202
        %4760 = vmatmul.mubr.bf16.gmra.mrb[0].mxu0 %v1613
        %v4761 = vpop.f32.mrb[0].mxu0
        %v4762 = vadd.f32 %v3481, %v4761
        %v4763 = vpop.f32.mrb[0].mxu0
        %v4764 = vadd.f32 %v3483, %v4763
        %v4765 = vpop.f32.mrb[0].mxu0
        %v4766 = vadd.f32 %v3485, %v4765
        %v4767 = vpop.f32.mrb[0].mxu0
        %v4768 = vadd.f32 %v3487, %v4767
        %4769 = vmatprep.mubr.bf16.mxu0 %v4205
        %4770 = vmatmul.mubr.bf16.gmra.mrb[0].mxu0 %v1615
        %v4771 = vpop.f32.mrb[0].mxu0
        %v4772 = vadd.f32 %v3491, %v4771
        %v4773 = vpop.f32.mrb[0].mxu0
        %v4774 = vadd.f32 %v3493, %v4773
        %v4775 = vpop.f32.mrb[0].mxu0
        %v4776 = vadd.f32 %v3495, %v4775
        %v4777 = vpop.f32.mrb[0].mxu0
        %v4778 = vadd.f32 %v3497, %v4777
        %4779 = vmatprep.mubr.bf16.mxu0 %v4208
        %4780 = vmatmul.mubr.bf16.gmra.mrb[0].mxu0 %v1617
        %v4781 = vpop.f32.mrb[0].mxu0
        %v4782 = vadd.f32 %v3501, %v4781
        %v4783 = vpop.f32.mrb[0].mxu0
        %v4784 = vadd.f32 %v3503, %v4783
        %v4785 = vpop.f32.mrb[0].mxu0
        %v4786 = vadd.f32 %v3505, %v4785
        %v4787 = vpop.f32.mrb[0].mxu0
        %v4788 = vadd.f32 %v3507, %v4787
        %4789 = vmatprep.mubr.bf16.mxu0 %v4211
        %4790 = vmatmul.mubr.bf16.gmra.mrb[0].mxu0 %v1619
        %v4791 = vpop.f32.mrb[0].mxu0
        %v4792 = vadd.f32 %v3511, %v4791
        %v4793 = vpop.f32.mrb[0].mxu0
        %v4794 = vadd.f32 %v3513, %v4793
        %v4795 = vpop.f32.mrb[0].mxu0
        %v4796 = vadd.f32 %v3515, %v4795
        %v4797 = vpop.f32.mrb[0].mxu0
        %v4798 = vadd.f32 %v3517, %v4797
        %4799 = vmatprep.mubr.bf16.mxu0 %v4214
        %4800 = vmatmul.mubr.bf16.gmra.mrb[0].mxu0 %v1621
        %v4801 = vpop.f32.mrb[0].mxu0
        %v4802 = vadd.f32 %v3521, %v4801
        %v4803 = vpop.f32.mrb[0].mxu0
        %v4804 = vadd.f32 %v3523, %v4803
        %v4805 = vpop.f32.mrb[0].mxu0
        %v4806 = vadd.f32 %v3525, %v4805
        %v4807 = vpop.f32.mrb[0].mxu0
        %v4808 = vadd.f32 %v3527, %v4807
        %4809 = vmatprep.mubr.bf16.mxu0 %v4217
        %4810 = vmatmul.mubr.bf16.gmra.mrb[0].mxu0 %v1623
        %v4811 = vpop.f32.mrb[0].mxu0
        %v4812 = vadd.f32 %v3531, %v4811
        %v4813 = vpop.f32.mrb[0].mxu0
        %v4814 = vadd.f32 %v3533, %v4813
        %v4815 = vpop.f32.mrb[0].mxu0
        %v4816 = vadd.f32 %v3535, %v4815
        %v4817 = vpop.f32.mrb[0].mxu0
        %v4818 = vadd.f32 %v3537, %v4817
        %4819 = vmatprep.mubr.bf16.mxu0 %v4220
        %4820 = vmatmul.mubr.bf16.gmra.mrb[0].mxu0 %v1625
        %v4821 = vpop.f32.mrb[0].mxu0
        %v4822 = vadd.f32 %v3541, %v4821
        %v4823 = vpop.f32.mrb[0].mxu0
        %v4824 = vadd.f32 %v3543, %v4823
        %v4825 = vpop.f32.mrb[0].mxu0
        %v4826 = vadd.f32 %v3545, %v4825
        %v4827 = vpop.f32.mrb[0].mxu0
        %v4828 = vadd.f32 %v3547, %v4827
        %4829 = vmatprep.mubr.bf16.mxu0 %v4223
        %4830 = vmatmul.mubr.bf16.gmra.mrb[0].mxu0 %v1627
        %v4831 = vpop.f32.mrb[0].mxu0
        %v4832 = vadd.f32 %v3551, %v4831
        %v4833 = vpop.f32.mrb[0].mxu0
        %v4834 = vadd.f32 %v3553, %v4833
        %v4835 = vpop.f32.mrb[0].mxu0
        %v4836 = vadd.f32 %v3555, %v4835
        %v4837 = vpop.f32.mrb[0].mxu0
        %v4838 = vadd.f32 %v3557, %v4837
        %4839 = vmatprep.mubr.bf16.mxu0 %v4226
        %4840 = vmatmul.mubr.bf16.gmra.mrb[0].mxu0 %v1629
        %v4841 = vpop.f32.mrb[0].mxu0
        %v4842 = vadd.f32 %v3561, %v4841
        %v4843 = vpop.f32.mrb[0].mxu0
        %v4844 = vadd.f32 %v3563, %v4843
        %v4845 = vpop.f32.mrb[0].mxu0
        %v4846 = vadd.f32 %v3565, %v4845
        %v4847 = vpop.f32.mrb[0].mxu0
        %v4848 = vadd.f32 %v3567, %v4847
        %4849 = vmatprep.mubr.bf16.mxu0 %v4229
        %4850 = vmatmul.mubr.bf16.gmra.mrb[0].mxu0 %v1631
        %v4851 = vpop.f32.mrb[0].mxu0
        %v4852 = vadd.f32 %v3571, %v4851
        %v4853 = vpop.f32.mrb[0].mxu0
        %v4854 = vadd.f32 %v3573, %v4853
        %v4855 = vpop.f32.mrb[0].mxu0
        %v4856 = vadd.f32 %v3575, %v4855
        %v4857 = vpop.f32.mrb[0].mxu0
        %v4858 = vadd.f32 %v3577, %v4857
        %4859 = vmatprep.mubr.bf16.mxu0 %v4232
        %4860 = vmatmul.mubr.bf16.gmra.mrb[0].mxu0 %v1633
        %v4861 = vpop.f32.mrb[0].mxu0
        %v4862 = vadd.f32 %v3581, %v4861
        %v4863 = vpop.f32.mrb[0].mxu0
        %v4864 = vadd.f32 %v3583, %v4863
        %v4865 = vpop.f32.mrb[0].mxu0
        %v4866 = vadd.f32 %v3585, %v4865
        %v4867 = vpop.f32.mrb[0].mxu0
        %v4868 = vadd.f32 %v3587, %v4867
        %4869 = vmatprep.mubr.bf16.mxu0 %v4235
        %4870 = vmatmul.mubr.bf16.gmra.mrb[0].mxu0 %v1635
        %v4871 = vpop.f32.mrb[0].mxu0
        %v4872 = vadd.f32 %v3591, %v4871
        %v4873 = vpop.f32.mrb[0].mxu0
        %v4874 = vadd.f32 %v3593, %v4873
        %v4875 = vpop.f32.mrb[0].mxu0
        %v4876 = vadd.f32 %v3595, %v4875
        %v4877 = vpop.f32.mrb[0].mxu0
        %v4878 = vadd.f32 %v3597, %v4877
        %4879 = vmatprep.mubr.bf16.mxu0 %v4238
        %4880 = vmatmul.mubr.bf16.gmra.mrb[0].mxu0 %v1637
        %v4881 = vpop.f32.mrb[0].mxu0
        %v4882 = vadd.f32 %v3601, %v4881
        %v4883 = vpop.f32.mrb[0].mxu0
        %v4884 = vadd.f32 %v3603, %v4883
        %v4885 = vpop.f32.mrb[0].mxu0
        %v4886 = vadd.f32 %v3605, %v4885
        %v4887 = vpop.f32.mrb[0].mxu0
        %v4888 = vadd.f32 %v3607, %v4887
        %4889 = vmatprep.mubr.bf16.mxu0 %v4241
        %4890 = vmatmul.mubr.bf16.gmra.mrb[0].mxu0 %v1639
        %v4891 = vpop.f32.mrb[0].mxu0
        %v4892 = vadd.f32 %v3611, %v4891
        %v4893 = vpop.f32.mrb[0].mxu0
        %v4894 = vadd.f32 %v3613, %v4893
        %v4895 = vpop.f32.mrb[0].mxu0
        %v4896 = vadd.f32 %v3615, %v4895
        %v4897 = vpop.f32.mrb[0].mxu0
        %v4898 = vadd.f32 %v3617, %v4897
        %4899 = vmatprep.mubr.bf16.mxu0 %v4244
        %4900 = vmatmul.mubr.bf16.gmra.mrb[0].mxu0 %v1641
        %v4901 = vpop.f32.mrb[0].mxu0
        %v4902 = vadd.f32 %v3621, %v4901
        %v4903 = vpop.f32.mrb[0].mxu0
        %v4904 = vadd.f32 %v3623, %v4903
        %v4905 = vpop.f32.mrb[0].mxu0
        %v4906 = vadd.f32 %v3625, %v4905
        %v4907 = vpop.f32.mrb[0].mxu0
        %v4908 = vadd.f32 %v3627, %v4907
        %4909 = vmatprep.mubr.bf16.mxu0 %v4247
        %4910 = vmatmul.mubr.bf16.gmra.mrb[0].mxu0 %v1643
        %v4911 = vpop.f32.mrb[0].mxu0
        %v4912 = vadd.f32 %v3631, %v4911
        %v4913 = vpop.f32.mrb[0].mxu0
        %v4914 = vadd.f32 %v3633, %v4913
        %v4915 = vpop.f32.mrb[0].mxu0
        %v4916 = vadd.f32 %v3635, %v4915
        %v4917 = vpop.f32.mrb[0].mxu0
        %v4918 = vadd.f32 %v3637, %v4917
        %4919 = vmatprep.mubr.bf16.mxu0 %v4250
        %4920 = vmatmul.mubr.bf16.gmra.mrb[0].mxu0 %v1645
        %v4921 = vpop.f32.mrb[0].mxu0
        %v4922 = vadd.f32 %v3641, %v4921
        %v4923 = vpop.f32.mrb[0].mxu0
        %v4924 = vadd.f32 %v3643, %v4923
        %v4925 = vpop.f32.mrb[0].mxu0
        %v4926 = vadd.f32 %v3645, %v4925
        %v4927 = vpop.f32.mrb[0].mxu0
        %v4928 = vadd.f32 %v3647, %v4927
        %4929 = vmatprep.mubr.bf16.mxu0 %v4253
        %4930 = vmatmul.mubr.bf16.gmra.mrb[0].mxu0 %v1647
        %v4931 = vpop.f32.mrb[0].mxu0
        %v4932 = vadd.f32 %v3651, %v4931
        %v4933 = vpop.f32.mrb[0].mxu0
        %v4934 = vadd.f32 %v3653, %v4933
        %v4935 = vpop.f32.mrb[0].mxu0
        %v4936 = vadd.f32 %v3655, %v4935
        %v4937 = vpop.f32.mrb[0].mxu0
        %v4938 = vadd.f32 %v3657, %v4937
        %4939 = vmatprep.mubr.bf16.mxu0 %v4256
        %4940 = vmatmul.mubr.bf16.gmra.mrb[0].mxu0 %v1649
        %v4941 = vpop.f32.mrb[0].mxu0
        %v4942 = vadd.f32 %v3661, %v4941
        %v4943 = vpop.f32.mrb[0].mxu0
        %v4944 = vadd.f32 %v3663, %v4943
        %v4945 = vpop.f32.mrb[0].mxu0
        %v4946 = vadd.f32 %v3665, %v4945
        %v4947 = vpop.f32.mrb[0].mxu0
        %v4948 = vadd.f32 %v3667, %v4947
        %4949 = vmatprep.mubr.bf16.mxu0 %v4259
        %4950 = vmatmul.mubr.bf16.gmra.mrb[0].mxu0 %v1651
        %v4951 = vpop.f32.mrb[0].mxu0
        %v4952 = vadd.f32 %v3671, %v4951
        %v4953 = vpop.f32.mrb[0].mxu0
        %v4954 = vadd.f32 %v3673, %v4953
        %v4955 = vpop.f32.mrb[0].mxu0
        %v4956 = vadd.f32 %v3675, %v4955
        %v4957 = vpop.f32.mrb[0].mxu0
        %v4958 = vadd.f32 %v3677, %v4957
        %4959 = vmatprep.mubr.bf16.mxu0 %v4262
        %4960 = vmatmul.mubr.bf16.gmra.mrb[0].mxu0 %v1653
        %v4961 = vpop.f32.mrb[0].mxu0
        %v4962 = vadd.f32 %v3681, %v4961
        %v4963 = vpop.f32.mrb[0].mxu0
        %v4964 = vadd.f32 %v3683, %v4963
        %v4965 = vpop.f32.mrb[0].mxu0
        %v4966 = vadd.f32 %v3685, %v4965
        %v4967 = vpop.f32.mrb[0].mxu0
        %v4968 = vadd.f32 %v3687, %v4967
        %4969 = vmatprep.mubr.bf16.mxu0 %v4265
        %4970 = vmatmul.mubr.bf16.gmra.mrb[0].mxu0 %v1655
        %v4971 = vpop.f32.mrb[0].mxu0
        %v4972 = vadd.f32 %v3691, %v4971
        %v4973 = vpop.f32.mrb[0].mxu0
        %v4974 = vadd.f32 %v3693, %v4973
        %v4975 = vpop.f32.mrb[0].mxu0
        %v4976 = vadd.f32 %v3695, %v4975
        %v4977 = vpop.f32.mrb[0].mxu0
        %v4978 = vadd.f32 %v3697, %v4977
        %4979 = vmatprep.mubr.bf16.mxu0 %v4268
        %4980 = vmatmul.mubr.bf16.gmra.mrb[0].mxu0 %v1657
        %v4981 = vpop.f32.mrb[0].mxu0
        %v4982 = vadd.f32 %v3701, %v4981
        %v4983 = vpop.f32.mrb[0].mxu0
        %v4984 = vadd.f32 %v3703, %v4983
        %v4985 = vpop.f32.mrb[0].mxu0
        %v4986 = vadd.f32 %v3705, %v4985
        %v4987 = vpop.f32.mrb[0].mxu0
        %v4988 = vadd.f32 %v3707, %v4987
        %4989 = vmatprep.mubr.bf16.mxu0 %v4271
        %4990 = vmatmul.mubr.bf16.gmra.mrb[0].mxu0 %v1659
        %v4991 = vpop.f32.mrb[0].mxu0
        %v4992 = vadd.f32 %v3711, %v4991
        %v4993 = vpop.f32.mrb[0].mxu0
        %v4994 = vadd.f32 %v3713, %v4993
        %v4995 = vpop.f32.mrb[0].mxu0
        %v4996 = vadd.f32 %v3715, %v4995
        %v4997 = vpop.f32.mrb[0].mxu0
        %v4998 = vadd.f32 %v3717, %v4997
        %4999 = vmatprep.mubr.bf16.mxu0 %v4274
        %5000 = vmatmul.mubr.bf16.gmra.mrb[0].mxu0 %v1661
        %v5001 = vpop.f32.mrb[0].mxu0
        %v5002 = vadd.f32 %v3721, %v5001
        %v5003 = vpop.f32.mrb[0].mxu0
        %v5004 = vadd.f32 %v3723, %v5003
        %v5005 = vpop.f32.mrb[0].mxu0
        %v5006 = vadd.f32 %v3725, %v5005
        %v5007 = vpop.f32.mrb[0].mxu0
        %v5008 = vadd.f32 %v3727, %v5007
        %5009 = vmatprep.mubr.bf16.mxu0 %v4277
        %5010 = vmatmul.mubr.bf16.gmra.mrb[0].mxu0 %v1663
        %v5011 = vpop.f32.mrb[0].mxu0
        %v5012 = vadd.f32 %v3731, %v5011
        %v5013 = vpop.f32.mrb[0].mxu0
        %v5014 = vadd.f32 %v3733, %v5013
        %v5015 = vpop.f32.mrb[0].mxu0
        %v5016 = vadd.f32 %v3735, %v5015
        %v5017 = vpop.f32.mrb[0].mxu0
        %v5018 = vadd.f32 %v3737, %v5017
        %5019 = vmatprep.mubr.bf16.mxu0 %v4280
        %5020 = vmatmul.mubr.bf16.gmra.mrb[0].mxu0 %v1665
        %v5021 = vpop.f32.mrb[0].mxu0
        %v5022 = vadd.f32 %v3741, %v5021
        %v5023 = vpop.f32.mrb[0].mxu0
        %v5024 = vadd.f32 %v3743, %v5023
        %v5025 = vpop.f32.mrb[0].mxu0
        %v5026 = vadd.f32 %v3745, %v5025
        %v5027 = vpop.f32.mrb[0].mxu0
        %v5028 = vadd.f32 %v3747, %v5027
        %5029 = vmatprep.mubr.bf16.mxu0 %v4283
        %5030 = vmatmul.mubr.bf16.gmra.mrb[0].mxu0 %v1667
        %v5031 = vpop.f32.mrb[0].mxu0
        %v5032 = vadd.f32 %v3751, %v5031
        %v5033 = vpop.f32.mrb[0].mxu0
        %v5034 = vadd.f32 %v3753, %v5033
        %v5035 = vpop.f32.mrb[0].mxu0
        %v5036 = vadd.f32 %v3755, %v5035
        %v5037 = vpop.f32.mrb[0].mxu0
        %v5038 = vadd.f32 %v3757, %v5037
        %5039 = vmatprep.mubr.bf16.mxu0 %v4286
        %5040 = vmatmul.mubr.bf16.gmra.mrb[0].mxu0 %v1669
        %v5041 = vpop.f32.mrb[0].mxu0
        %v5042 = vadd.f32 %v3761, %v5041
        %v5043 = vpop.f32.mrb[0].mxu0
        %v5044 = vadd.f32 %v3763, %v5043
        %v5045 = vpop.f32.mrb[0].mxu0
        %v5046 = vadd.f32 %v3765, %v5045
        %v5047 = vpop.f32.mrb[0].mxu0
        %v5048 = vadd.f32 %v3767, %v5047
        %5049 = vmatprep.mubr.bf16.mxu0 %v4289
        %5050 = vmatmul.mubr.bf16.gmra.mrb[0].mxu0 %v1671
        %v5051 = vpop.f32.mrb[0].mxu0
        %v5052 = vadd.f32 %v3771, %v5051
        %v5053 = vpop.f32.mrb[0].mxu0
        %v5054 = vadd.f32 %v3773, %v5053
        %v5055 = vpop.f32.mrb[0].mxu0
        %v5056 = vadd.f32 %v3775, %v5055
        %v5057 = vpop.f32.mrb[0].mxu0
        %v5058 = vadd.f32 %v3777, %v5057
        %5059 = vmatprep.mubr.bf16.mxu0 %v4292
        %5060 = vmatmul.mubr.bf16.gmra.mrb[0].mxu0 %v1673
        %v5061 = vpop.f32.mrb[0].mxu0
        %v5062 = vadd.f32 %v3781, %v5061
        %v5063 = vpop.f32.mrb[0].mxu0
        %v5064 = vadd.f32 %v3783, %v5063
        %v5065 = vpop.f32.mrb[0].mxu0
        %v5066 = vadd.f32 %v3785, %v5065
        %v5067 = vpop.f32.mrb[0].mxu0
        %v5068 = vadd.f32 %v3787, %v5067
        %5069 = vmatprep.mubr.bf16.mxu0 %v4295
        %5070 = vmatmul.mubr.bf16.gmra.mrb[0].mxu0 %v1675
        %v5071 = vpop.f32.mrb[0].mxu0
        %v5072 = vadd.f32 %v3791, %v5071
        %v5073 = vpop.f32.mrb[0].mxu0
        %v5074 = vadd.f32 %v3793, %v5073
        %v5075 = vpop.f32.mrb[0].mxu0
        %v5076 = vadd.f32 %v3795, %v5075
        %v5077 = vpop.f32.mrb[0].mxu0
        %v5078 = vadd.f32 %v3797, %v5077
        %5079 = vmatprep.mubr.bf16.mxu0 %v4298
        %5080 = vmatmul.mubr.bf16.gmra.mrb[0].mxu0 %v1677
        %v5081 = vpop.f32.mrb[0].mxu0
        %v5082 = vadd.f32 %v3801, %v5081
        %v5083 = vpop.f32.mrb[0].mxu0
        %v5084 = vadd.f32 %v3803, %v5083
        %v5085 = vpop.f32.mrb[0].mxu0
        %v5086 = vadd.f32 %v3805, %v5085
        %v5087 = vpop.f32.mrb[0].mxu0
        %v5088 = vadd.f32 %v3807, %v5087
        %5089 = vmatprep.mubr.bf16.mxu0 %v4301
        %5090 = vmatmul.mubr.bf16.gmra.mrb[0].mxu0 %v1679
        %v5091 = vpop.f32.mrb[0].mxu0
        %v5092 = vadd.f32 %v3811, %v5091
        %v5093 = vpop.f32.mrb[0].mxu0
        %v5094 = vadd.f32 %v3813, %v5093
        %v5095 = vpop.f32.mrb[0].mxu0
        %v5096 = vadd.f32 %v3815, %v5095
        %v5097 = vpop.f32.mrb[0].mxu0
        %v5098 = vadd.f32 %v3817, %v5097
        %5099 = vmatprep.mubr.bf16.mxu0 %v4304
        %5100 = vmatmul.mubr.bf16.gmra.mrb[0].mxu0 %v1681
        %v5101 = vpop.f32.mrb[0].mxu0
        %v5102 = vadd.f32 %v3821, %v5101
        %v5103 = vpop.f32.mrb[0].mxu0
        %v5104 = vadd.f32 %v3823, %v5103
        %v5105 = vpop.f32.mrb[0].mxu0
        %v5106 = vadd.f32 %v3825, %v5105
        %v5107 = vpop.f32.mrb[0].mxu0
        %v5108 = vadd.f32 %v3827, %v5107
        %5109 = vmatprep.mubr.bf16.mxu0 %v4307
        %5110 = vmatmul.mubr.bf16.gmra.mrb[0].mxu0 %v1683
        %v5111 = vpop.f32.mrb[0].mxu0
        %v5112 = vadd.f32 %v3831, %v5111
        %v5113 = vpop.f32.mrb[0].mxu0
        %v5114 = vadd.f32 %v3833, %v5113
        %v5115 = vpop.f32.mrb[0].mxu0
        %v5116 = vadd.f32 %v3835, %v5115
        %v5117 = vpop.f32.mrb[0].mxu0
        %v5118 = vadd.f32 %v3837, %v5117
        %5119 = vmatprep.mubr.bf16.mxu0 %v4310
        %5120 = vmatmul.mubr.bf16.gmra.mrb[0].mxu0 %v1685
        %v5121 = vpop.f32.mrb[0].mxu0
        %v5122 = vadd.f32 %v3841, %v5121
        %v5123 = vpop.f32.mrb[0].mxu0
        %v5124 = vadd.f32 %v3843, %v5123
        %v5125 = vpop.f32.mrb[0].mxu0
        %v5126 = vadd.f32 %v3845, %v5125
        %v5127 = vpop.f32.mrb[0].mxu0
        %v5128 = vadd.f32 %v3847, %v5127
        %5129 = vmatprep.mubr.bf16.mxu0 %v4313
        %5130 = vmatmul.mubr.bf16.gmra.mrb[0].mxu0 %v1687
        %v5131 = vpop.f32.mrb[0].mxu0
        %v5132 = vadd.f32 %v3851, %v5131
        %v5133 = vpop.f32.mrb[0].mxu0
        %v5134 = vadd.f32 %v3853, %v5133
        %v5135 = vpop.f32.mrb[0].mxu0
        %v5136 = vadd.f32 %v3855, %v5135
        %v5137 = vpop.f32.mrb[0].mxu0
        %v5138 = vadd.f32 %v3857, %v5137
        %5139 = vmatprep.mubr.bf16.mxu0 %v4316
        %5140 = vmatmul.mubr.bf16.gmra.mrb[0].mxu0 %v1689
        %v5141 = vpop.f32.mrb[0].mxu0
        %v5142 = vadd.f32 %v3861, %v5141
        %v5143 = vpop.f32.mrb[0].mxu0
        %v5144 = vadd.f32 %v3863, %v5143
        %v5145 = vpop.f32.mrb[0].mxu0
        %v5146 = vadd.f32 %v3865, %v5145
        %v5147 = vpop.f32.mrb[0].mxu0
        %v5148 = vadd.f32 %v3867, %v5147
        %5149 = vmatprep.mubr.bf16.mxu0 %v4319
        %5150 = vmatmul.mubr.bf16.gmra.mrb[0].mxu0 %v1691
        %v5151 = vpop.f32.mrb[0].mxu0
        %v5152 = vadd.f32 %v3871, %v5151
        %v5153 = vpop.f32.mrb[0].mxu0
        %v5154 = vadd.f32 %v3873, %v5153
        %v5155 = vpop.f32.mrb[0].mxu0
        %v5156 = vadd.f32 %v3875, %v5155
        %v5157 = vpop.f32.mrb[0].mxu0
        %v5158 = vadd.f32 %v3877, %v5157
        %5159 = vmatprep.mubr.bf16.mxu0 %v4322
        %5160 = vmatmul.mubr.bf16.gmra.mrb[0].mxu0 %v1693
        %v5161 = vpop.f32.mrb[0].mxu0
        %v5162 = vadd.f32 %v3881, %v5161
        %v5163 = vpop.f32.mrb[0].mxu0
        %v5164 = vadd.f32 %v3883, %v5163
        %v5165 = vpop.f32.mrb[0].mxu0
        %v5166 = vadd.f32 %v3885, %v5165
        %v5167 = vpop.f32.mrb[0].mxu0
        %v5168 = vadd.f32 %v3887, %v5167
        %5169 = vmatprep.mubr.bf16.mxu0 %v4325
        %5170 = vmatmul.mubr.bf16.gmra.mrb[0].mxu0 %v1695
        %v5171 = vpop.f32.mrb[0].mxu0
        %v5172 = vadd.f32 %v3891, %v5171
        %v5173 = vpop.f32.mrb[0].mxu0
        %v5174 = vadd.f32 %v3893, %v5173
        %v5175 = vpop.f32.mrb[0].mxu0
        %v5176 = vadd.f32 %v3895, %v5175
        %v5177 = vpop.f32.mrb[0].mxu0
        %v5178 = vadd.f32 %v3897, %v5177
        %5179 = vmatprep.mubr.bf16.mxu0 %v4328
        %5180 = vmatmul.mubr.bf16.gmra.mrb[0].mxu0 %v1697
        %v5181 = vpop.f32.mrb[0].mxu0
        %v5182 = vadd.f32 %v3901, %v5181
        %v5183 = vpop.f32.mrb[0].mxu0
        %v5184 = vadd.f32 %v3903, %v5183
        %v5185 = vpop.f32.mrb[0].mxu0
        %v5186 = vadd.f32 %v3905, %v5185
        %v5187 = vpop.f32.mrb[0].mxu0
        %v5188 = vadd.f32 %v3907, %v5187
        %5189 = vmatprep.mubr.bf16.mxu0 %v4331
        %5190 = vmatmul.mubr.bf16.gmra.mrb[0].mxu0 %v1699
        %v5191 = vpop.f32.mrb[0].mxu0
        %v5192 = vadd.f32 %v3911, %v5191
        %v5193 = vpop.f32.mrb[0].mxu0
        %v5194 = vadd.f32 %v3913, %v5193
        %v5195 = vpop.f32.mrb[0].mxu0
        %v5196 = vadd.f32 %v3915, %v5195
        %v5197 = vpop.f32.mrb[0].mxu0
        %v5198 = vadd.f32 %v3917, %v5197
        %5199 = vmatprep.mubr.bf16.mxu0 %v4334
        %5200 = vmatmul.mubr.bf16.gmra.mrb[0].mxu0 %v1701
        %v5201 = vpop.f32.mrb[0].mxu0
        %v5202 = vadd.f32 %v3921, %v5201
        %v5203 = vpop.f32.mrb[0].mxu0
        %v5204 = vadd.f32 %v3923, %v5203
        %v5205 = vpop.f32.mrb[0].mxu0
        %v5206 = vadd.f32 %v3925, %v5205
        %v5207 = vpop.f32.mrb[0].mxu0
        %v5208 = vadd.f32 %v3927, %v5207
        %5209 = vmatprep.mubr.bf16.mxu0 %v4337
        %5210 = vmatmul.mubr.bf16.gmra.mrb[0].mxu0 %v1703
        %v5211 = vpop.f32.mrb[0].mxu0
        %v5212 = vadd.f32 %v3931, %v5211
        %v5213 = vpop.f32.mrb[0].mxu0
        %v5214 = vadd.f32 %v3933, %v5213
        %v5215 = vpop.f32.mrb[0].mxu0
        %v5216 = vadd.f32 %v3935, %v5215
        %v5217 = vpop.f32.mrb[0].mxu0
        %v5218 = vadd.f32 %v3937, %v5217
        %5219 = vmatprep.mubr.bf16.mxu0 %v4340
        %5220 = vmatmul.mubr.bf16.gmra.mrb[0].mxu0 %v1705
        %v5221 = vpop.f32.mrb[0].mxu0
        %v5222 = vadd.f32 %v3941, %v5221
        %v5223 = vpop.f32.mrb[0].mxu0
        %v5224 = vadd.f32 %v3943, %v5223
        %v5225 = vpop.f32.mrb[0].mxu0
        %v5226 = vadd.f32 %v3945, %v5225
        %v5227 = vpop.f32.mrb[0].mxu0
        %v5228 = vadd.f32 %v3947, %v5227
        %5229 = vmatprep.mubr.bf16.mxu0 %v4343
        %5230 = vmatmul.mubr.bf16.gmra.mrb[0].mxu0 %v1707
        %v5231 = vpop.f32.mrb[0].mxu0
        %v5232 = vadd.f32 %v3951, %v5231
        %v5233 = vpop.f32.mrb[0].mxu0
        %v5234 = vadd.f32 %v3953, %v5233
        %v5235 = vpop.f32.mrb[0].mxu0
        %v5236 = vadd.f32 %v3955, %v5235
        %v5237 = vpop.f32.mrb[0].mxu0
        %v5238 = vadd.f32 %v3957, %v5237
        %5239 = vmatprep.mubr.bf16.mxu0 %v4346
        %5240 = vmatmul.mubr.bf16.gmra.mrb[0].mxu0 %v1709
        %v5241 = vpop.f32.mrb[0].mxu0
        %v5242 = vadd.f32 %v3961, %v5241
        %v5243 = vpop.f32.mrb[0].mxu0
        %v5244 = vadd.f32 %v3963, %v5243
        %v5245 = vpop.f32.mrb[0].mxu0
        %v5246 = vadd.f32 %v3965, %v5245
        %v5247 = vpop.f32.mrb[0].mxu0
        %v5248 = vadd.f32 %v3967, %v5247
        %5249 = vmatprep.mubr.bf16.mxu0 %v4349
        %5250 = vmatmul.mubr.bf16.gmra.mrb[0].mxu0 %v1711
        %v5251 = vpop.f32.mrb[0].mxu0
        %v5252 = vadd.f32 %v3971, %v5251
        %v5253 = vpop.f32.mrb[0].mxu0
        %v5254 = vadd.f32 %v3973, %v5253
        %v5255 = vpop.f32.mrb[0].mxu0
        %v5256 = vadd.f32 %v3975, %v5255
        %v5257 = vpop.f32.mrb[0].mxu0
        %v5258 = vadd.f32 %v3977, %v5257
        %5259 = vmatprep.mubr.bf16.mxu0 %v4352
        %5260 = vmatmul.mubr.bf16.gmra.mrb[0].mxu0 %v1713
        %v5261 = vpop.f32.mrb[0].mxu0
        %v5262 = vadd.f32 %v3981, %v5261
        %v5263 = vpop.f32.mrb[0].mxu0
        %v5264 = vadd.f32 %v3983, %v5263
        %v5265 = vpop.f32.mrb[0].mxu0
        %v5266 = vadd.f32 %v3985, %v5265
        %v5267 = vpop.f32.mrb[0].mxu0
        %v5268 = vadd.f32 %v3987, %v5267
        %5269 = vmatprep.mubr.bf16.mxu0 %v4355
        %5270 = vmatmul.mubr.bf16.gmra.mrb[0].mxu0 %v1715
        %v5271 = vpop.f32.mrb[0].mxu0
        %v5272 = vadd.f32 %v3991, %v5271
        %v5273 = vpop.f32.mrb[0].mxu0
        %v5274 = vadd.f32 %v3993, %v5273
        %v5275 = vpop.f32.mrb[0].mxu0
        %v5276 = vadd.f32 %v3995, %v5275
        %v5277 = vpop.f32.mrb[0].mxu0
        %v5278 = vadd.f32 %v3997, %v5277
        %5279 = vmatprep.mubr.bf16.mxu0 %v4358
        %5280 = vmatmul.mubr.bf16.gmra.mrb[0].mxu0 %v1717
        %v5281 = vpop.f32.mrb[0].mxu0
        %v5282 = vadd.f32 %v4001, %v5281
        %v5283 = vpop.f32.mrb[0].mxu0
        %v5284 = vadd.f32 %v4003, %v5283
        %v5285 = vpop.f32.mrb[0].mxu0
        %v5286 = vadd.f32 %v4005, %v5285
        %v5287 = vpop.f32.mrb[0].mxu0
        %v5288 = vadd.f32 %v4007, %v5287
        %5289 = vmatprep.mubr.bf16.mxu0 %v4361
        %5290 = vmatmul.mubr.bf16.gmra.mrb[0].mxu0 %v1719
        %v5291 = vpop.f32.mrb[0].mxu0
        %v5292 = vadd.f32 %v4011, %v5291
        %v5293 = vpop.f32.mrb[0].mxu0
        %v5294 = vadd.f32 %v4013, %v5293
        %v5295 = vpop.f32.mrb[0].mxu0
        %v5296 = vadd.f32 %v4015, %v5295
        %v5297 = vpop.f32.mrb[0].mxu0
        %v5298 = vadd.f32 %v4017, %v5297
        %5299 = vmatprep.mubr.bf16.mxu0 %v4364
        %5300 = vmatmul.mubr.bf16.gmra.mrb[0].mxu0 %v1721
        %v5301 = vpop.f32.mrb[0].mxu0
        %v5302 = vadd.f32 %v4021, %v5301
        %v5303 = vpop.f32.mrb[0].mxu0
        %v5304 = vadd.f32 %v4023, %v5303
        %v5305 = vpop.f32.mrb[0].mxu0
        %v5306 = vadd.f32 %v4025, %v5305
        %v5307 = vpop.f32.mrb[0].mxu0
        %v5308 = vadd.f32 %v4027, %v5307
        %5309 = vmatprep.mubr.bf16.mxu0 %v4367
        %5310 = vmatmul.mubr.bf16.gmra.mrb[0].mxu0 %v1723
        %v5311 = vpop.f32.mrb[0].mxu0
        %v5312 = vadd.f32 %v4031, %v5311
        %v5313 = vpop.f32.mrb[0].mxu0
        %v5314 = vadd.f32 %v4033, %v5313
        %v5315 = vpop.f32.mrb[0].mxu0
        %v5316 = vadd.f32 %v4035, %v5315
        %v5317 = vpop.f32.mrb[0].mxu0
        %v5318 = vadd.f32 %v4037, %v5317
        %5319 = vmatprep.mubr.bf16.mxu0 %v4370
        %5320 = vmatmul.mubr.bf16.gmra.mrb[0].mxu0 %v1725
        %v5321 = vpop.f32.mrb[0].mxu0
        %v5322 = vadd.f32 %v4041, %v5321
        %v5323 = vpop.f32.mrb[0].mxu0
        %v5324 = vadd.f32 %v4043, %v5323
        %v5325 = vpop.f32.mrb[0].mxu0
        %v5326 = vadd.f32 %v4045, %v5325
        %v5327 = vpop.f32.mrb[0].mxu0
        %v5328 = vadd.f32 %v4047, %v5327
        %5329 = vmatprep.mubr.bf16.mxu0 %v4373
        %5330 = vmatmul.mubr.bf16.gmra.mrb[0].mxu0 %v1727
        %v5331 = vpop.f32.mrb[0].mxu0
        %v5332 = vadd.f32 %v4051, %v5331
        %v5333 = vpop.f32.mrb[0].mxu0
        %v5334 = vadd.f32 %v4053, %v5333
        %v5335 = vpop.f32.mrb[0].mxu0
        %v5336 = vadd.f32 %v4055, %v5335
        %v5337 = vpop.f32.mrb[0].mxu0
        %v5338 = vadd.f32 %v4057, %v5337
        %5339 = vmatprep.mubr.bf16.mxu0 %v4376
        %5340 = vmatmul.mubr.bf16.gmra.mrb[0].mxu0 %v1729
        %v5341 = vpop.f32.mrb[0].mxu0
        %v5342 = vadd.f32 %v4061, %v5341
        %v5343 = vpop.f32.mrb[0].mxu0
        %v5344 = vadd.f32 %v4063, %v5343
        %v5345 = vpop.f32.mrb[0].mxu0
        %v5346 = vadd.f32 %v4065, %v5345
        %v5347 = vpop.f32.mrb[0].mxu0
        %v5348 = vadd.f32 %v4067, %v5347
        %5349 = vmatprep.mubr.bf16.mxu0 %v4379
        %5350 = vmatmul.mubr.bf16.gmra.mrb[0].mxu0 %v1731
        %v5351 = vpop.f32.mrb[0].mxu0
        %v5352 = vadd.f32 %v4071, %v5351
        %v5353 = vpop.f32.mrb[0].mxu0
        %v5354 = vadd.f32 %v4073, %v5353
        %v5355 = vpop.f32.mrb[0].mxu0
        %v5356 = vadd.f32 %v4075, %v5355
        %v5357 = vpop.f32.mrb[0].mxu0
        %v5358 = vadd.f32 %v4077, %v5357
        %5359 = vmatprep.mubr.bf16.mxu0 %v4382
        %5360 = vmatmul.mubr.bf16.gmra.mrb[0].mxu0 %v1733
        %v5361 = vpop.f32.mrb[0].mxu0
        %v5362 = vadd.f32 %v4081, %v5361
        %v5363 = vpop.f32.mrb[0].mxu0
        %v5364 = vadd.f32 %v4083, %v5363
        %v5365 = vpop.f32.mrb[0].mxu0
        %v5366 = vadd.f32 %v4085, %v5365
        %v5367 = vpop.f32.mrb[0].mxu0
        %v5368 = vadd.f32 %v4087, %v5367
        %5369 = vmatprep.mubr.bf16.mxu0 %v4385
        %5370 = vmatmul.mubr.bf16.gmra.mrb[0].mxu0 %v1735
        %v5371 = vpop.f32.mrb[0].mxu0
        %v5372 = vadd.f32 %v4091, %v5371
        %v5373 = vpop.f32.mrb[0].mxu0
        %v5374 = vadd.f32 %v4093, %v5373
        %v5375 = vpop.f32.mrb[0].mxu0
        %v5376 = vadd.f32 %v4095, %v5375
        %v5377 = vpop.f32.mrb[0].mxu0
        %v5378 = vadd.f32 %v4097, %v5377
        %5379 = vdwg.mxu0
        %v5381 = vsel %vm2817, %v586, 0
        %v5384 = vsel %vm2817, %v588, 0
        %v5387 = vsel %vm2817, %v590, 0
        %v5390 = vsel %vm2817, %v592, 0
        %v5393 = vsel %vm2817, %v594, 0
        %v5396 = vsel %vm2817, %v596, 0
        %v5399 = vsel %vm2817, %v598, 0
        %v5402 = vsel %vm2817, %v600, 0
        %v5405 = vsel %vm2817, %v602, 0
        %v5408 = vsel %vm2817, %v604, 0
        %v5411 = vsel %vm2817, %v606, 0
        %v5414 = vsel %vm2817, %v608, 0
        %v5417 = vsel %vm2817, %v610, 0
        %v5420 = vsel %vm2817, %v612, 0
        %v5423 = vsel %vm2817, %v614, 0
        %v5426 = vsel %vm2817, %v616, 0
        %v5429 = vsel %vm2817, %v618, 0
        %v5432 = vsel %vm2817, %v620, 0
        %v5435 = vsel %vm2817, %v622, 0
        %v5438 = vsel %vm2817, %v624, 0
        %v5441 = vsel %vm2817, %v626, 0
        %v5444 = vsel %vm2817, %v628, 0
        %v5447 = vsel %vm2817, %v630, 0
        %v5450 = vsel %vm2817, %v632, 0
        %v5453 = vsel %vm2817, %v634, 0
        %v5456 = vsel %vm2817, %v636, 0
        %v5459 = vsel %vm2817, %v638, 0
        %v5462 = vsel %vm2817, %v640, 0
        %v5465 = vsel %vm2817, %v642, 0
        %v5468 = vsel %vm2817, %v644, 0
        %v5471 = vsel %vm2817, %v646, 0
        %v5474 = vsel %vm2817, %v648, 0
        %v5477 = vsel %vm2817, %v650, 0
        %v5480 = vsel %vm2817, %v652, 0
        %v5483 = vsel %vm2817, %v654, 0
        %v5486 = vsel %vm2817, %v656, 0
        %v5489 = vsel %vm2817, %v658, 0
        %v5492 = vsel %vm2817, %v660, 0
        %v5495 = vsel %vm2817, %v662, 0
        %v5498 = vsel %vm2817, %v664, 0
        %v5501 = vsel %vm2817, %v666, 0
        %v5504 = vsel %vm2817, %v668, 0
        %v5507 = vsel %vm2817, %v670, 0
        %v5510 = vsel %vm2817, %v672, 0
        %v5513 = vsel %vm2817, %v674, 0
        %v5516 = vsel %vm2817, %v676, 0
        %v5519 = vsel %vm2817, %v678, 0
        %v5522 = vsel %vm2817, %v680, 0
        %v5525 = vsel %vm2817, %v682, 0
        %v5528 = vsel %vm2817, %v684, 0
        %v5531 = vsel %vm2817, %v686, 0
        %v5534 = vsel %vm2817, %v688, 0
        %v5537 = vsel %vm2817, %v690, 0
        %v5540 = vsel %vm2817, %v692, 0
        %v5543 = vsel %vm2817, %v694, 0
        %v5546 = vsel %vm2817, %v696, 0
        %v5549 = vsel %vm2817, %v698, 0
        %v5552 = vsel %vm2817, %v700, 0
        %v5555 = vsel %vm2817, %v702, 0
        %v5558 = vsel %vm2817, %v704, 0
        %v5561 = vsel %vm2817, %v706, 0
        %v5564 = vsel %vm2817, %v708, 0
        %v5567 = vsel %vm2817, %v710, 0
        %v5570 = vsel %vm2817, %v712, 0
        %v5573 = vsel %vm2817, %v714, 0
        %v5576 = vsel %vm2817, %v716, 0
        %v5579 = vsel %vm2817, %v718, 0
        %v5582 = vsel %vm2817, %v720, 0
        %v5585 = vsel %vm2817, %v722, 0
        %v5588 = vsel %vm2817, %v724, 0
        %v5591 = vsel %vm2817, %v726, 0
        %v5594 = vsel %vm2817, %v728, 0
        %v5597 = vsel %vm2817, %v730, 0
        %v5600 = vsel %vm2817, %v732, 0
        %v5603 = vsel %vm2817, %v734, 0
        %v5606 = vsel %vm2817, %v736, 0
        %v5609 = vsel %vm2817, %v738, 0
        %v5612 = vsel %vm2817, %v740, 0
        %v5615 = vsel %vm2817, %v742, 0
        %v5618 = vsel %vm2817, %v744, 0
        %v5621 = vsel %vm2817, %v746, 0
        %v5624 = vsel %vm2817, %v748, 0
        %v5627 = vsel %vm2817, %v750, 0
        %v5630 = vsel %vm2817, %v752, 0
        %v5633 = vsel %vm2817, %v754, 0
        %v5636 = vsel %vm2817, %v756, 0
        %v5639 = vsel %vm2817, %v758, 0
        %v5642 = vsel %vm2817, %v760, 0
        %v5645 = vsel %vm2817, %v762, 0
        %v5648 = vsel %vm2817, %v764, 0
        %v5651 = vsel %vm2817, %v766, 0
        %v5654 = vsel %vm2817, %v768, 0
        %v5657 = vsel %vm2817, %v770, 0
        %v5660 = vsel %vm2817, %v772, 0
        %v5663 = vsel %vm2817, %v774, 0
        %v5666 = vsel %vm2817, %v776, 0
        %5668 = vmatprep.subr.bf16.mxu0 %v2770
        %5669 = vmatpush1.bf16.msra.mxu0 %v2769
        %5670 = vmatprep.subr.bf16.mxu0 %v2772
        %5671 = vmatpush1.bf16.msra.mxu0 %v2771
        %5672 = vmatprep.subr.bf16.mxu0 %v2774
        %5673 = vmatpush1.bf16.msra.mxu0 %v2773
        %5674 = vmatprep.subr.bf16.mxu0 %v2776
        %5675 = vmatpush1.bf16.msra.mxu0 %v2775
        %5676 = vmatprep.subr.bf16.mxu0 %v2778
        %5677 = vmatpush1.bf16.msra.mxu0 %v2777
        %5678 = vmatprep.subr.bf16.mxu0 %v2780
        %5679 = vmatpush1.bf16.msra.mxu0 %v2779
        %5680 = vmatprep.subr.bf16.mxu0 %v2782
        %5681 = vmatpush1.bf16.msra.mxu0 %v2781
        %5682 = vmatprep.subr.bf16.mxu0 %v2784
        %5683 = vmatpush1.bf16.msra.mxu0 %v2783
        %5684 = vmatprep.subr.bf16.mxu0 %v2786
        %5685 = vmatpush1.bf16.msra.mxu0 %v2785
        %5686 = vmatprep.subr.bf16.mxu0 %v2788
        %5687 = vmatpush1.bf16.msra.mxu0 %v2787
        %5688 = vmatprep.subr.bf16.mxu0 %v2790
        %5689 = vmatpush1.bf16.msra.mxu0 %v2789
        %5690 = vmatprep.subr.bf16.mxu0 %v2792
        %5691 = vmatpush1.bf16.msra.mxu0 %v2791
        %5692 = vmatprep.subr.bf16.mxu0 0
        %5693 = vmatpush1.bf16.msra.mxu0 0
        %5694 = vmatprep.subr.bf16.mxu0 0
        %5695 = vmatpush1.bf16.msra.mxu0 0
        %5696 = vmatprep.subr.bf16.mxu0 0
        %5697 = vmatpush1.bf16.msra.mxu0 0
        %5698 = vmatprep.subr.bf16.mxu0 0
        %5699 = vmatpush1.bf16.msra.mxu0 0
        %5700 = vmatprep.mubr.bf16.mxu0 %v5381
        %5701 = vmatmul.mubr.bf16.gmra.mrb[0].mxu0 %v585
        %v5702 = vpop.f32.mrb[0].mxu0
        %v5703 = vadd.f32 %v4422, %v5702
        %v5704 = vpop.f32.mrb[0].mxu0
        %v5705 = vadd.f32 %v4424, %v5704
        %v5706 = vpop.f32.mrb[0].mxu0
        %v5707 = vadd.f32 %v4426, %v5706
        %v5708 = vpop.f32.mrb[0].mxu0
        %v5709 = vadd.f32 %v4428, %v5708
        %5710 = vmatprep.mubr.bf16.mxu0 %v5384
        %5711 = vmatmul.mubr.bf16.gmra.mrb[0].mxu0 %v587
        %v5712 = vpop.f32.mrb[0].mxu0
        %v5713 = vadd.f32 %v4432, %v5712
        %v5714 = vpop.f32.mrb[0].mxu0
        %v5715 = vadd.f32 %v4434, %v5714
        %v5716 = vpop.f32.mrb[0].mxu0
        %v5717 = vadd.f32 %v4436, %v5716
        %v5718 = vpop.f32.mrb[0].mxu0
        %v5719 = vadd.f32 %v4438, %v5718
        %5720 = vmatprep.mubr.bf16.mxu0 %v5387
        %5721 = vmatmul.mubr.bf16.gmra.mrb[0].mxu0 %v589
        %v5722 = vpop.f32.mrb[0].mxu0
        %v5723 = vadd.f32 %v4442, %v5722
        %v5724 = vpop.f32.mrb[0].mxu0
        %v5725 = vadd.f32 %v4444, %v5724
        %v5726 = vpop.f32.mrb[0].mxu0
        %v5727 = vadd.f32 %v4446, %v5726
        %v5728 = vpop.f32.mrb[0].mxu0
        %v5729 = vadd.f32 %v4448, %v5728
        %5730 = vmatprep.mubr.bf16.mxu0 %v5390
        %5731 = vmatmul.mubr.bf16.gmra.mrb[0].mxu0 %v591
        %v5732 = vpop.f32.mrb[0].mxu0
        %v5733 = vadd.f32 %v4452, %v5732
        %v5734 = vpop.f32.mrb[0].mxu0
        %v5735 = vadd.f32 %v4454, %v5734
        %v5736 = vpop.f32.mrb[0].mxu0
        %v5737 = vadd.f32 %v4456, %v5736
        %v5738 = vpop.f32.mrb[0].mxu0
        %v5739 = vadd.f32 %v4458, %v5738
        %5740 = vmatprep.mubr.bf16.mxu0 %v5393
        %5741 = vmatmul.mubr.bf16.gmra.mrb[0].mxu0 %v593
        %v5742 = vpop.f32.mrb[0].mxu0
        %v5743 = vadd.f32 %v4462, %v5742
        %v5744 = vpop.f32.mrb[0].mxu0
        %v5745 = vadd.f32 %v4464, %v5744
        %v5746 = vpop.f32.mrb[0].mxu0
        %v5747 = vadd.f32 %v4466, %v5746
        %v5748 = vpop.f32.mrb[0].mxu0
        %v5749 = vadd.f32 %v4468, %v5748
        %5750 = vmatprep.mubr.bf16.mxu0 %v5396
        %5751 = vmatmul.mubr.bf16.gmra.mrb[0].mxu0 %v595
        %v5752 = vpop.f32.mrb[0].mxu0
        %v5753 = vadd.f32 %v4472, %v5752
        %v5754 = vpop.f32.mrb[0].mxu0
        %v5755 = vadd.f32 %v4474, %v5754
        %v5756 = vpop.f32.mrb[0].mxu0
        %v5757 = vadd.f32 %v4476, %v5756
        %v5758 = vpop.f32.mrb[0].mxu0
        %v5759 = vadd.f32 %v4478, %v5758
        %5760 = vmatprep.mubr.bf16.mxu0 %v5399
        %5761 = vmatmul.mubr.bf16.gmra.mrb[0].mxu0 %v597
        %v5762 = vpop.f32.mrb[0].mxu0
        %v5763 = vadd.f32 %v4482, %v5762
        %v5764 = vpop.f32.mrb[0].mxu0
        %v5765 = vadd.f32 %v4484, %v5764
        %v5766 = vpop.f32.mrb[0].mxu0
        %v5767 = vadd.f32 %v4486, %v5766
        %v5768 = vpop.f32.mrb[0].mxu0
        %v5769 = vadd.f32 %v4488, %v5768
        %5770 = vmatprep.mubr.bf16.mxu0 %v5402
        %5771 = vmatmul.mubr.bf16.gmra.mrb[0].mxu0 %v599
        %v5772 = vpop.f32.mrb[0].mxu0
        %v5773 = vadd.f32 %v4492, %v5772
        %v5774 = vpop.f32.mrb[0].mxu0
        %v5775 = vadd.f32 %v4494, %v5774
        %v5776 = vpop.f32.mrb[0].mxu0
        %v5777 = vadd.f32 %v4496, %v5776
        %v5778 = vpop.f32.mrb[0].mxu0
        %v5779 = vadd.f32 %v4498, %v5778
        %5780 = vmatprep.mubr.bf16.mxu0 %v5405
        %5781 = vmatmul.mubr.bf16.gmra.mrb[0].mxu0 %v601
        %v5782 = vpop.f32.mrb[0].mxu0
        %v5783 = vadd.f32 %v4502, %v5782
        %v5784 = vpop.f32.mrb[0].mxu0
        %v5785 = vadd.f32 %v4504, %v5784
        %v5786 = vpop.f32.mrb[0].mxu0
        %v5787 = vadd.f32 %v4506, %v5786
        %v5788 = vpop.f32.mrb[0].mxu0
        %v5789 = vadd.f32 %v4508, %v5788
        %5790 = vmatprep.mubr.bf16.mxu0 %v5408
        %5791 = vmatmul.mubr.bf16.gmra.mrb[0].mxu0 %v603
        %v5792 = vpop.f32.mrb[0].mxu0
        %v5793 = vadd.f32 %v4512, %v5792
        %v5794 = vpop.f32.mrb[0].mxu0
        %v5795 = vadd.f32 %v4514, %v5794
        %v5796 = vpop.f32.mrb[0].mxu0
        %v5797 = vadd.f32 %v4516, %v5796
        %v5798 = vpop.f32.mrb[0].mxu0
        %v5799 = vadd.f32 %v4518, %v5798
        %5800 = vmatprep.mubr.bf16.mxu0 %v5411
        %5801 = vmatmul.mubr.bf16.gmra.mrb[0].mxu0 %v605
        %v5802 = vpop.f32.mrb[0].mxu0
        %v5803 = vadd.f32 %v4522, %v5802
        %v5804 = vpop.f32.mrb[0].mxu0
        %v5805 = vadd.f32 %v4524, %v5804
        %v5806 = vpop.f32.mrb[0].mxu0
        %v5807 = vadd.f32 %v4526, %v5806
        %v5808 = vpop.f32.mrb[0].mxu0
        %v5809 = vadd.f32 %v4528, %v5808
        %5810 = vmatprep.mubr.bf16.mxu0 %v5414
        %5811 = vmatmul.mubr.bf16.gmra.mrb[0].mxu0 %v607
        %v5812 = vpop.f32.mrb[0].mxu0
        %v5813 = vadd.f32 %v4532, %v5812
        %v5814 = vpop.f32.mrb[0].mxu0
        %v5815 = vadd.f32 %v4534, %v5814
        %v5816 = vpop.f32.mrb[0].mxu0
        %v5817 = vadd.f32 %v4536, %v5816
        %v5818 = vpop.f32.mrb[0].mxu0
        %v5819 = vadd.f32 %v4538, %v5818
        %5820 = vmatprep.mubr.bf16.mxu0 %v5417
        %5821 = vmatmul.mubr.bf16.gmra.mrb[0].mxu0 %v609
        %v5822 = vpop.f32.mrb[0].mxu0
        %v5823 = vadd.f32 %v4542, %v5822
        %v5824 = vpop.f32.mrb[0].mxu0
        %v5825 = vadd.f32 %v4544, %v5824
        %v5826 = vpop.f32.mrb[0].mxu0
        %v5827 = vadd.f32 %v4546, %v5826
        %v5828 = vpop.f32.mrb[0].mxu0
        %v5829 = vadd.f32 %v4548, %v5828
        %5830 = vmatprep.mubr.bf16.mxu0 %v5420
        %5831 = vmatmul.mubr.bf16.gmra.mrb[0].mxu0 %v611
        %v5832 = vpop.f32.mrb[0].mxu0
        %v5833 = vadd.f32 %v4552, %v5832
        %v5834 = vpop.f32.mrb[0].mxu0
        %v5835 = vadd.f32 %v4554, %v5834
        %v5836 = vpop.f32.mrb[0].mxu0
        %v5837 = vadd.f32 %v4556, %v5836
        %v5838 = vpop.f32.mrb[0].mxu0
        %v5839 = vadd.f32 %v4558, %v5838
        %5840 = vmatprep.mubr.bf16.mxu0 %v5423
        %5841 = vmatmul.mubr.bf16.gmra.mrb[0].mxu0 %v613
        %v5842 = vpop.f32.mrb[0].mxu0
        %v5843 = vadd.f32 %v4562, %v5842
        %v5844 = vpop.f32.mrb[0].mxu0
        %v5845 = vadd.f32 %v4564, %v5844
        %v5846 = vpop.f32.mrb[0].mxu0
        %v5847 = vadd.f32 %v4566, %v5846
        %v5848 = vpop.f32.mrb[0].mxu0
        %v5849 = vadd.f32 %v4568, %v5848
        %5850 = vmatprep.mubr.bf16.mxu0 %v5426
        %5851 = vmatmul.mubr.bf16.gmra.mrb[0].mxu0 %v615
        %v5852 = vpop.f32.mrb[0].mxu0
        %v5853 = vadd.f32 %v4572, %v5852
        %v5854 = vpop.f32.mrb[0].mxu0
        %v5855 = vadd.f32 %v4574, %v5854
        %v5856 = vpop.f32.mrb[0].mxu0
        %v5857 = vadd.f32 %v4576, %v5856
        %v5858 = vpop.f32.mrb[0].mxu0
        %v5859 = vadd.f32 %v4578, %v5858
        %5860 = vmatprep.mubr.bf16.mxu0 %v5429
        %5861 = vmatmul.mubr.bf16.gmra.mrb[0].mxu0 %v617
        %v5862 = vpop.f32.mrb[0].mxu0
        %v5863 = vadd.f32 %v4582, %v5862
        %v5864 = vpop.f32.mrb[0].mxu0
        %v5865 = vadd.f32 %v4584, %v5864
        %v5866 = vpop.f32.mrb[0].mxu0
        %v5867 = vadd.f32 %v4586, %v5866
        %v5868 = vpop.f32.mrb[0].mxu0
        %v5869 = vadd.f32 %v4588, %v5868
        %5870 = vmatprep.mubr.bf16.mxu0 %v5432
        %5871 = vmatmul.mubr.bf16.gmra.mrb[0].mxu0 %v619
        %v5872 = vpop.f32.mrb[0].mxu0
        %v5873 = vadd.f32 %v4592, %v5872
        %v5874 = vpop.f32.mrb[0].mxu0
        %v5875 = vadd.f32 %v4594, %v5874
        %v5876 = vpop.f32.mrb[0].mxu0
        %v5877 = vadd.f32 %v4596, %v5876
        %v5878 = vpop.f32.mrb[0].mxu0
        %v5879 = vadd.f32 %v4598, %v5878
        %5880 = vmatprep.mubr.bf16.mxu0 %v5435
        %5881 = vmatmul.mubr.bf16.gmra.mrb[0].mxu0 %v621
        %v5882 = vpop.f32.mrb[0].mxu0
        %v5883 = vadd.f32 %v4602, %v5882
        %v5884 = vpop.f32.mrb[0].mxu0
        %v5885 = vadd.f32 %v4604, %v5884
        %v5886 = vpop.f32.mrb[0].mxu0
        %v5887 = vadd.f32 %v4606, %v5886
        %v5888 = vpop.f32.mrb[0].mxu0
        %v5889 = vadd.f32 %v4608, %v5888
        %5890 = vmatprep.mubr.bf16.mxu0 %v5438
        %5891 = vmatmul.mubr.bf16.gmra.mrb[0].mxu0 %v623
        %v5892 = vpop.f32.mrb[0].mxu0
        %v5893 = vadd.f32 %v4612, %v5892
        %v5894 = vpop.f32.mrb[0].mxu0
        %v5895 = vadd.f32 %v4614, %v5894
        %v5896 = vpop.f32.mrb[0].mxu0
        %v5897 = vadd.f32 %v4616, %v5896
        %v5898 = vpop.f32.mrb[0].mxu0
        %v5899 = vadd.f32 %v4618, %v5898
        %5900 = vmatprep.mubr.bf16.mxu0 %v5441
        %5901 = vmatmul.mubr.bf16.gmra.mrb[0].mxu0 %v625
        %v5902 = vpop.f32.mrb[0].mxu0
        %v5903 = vadd.f32 %v4622, %v5902
        %v5904 = vpop.f32.mrb[0].mxu0
        %v5905 = vadd.f32 %v4624, %v5904
        %v5906 = vpop.f32.mrb[0].mxu0
        %v5907 = vadd.f32 %v4626, %v5906
        %v5908 = vpop.f32.mrb[0].mxu0
        %v5909 = vadd.f32 %v4628, %v5908
        %5910 = vmatprep.mubr.bf16.mxu0 %v5444
        %5911 = vmatmul.mubr.bf16.gmra.mrb[0].mxu0 %v627
        %v5912 = vpop.f32.mrb[0].mxu0
        %v5913 = vadd.f32 %v4632, %v5912
        %v5914 = vpop.f32.mrb[0].mxu0
        %v5915 = vadd.f32 %v4634, %v5914
        %v5916 = vpop.f32.mrb[0].mxu0
        %v5917 = vadd.f32 %v4636, %v5916
        %v5918 = vpop.f32.mrb[0].mxu0
        %v5919 = vadd.f32 %v4638, %v5918
        %5920 = vmatprep.mubr.bf16.mxu0 %v5447
        %5921 = vmatmul.mubr.bf16.gmra.mrb[0].mxu0 %v629
        %v5922 = vpop.f32.mrb[0].mxu0
        %v5923 = vadd.f32 %v4642, %v5922
        %v5924 = vpop.f32.mrb[0].mxu0
        %v5925 = vadd.f32 %v4644, %v5924
        %v5926 = vpop.f32.mrb[0].mxu0
        %v5927 = vadd.f32 %v4646, %v5926
        %v5928 = vpop.f32.mrb[0].mxu0
        %v5929 = vadd.f32 %v4648, %v5928
        %5930 = vmatprep.mubr.bf16.mxu0 %v5450
        %5931 = vmatmul.mubr.bf16.gmra.mrb[0].mxu0 %v631
        %v5932 = vpop.f32.mrb[0].mxu0
        %v5933 = vadd.f32 %v4652, %v5932
        %v5934 = vpop.f32.mrb[0].mxu0
        %v5935 = vadd.f32 %v4654, %v5934
        %v5936 = vpop.f32.mrb[0].mxu0
        %v5937 = vadd.f32 %v4656, %v5936
        %v5938 = vpop.f32.mrb[0].mxu0
        %v5939 = vadd.f32 %v4658, %v5938
        %5940 = vmatprep.mubr.bf16.mxu0 %v5453
        %5941 = vmatmul.mubr.bf16.gmra.mrb[0].mxu0 %v633
        %v5942 = vpop.f32.mrb[0].mxu0
        %v5943 = vadd.f32 %v4662, %v5942
        %v5944 = vpop.f32.mrb[0].mxu0
        %v5945 = vadd.f32 %v4664, %v5944
        %v5946 = vpop.f32.mrb[0].mxu0
        %v5947 = vadd.f32 %v4666, %v5946
        %v5948 = vpop.f32.mrb[0].mxu0
        %v5949 = vadd.f32 %v4668, %v5948
        %5950 = vmatprep.mubr.bf16.mxu0 %v5456
        %5951 = vmatmul.mubr.bf16.gmra.mrb[0].mxu0 %v635
        %v5952 = vpop.f32.mrb[0].mxu0
        %v5953 = vadd.f32 %v4672, %v5952
        %v5954 = vpop.f32.mrb[0].mxu0
        %v5955 = vadd.f32 %v4674, %v5954
        %v5956 = vpop.f32.mrb[0].mxu0
        %v5957 = vadd.f32 %v4676, %v5956
        %v5958 = vpop.f32.mrb[0].mxu0
        %v5959 = vadd.f32 %v4678, %v5958
        %5960 = vmatprep.mubr.bf16.mxu0 %v5459
        %5961 = vmatmul.mubr.bf16.gmra.mrb[0].mxu0 %v637
        %v5962 = vpop.f32.mrb[0].mxu0
        %v5963 = vadd.f32 %v4682, %v5962
        %v5964 = vpop.f32.mrb[0].mxu0
        %v5965 = vadd.f32 %v4684, %v5964
        %v5966 = vpop.f32.mrb[0].mxu0
        %v5967 = vadd.f32 %v4686, %v5966
        %v5968 = vpop.f32.mrb[0].mxu0
        %v5969 = vadd.f32 %v4688, %v5968
        %5970 = vmatprep.mubr.bf16.mxu0 %v5462
        %5971 = vmatmul.mubr.bf16.gmra.mrb[0].mxu0 %v639
        %v5972 = vpop.f32.mrb[0].mxu0
        %v5973 = vadd.f32 %v4692, %v5972
        %v5974 = vpop.f32.mrb[0].mxu0
        %v5975 = vadd.f32 %v4694, %v5974
        %v5976 = vpop.f32.mrb[0].mxu0
        %v5977 = vadd.f32 %v4696, %v5976
        %v5978 = vpop.f32.mrb[0].mxu0
        %v5979 = vadd.f32 %v4698, %v5978
        %5980 = vmatprep.mubr.bf16.mxu0 %v5465
        %5981 = vmatmul.mubr.bf16.gmra.mrb[0].mxu0 %v641
        %v5982 = vpop.f32.mrb[0].mxu0
        %v5983 = vadd.f32 %v4702, %v5982
        %v5984 = vpop.f32.mrb[0].mxu0
        %v5985 = vadd.f32 %v4704, %v5984
        %v5986 = vpop.f32.mrb[0].mxu0
        %v5987 = vadd.f32 %v4706, %v5986
        %v5988 = vpop.f32.mrb[0].mxu0
        %v5989 = vadd.f32 %v4708, %v5988
        %5990 = vmatprep.mubr.bf16.mxu0 %v5468
        %5991 = vmatmul.mubr.bf16.gmra.mrb[0].mxu0 %v643
        %v5992 = vpop.f32.mrb[0].mxu0
        %v5993 = vadd.f32 %v4712, %v5992
        %v5994 = vpop.f32.mrb[0].mxu0
        %v5995 = vadd.f32 %v4714, %v5994
        %v5996 = vpop.f32.mrb[0].mxu0
        %v5997 = vadd.f32 %v4716, %v5996
        %v5998 = vpop.f32.mrb[0].mxu0
        %v5999 = vadd.f32 %v4718, %v5998
        %6000 = vmatprep.mubr.bf16.mxu0 %v5471
        %6001 = vmatmul.mubr.bf16.gmra.mrb[0].mxu0 %v645
        %v6002 = vpop.f32.mrb[0].mxu0
        %v6003 = vadd.f32 %v4722, %v6002
        %v6004 = vpop.f32.mrb[0].mxu0
        %v6005 = vadd.f32 %v4724, %v6004
        %v6006 = vpop.f32.mrb[0].mxu0
        %v6007 = vadd.f32 %v4726, %v6006
        %v6008 = vpop.f32.mrb[0].mxu0
        %v6009 = vadd.f32 %v4728, %v6008
        %6010 = vmatprep.mubr.bf16.mxu0 %v5474
        %6011 = vmatmul.mubr.bf16.gmra.mrb[0].mxu0 %v647
        %v6012 = vpop.f32.mrb[0].mxu0
        %v6013 = vadd.f32 %v4732, %v6012
        %v6014 = vpop.f32.mrb[0].mxu0
        %v6015 = vadd.f32 %v4734, %v6014
        %v6016 = vpop.f32.mrb[0].mxu0
        %v6017 = vadd.f32 %v4736, %v6016
        %v6018 = vpop.f32.mrb[0].mxu0
        %v6019 = vadd.f32 %v4738, %v6018
        %6020 = vmatprep.mubr.bf16.mxu0 %v5477
        %6021 = vmatmul.mubr.bf16.gmra.mrb[0].mxu0 %v649
        %v6022 = vpop.f32.mrb[0].mxu0
        %v6023 = vadd.f32 %v4742, %v6022
        %v6024 = vpop.f32.mrb[0].mxu0
        %v6025 = vadd.f32 %v4744, %v6024
        %v6026 = vpop.f32.mrb[0].mxu0
        %v6027 = vadd.f32 %v4746, %v6026
        %v6028 = vpop.f32.mrb[0].mxu0
        %v6029 = vadd.f32 %v4748, %v6028
        %6030 = vmatprep.mubr.bf16.mxu0 %v5480
        %6031 = vmatmul.mubr.bf16.gmra.mrb[0].mxu0 %v651
        %v6032 = vpop.f32.mrb[0].mxu0
        %v6033 = vadd.f32 %v4752, %v6032
        %v6034 = vpop.f32.mrb[0].mxu0
        %v6035 = vadd.f32 %v4754, %v6034
        %v6036 = vpop.f32.mrb[0].mxu0
        %v6037 = vadd.f32 %v4756, %v6036
        %v6038 = vpop.f32.mrb[0].mxu0
        %v6039 = vadd.f32 %v4758, %v6038
        %6040 = vmatprep.mubr.bf16.mxu0 %v5483
        %6041 = vmatmul.mubr.bf16.gmra.mrb[0].mxu0 %v653
        %v6042 = vpop.f32.mrb[0].mxu0
        %v6043 = vadd.f32 %v4762, %v6042
        %v6044 = vpop.f32.mrb[0].mxu0
        %v6045 = vadd.f32 %v4764, %v6044
        %v6046 = vpop.f32.mrb[0].mxu0
        %v6047 = vadd.f32 %v4766, %v6046
        %v6048 = vpop.f32.mrb[0].mxu0
        %v6049 = vadd.f32 %v4768, %v6048
        %6050 = vmatprep.mubr.bf16.mxu0 %v5486
        %6051 = vmatmul.mubr.bf16.gmra.mrb[0].mxu0 %v655
        %v6052 = vpop.f32.mrb[0].mxu0
        %v6053 = vadd.f32 %v4772, %v6052
        %v6054 = vpop.f32.mrb[0].mxu0
        %v6055 = vadd.f32 %v4774, %v6054
        %v6056 = vpop.f32.mrb[0].mxu0
        %v6057 = vadd.f32 %v4776, %v6056
        %v6058 = vpop.f32.mrb[0].mxu0
        %v6059 = vadd.f32 %v4778, %v6058
        %6060 = vmatprep.mubr.bf16.mxu0 %v5489
        %6061 = vmatmul.mubr.bf16.gmra.mrb[0].mxu0 %v657
        %v6062 = vpop.f32.mrb[0].mxu0
        %v6063 = vadd.f32 %v4782, %v6062
        %v6064 = vpop.f32.mrb[0].mxu0
        %v6065 = vadd.f32 %v4784, %v6064
        %v6066 = vpop.f32.mrb[0].mxu0
        %v6067 = vadd.f32 %v4786, %v6066
        %v6068 = vpop.f32.mrb[0].mxu0
        %v6069 = vadd.f32 %v4788, %v6068
        %6070 = vmatprep.mubr.bf16.mxu0 %v5492
        %6071 = vmatmul.mubr.bf16.gmra.mrb[0].mxu0 %v659
        %v6072 = vpop.f32.mrb[0].mxu0
        %v6073 = vadd.f32 %v4792, %v6072
        %v6074 = vpop.f32.mrb[0].mxu0
        %v6075 = vadd.f32 %v4794, %v6074
        %v6076 = vpop.f32.mrb[0].mxu0
        %v6077 = vadd.f32 %v4796, %v6076
        %v6078 = vpop.f32.mrb[0].mxu0
        %v6079 = vadd.f32 %v4798, %v6078
        %6080 = vmatprep.mubr.bf16.mxu0 %v5495
        %6081 = vmatmul.mubr.bf16.gmra.mrb[0].mxu0 %v661
        %v6082 = vpop.f32.mrb[0].mxu0
        %v6083 = vadd.f32 %v4802, %v6082
        %v6084 = vpop.f32.mrb[0].mxu0
        %v6085 = vadd.f32 %v4804, %v6084
        %v6086 = vpop.f32.mrb[0].mxu0
        %v6087 = vadd.f32 %v4806, %v6086
        %v6088 = vpop.f32.mrb[0].mxu0
        %v6089 = vadd.f32 %v4808, %v6088
        %6090 = vmatprep.mubr.bf16.mxu0 %v5498
        %6091 = vmatmul.mubr.bf16.gmra.mrb[0].mxu0 %v663
        %v6092 = vpop.f32.mrb[0].mxu0
        %v6093 = vadd.f32 %v4812, %v6092
        %v6094 = vpop.f32.mrb[0].mxu0
        %v6095 = vadd.f32 %v4814, %v6094
        %v6096 = vpop.f32.mrb[0].mxu0
        %v6097 = vadd.f32 %v4816, %v6096
        %v6098 = vpop.f32.mrb[0].mxu0
        %v6099 = vadd.f32 %v4818, %v6098
        %6100 = vmatprep.mubr.bf16.mxu0 %v5501
        %6101 = vmatmul.mubr.bf16.gmra.mrb[0].mxu0 %v665
        %v6102 = vpop.f32.mrb[0].mxu0
        %v6103 = vadd.f32 %v4822, %v6102
        %v6104 = vpop.f32.mrb[0].mxu0
        %v6105 = vadd.f32 %v4824, %v6104
        %v6106 = vpop.f32.mrb[0].mxu0
        %v6107 = vadd.f32 %v4826, %v6106
        %v6108 = vpop.f32.mrb[0].mxu0
        %v6109 = vadd.f32 %v4828, %v6108
        %6110 = vmatprep.mubr.bf16.mxu0 %v5504
        %6111 = vmatmul.mubr.bf16.gmra.mrb[0].mxu0 %v667
        %v6112 = vpop.f32.mrb[0].mxu0
        %v6113 = vadd.f32 %v4832, %v6112
        %v6114 = vpop.f32.mrb[0].mxu0
        %v6115 = vadd.f32 %v4834, %v6114
        %v6116 = vpop.f32.mrb[0].mxu0
        %v6117 = vadd.f32 %v4836, %v6116
        %v6118 = vpop.f32.mrb[0].mxu0
        %v6119 = vadd.f32 %v4838, %v6118
        %6120 = vmatprep.mubr.bf16.mxu0 %v5507
        %6121 = vmatmul.mubr.bf16.gmra.mrb[0].mxu0 %v669
        %v6122 = vpop.f32.mrb[0].mxu0
        %v6123 = vadd.f32 %v4842, %v6122
        %v6124 = vpop.f32.mrb[0].mxu0
        %v6125 = vadd.f32 %v4844, %v6124
        %v6126 = vpop.f32.mrb[0].mxu0
        %v6127 = vadd.f32 %v4846, %v6126
        %v6128 = vpop.f32.mrb[0].mxu0
        %v6129 = vadd.f32 %v4848, %v6128
        %6130 = vmatprep.mubr.bf16.mxu0 %v5510
        %6131 = vmatmul.mubr.bf16.gmra.mrb[0].mxu0 %v671
        %v6132 = vpop.f32.mrb[0].mxu0
        %v6133 = vadd.f32 %v4852, %v6132
        %v6134 = vpop.f32.mrb[0].mxu0
        %v6135 = vadd.f32 %v4854, %v6134
        %v6136 = vpop.f32.mrb[0].mxu0
        %v6137 = vadd.f32 %v4856, %v6136
        %v6138 = vpop.f32.mrb[0].mxu0
        %v6139 = vadd.f32 %v4858, %v6138
        %6140 = vmatprep.mubr.bf16.mxu0 %v5513
        %6141 = vmatmul.mubr.bf16.gmra.mrb[0].mxu0 %v673
        %v6142 = vpop.f32.mrb[0].mxu0
        %v6143 = vadd.f32 %v4862, %v6142
        %v6144 = vpop.f32.mrb[0].mxu0
        %v6145 = vadd.f32 %v4864, %v6144
        %v6146 = vpop.f32.mrb[0].mxu0
        %v6147 = vadd.f32 %v4866, %v6146
        %v6148 = vpop.f32.mrb[0].mxu0
        %v6149 = vadd.f32 %v4868, %v6148
        %6150 = vmatprep.mubr.bf16.mxu0 %v5516
        %6151 = vmatmul.mubr.bf16.gmra.mrb[0].mxu0 %v675
        %v6152 = vpop.f32.mrb[0].mxu0
        %v6153 = vadd.f32 %v4872, %v6152
        %v6154 = vpop.f32.mrb[0].mxu0
        %v6155 = vadd.f32 %v4874, %v6154
        %v6156 = vpop.f32.mrb[0].mxu0
        %v6157 = vadd.f32 %v4876, %v6156
        %v6158 = vpop.f32.mrb[0].mxu0
        %v6159 = vadd.f32 %v4878, %v6158
        %6160 = vmatprep.mubr.bf16.mxu0 %v5519
        %6161 = vmatmul.mubr.bf16.gmra.mrb[0].mxu0 %v677
        %v6162 = vpop.f32.mrb[0].mxu0
        %v6163 = vadd.f32 %v4882, %v6162
        %v6164 = vpop.f32.mrb[0].mxu0
        %v6165 = vadd.f32 %v4884, %v6164
        %v6166 = vpop.f32.mrb[0].mxu0
        %v6167 = vadd.f32 %v4886, %v6166
        %v6168 = vpop.f32.mrb[0].mxu0
        %v6169 = vadd.f32 %v4888, %v6168
        %6170 = vmatprep.mubr.bf16.mxu0 %v5522
        %6171 = vmatmul.mubr.bf16.gmra.mrb[0].mxu0 %v679
        %v6172 = vpop.f32.mrb[0].mxu0
        %v6173 = vadd.f32 %v4892, %v6172
        %v6174 = vpop.f32.mrb[0].mxu0
        %v6175 = vadd.f32 %v4894, %v6174
        %v6176 = vpop.f32.mrb[0].mxu0
        %v6177 = vadd.f32 %v4896, %v6176
        %v6178 = vpop.f32.mrb[0].mxu0
        %v6179 = vadd.f32 %v4898, %v6178
        %6180 = vmatprep.mubr.bf16.mxu0 %v5525
        %6181 = vmatmul.mubr.bf16.gmra.mrb[0].mxu0 %v681
        %v6182 = vpop.f32.mrb[0].mxu0
        %v6183 = vadd.f32 %v4902, %v6182
        %v6184 = vpop.f32.mrb[0].mxu0
        %v6185 = vadd.f32 %v4904, %v6184
        %v6186 = vpop.f32.mrb[0].mxu0
        %v6187 = vadd.f32 %v4906, %v6186
        %v6188 = vpop.f32.mrb[0].mxu0
        %v6189 = vadd.f32 %v4908, %v6188
        %6190 = vmatprep.mubr.bf16.mxu0 %v5528
        %6191 = vmatmul.mubr.bf16.gmra.mrb[0].mxu0 %v683
        %v6192 = vpop.f32.mrb[0].mxu0
        %v6193 = vadd.f32 %v4912, %v6192
        %v6194 = vpop.f32.mrb[0].mxu0
        %v6195 = vadd.f32 %v4914, %v6194
        %v6196 = vpop.f32.mrb[0].mxu0
        %v6197 = vadd.f32 %v4916, %v6196
        %v6198 = vpop.f32.mrb[0].mxu0
        %v6199 = vadd.f32 %v4918, %v6198
        %6200 = vmatprep.mubr.bf16.mxu0 %v5531
        %6201 = vmatmul.mubr.bf16.gmra.mrb[0].mxu0 %v685
        %v6202 = vpop.f32.mrb[0].mxu0
        %v6203 = vadd.f32 %v4922, %v6202
        %v6204 = vpop.f32.mrb[0].mxu0
        %v6205 = vadd.f32 %v4924, %v6204
        %v6206 = vpop.f32.mrb[0].mxu0
        %v6207 = vadd.f32 %v4926, %v6206
        %v6208 = vpop.f32.mrb[0].mxu0
        %v6209 = vadd.f32 %v4928, %v6208
        %6210 = vmatprep.mubr.bf16.mxu0 %v5534
        %6211 = vmatmul.mubr.bf16.gmra.mrb[0].mxu0 %v687
        %v6212 = vpop.f32.mrb[0].mxu0
        %v6213 = vadd.f32 %v4932, %v6212
        %v6214 = vpop.f32.mrb[0].mxu0
        %v6215 = vadd.f32 %v4934, %v6214
        %v6216 = vpop.f32.mrb[0].mxu0
        %v6217 = vadd.f32 %v4936, %v6216
        %v6218 = vpop.f32.mrb[0].mxu0
        %v6219 = vadd.f32 %v4938, %v6218
        %6220 = vmatprep.mubr.bf16.mxu0 %v5537
        %6221 = vmatmul.mubr.bf16.gmra.mrb[0].mxu0 %v689
        %v6222 = vpop.f32.mrb[0].mxu0
        %v6223 = vadd.f32 %v4942, %v6222
        %v6224 = vpop.f32.mrb[0].mxu0
        %v6225 = vadd.f32 %v4944, %v6224
        %v6226 = vpop.f32.mrb[0].mxu0
        %v6227 = vadd.f32 %v4946, %v6226
        %v6228 = vpop.f32.mrb[0].mxu0
        %v6229 = vadd.f32 %v4948, %v6228
        %6230 = vmatprep.mubr.bf16.mxu0 %v5540
        %6231 = vmatmul.mubr.bf16.gmra.mrb[0].mxu0 %v691
        %v6232 = vpop.f32.mrb[0].mxu0
        %v6233 = vadd.f32 %v4952, %v6232
        %v6234 = vpop.f32.mrb[0].mxu0
        %v6235 = vadd.f32 %v4954, %v6234
        %v6236 = vpop.f32.mrb[0].mxu0
        %v6237 = vadd.f32 %v4956, %v6236
        %v6238 = vpop.f32.mrb[0].mxu0
        %v6239 = vadd.f32 %v4958, %v6238
        %6240 = vmatprep.mubr.bf16.mxu0 %v5543
        %6241 = vmatmul.mubr.bf16.gmra.mrb[0].mxu0 %v693
        %v6242 = vpop.f32.mrb[0].mxu0
        %v6243 = vadd.f32 %v4962, %v6242
        %v6244 = vpop.f32.mrb[0].mxu0
        %v6245 = vadd.f32 %v4964, %v6244
        %v6246 = vpop.f32.mrb[0].mxu0
        %v6247 = vadd.f32 %v4966, %v6246
        %v6248 = vpop.f32.mrb[0].mxu0
        %v6249 = vadd.f32 %v4968, %v6248
        %6250 = vmatprep.mubr.bf16.mxu0 %v5546
        %6251 = vmatmul.mubr.bf16.gmra.mrb[0].mxu0 %v695
        %v6252 = vpop.f32.mrb[0].mxu0
        %v6253 = vadd.f32 %v4972, %v6252
        %v6254 = vpop.f32.mrb[0].mxu0
        %v6255 = vadd.f32 %v4974, %v6254
        %v6256 = vpop.f32.mrb[0].mxu0
        %v6257 = vadd.f32 %v4976, %v6256
        %v6258 = vpop.f32.mrb[0].mxu0
        %v6259 = vadd.f32 %v4978, %v6258
        %6260 = vmatprep.mubr.bf16.mxu0 %v5549
        %6261 = vmatmul.mubr.bf16.gmra.mrb[0].mxu0 %v697
        %v6262 = vpop.f32.mrb[0].mxu0
        %v6263 = vadd.f32 %v4982, %v6262
        %v6264 = vpop.f32.mrb[0].mxu0
        %v6265 = vadd.f32 %v4984, %v6264
        %v6266 = vpop.f32.mrb[0].mxu0
        %v6267 = vadd.f32 %v4986, %v6266
        %v6268 = vpop.f32.mrb[0].mxu0
        %v6269 = vadd.f32 %v4988, %v6268
        %6270 = vmatprep.mubr.bf16.mxu0 %v5552
        %6271 = vmatmul.mubr.bf16.gmra.mrb[0].mxu0 %v699
        %v6272 = vpop.f32.mrb[0].mxu0
        %v6273 = vadd.f32 %v4992, %v6272
        %v6274 = vpop.f32.mrb[0].mxu0
        %v6275 = vadd.f32 %v4994, %v6274
        %v6276 = vpop.f32.mrb[0].mxu0
        %v6277 = vadd.f32 %v4996, %v6276
        %v6278 = vpop.f32.mrb[0].mxu0
        %v6279 = vadd.f32 %v4998, %v6278
        %6280 = vmatprep.mubr.bf16.mxu0 %v5555
        %6281 = vmatmul.mubr.bf16.gmra.mrb[0].mxu0 %v701
        %v6282 = vpop.f32.mrb[0].mxu0
        %v6283 = vadd.f32 %v5002, %v6282
        %v6284 = vpop.f32.mrb[0].mxu0
        %v6285 = vadd.f32 %v5004, %v6284
        %v6286 = vpop.f32.mrb[0].mxu0
        %v6287 = vadd.f32 %v5006, %v6286
        %v6288 = vpop.f32.mrb[0].mxu0
        %v6289 = vadd.f32 %v5008, %v6288
        %6290 = vmatprep.mubr.bf16.mxu0 %v5558
        %6291 = vmatmul.mubr.bf16.gmra.mrb[0].mxu0 %v703
        %v6292 = vpop.f32.mrb[0].mxu0
        %v6293 = vadd.f32 %v5012, %v6292
        %v6294 = vpop.f32.mrb[0].mxu0
        %v6295 = vadd.f32 %v5014, %v6294
        %v6296 = vpop.f32.mrb[0].mxu0
        %v6297 = vadd.f32 %v5016, %v6296
        %v6298 = vpop.f32.mrb[0].mxu0
        %v6299 = vadd.f32 %v5018, %v6298
        %6300 = vmatprep.mubr.bf16.mxu0 %v5561
        %6301 = vmatmul.mubr.bf16.gmra.mrb[0].mxu0 %v705
        %v6302 = vpop.f32.mrb[0].mxu0
        %v6303 = vadd.f32 %v5022, %v6302
        %v6304 = vpop.f32.mrb[0].mxu0
        %v6305 = vadd.f32 %v5024, %v6304
        %v6306 = vpop.f32.mrb[0].mxu0
        %v6307 = vadd.f32 %v5026, %v6306
        %v6308 = vpop.f32.mrb[0].mxu0
        %v6309 = vadd.f32 %v5028, %v6308
        %6310 = vmatprep.mubr.bf16.mxu0 %v5564
        %6311 = vmatmul.mubr.bf16.gmra.mrb[0].mxu0 %v707
        %v6312 = vpop.f32.mrb[0].mxu0
        %v6313 = vadd.f32 %v5032, %v6312
        %v6314 = vpop.f32.mrb[0].mxu0
        %v6315 = vadd.f32 %v5034, %v6314
        %v6316 = vpop.f32.mrb[0].mxu0
        %v6317 = vadd.f32 %v5036, %v6316
        %v6318 = vpop.f32.mrb[0].mxu0
        %v6319 = vadd.f32 %v5038, %v6318
        %6320 = vmatprep.mubr.bf16.mxu0 %v5567
        %6321 = vmatmul.mubr.bf16.gmra.mrb[0].mxu0 %v709
        %v6322 = vpop.f32.mrb[0].mxu0
        %v6323 = vadd.f32 %v5042, %v6322
        %v6324 = vpop.f32.mrb[0].mxu0
        %v6325 = vadd.f32 %v5044, %v6324
        %v6326 = vpop.f32.mrb[0].mxu0
        %v6327 = vadd.f32 %v5046, %v6326
        %v6328 = vpop.f32.mrb[0].mxu0
        %v6329 = vadd.f32 %v5048, %v6328
        %6330 = vmatprep.mubr.bf16.mxu0 %v5570
        %6331 = vmatmul.mubr.bf16.gmra.mrb[0].mxu0 %v711
        %v6332 = vpop.f32.mrb[0].mxu0
        %v6333 = vadd.f32 %v5052, %v6332
        %v6334 = vpop.f32.mrb[0].mxu0
        %v6335 = vadd.f32 %v5054, %v6334
        %v6336 = vpop.f32.mrb[0].mxu0
        %v6337 = vadd.f32 %v5056, %v6336
        %v6338 = vpop.f32.mrb[0].mxu0
        %v6339 = vadd.f32 %v5058, %v6338
        %6340 = vmatprep.mubr.bf16.mxu0 %v5573
        %6341 = vmatmul.mubr.bf16.gmra.mrb[0].mxu0 %v713
        %v6342 = vpop.f32.mrb[0].mxu0
        %v6343 = vadd.f32 %v5062, %v6342
        %v6344 = vpop.f32.mrb[0].mxu0
        %v6345 = vadd.f32 %v5064, %v6344
        %v6346 = vpop.f32.mrb[0].mxu0
        %v6347 = vadd.f32 %v5066, %v6346
        %v6348 = vpop.f32.mrb[0].mxu0
        %v6349 = vadd.f32 %v5068, %v6348
        %6350 = vmatprep.mubr.bf16.mxu0 %v5576
        %6351 = vmatmul.mubr.bf16.gmra.mrb[0].mxu0 %v715
        %v6352 = vpop.f32.mrb[0].mxu0
        %v6353 = vadd.f32 %v5072, %v6352
        %v6354 = vpop.f32.mrb[0].mxu0
        %v6355 = vadd.f32 %v5074, %v6354
        %v6356 = vpop.f32.mrb[0].mxu0
        %v6357 = vadd.f32 %v5076, %v6356
        %v6358 = vpop.f32.mrb[0].mxu0
        %v6359 = vadd.f32 %v5078, %v6358
        %6360 = vmatprep.mubr.bf16.mxu0 %v5579
        %6361 = vmatmul.mubr.bf16.gmra.mrb[0].mxu0 %v717
        %v6362 = vpop.f32.mrb[0].mxu0
        %v6363 = vadd.f32 %v5082, %v6362
        %v6364 = vpop.f32.mrb[0].mxu0
        %v6365 = vadd.f32 %v5084, %v6364
        %v6366 = vpop.f32.mrb[0].mxu0
        %v6367 = vadd.f32 %v5086, %v6366
        %v6368 = vpop.f32.mrb[0].mxu0
        %v6369 = vadd.f32 %v5088, %v6368
        %6370 = vmatprep.mubr.bf16.mxu0 %v5582
        %6371 = vmatmul.mubr.bf16.gmra.mrb[0].mxu0 %v719
        %v6372 = vpop.f32.mrb[0].mxu0
        %v6373 = vadd.f32 %v5092, %v6372
        %v6374 = vpop.f32.mrb[0].mxu0
        %v6375 = vadd.f32 %v5094, %v6374
        %v6376 = vpop.f32.mrb[0].mxu0
        %v6377 = vadd.f32 %v5096, %v6376
        %v6378 = vpop.f32.mrb[0].mxu0
        %v6379 = vadd.f32 %v5098, %v6378
        %6380 = vmatprep.mubr.bf16.mxu0 %v5585
        %6381 = vmatmul.mubr.bf16.gmra.mrb[0].mxu0 %v721
        %v6382 = vpop.f32.mrb[0].mxu0
        %v6383 = vadd.f32 %v5102, %v6382
        %v6384 = vpop.f32.mrb[0].mxu0
        %v6385 = vadd.f32 %v5104, %v6384
        %v6386 = vpop.f32.mrb[0].mxu0
        %v6387 = vadd.f32 %v5106, %v6386
        %v6388 = vpop.f32.mrb[0].mxu0
        %v6389 = vadd.f32 %v5108, %v6388
        %6390 = vmatprep.mubr.bf16.mxu0 %v5588
        %6391 = vmatmul.mubr.bf16.gmra.mrb[0].mxu0 %v723
        %v6392 = vpop.f32.mrb[0].mxu0
        %v6393 = vadd.f32 %v5112, %v6392
        %v6394 = vpop.f32.mrb[0].mxu0
        %v6395 = vadd.f32 %v5114, %v6394
        %v6396 = vpop.f32.mrb[0].mxu0
        %v6397 = vadd.f32 %v5116, %v6396
        %v6398 = vpop.f32.mrb[0].mxu0
        %v6399 = vadd.f32 %v5118, %v6398
        %6400 = vmatprep.mubr.bf16.mxu0 %v5591
        %6401 = vmatmul.mubr.bf16.gmra.mrb[0].mxu0 %v725
        %v6402 = vpop.f32.mrb[0].mxu0
        %v6403 = vadd.f32 %v5122, %v6402
        %v6404 = vpop.f32.mrb[0].mxu0
        %v6405 = vadd.f32 %v5124, %v6404
        %v6406 = vpop.f32.mrb[0].mxu0
        %v6407 = vadd.f32 %v5126, %v6406
        %v6408 = vpop.f32.mrb[0].mxu0
        %v6409 = vadd.f32 %v5128, %v6408
        %6410 = vmatprep.mubr.bf16.mxu0 %v5594
        %6411 = vmatmul.mubr.bf16.gmra.mrb[0].mxu0 %v727
        %v6412 = vpop.f32.mrb[0].mxu0
        %v6413 = vadd.f32 %v5132, %v6412
        %v6414 = vpop.f32.mrb[0].mxu0
        %v6415 = vadd.f32 %v5134, %v6414
        %v6416 = vpop.f32.mrb[0].mxu0
        %v6417 = vadd.f32 %v5136, %v6416
        %v6418 = vpop.f32.mrb[0].mxu0
        %v6419 = vadd.f32 %v5138, %v6418
        %6420 = vmatprep.mubr.bf16.mxu0 %v5597
        %6421 = vmatmul.mubr.bf16.gmra.mrb[0].mxu0 %v729
        %v6422 = vpop.f32.mrb[0].mxu0
        %v6423 = vadd.f32 %v5142, %v6422
        %v6424 = vpop.f32.mrb[0].mxu0
        %v6425 = vadd.f32 %v5144, %v6424
        %v6426 = vpop.f32.mrb[0].mxu0
        %v6427 = vadd.f32 %v5146, %v6426
        %v6428 = vpop.f32.mrb[0].mxu0
        %v6429 = vadd.f32 %v5148, %v6428
        %6430 = vmatprep.mubr.bf16.mxu0 %v5600
        %6431 = vmatmul.mubr.bf16.gmra.mrb[0].mxu0 %v731
        %v6432 = vpop.f32.mrb[0].mxu0
        %v6433 = vadd.f32 %v5152, %v6432
        %v6434 = vpop.f32.mrb[0].mxu0
        %v6435 = vadd.f32 %v5154, %v6434
        %v6436 = vpop.f32.mrb[0].mxu0
        %v6437 = vadd.f32 %v5156, %v6436
        %v6438 = vpop.f32.mrb[0].mxu0
        %v6439 = vadd.f32 %v5158, %v6438
        %6440 = vmatprep.mubr.bf16.mxu0 %v5603
        %6441 = vmatmul.mubr.bf16.gmra.mrb[0].mxu0 %v733
        %v6442 = vpop.f32.mrb[0].mxu0
        %v6443 = vadd.f32 %v5162, %v6442
        %v6444 = vpop.f32.mrb[0].mxu0
        %v6445 = vadd.f32 %v5164, %v6444
        %v6446 = vpop.f32.mrb[0].mxu0
        %v6447 = vadd.f32 %v5166, %v6446
        %v6448 = vpop.f32.mrb[0].mxu0
        %v6449 = vadd.f32 %v5168, %v6448
        %6450 = vmatprep.mubr.bf16.mxu0 %v5606
        %6451 = vmatmul.mubr.bf16.gmra.mrb[0].mxu0 %v735
        %v6452 = vpop.f32.mrb[0].mxu0
        %v6453 = vadd.f32 %v5172, %v6452
        %v6454 = vpop.f32.mrb[0].mxu0
        %v6455 = vadd.f32 %v5174, %v6454
        %v6456 = vpop.f32.mrb[0].mxu0
        %v6457 = vadd.f32 %v5176, %v6456
        %v6458 = vpop.f32.mrb[0].mxu0
        %v6459 = vadd.f32 %v5178, %v6458
        %6460 = vmatprep.mubr.bf16.mxu0 %v5609
        %6461 = vmatmul.mubr.bf16.gmra.mrb[0].mxu0 %v737
        %v6462 = vpop.f32.mrb[0].mxu0
        %v6463 = vadd.f32 %v5182, %v6462
        %v6464 = vpop.f32.mrb[0].mxu0
        %v6465 = vadd.f32 %v5184, %v6464
        %v6466 = vpop.f32.mrb[0].mxu0
        %v6467 = vadd.f32 %v5186, %v6466
        %v6468 = vpop.f32.mrb[0].mxu0
        %v6469 = vadd.f32 %v5188, %v6468
        %6470 = vmatprep.mubr.bf16.mxu0 %v5612
        %6471 = vmatmul.mubr.bf16.gmra.mrb[0].mxu0 %v739
        %v6472 = vpop.f32.mrb[0].mxu0
        %v6473 = vadd.f32 %v5192, %v6472
        %v6474 = vpop.f32.mrb[0].mxu0
        %v6475 = vadd.f32 %v5194, %v6474
        %v6476 = vpop.f32.mrb[0].mxu0
        %v6477 = vadd.f32 %v5196, %v6476
        %v6478 = vpop.f32.mrb[0].mxu0
        %v6479 = vadd.f32 %v5198, %v6478
        %6480 = vmatprep.mubr.bf16.mxu0 %v5615
        %6481 = vmatmul.mubr.bf16.gmra.mrb[0].mxu0 %v741
        %v6482 = vpop.f32.mrb[0].mxu0
        %v6483 = vadd.f32 %v5202, %v6482
        %v6484 = vpop.f32.mrb[0].mxu0
        %v6485 = vadd.f32 %v5204, %v6484
        %v6486 = vpop.f32.mrb[0].mxu0
        %v6487 = vadd.f32 %v5206, %v6486
        %v6488 = vpop.f32.mrb[0].mxu0
        %v6489 = vadd.f32 %v5208, %v6488
        %6490 = vmatprep.mubr.bf16.mxu0 %v5618
        %6491 = vmatmul.mubr.bf16.gmra.mrb[0].mxu0 %v743
        %v6492 = vpop.f32.mrb[0].mxu0
        %v6493 = vadd.f32 %v5212, %v6492
        %v6494 = vpop.f32.mrb[0].mxu0
        %v6495 = vadd.f32 %v5214, %v6494
        %v6496 = vpop.f32.mrb[0].mxu0
        %v6497 = vadd.f32 %v5216, %v6496
        %v6498 = vpop.f32.mrb[0].mxu0
        %v6499 = vadd.f32 %v5218, %v6498
        %6500 = vmatprep.mubr.bf16.mxu0 %v5621
        %6501 = vmatmul.mubr.bf16.gmra.mrb[0].mxu0 %v745
        %v6502 = vpop.f32.mrb[0].mxu0
        %v6503 = vadd.f32 %v5222, %v6502
        %v6504 = vpop.f32.mrb[0].mxu0
        %v6505 = vadd.f32 %v5224, %v6504
        %v6506 = vpop.f32.mrb[0].mxu0
        %v6507 = vadd.f32 %v5226, %v6506
        %v6508 = vpop.f32.mrb[0].mxu0
        %v6509 = vadd.f32 %v5228, %v6508
        %6510 = vmatprep.mubr.bf16.mxu0 %v5624
        %6511 = vmatmul.mubr.bf16.gmra.mrb[0].mxu0 %v747
        %v6512 = vpop.f32.mrb[0].mxu0
        %v6513 = vadd.f32 %v5232, %v6512
        %v6514 = vpop.f32.mrb[0].mxu0
        %v6515 = vadd.f32 %v5234, %v6514
        %v6516 = vpop.f32.mrb[0].mxu0
        %v6517 = vadd.f32 %v5236, %v6516
        %v6518 = vpop.f32.mrb[0].mxu0
        %v6519 = vadd.f32 %v5238, %v6518
        %6520 = vmatprep.mubr.bf16.mxu0 %v5627
        %6521 = vmatmul.mubr.bf16.gmra.mrb[0].mxu0 %v749
        %v6522 = vpop.f32.mrb[0].mxu0
        %v6523 = vadd.f32 %v5242, %v6522
        %v6524 = vpop.f32.mrb[0].mxu0
        %v6525 = vadd.f32 %v5244, %v6524
        %v6526 = vpop.f32.mrb[0].mxu0
        %v6527 = vadd.f32 %v5246, %v6526
        %v6528 = vpop.f32.mrb[0].mxu0
        %v6529 = vadd.f32 %v5248, %v6528
        %6530 = vmatprep.mubr.bf16.mxu0 %v5630
        %6531 = vmatmul.mubr.bf16.gmra.mrb[0].mxu0 %v751
        %v6532 = vpop.f32.mrb[0].mxu0
        %v6533 = vadd.f32 %v5252, %v6532
        %v6534 = vpop.f32.mrb[0].mxu0
        %v6535 = vadd.f32 %v5254, %v6534
        %v6536 = vpop.f32.mrb[0].mxu0
        %v6537 = vadd.f32 %v5256, %v6536
        %v6538 = vpop.f32.mrb[0].mxu0
        %v6539 = vadd.f32 %v5258, %v6538
        %6540 = vmatprep.mubr.bf16.mxu0 %v5633
        %6541 = vmatmul.mubr.bf16.gmra.mrb[0].mxu0 %v753
        %v6542 = vpop.f32.mrb[0].mxu0
        %v6543 = vadd.f32 %v5262, %v6542
        %v6544 = vpop.f32.mrb[0].mxu0
        %v6545 = vadd.f32 %v5264, %v6544
        %v6546 = vpop.f32.mrb[0].mxu0
        %v6547 = vadd.f32 %v5266, %v6546
        %v6548 = vpop.f32.mrb[0].mxu0
        %v6549 = vadd.f32 %v5268, %v6548
        %6550 = vmatprep.mubr.bf16.mxu0 %v5636
        %6551 = vmatmul.mubr.bf16.gmra.mrb[0].mxu0 %v755
        %v6552 = vpop.f32.mrb[0].mxu0
        %v6553 = vadd.f32 %v5272, %v6552
        %v6554 = vpop.f32.mrb[0].mxu0
        %v6555 = vadd.f32 %v5274, %v6554
        %v6556 = vpop.f32.mrb[0].mxu0
        %v6557 = vadd.f32 %v5276, %v6556
        %v6558 = vpop.f32.mrb[0].mxu0
        %v6559 = vadd.f32 %v5278, %v6558
        %6560 = vmatprep.mubr.bf16.mxu0 %v5639
        %6561 = vmatmul.mubr.bf16.gmra.mrb[0].mxu0 %v757
        %v6562 = vpop.f32.mrb[0].mxu0
        %v6563 = vadd.f32 %v5282, %v6562
        %v6564 = vpop.f32.mrb[0].mxu0
        %v6565 = vadd.f32 %v5284, %v6564
        %v6566 = vpop.f32.mrb[0].mxu0
        %v6567 = vadd.f32 %v5286, %v6566
        %v6568 = vpop.f32.mrb[0].mxu0
        %v6569 = vadd.f32 %v5288, %v6568
        %6570 = vmatprep.mubr.bf16.mxu0 %v5642
        %6571 = vmatmul.mubr.bf16.gmra.mrb[0].mxu0 %v759
        %v6572 = vpop.f32.mrb[0].mxu0
        %v6573 = vadd.f32 %v5292, %v6572
        %v6574 = vpop.f32.mrb[0].mxu0
        %v6575 = vadd.f32 %v5294, %v6574
        %v6576 = vpop.f32.mrb[0].mxu0
        %v6577 = vadd.f32 %v5296, %v6576
        %v6578 = vpop.f32.mrb[0].mxu0
        %v6579 = vadd.f32 %v5298, %v6578
        %6580 = vmatprep.mubr.bf16.mxu0 %v5645
        %6581 = vmatmul.mubr.bf16.gmra.mrb[0].mxu0 %v761
        %v6582 = vpop.f32.mrb[0].mxu0
        %v6583 = vadd.f32 %v5302, %v6582
        %v6584 = vpop.f32.mrb[0].mxu0
        %v6585 = vadd.f32 %v5304, %v6584
        %v6586 = vpop.f32.mrb[0].mxu0
        %v6587 = vadd.f32 %v5306, %v6586
        %v6588 = vpop.f32.mrb[0].mxu0
        %v6589 = vadd.f32 %v5308, %v6588
        %6590 = vmatprep.mubr.bf16.mxu0 %v5648
        %6591 = vmatmul.mubr.bf16.gmra.mrb[0].mxu0 %v763
        %v6592 = vpop.f32.mrb[0].mxu0
        %v6593 = vadd.f32 %v5312, %v6592
        %v6594 = vpop.f32.mrb[0].mxu0
        %v6595 = vadd.f32 %v5314, %v6594
        %v6596 = vpop.f32.mrb[0].mxu0
        %v6597 = vadd.f32 %v5316, %v6596
        %v6598 = vpop.f32.mrb[0].mxu0
        %v6599 = vadd.f32 %v5318, %v6598
        %6600 = vmatprep.mubr.bf16.mxu0 %v5651
        %6601 = vmatmul.mubr.bf16.gmra.mrb[0].mxu0 %v765
        %v6602 = vpop.f32.mrb[0].mxu0
        %v6603 = vadd.f32 %v5322, %v6602
        %v6604 = vpop.f32.mrb[0].mxu0
        %v6605 = vadd.f32 %v5324, %v6604
        %v6606 = vpop.f32.mrb[0].mxu0
        %v6607 = vadd.f32 %v5326, %v6606
        %v6608 = vpop.f32.mrb[0].mxu0
        %v6609 = vadd.f32 %v5328, %v6608
        %6610 = vmatprep.mubr.bf16.mxu0 %v5654
        %6611 = vmatmul.mubr.bf16.gmra.mrb[0].mxu0 %v767
        %v6612 = vpop.f32.mrb[0].mxu0
        %v6613 = vadd.f32 %v5332, %v6612
        %v6614 = vpop.f32.mrb[0].mxu0
        %v6615 = vadd.f32 %v5334, %v6614
        %v6616 = vpop.f32.mrb[0].mxu0
        %v6617 = vadd.f32 %v5336, %v6616
        %v6618 = vpop.f32.mrb[0].mxu0
        %v6619 = vadd.f32 %v5338, %v6618
        %6620 = vmatprep.mubr.bf16.mxu0 %v5657
        %6621 = vmatmul.mubr.bf16.gmra.mrb[0].mxu0 %v769
        %v6622 = vpop.f32.mrb[0].mxu0
        %v6623 = vadd.f32 %v5342, %v6622
        %v6624 = vpop.f32.mrb[0].mxu0
        %v6625 = vadd.f32 %v5344, %v6624
        %v6626 = vpop.f32.mrb[0].mxu0
        %v6627 = vadd.f32 %v5346, %v6626
        %v6628 = vpop.f32.mrb[0].mxu0
        %v6629 = vadd.f32 %v5348, %v6628
        %6630 = vmatprep.mubr.bf16.mxu0 %v5660
        %6631 = vmatmul.mubr.bf16.gmra.mrb[0].mxu0 %v771
        %v6632 = vpop.f32.mrb[0].mxu0
        %v6633 = vadd.f32 %v5352, %v6632
        %v6634 = vpop.f32.mrb[0].mxu0
        %v6635 = vadd.f32 %v5354, %v6634
        %v6636 = vpop.f32.mrb[0].mxu0
        %v6637 = vadd.f32 %v5356, %v6636
        %v6638 = vpop.f32.mrb[0].mxu0
        %v6639 = vadd.f32 %v5358, %v6638
        %6640 = vmatprep.mubr.bf16.mxu0 %v5663
        %6641 = vmatmul.mubr.bf16.gmra.mrb[0].mxu0 %v773
        %v6642 = vpop.f32.mrb[0].mxu0
        %v6643 = vadd.f32 %v5362, %v6642
        %v6644 = vpop.f32.mrb[0].mxu0
        %v6645 = vadd.f32 %v5364, %v6644
        %v6646 = vpop.f32.mrb[0].mxu0
        %v6647 = vadd.f32 %v5366, %v6646
        %v6648 = vpop.f32.mrb[0].mxu0
        %v6649 = vadd.f32 %v5368, %v6648
        %6650 = vmatprep.mubr.bf16.mxu0 %v5666
        %6651 = vmatmul.mubr.bf16.gmra.mrb[0].mxu0 %v775
        %v6652 = vpop.f32.mrb[0].mxu0
        %v6653 = vadd.f32 %v5372, %v6652
        %v6654 = vpop.f32.mrb[0].mxu0
        %v6655 = vadd.f32 %v5374, %v6654
        %v6656 = vpop.f32.mrb[0].mxu0
        %v6657 = vadd.f32 %v5376, %v6656
        %v6658 = vpop.f32.mrb[0].mxu0
        %v6659 = vadd.f32 %v5378, %v6658
        %6660 = vdwg.mxu0
        %v6662 = vlaneseq
        %v6663 = vshrl.u32 %v6662, 7
        %v6664 = vsub.s32 0, %v6663
        %v6665 = vrot.slane %v200, %v6664
        %v6666 = vlaneseq
        %v6667 = vshrl.u32 %v6666, 7
        %v6668 = vsub.s32 1, %v6667
        %v6669 = vrot.slane %v200, %v6668
        %v6672 = vadd.f32 %v5703, %v6665
        %v6673 = vadd.f32 %v5705, %v6669
        %v6674 = vadd.f32 %v5707, %v6665
        %v6675 = vadd.f32 %v5709, %v6669
        %v6676 = vadd.f32 %v5713, %v6665
        %v6677 = vadd.f32 %v5715, %v6669
        %v6678 = vadd.f32 %v5717, %v6665
        %v6679 = vadd.f32 %v5719, %v6669
        %v6680 = vadd.f32 %v5723, %v6665
        %v6681 = vadd.f32 %v5725, %v6669
        %v6682 = vadd.f32 %v5727, %v6665
        %v6683 = vadd.f32 %v5729, %v6669
        %v6684 = vadd.f32 %v5733, %v6665
        %v6685 = vadd.f32 %v5735, %v6669
        %v6686 = vadd.f32 %v5737, %v6665
        %v6687 = vadd.f32 %v5739, %v6669
        %v6688 = vadd.f32 %v5743, %v6665
        %v6689 = vadd.f32 %v5745, %v6669
        %v6690 = vadd.f32 %v5747, %v6665
        %v6691 = vadd.f32 %v5749, %v6669
        %v6692 = vadd.f32 %v5753, %v6665
        %v6693 = vadd.f32 %v5755, %v6669
        %v6694 = vadd.f32 %v5757, %v6665
        %v6695 = vadd.f32 %v5759, %v6669
        %v6696 = vadd.f32 %v5763, %v6665
        %v6697 = vadd.f32 %v5765, %v6669
        %v6698 = vadd.f32 %v5767, %v6665
        %v6699 = vadd.f32 %v5769, %v6669
        %v6700 = vadd.f32 %v5773, %v6665
        %v6701 = vadd.f32 %v5775, %v6669
        %v6702 = vadd.f32 %v5777, %v6665
        %v6703 = vadd.f32 %v5779, %v6669
        %v6704 = vadd.f32 %v5783, %v6665
        %v6705 = vadd.f32 %v5785, %v6669
        %v6706 = vadd.f32 %v5787, %v6665
        %v6707 = vadd.f32 %v5789, %v6669
        %v6708 = vadd.f32 %v5793, %v6665
        %v6709 = vadd.f32 %v5795, %v6669
        %v6710 = vadd.f32 %v5797, %v6665
        %v6711 = vadd.f32 %v5799, %v6669
        %v6712 = vadd.f32 %v5803, %v6665
        %v6713 = vadd.f32 %v5805, %v6669
        %v6714 = vadd.f32 %v5807, %v6665
        %v6715 = vadd.f32 %v5809, %v6669
        %v6716 = vadd.f32 %v5813, %v6665
        %v6717 = vadd.f32 %v5815, %v6669
        %v6718 = vadd.f32 %v5817, %v6665
        %v6719 = vadd.f32 %v5819, %v6669
        %v6720 = vadd.f32 %v5823, %v6665
        %v6721 = vadd.f32 %v5825, %v6669
        %v6722 = vadd.f32 %v5827, %v6665
        %v6723 = vadd.f32 %v5829, %v6669
        %v6724 = vadd.f32 %v5833, %v6665
        %v6725 = vadd.f32 %v5835, %v6669
        %v6726 = vadd.f32 %v5837, %v6665
        %v6727 = vadd.f32 %v5839, %v6669
        %v6728 = vadd.f32 %v5843, %v6665
        %v6729 = vadd.f32 %v5845, %v6669
        %v6730 = vadd.f32 %v5847, %v6665
        %v6731 = vadd.f32 %v5849, %v6669
        %v6732 = vadd.f32 %v5853, %v6665
        %v6733 = vadd.f32 %v5855, %v6669
        %v6734 = vadd.f32 %v5857, %v6665
        %v6735 = vadd.f32 %v5859, %v6669
        %v6736 = vadd.f32 %v5863, %v6665
        %v6737 = vadd.f32 %v5865, %v6669
        %v6738 = vadd.f32 %v5867, %v6665
        %v6739 = vadd.f32 %v5869, %v6669
        %v6740 = vadd.f32 %v5873, %v6665
        %v6741 = vadd.f32 %v5875, %v6669
        %v6742 = vadd.f32 %v5877, %v6665
        %v6743 = vadd.f32 %v5879, %v6669
        %v6744 = vadd.f32 %v5883, %v6665
        %v6745 = vadd.f32 %v5885, %v6669
        %v6746 = vadd.f32 %v5887, %v6665
        %v6747 = vadd.f32 %v5889, %v6669
        %v6748 = vadd.f32 %v5893, %v6665
        %v6749 = vadd.f32 %v5895, %v6669
        %v6750 = vadd.f32 %v5897, %v6665
        %v6751 = vadd.f32 %v5899, %v6669
        %v6752 = vadd.f32 %v5903, %v6665
        %v6753 = vadd.f32 %v5905, %v6669
        %v6754 = vadd.f32 %v5907, %v6665
        %v6755 = vadd.f32 %v5909, %v6669
        %v6756 = vadd.f32 %v5913, %v6665
        %v6757 = vadd.f32 %v5915, %v6669
        %v6758 = vadd.f32 %v5917, %v6665
        %v6759 = vadd.f32 %v5919, %v6669
        %v6760 = vadd.f32 %v5923, %v6665
        %v6761 = vadd.f32 %v5925, %v6669
        %v6762 = vadd.f32 %v5927, %v6665
        %v6763 = vadd.f32 %v5929, %v6669
        %v6764 = vadd.f32 %v5933, %v6665
        %v6765 = vadd.f32 %v5935, %v6669
        %v6766 = vadd.f32 %v5937, %v6665
        %v6767 = vadd.f32 %v5939, %v6669
        %v6768 = vadd.f32 %v5943, %v6665
        %v6769 = vadd.f32 %v5945, %v6669
        %v6770 = vadd.f32 %v5947, %v6665
        %v6771 = vadd.f32 %v5949, %v6669
        %v6772 = vadd.f32 %v5953, %v6665
        %v6773 = vadd.f32 %v5955, %v6669
        %v6774 = vadd.f32 %v5957, %v6665
        %v6775 = vadd.f32 %v5959, %v6669
        %v6776 = vadd.f32 %v5963, %v6665
        %v6777 = vadd.f32 %v5965, %v6669
        %v6778 = vadd.f32 %v5967, %v6665
        %v6779 = vadd.f32 %v5969, %v6669
        %v6780 = vadd.f32 %v5973, %v6665
        %v6781 = vadd.f32 %v5975, %v6669
        %v6782 = vadd.f32 %v5977, %v6665
        %v6783 = vadd.f32 %v5979, %v6669
        %v6784 = vadd.f32 %v5983, %v6665
        %v6785 = vadd.f32 %v5985, %v6669
        %v6786 = vadd.f32 %v5987, %v6665
        %v6787 = vadd.f32 %v5989, %v6669
        %v6788 = vadd.f32 %v5993, %v6665
        %v6789 = vadd.f32 %v5995, %v6669
        %v6790 = vadd.f32 %v5997, %v6665
        %v6791 = vadd.f32 %v5999, %v6669
        %v6792 = vadd.f32 %v6003, %v6665
        %v6793 = vadd.f32 %v6005, %v6669
        %v6794 = vadd.f32 %v6007, %v6665
        %v6795 = vadd.f32 %v6009, %v6669
        %v6796 = vadd.f32 %v6013, %v6665
        %v6797 = vadd.f32 %v6015, %v6669
        %v6798 = vadd.f32 %v6017, %v6665
        %v6799 = vadd.f32 %v6019, %v6669
        %v6800 = vadd.f32 %v6023, %v6665
        %v6801 = vadd.f32 %v6025, %v6669
        %v6802 = vadd.f32 %v6027, %v6665
        %v6803 = vadd.f32 %v6029, %v6669
        %v6804 = vadd.f32 %v6033, %v6665
        %v6805 = vadd.f32 %v6035, %v6669
        %v6806 = vadd.f32 %v6037, %v6665
        %v6807 = vadd.f32 %v6039, %v6669
        %v6808 = vadd.f32 %v6043, %v6665
        %v6809 = vadd.f32 %v6045, %v6669
        %v6810 = vadd.f32 %v6047, %v6665
        %v6811 = vadd.f32 %v6049, %v6669
        %v6812 = vadd.f32 %v6053, %v6665
        %v6813 = vadd.f32 %v6055, %v6669
        %v6814 = vadd.f32 %v6057, %v6665
        %v6815 = vadd.f32 %v6059, %v6669
        %v6816 = vadd.f32 %v6063, %v6665
        %v6817 = vadd.f32 %v6065, %v6669
        %v6818 = vadd.f32 %v6067, %v6665
        %v6819 = vadd.f32 %v6069, %v6669
        %v6820 = vadd.f32 %v6073, %v6665
        %v6821 = vadd.f32 %v6075, %v6669
        %v6822 = vadd.f32 %v6077, %v6665
        %v6823 = vadd.f32 %v6079, %v6669
        %v6824 = vadd.f32 %v6083, %v6665
        %v6825 = vadd.f32 %v6085, %v6669
        %v6826 = vadd.f32 %v6087, %v6665
        %v6827 = vadd.f32 %v6089, %v6669
        %v6828 = vadd.f32 %v6093, %v6665
        %v6829 = vadd.f32 %v6095, %v6669
        %v6830 = vadd.f32 %v6097, %v6665
        %v6831 = vadd.f32 %v6099, %v6669
        %v6832 = vadd.f32 %v6103, %v6665
        %v6833 = vadd.f32 %v6105, %v6669
        %v6834 = vadd.f32 %v6107, %v6665
        %v6835 = vadd.f32 %v6109, %v6669
        %v6836 = vadd.f32 %v6113, %v6665
        %v6837 = vadd.f32 %v6115, %v6669
        %v6838 = vadd.f32 %v6117, %v6665
        %v6839 = vadd.f32 %v6119, %v6669
        %v6840 = vadd.f32 %v6123, %v6665
        %v6841 = vadd.f32 %v6125, %v6669
        %v6842 = vadd.f32 %v6127, %v6665
        %v6843 = vadd.f32 %v6129, %v6669
        %v6844 = vadd.f32 %v6133, %v6665
        %v6845 = vadd.f32 %v6135, %v6669
        %v6846 = vadd.f32 %v6137, %v6665
        %v6847 = vadd.f32 %v6139, %v6669
        %v6848 = vadd.f32 %v6143, %v6665
        %v6849 = vadd.f32 %v6145, %v6669
        %v6850 = vadd.f32 %v6147, %v6665
        %v6851 = vadd.f32 %v6149, %v6669
        %v6852 = vadd.f32 %v6153, %v6665
        %v6853 = vadd.f32 %v6155, %v6669
        %v6854 = vadd.f32 %v6157, %v6665
        %v6855 = vadd.f32 %v6159, %v6669
        %v6856 = vadd.f32 %v6163, %v6665
        %v6857 = vadd.f32 %v6165, %v6669
        %v6858 = vadd.f32 %v6167, %v6665
        %v6859 = vadd.f32 %v6169, %v6669
        %v6860 = vadd.f32 %v6173, %v6665
        %v6861 = vadd.f32 %v6175, %v6669
        %v6862 = vadd.f32 %v6177, %v6665
        %v6863 = vadd.f32 %v6179, %v6669
        %v6864 = vadd.f32 %v6183, %v6665
        %v6865 = vadd.f32 %v6185, %v6669
        %v6866 = vadd.f32 %v6187, %v6665
        %v6867 = vadd.f32 %v6189, %v6669
        %v6868 = vadd.f32 %v6193, %v6665
        %v6869 = vadd.f32 %v6195, %v6669
        %v6870 = vadd.f32 %v6197, %v6665
        %v6871 = vadd.f32 %v6199, %v6669
        %v6872 = vadd.f32 %v6203, %v6665
        %v6873 = vadd.f32 %v6205, %v6669
        %v6874 = vadd.f32 %v6207, %v6665
        %v6875 = vadd.f32 %v6209, %v6669
        %v6876 = vadd.f32 %v6213, %v6665
        %v6877 = vadd.f32 %v6215, %v6669
        %v6878 = vadd.f32 %v6217, %v6665
        %v6879 = vadd.f32 %v6219, %v6669
        %v6880 = vadd.f32 %v6223, %v6665
        %v6881 = vadd.f32 %v6225, %v6669
        %v6882 = vadd.f32 %v6227, %v6665
        %v6883 = vadd.f32 %v6229, %v6669
        %v6884 = vadd.f32 %v6233, %v6665
        %v6885 = vadd.f32 %v6235, %v6669
        %v6886 = vadd.f32 %v6237, %v6665
        %v6887 = vadd.f32 %v6239, %v6669
        %v6888 = vadd.f32 %v6243, %v6665
        %v6889 = vadd.f32 %v6245, %v6669
        %v6890 = vadd.f32 %v6247, %v6665
        %v6891 = vadd.f32 %v6249, %v6669
        %v6892 = vadd.f32 %v6253, %v6665
        %v6893 = vadd.f32 %v6255, %v6669
        %v6894 = vadd.f32 %v6257, %v6665
        %v6895 = vadd.f32 %v6259, %v6669
        %v6896 = vadd.f32 %v6263, %v6665
        %v6897 = vadd.f32 %v6265, %v6669
        %v6898 = vadd.f32 %v6267, %v6665
        %v6899 = vadd.f32 %v6269, %v6669
        %v6900 = vadd.f32 %v6273, %v6665
        %v6901 = vadd.f32 %v6275, %v6669
        %v6902 = vadd.f32 %v6277, %v6665
        %v6903 = vadd.f32 %v6279, %v6669
        %v6904 = vadd.f32 %v6283, %v6665
        %v6905 = vadd.f32 %v6285, %v6669
        %v6906 = vadd.f32 %v6287, %v6665
        %v6907 = vadd.f32 %v6289, %v6669
        %v6908 = vadd.f32 %v6293, %v6665
        %v6909 = vadd.f32 %v6295, %v6669
        %v6910 = vadd.f32 %v6297, %v6665
        %v6911 = vadd.f32 %v6299, %v6669
        %v6912 = vadd.f32 %v6303, %v6665
        %v6913 = vadd.f32 %v6305, %v6669
        %v6914 = vadd.f32 %v6307, %v6665
        %v6915 = vadd.f32 %v6309, %v6669
        %v6916 = vadd.f32 %v6313, %v6665
        %v6917 = vadd.f32 %v6315, %v6669
        %v6918 = vadd.f32 %v6317, %v6665
        %v6919 = vadd.f32 %v6319, %v6669
        %v6920 = vadd.f32 %v6323, %v6665
        %v6921 = vadd.f32 %v6325, %v6669
        %v6922 = vadd.f32 %v6327, %v6665
        %v6923 = vadd.f32 %v6329, %v6669
        %v6924 = vadd.f32 %v6333, %v6665
        %v6925 = vadd.f32 %v6335, %v6669
        %v6926 = vadd.f32 %v6337, %v6665
        %v6927 = vadd.f32 %v6339, %v6669
        %v6928 = vadd.f32 %v6343, %v6665
        %v6929 = vadd.f32 %v6345, %v6669
        %v6930 = vadd.f32 %v6347, %v6665
        %v6931 = vadd.f32 %v6349, %v6669
        %v6932 = vadd.f32 %v6353, %v6665
        %v6933 = vadd.f32 %v6355, %v6669
        %v6934 = vadd.f32 %v6357, %v6665
        %v6935 = vadd.f32 %v6359, %v6669
        %v6936 = vadd.f32 %v6363, %v6665
        %v6937 = vadd.f32 %v6365, %v6669
        %v6938 = vadd.f32 %v6367, %v6665
        %v6939 = vadd.f32 %v6369, %v6669
        %v6940 = vadd.f32 %v6373, %v6665
        %v6941 = vadd.f32 %v6375, %v6669
        %v6942 = vadd.f32 %v6377, %v6665
        %v6943 = vadd.f32 %v6379, %v6669
        %v6944 = vadd.f32 %v6383, %v6665
        %v6945 = vadd.f32 %v6385, %v6669
        %v6946 = vadd.f32 %v6387, %v6665
        %v6947 = vadd.f32 %v6389, %v6669
        %v6948 = vadd.f32 %v6393, %v6665
        %v6949 = vadd.f32 %v6395, %v6669
        %v6950 = vadd.f32 %v6397, %v6665
        %v6951 = vadd.f32 %v6399, %v6669
        %v6952 = vadd.f32 %v6403, %v6665
        %v6953 = vadd.f32 %v6405, %v6669
        %v6954 = vadd.f32 %v6407, %v6665
        %v6955 = vadd.f32 %v6409, %v6669
        %v6956 = vadd.f32 %v6413, %v6665
        %v6957 = vadd.f32 %v6415, %v6669
        %v6958 = vadd.f32 %v6417, %v6665
        %v6959 = vadd.f32 %v6419, %v6669
        %v6960 = vadd.f32 %v6423, %v6665
        %v6961 = vadd.f32 %v6425, %v6669
        %v6962 = vadd.f32 %v6427, %v6665
        %v6963 = vadd.f32 %v6429, %v6669
        %v6964 = vadd.f32 %v6433, %v6665
        %v6965 = vadd.f32 %v6435, %v6669
        %v6966 = vadd.f32 %v6437, %v6665
        %v6967 = vadd.f32 %v6439, %v6669
        %v6968 = vadd.f32 %v6443, %v6665
        %v6969 = vadd.f32 %v6445, %v6669
        %v6970 = vadd.f32 %v6447, %v6665
        %v6971 = vadd.f32 %v6449, %v6669
        %v6972 = vadd.f32 %v6453, %v6665
        %v6973 = vadd.f32 %v6455, %v6669
        %v6974 = vadd.f32 %v6457, %v6665
        %v6975 = vadd.f32 %v6459, %v6669
        %v6976 = vadd.f32 %v6463, %v6665
        %v6977 = vadd.f32 %v6465, %v6669
        %v6978 = vadd.f32 %v6467, %v6665
        %v6979 = vadd.f32 %v6469, %v6669
        %v6980 = vadd.f32 %v6473, %v6665
        %v6981 = vadd.f32 %v6475, %v6669
        %v6982 = vadd.f32 %v6477, %v6665
        %v6983 = vadd.f32 %v6479, %v6669
        %v6984 = vadd.f32 %v6483, %v6665
        %v6985 = vadd.f32 %v6485, %v6669
        %v6986 = vadd.f32 %v6487, %v6665
        %v6987 = vadd.f32 %v6489, %v6669
        %v6988 = vadd.f32 %v6493, %v6665
        %v6989 = vadd.f32 %v6495, %v6669
        %v6990 = vadd.f32 %v6497, %v6665
        %v6991 = vadd.f32 %v6499, %v6669
        %v6992 = vadd.f32 %v6503, %v6665
        %v6993 = vadd.f32 %v6505, %v6669
        %v6994 = vadd.f32 %v6507, %v6665
        %v6995 = vadd.f32 %v6509, %v6669
        %v6996 = vadd.f32 %v6513, %v6665
        %v6997 = vadd.f32 %v6515, %v6669
        %v6998 = vadd.f32 %v6517, %v6665
        %v6999 = vadd.f32 %v6519, %v6669
        %v7000 = vadd.f32 %v6523, %v6665
        %v7001 = vadd.f32 %v6525, %v6669
        %v7002 = vadd.f32 %v6527, %v6665
        %v7003 = vadd.f32 %v6529, %v6669
        %v7004 = vadd.f32 %v6533, %v6665
        %v7005 = vadd.f32 %v6535, %v6669
        %v7006 = vadd.f32 %v6537, %v6665
        %v7007 = vadd.f32 %v6539, %v6669
        %v7008 = vadd.f32 %v6543, %v6665
        %v7009 = vadd.f32 %v6545, %v6669
        %v7010 = vadd.f32 %v6547, %v6665
        %v7011 = vadd.f32 %v6549, %v6669
        %v7012 = vadd.f32 %v6553, %v6665
        %v7013 = vadd.f32 %v6555, %v6669
        %v7014 = vadd.f32 %v6557, %v6665
        %v7015 = vadd.f32 %v6559, %v6669
        %v7016 = vadd.f32 %v6563, %v6665
        %v7017 = vadd.f32 %v6565, %v6669
        %v7018 = vadd.f32 %v6567, %v6665
        %v7019 = vadd.f32 %v6569, %v6669
        %v7020 = vadd.f32 %v6573, %v6665
        %v7021 = vadd.f32 %v6575, %v6669
        %v7022 = vadd.f32 %v6577, %v6665
        %v7023 = vadd.f32 %v6579, %v6669
        %v7024 = vadd.f32 %v6583, %v6665
        %v7025 = vadd.f32 %v6585, %v6669
        %v7026 = vadd.f32 %v6587, %v6665
        %v7027 = vadd.f32 %v6589, %v6669
        %v7028 = vadd.f32 %v6593, %v6665
        %v7029 = vadd.f32 %v6595, %v6669
        %v7030 = vadd.f32 %v6597, %v6665
        %v7031 = vadd.f32 %v6599, %v6669
        %v7032 = vadd.f32 %v6603, %v6665
        %v7033 = vadd.f32 %v6605, %v6669
        %v7034 = vadd.f32 %v6607, %v6665
        %v7035 = vadd.f32 %v6609, %v6669
        %v7036 = vadd.f32 %v6613, %v6665
        %v7037 = vadd.f32 %v6615, %v6669
        %v7038 = vadd.f32 %v6617, %v6665
        %v7039 = vadd.f32 %v6619, %v6669
        %v7040 = vadd.f32 %v6623, %v6665
        %v7041 = vadd.f32 %v6625, %v6669
        %v7042 = vadd.f32 %v6627, %v6665
        %v7043 = vadd.f32 %v6629, %v6669
        %v7044 = vadd.f32 %v6633, %v6665
        %v7045 = vadd.f32 %v6635, %v6669
        %v7046 = vadd.f32 %v6637, %v6665
        %v7047 = vadd.f32 %v6639, %v6669
        %v7048 = vadd.f32 %v6643, %v6665
        %v7049 = vadd.f32 %v6645, %v6669
        %v7050 = vadd.f32 %v6647, %v6665
        %v7051 = vadd.f32 %v6649, %v6669
        %v7052 = vadd.f32 %v6653, %v6665
        %v7053 = vadd.f32 %v6655, %v6669
        %v7054 = vadd.f32 %v6657, %v6665
        %v7055 = vadd.f32 %v6659, %v6669
        %7056 = vst [vmem:[%s166] sm:$0xff] %v6672
        %7057 = vst [vmem:[%s166 + $0x8] sm:$0xff] %v6673
        %7058 = vst [vmem:[%s166 + $0x10] sm:$0xff] %v6674
        %7059 = vst [vmem:[%s166 + $0x18] sm:$0xff] %v6675
        %7060 = vst [vmem:[%s166 + $0x20] sm:$0xff] %v6676
        %7061 = vst [vmem:[%s166 + $0x28] sm:$0xff] %v6677
        %7062 = vst [vmem:[%s166 + $0x30] sm:$0xff] %v6678
        %7063 = vst [vmem:[%s166 + $0x38] sm:$0xff] %v6679
        %7064 = vst [vmem:[%s166 + $0x40] sm:$0xff] %v6680
        %7065 = vst [vmem:[%s166 + $0x48] sm:$0xff] %v6681
        %7066 = vst [vmem:[%s166 + $0x50] sm:$0xff] %v6682
        %7067 = vst [vmem:[%s166 + $0x58] sm:$0xff] %v6683
        %7068 = vst [vmem:[%s166 + $0x60] sm:$0xff] %v6684
        %7069 = vst [vmem:[%s166 + $0x68] sm:$0xff] %v6685
        %7070 = vst [vmem:[%s166 + $0x70] sm:$0xff] %v6686
        %7071 = vst [vmem:[%s166 + $0x78] sm:$0xff] %v6687
        %7072 = vst [vmem:[%s166 + $0x80] sm:$0xff] %v6688
        %7073 = vst [vmem:[%s166 + $0x88] sm:$0xff] %v6689
        %7074 = vst [vmem:[%s166 + $0x90] sm:$0xff] %v6690
        %7075 = vst [vmem:[%s166 + $0x98] sm:$0xff] %v6691
        %7076 = vst [vmem:[%s166 + $0xa0] sm:$0xff] %v6692
        %7077 = vst [vmem:[%s166 + $0xa8] sm:$0xff] %v6693
        %7078 = vst [vmem:[%s166 + $0xb0] sm:$0xff] %v6694
        %7079 = vst [vmem:[%s166 + $0xb8] sm:$0xff] %v6695
        %7080 = vst [vmem:[%s166 + $0xc0] sm:$0xff] %v6696
        %7081 = vst [vmem:[%s166 + $0xc8] sm:$0xff] %v6697
        %7082 = vst [vmem:[%s166 + $0xd0] sm:$0xff] %v6698
        %7083 = vst [vmem:[%s166 + $0xd8] sm:$0xff] %v6699
        %7084 = vst [vmem:[%s166 + $0xe0] sm:$0xff] %v6700
        %7085 = vst [vmem:[%s166 + $0xe8] sm:$0xff] %v6701
        %7086 = vst [vmem:[%s166 + $0xf0] sm:$0xff] %v6702
        %7087 = vst [vmem:[%s166 + $0xf8] sm:$0xff] %v6703
        %7088 = vst [vmem:[%s166 + $0x100] sm:$0xff] %v6704
        %7089 = vst [vmem:[%s166 + $0x108] sm:$0xff] %v6705
        %7090 = vst [vmem:[%s166 + $0x110] sm:$0xff] %v6706
        %7091 = vst [vmem:[%s166 + $0x118] sm:$0xff] %v6707
        %7092 = vst [vmem:[%s166 + $0x120] sm:$0xff] %v6708
        %7093 = vst [vmem:[%s166 + $0x128] sm:$0xff] %v6709
        %7094 = vst [vmem:[%s166 + $0x130] sm:$0xff] %v6710
        %7095 = vst [vmem:[%s166 + $0x138] sm:$0xff] %v6711
        %7096 = vst [vmem:[%s166 + $0x140] sm:$0xff] %v6712
        %7097 = vst [vmem:[%s166 + $0x148] sm:$0xff] %v6713
        %7098 = vst [vmem:[%s166 + $0x150] sm:$0xff] %v6714
        %7099 = vst [vmem:[%s166 + $0x158] sm:$0xff] %v6715
        %7100 = vst [vmem:[%s166 + $0x160] sm:$0xff] %v6716
        %7101 = vst [vmem:[%s166 + $0x168] sm:$0xff] %v6717
        %7102 = vst [vmem:[%s166 + $0x170] sm:$0xff] %v6718
        %7103 = vst [vmem:[%s166 + $0x178] sm:$0xff] %v6719
        %7104 = vst [vmem:[%s166 + $0x180] sm:$0xff] %v6720
        %7105 = vst [vmem:[%s166 + $0x188] sm:$0xff] %v6721
        %7106 = vst [vmem:[%s166 + $0x190] sm:$0xff] %v6722
        %7107 = vst [vmem:[%s166 + $0x198] sm:$0xff] %v6723
        %7108 = vst [vmem:[%s166 + $0x1a0] sm:$0xff] %v6724
        %7109 = vst [vmem:[%s166 + $0x1a8] sm:$0xff] %v6725
        %7110 = vst [vmem:[%s166 + $0x1b0] sm:$0xff] %v6726
        %7111 = vst [vmem:[%s166 + $0x1b8] sm:$0xff] %v6727
        %7112 = vst [vmem:[%s166 + $0x1c0] sm:$0xff] %v6728
        %7113 = vst [vmem:[%s166 + $0x1c8] sm:$0xff] %v6729
        %7114 = vst [vmem:[%s166 + $0x1d0] sm:$0xff] %v6730
        %7115 = vst [vmem:[%s166 + $0x1d8] sm:$0xff] %v6731
        %7116 = vst [vmem:[%s166 + $0x1e0] sm:$0xff] %v6732
        %7117 = vst [vmem:[%s166 + $0x1e8] sm:$0xff] %v6733
        %7118 = vst [vmem:[%s166 + $0x1f0] sm:$0xff] %v6734
        %7119 = vst [vmem:[%s166 + $0x1f8] sm:$0xff] %v6735
        %7120 = vst [vmem:[%s166 + $0x200] sm:$0xff] %v6736
        %7121 = vst [vmem:[%s166 + $0x208] sm:$0xff] %v6737
        %7122 = vst [vmem:[%s166 + $0x210] sm:$0xff] %v6738
        %7123 = vst [vmem:[%s166 + $0x218] sm:$0xff] %v6739
        %7124 = vst [vmem:[%s166 + $0x220] sm:$0xff] %v6740
        %7125 = vst [vmem:[%s166 + $0x228] sm:$0xff] %v6741
        %7126 = vst [vmem:[%s166 + $0x230] sm:$0xff] %v6742
        %7127 = vst [vmem:[%s166 + $0x238] sm:$0xff] %v6743
        %7128 = vst [vmem:[%s166 + $0x240] sm:$0xff] %v6744
        %7129 = vst [vmem:[%s166 + $0x248] sm:$0xff] %v6745
        %7130 = vst [vmem:[%s166 + $0x250] sm:$0xff] %v6746
        %7131 = vst [vmem:[%s166 + $0x258] sm:$0xff] %v6747
        %7132 = vst [vmem:[%s166 + $0x260] sm:$0xff] %v6748
        %7133 = vst [vmem:[%s166 + $0x268] sm:$0xff] %v6749
        %7134 = vst [vmem:[%s166 + $0x270] sm:$0xff] %v6750
        %7135 = vst [vmem:[%s166 + $0x278] sm:$0xff] %v6751
        %7136 = vst [vmem:[%s166 + $0x280] sm:$0xff] %v6752
        %7137 = vst [vmem:[%s166 + $0x288] sm:$0xff] %v6753
        %7138 = vst [vmem:[%s166 + $0x290] sm:$0xff] %v6754
        %7139 = vst [vmem:[%s166 + $0x298] sm:$0xff] %v6755
        %7140 = vst [vmem:[%s166 + $0x2a0] sm:$0xff] %v6756
        %7141 = vst [vmem:[%s166 + $0x2a8] sm:$0xff] %v6757
        %7142 = vst [vmem:[%s166 + $0x2b0] sm:$0xff] %v6758
        %7143 = vst [vmem:[%s166 + $0x2b8] sm:$0xff] %v6759
        %7144 = vst [vmem:[%s166 + $0x2c0] sm:$0xff] %v6760
        %7145 = vst [vmem:[%s166 + $0x2c8] sm:$0xff] %v6761
        %7146 = vst [vmem:[%s166 + $0x2d0] sm:$0xff] %v6762
        %7147 = vst [vmem:[%s166 + $0x2d8] sm:$0xff] %v6763
        %7148 = vst [vmem:[%s166 + $0x2e0] sm:$0xff] %v6764
        %7149 = vst [vmem:[%s166 + $0x2e8] sm:$0xff] %v6765
        %7150 = vst [vmem:[%s166 + $0x2f0] sm:$0xff] %v6766
        %7151 = vst [vmem:[%s166 + $0x2f8] sm:$0xff] %v6767
        %7152 = vst [vmem:[%s166 + $0x300] sm:$0xff] %v6768
        %7153 = vst [vmem:[%s166 + $0x308] sm:$0xff] %v6769
        %7154 = vst [vmem:[%s166 + $0x310] sm:$0xff] %v6770
        %7155 = vst [vmem:[%s166 + $0x318] sm:$0xff] %v6771
        %7156 = vst [vmem:[%s166 + $0x320] sm:$0xff] %v6772
        %7157 = vst [vmem:[%s166 + $0x328] sm:$0xff] %v6773
        %7158 = vst [vmem:[%s166 + $0x330] sm:$0xff] %v6774
        %7159 = vst [vmem:[%s166 + $0x338] sm:$0xff] %v6775
        %7160 = vst [vmem:[%s166 + $0x340] sm:$0xff] %v6776
        %7161 = vst [vmem:[%s166 + $0x348] sm:$0xff] %v6777
        %7162 = vst [vmem:[%s166 + $0x350] sm:$0xff] %v6778
        %7163 = vst [vmem:[%s166 + $0x358] sm:$0xff] %v6779
        %7164 = vst [vmem:[%s166 + $0x360] sm:$0xff] %v6780
        %7165 = vst [vmem:[%s166 + $0x368] sm:$0xff] %v6781
        %7166 = vst [vmem:[%s166 + $0x370] sm:$0xff] %v6782
        %7167 = vst [vmem:[%s166 + $0x378] sm:$0xff] %v6783
        %7168 = vst [vmem:[%s166 + $0x380] sm:$0xff] %v6784
        %7169 = vst [vmem:[%s166 + $0x388] sm:$0xff] %v6785
        %7170 = vst [vmem:[%s166 + $0x390] sm:$0xff] %v6786
        %7171 = vst [vmem:[%s166 + $0x398] sm:$0xff] %v6787
        %7172 = vst [vmem:[%s166 + $0x3a0] sm:$0xff] %v6788
        %7173 = vst [vmem:[%s166 + $0x3a8] sm:$0xff] %v6789
        %7174 = vst [vmem:[%s166 + $0x3b0] sm:$0xff] %v6790
        %7175 = vst [vmem:[%s166 + $0x3b8] sm:$0xff] %v6791
        %7176 = vst [vmem:[%s166 + $0x3c0] sm:$0xff] %v6792
        %7177 = vst [vmem:[%s166 + $0x3c8] sm:$0xff] %v6793
        %7178 = vst [vmem:[%s166 + $0x3d0] sm:$0xff] %v6794
        %7179 = vst [vmem:[%s166 + $0x3d8] sm:$0xff] %v6795
        %7180 = vst [vmem:[%s166 + $0x3e0] sm:$0xff] %v6796
        %7181 = vst [vmem:[%s166 + $0x3e8] sm:$0xff] %v6797
        %7182 = vst [vmem:[%s166 + $0x3f0] sm:$0xff] %v6798
        %7183 = vst [vmem:[%s166 + $0x3f8] sm:$0xff] %v6799
        %7184 = vst [vmem:[%s166 + $0x400] sm:$0xff] %v6800
        %7185 = vst [vmem:[%s166 + $0x408] sm:$0xff] %v6801
        %7186 = vst [vmem:[%s166 + $0x410] sm:$0xff] %v6802
        %7187 = vst [vmem:[%s166 + $0x418] sm:$0xff] %v6803
        %7188 = vst [vmem:[%s166 + $0x420] sm:$0xff] %v6804
        %7189 = vst [vmem:[%s166 + $0x428] sm:$0xff] %v6805
        %7190 = vst [vmem:[%s166 + $0x430] sm:$0xff] %v6806
        %7191 = vst [vmem:[%s166 + $0x438] sm:$0xff] %v6807
        %7192 = vst [vmem:[%s166 + $0x440] sm:$0xff] %v6808
        %7193 = vst [vmem:[%s166 + $0x448] sm:$0xff] %v6809
        %7194 = vst [vmem:[%s166 + $0x450] sm:$0xff] %v6810
        %7195 = vst [vmem:[%s166 + $0x458] sm:$0xff] %v6811
        %7196 = vst [vmem:[%s166 + $0x460] sm:$0xff] %v6812
        %7197 = vst [vmem:[%s166 + $0x468] sm:$0xff] %v6813
        %7198 = vst [vmem:[%s166 + $0x470] sm:$0xff] %v6814
        %7199 = vst [vmem:[%s166 + $0x478] sm:$0xff] %v6815
        %7200 = vst [vmem:[%s166 + $0x480] sm:$0xff] %v6816
        %7201 = vst [vmem:[%s166 + $0x488] sm:$0xff] %v6817
        %7202 = vst [vmem:[%s166 + $0x490] sm:$0xff] %v6818
        %7203 = vst [vmem:[%s166 + $0x498] sm:$0xff] %v6819
        %7204 = vst [vmem:[%s166 + $0x4a0] sm:$0xff] %v6820
        %7205 = vst [vmem:[%s166 + $0x4a8] sm:$0xff] %v6821
        %7206 = vst [vmem:[%s166 + $0x4b0] sm:$0xff] %v6822
        %7207 = vst [vmem:[%s166 + $0x4b8] sm:$0xff] %v6823
        %7208 = vst [vmem:[%s166 + $0x4c0] sm:$0xff] %v6824
        %7209 = vst [vmem:[%s166 + $0x4c8] sm:$0xff] %v6825
        %7210 = vst [vmem:[%s166 + $0x4d0] sm:$0xff] %v6826
        %7211 = vst [vmem:[%s166 + $0x4d8] sm:$0xff] %v6827
        %7212 = vst [vmem:[%s166 + $0x4e0] sm:$0xff] %v6828
        %7213 = vst [vmem:[%s166 + $0x4e8] sm:$0xff] %v6829
        %7214 = vst [vmem:[%s166 + $0x4f0] sm:$0xff] %v6830
        %7215 = vst [vmem:[%s166 + $0x4f8] sm:$0xff] %v6831
        %7216 = vst [vmem:[%s166 + $0x500] sm:$0xff] %v6832
        %7217 = vst [vmem:[%s166 + $0x508] sm:$0xff] %v6833
        %7218 = vst [vmem:[%s166 + $0x510] sm:$0xff] %v6834
        %7219 = vst [vmem:[%s166 + $0x518] sm:$0xff] %v6835
        %7220 = vst [vmem:[%s166 + $0x520] sm:$0xff] %v6836
        %7221 = vst [vmem:[%s166 + $0x528] sm:$0xff] %v6837
        %7222 = vst [vmem:[%s166 + $0x530] sm:$0xff] %v6838
        %7223 = vst [vmem:[%s166 + $0x538] sm:$0xff] %v6839
        %7224 = vst [vmem:[%s166 + $0x540] sm:$0xff] %v6840
        %7225 = vst [vmem:[%s166 + $0x548] sm:$0xff] %v6841
        %7226 = vst [vmem:[%s166 + $0x550] sm:$0xff] %v6842
        %7227 = vst [vmem:[%s166 + $0x558] sm:$0xff] %v6843
        %7228 = vst [vmem:[%s166 + $0x560] sm:$0xff] %v6844
        %7229 = vst [vmem:[%s166 + $0x568] sm:$0xff] %v6845
        %7230 = vst [vmem:[%s166 + $0x570] sm:$0xff] %v6846
        %7231 = vst [vmem:[%s166 + $0x578] sm:$0xff] %v6847
        %7232 = vst [vmem:[%s166 + $0x580] sm:$0xff] %v6848
        %7233 = vst [vmem:[%s166 + $0x588] sm:$0xff] %v6849
        %7234 = vst [vmem:[%s166 + $0x590] sm:$0xff] %v6850
        %7235 = vst [vmem:[%s166 + $0x598] sm:$0xff] %v6851
        %7236 = vst [vmem:[%s166 + $0x5a0] sm:$0xff] %v6852
        %7237 = vst [vmem:[%s166 + $0x5a8] sm:$0xff] %v6853
        %7238 = vst [vmem:[%s166 + $0x5b0] sm:$0xff] %v6854
        %7239 = vst [vmem:[%s166 + $0x5b8] sm:$0xff] %v6855
        %7240 = vst [vmem:[%s166 + $0x5c0] sm:$0xff] %v6856
        %7241 = vst [vmem:[%s166 + $0x5c8] sm:$0xff] %v6857
        %7242 = vst [vmem:[%s166 + $0x5d0] sm:$0xff] %v6858
        %7243 = vst [vmem:[%s166 + $0x5d8] sm:$0xff] %v6859
        %7244 = vst [vmem:[%s166 + $0x5e0] sm:$0xff] %v6860
        %7245 = vst [vmem:[%s166 + $0x5e8] sm:$0xff] %v6861
        %7246 = vst [vmem:[%s166 + $0x5f0] sm:$0xff] %v6862
        %7247 = vst [vmem:[%s166 + $0x5f8] sm:$0xff] %v6863
        %7248 = vst [vmem:[%s166 + $0x600] sm:$0xff] %v6864
        %7249 = vst [vmem:[%s166 + $0x608] sm:$0xff] %v6865
        %7250 = vst [vmem:[%s166 + $0x610] sm:$0xff] %v6866
        %7251 = vst [vmem:[%s166 + $0x618] sm:$0xff] %v6867
        %7252 = vst [vmem:[%s166 + $0x620] sm:$0xff] %v6868
        %7253 = vst [vmem:[%s166 + $0x628] sm:$0xff] %v6869
        %7254 = vst [vmem:[%s166 + $0x630] sm:$0xff] %v6870
        %7255 = vst [vmem:[%s166 + $0x638] sm:$0xff] %v6871
        %7256 = vst [vmem:[%s166 + $0x640] sm:$0xff] %v6872
        %7257 = vst [vmem:[%s166 + $0x648] sm:$0xff] %v6873
        %7258 = vst [vmem:[%s166 + $0x650] sm:$0xff] %v6874
        %7259 = vst [vmem:[%s166 + $0x658] sm:$0xff] %v6875
        %7260 = vst [vmem:[%s166 + $0x660] sm:$0xff] %v6876
        %7261 = vst [vmem:[%s166 + $0x668] sm:$0xff] %v6877
        %7262 = vst [vmem:[%s166 + $0x670] sm:$0xff] %v6878
        %7263 = vst [vmem:[%s166 + $0x678] sm:$0xff] %v6879
        %7264 = vst [vmem:[%s166 + $0x680] sm:$0xff] %v6880
        %7265 = vst [vmem:[%s166 + $0x688] sm:$0xff] %v6881
        %7266 = vst [vmem:[%s166 + $0x690] sm:$0xff] %v6882
        %7267 = vst [vmem:[%s166 + $0x698] sm:$0xff] %v6883
        %7268 = vst [vmem:[%s166 + $0x6a0] sm:$0xff] %v6884
        %7269 = vst [vmem:[%s166 + $0x6a8] sm:$0xff] %v6885
        %7270 = vst [vmem:[%s166 + $0x6b0] sm:$0xff] %v6886
        %7271 = vst [vmem:[%s166 + $0x6b8] sm:$0xff] %v6887
        %7272 = vst [vmem:[%s166 + $0x6c0] sm:$0xff] %v6888
        %7273 = vst [vmem:[%s166 + $0x6c8] sm:$0xff] %v6889
        %7274 = vst [vmem:[%s166 + $0x6d0] sm:$0xff] %v6890
        %7275 = vst [vmem:[%s166 + $0x6d8] sm:$0xff] %v6891
        %7276 = vst [vmem:[%s166 + $0x6e0] sm:$0xff] %v6892
        %7277 = vst [vmem:[%s166 + $0x6e8] sm:$0xff] %v6893
        %7278 = vst [vmem:[%s166 + $0x6f0] sm:$0xff] %v6894
        %7279 = vst [vmem:[%s166 + $0x6f8] sm:$0xff] %v6895
        %7280 = vst [vmem:[%s166 + $0x700] sm:$0xff] %v6896
        %7281 = vst [vmem:[%s166 + $0x708] sm:$0xff] %v6897
        %7282 = vst [vmem:[%s166 + $0x710] sm:$0xff] %v6898
        %7283 = vst [vmem:[%s166 + $0x718] sm:$0xff] %v6899
        %7284 = vst [vmem:[%s166 + $0x720] sm:$0xff] %v6900
        %7285 = vst [vmem:[%s166 + $0x728] sm:$0xff] %v6901
        %7286 = vst [vmem:[%s166 + $0x730] sm:$0xff] %v6902
        %7287 = vst [vmem:[%s166 + $0x738] sm:$0xff] %v6903
        %7288 = vst [vmem:[%s166 + $0x740] sm:$0xff] %v6904
        %7289 = vst [vmem:[%s166 + $0x748] sm:$0xff] %v6905
        %7290 = vst [vmem:[%s166 + $0x750] sm:$0xff] %v6906
        %7291 = vst [vmem:[%s166 + $0x758] sm:$0xff] %v6907
        %7292 = vst [vmem:[%s166 + $0x760] sm:$0xff] %v6908
        %7293 = vst [vmem:[%s166 + $0x768] sm:$0xff] %v6909
        %7294 = vst [vmem:[%s166 + $0x770] sm:$0xff] %v6910
        %7295 = vst [vmem:[%s166 + $0x778] sm:$0xff] %v6911
        %7296 = vst [vmem:[%s166 + $0x780] sm:$0xff] %v6912
        %7297 = vst [vmem:[%s166 + $0x788] sm:$0xff] %v6913
        %7298 = vst [vmem:[%s166 + $0x790] sm:$0xff] %v6914
        %7299 = vst [vmem:[%s166 + $0x798] sm:$0xff] %v6915
        %7300 = vst [vmem:[%s166 + $0x7a0] sm:$0xff] %v6916
        %7301 = vst [vmem:[%s166 + $0x7a8] sm:$0xff] %v6917
        %7302 = vst [vmem:[%s166 + $0x7b0] sm:$0xff] %v6918
        %7303 = vst [vmem:[%s166 + $0x7b8] sm:$0xff] %v6919
        %7304 = vst [vmem:[%s166 + $0x7c0] sm:$0xff] %v6920
        %7305 = vst [vmem:[%s166 + $0x7c8] sm:$0xff] %v6921
        %7306 = vst [vmem:[%s166 + $0x7d0] sm:$0xff] %v6922
        %7307 = vst [vmem:[%s166 + $0x7d8] sm:$0xff] %v6923
        %7308 = vst [vmem:[%s166 + $0x7e0] sm:$0xff] %v6924
        %7309 = vst [vmem:[%s166 + $0x7e8] sm:$0xff] %v6925
        %7310 = vst [vmem:[%s166 + $0x7f0] sm:$0xff] %v6926
        %7311 = vst [vmem:[%s166 + $0x7f8] sm:$0xff] %v6927
        %7312 = vst [vmem:[%s166 + $0x800] sm:$0xff] %v6928
        %7313 = vst [vmem:[%s166 + $0x808] sm:$0xff] %v6929
        %7314 = vst [vmem:[%s166 + $0x810] sm:$0xff] %v6930
        %7315 = vst [vmem:[%s166 + $0x818] sm:$0xff] %v6931
        %7316 = vst [vmem:[%s166 + $0x820] sm:$0xff] %v6932
        %7317 = vst [vmem:[%s166 + $0x828] sm:$0xff] %v6933
        %7318 = vst [vmem:[%s166 + $0x830] sm:$0xff] %v6934
        %7319 = vst [vmem:[%s166 + $0x838] sm:$0xff] %v6935
        %7320 = vst [vmem:[%s166 + $0x840] sm:$0xff] %v6936
        %7321 = vst [vmem:[%s166 + $0x848] sm:$0xff] %v6937
        %7322 = vst [vmem:[%s166 + $0x850] sm:$0xff] %v6938
        %7323 = vst [vmem:[%s166 + $0x858] sm:$0xff] %v6939
        %7324 = vst [vmem:[%s166 + $0x860] sm:$0xff] %v6940
        %7325 = vst [vmem:[%s166 + $0x868] sm:$0xff] %v6941
        %7326 = vst [vmem:[%s166 + $0x870] sm:$0xff] %v6942
        %7327 = vst [vmem:[%s166 + $0x878] sm:$0xff] %v6943
        %7328 = vst [vmem:[%s166 + $0x880] sm:$0xff] %v6944
        %7329 = vst [vmem:[%s166 + $0x888] sm:$0xff] %v6945
        %7330 = vst [vmem:[%s166 + $0x890] sm:$0xff] %v6946
        %7331 = vst [vmem:[%s166 + $0x898] sm:$0xff] %v6947
        %7332 = vst [vmem:[%s166 + $0x8a0] sm:$0xff] %v6948
        %7333 = vst [vmem:[%s166 + $0x8a8] sm:$0xff] %v6949
        %7334 = vst [vmem:[%s166 + $0x8b0] sm:$0xff] %v6950
        %7335 = vst [vmem:[%s166 + $0x8b8] sm:$0xff] %v6951
        %7336 = vst [vmem:[%s166 + $0x8c0] sm:$0xff] %v6952
        %7337 = vst [vmem:[%s166 + $0x8c8] sm:$0xff] %v6953
        %7338 = vst [vmem:[%s166 + $0x8d0] sm:$0xff] %v6954
        %7339 = vst [vmem:[%s166 + $0x8d8] sm:$0xff] %v6955
        %7340 = vst [vmem:[%s166 + $0x8e0] sm:$0xff] %v6956
        %7341 = vst [vmem:[%s166 + $0x8e8] sm:$0xff] %v6957
        %7342 = vst [vmem:[%s166 + $0x8f0] sm:$0xff] %v6958
        %7343 = vst [vmem:[%s166 + $0x8f8] sm:$0xff] %v6959
        %7344 = vst [vmem:[%s166 + $0x900] sm:$0xff] %v6960
        %7345 = vst [vmem:[%s166 + $0x908] sm:$0xff] %v6961
        %7346 = vst [vmem:[%s166 + $0x910] sm:$0xff] %v6962
        %7347 = vst [vmem:[%s166 + $0x918] sm:$0xff] %v6963
        %7348 = vst [vmem:[%s166 + $0x920] sm:$0xff] %v6964
        %7349 = vst [vmem:[%s166 + $0x928] sm:$0xff] %v6965
        %7350 = vst [vmem:[%s166 + $0x930] sm:$0xff] %v6966
        %7351 = vst [vmem:[%s166 + $0x938] sm:$0xff] %v6967
        %7352 = vst [vmem:[%s166 + $0x940] sm:$0xff] %v6968
        %7353 = vst [vmem:[%s166 + $0x948] sm:$0xff] %v6969
        %7354 = vst [vmem:[%s166 + $0x950] sm:$0xff] %v6970
        %7355 = vst [vmem:[%s166 + $0x958] sm:$0xff] %v6971
        %7356 = vst [vmem:[%s166 + $0x960] sm:$0xff] %v6972
        %7357 = vst [vmem:[%s166 + $0x968] sm:$0xff] %v6973
        %7358 = vst [vmem:[%s166 + $0x970] sm:$0xff] %v6974
        %7359 = vst [vmem:[%s166 + $0x978] sm:$0xff] %v6975
        %7360 = vst [vmem:[%s166 + $0x980] sm:$0xff] %v6976
        %7361 = vst [vmem:[%s166 + $0x988] sm:$0xff] %v6977
        %7362 = vst [vmem:[%s166 + $0x990] sm:$0xff] %v6978
        %7363 = vst [vmem:[%s166 + $0x998] sm:$0xff] %v6979
        %7364 = vst [vmem:[%s166 + $0x9a0] sm:$0xff] %v6980
        %7365 = vst [vmem:[%s166 + $0x9a8] sm:$0xff] %v6981
        %7366 = vst [vmem:[%s166 + $0x9b0] sm:$0xff] %v6982
        %7367 = vst [vmem:[%s166 + $0x9b8] sm:$0xff] %v6983
        %7368 = vst [vmem:[%s166 + $0x9c0] sm:$0xff] %v6984
        %7369 = vst [vmem:[%s166 + $0x9c8] sm:$0xff] %v6985
        %7370 = vst [vmem:[%s166 + $0x9d0] sm:$0xff] %v6986
        %7371 = vst [vmem:[%s166 + $0x9d8] sm:$0xff] %v6987
        %7372 = vst [vmem:[%s166 + $0x9e0] sm:$0xff] %v6988
        %7373 = vst [vmem:[%s166 + $0x9e8] sm:$0xff] %v6989
        %7374 = vst [vmem:[%s166 + $0x9f0] sm:$0xff] %v6990
        %7375 = vst [vmem:[%s166 + $0x9f8] sm:$0xff] %v6991
        %7376 = vst [vmem:[%s166 + $0xa00] sm:$0xff] %v6992
        %7377 = vst [vmem:[%s166 + $0xa08] sm:$0xff] %v6993
        %7378 = vst [vmem:[%s166 + $0xa10] sm:$0xff] %v6994
        %7379 = vst [vmem:[%s166 + $0xa18] sm:$0xff] %v6995
        %7380 = vst [vmem:[%s166 + $0xa20] sm:$0xff] %v6996
        %7381 = vst [vmem:[%s166 + $0xa28] sm:$0xff] %v6997
        %7382 = vst [vmem:[%s166 + $0xa30] sm:$0xff] %v6998
        %7383 = vst [vmem:[%s166 + $0xa38] sm:$0xff] %v6999
        %7384 = vst [vmem:[%s166 + $0xa40] sm:$0xff] %v7000
        %7385 = vst [vmem:[%s166 + $0xa48] sm:$0xff] %v7001
        %7386 = vst [vmem:[%s166 + $0xa50] sm:$0xff] %v7002
        %7387 = vst [vmem:[%s166 + $0xa58] sm:$0xff] %v7003
        %7388 = vst [vmem:[%s166 + $0xa60] sm:$0xff] %v7004
        %7389 = vst [vmem:[%s166 + $0xa68] sm:$0xff] %v7005
        %7390 = vst [vmem:[%s166 + $0xa70] sm:$0xff] %v7006
        %7391 = vst [vmem:[%s166 + $0xa78] sm:$0xff] %v7007
        %7392 = vst [vmem:[%s166 + $0xa80] sm:$0xff] %v7008
        %7393 = vst [vmem:[%s166 + $0xa88] sm:$0xff] %v7009
        %7394 = vst [vmem:[%s166 + $0xa90] sm:$0xff] %v7010
        %7395 = vst [vmem:[%s166 + $0xa98] sm:$0xff] %v7011
        %7396 = vst [vmem:[%s166 + $0xaa0] sm:$0xff] %v7012
        %7397 = vst [vmem:[%s166 + $0xaa8] sm:$0xff] %v7013
        %7398 = vst [vmem:[%s166 + $0xab0] sm:$0xff] %v7014
        %7399 = vst [vmem:[%s166 + $0xab8] sm:$0xff] %v7015
        %7400 = vst [vmem:[%s166 + $0xac0] sm:$0xff] %v7016
        %7401 = vst [vmem:[%s166 + $0xac8] sm:$0xff] %v7017
        %7402 = vst [vmem:[%s166 + $0xad0] sm:$0xff] %v7018
        %7403 = vst [vmem:[%s166 + $0xad8] sm:$0xff] %v7019
        %7404 = vst [vmem:[%s166 + $0xae0] sm:$0xff] %v7020
        %7405 = vst [vmem:[%s166 + $0xae8] sm:$0xff] %v7021
        %7406 = vst [vmem:[%s166 + $0xaf0] sm:$0xff] %v7022
        %7407 = vst [vmem:[%s166 + $0xaf8] sm:$0xff] %v7023
        %7408 = vst [vmem:[%s166 + $0xb00] sm:$0xff] %v7024
        %7409 = vst [vmem:[%s166 + $0xb08] sm:$0xff] %v7025
        %7410 = vst [vmem:[%s166 + $0xb10] sm:$0xff] %v7026
        %7411 = vst [vmem:[%s166 + $0xb18] sm:$0xff] %v7027
        %7412 = vst [vmem:[%s166 + $0xb20] sm:$0xff] %v7028
        %7413 = vst [vmem:[%s166 + $0xb28] sm:$0xff] %v7029
        %7414 = vst [vmem:[%s166 + $0xb30] sm:$0xff] %v7030
        %7415 = vst [vmem:[%s166 + $0xb38] sm:$0xff] %v7031
        %7416 = vst [vmem:[%s166 + $0xb40] sm:$0xff] %v7032
        %7417 = vst [vmem:[%s166 + $0xb48] sm:$0xff] %v7033
        %7418 = vst [vmem:[%s166 + $0xb50] sm:$0xff] %v7034
        %7419 = vst [vmem:[%s166 + $0xb58] sm:$0xff] %v7035
        %7420 = vst [vmem:[%s166 + $0xb60] sm:$0xff] %v7036
        %7421 = vst [vmem:[%s166 + $0xb68] sm:$0xff] %v7037
        %7422 = vst [vmem:[%s166 + $0xb70] sm:$0xff] %v7038
        %7423 = vst [vmem:[%s166 + $0xb78] sm:$0xff] %v7039
        %7424 = vst [vmem:[%s166 + $0xb80] sm:$0xff] %v7040
        %7425 = vst [vmem:[%s166 + $0xb88] sm:$0xff] %v7041
        %7426 = vst [vmem:[%s166 + $0xb90] sm:$0xff] %v7042
        %7427 = vst [vmem:[%s166 + $0xb98] sm:$0xff] %v7043
        %7428 = vst [vmem:[%s166 + $0xba0] sm:$0xff] %v7044
        %7429 = vst [vmem:[%s166 + $0xba8] sm:$0xff] %v7045
        %7430 = vst [vmem:[%s166 + $0xbb0] sm:$0xff] %v7046
        %7431 = vst [vmem:[%s166 + $0xbb8] sm:$0xff] %v7047
        %7432 = vst [vmem:[%s166 + $0xbc0] sm:$0xff] %v7048
        %7433 = vst [vmem:[%s166 + $0xbc8] sm:$0xff] %v7049
        %7434 = vst [vmem:[%s166 + $0xbd0] sm:$0xff] %v7050
        %7435 = vst [vmem:[%s166 + $0xbd8] sm:$0xff] %v7051
        %7436 = vst [vmem:[%s166 + $0xbe0] sm:$0xff] %v7052
        %7437 = vst [vmem:[%s166 + $0xbe8] sm:$0xff] %v7053
        %7438 = vst [vmem:[%s166 + $0xbf0] sm:$0xff] %v7054
        %7439 = vst [vmem:[%s166 + $0xbf8] sm:$0xff] %v7055
        %s7440 = sand.u32 %s93, 1
        %s7441 = scalar_lea.sflag [#allocation3], %s7440
        %s7442 = sand.u32 %s93, 1
        %s7443 = smul.addr %s7442, 3072
        %s7444 = scalar_lea.vmem [#allocation2], %s7443
        // Predicated region
        $region33: #{tpu_custom_call.1} parent=31 // pred_check
          %p7445 = pneg %p103
        $region34: #{tpu_custom_call.1} parent=31 // pred_check_branch
          %7447 = sbr.rel (%p7445) target = $region36
        $region35: #{tpu_custom_call.1} parent=31 // pred_region
          %s7448 = smul.u32 192, %s17
          %s7450 = ssub.s32 49152, 49152
          %7451 = vsyncadd %s7441, %s7450
          %s7452 = smul.addr %s7448, 2
          %s7453 = smul.addr %s7452, 128
          %s7454 = scalar_lea.hbm %s3, %s7453
          %s7455 = sshll.u32 %s7444, 4
          %s7456 = int_to_ptr.vmem [resolvable:$true] %s7455
          %7461 = dma.vmem_to_hbm [thread:$0]  %s7456, 49152, %s7454, %s7441, 256, 256, 16
        $region36: #{tpu_custom_call.1} parent=31 // pred_fallthru
          _
      $region32: #{tpu_custom_call.1} parent=5 // pred_fallthru
        _
      %p7462 = scmp.le.s32.totalorder 2, %s12
      // Predicated region
      $region37: #{tpu_custom_call.1} parent=5 // pred_check
        %p7463 = pneg %p7462
      $region38: #{tpu_custom_call.1} parent=5 // pred_check_branch
        %7465 = sbr.rel (%p7463) target = $region40
      $region39: #{tpu_custom_call.1} parent=5 // pred_region
        %s7466 = ssub.s32 %s12, 2
        // Predicated region
        $region41: #{tpu_custom_call.1} parent=39 // pred_check
          %p7467 = pneg %p109
        $region42: #{tpu_custom_call.1} parent=39 // pred_check_branch
          %7469 = sbr.rel (%p7467) target = $region44
        $region43: #{tpu_custom_call.1} parent=39 // pred_region
          %s7470 = sand.u32 %s94, 1
          %s7471 = scalar_lea.sflag [#allocation3], %s7470
          %s7472 = sand.u32 %s94, 1
          %s7473 = smul.addr %s7472, 3072
          %s7474 = scalar_lea.vmem [#allocation2], %s7473
          %7475 = dma.done %s7471, 49152
        $region44: #{tpu_custom_call.1} parent=39 // pred_fallthru
          _
      $region40: #{tpu_custom_call.1} parent=5 // pred_fallthru
        _
    $region6: #{tpu_custom_call.1} parent=1 // loop_footer
      %s16 = sadd.s32 1, %s12
    $region7: #{tpu_custom_call.1} parent=1 // loop_footer_branch
      %11 = sbr.rel target = $region3
    $region8: #{tpu_custom_call.1} parent=1 // loop_exit
      _
    %7476 = vsyncpa [#allocation3], 1
    %s7477 = scalar_lea.sflag [#allocation3], 1
    %7478 = vsyncpa %s7477, 1

</llo_original>
